<compile_context>
chip_gen: v5e
topology: v5e:2x2
jax: 0.10.0
libtpu: 0.0.40
codegen_flags: <defaults>
</compile_context>

<pallas_src>
import jax
import jax.numpy as jnp
from jax.experimental import pallas as pl
from jax.experimental.pallas import tpu as pltpu

# ---------------- configuration (small, consistent with the module) ----------------
B = 2
DIM = 4                      # input channels `dim` (== C)
H = W = 16                   # input_resolution
PATCH = (1, 1)               # patch_size
DMODEL = 32
NUM_HEADS = 2
DIM_HEAD = 8
IN_DEPTH = 1                 # module default in_depth=1 (kernel below is written for depth=1)
MLP_DIM = DMODEL * 4         # module overrides mlp_dim = dmodel * 4
INNER = NUM_HEADS * DIM_HEAD
N = (H // PATCH[0]) * (W // PATCH[1])
PATCH_DIM = PATCH[0] * PATCH[1] * DIM
SCALE = DIM_HEAD ** -0.5
LN_EPS = 1e-5
ADD_MAP = True


# ---------------------------------- Pallas kernel -----------------------------------
def vit_kernel(xe_ref, m_ref,
               g1_ref, bln1_ref,
               wq_ref, wk_ref, wv_ref, wo_ref, bo_ref,
               g2_ref, bln2_ref, w1_ref, b1_ref, w2_ref, b2_ref,
               out_ref):
    bb = xe_ref.shape[0]                 # batch elements in this grid step (static)

    g1 = g1_ref[...]
    bln1 = bln1_ref[...]
    g2 = g2_ref[...]
    bln2 = bln2_ref[...]
    bo = bo_ref[...]
    w1 = w1_ref[...]
    b1 = b1_ref[...]
    w2 = w2_ref[...]
    b2 = b2_ref[...]

    def layernorm(z, g, b):
        mu = jnp.mean(z, axis=-1, keepdims=True)
        var = jnp.mean((z - mu) ** 2, axis=-1, keepdims=True)
        return (z - mu) * jax.lax.rsqrt(var + LN_EPS) * g + b

    for bi in range(bb):                 # static unroll; bb is 1 or B (tiny)
        xe = xe_ref[bi]                  # (N, DMODEL) embedded tokens (+pos) from wrapper
        mrow = m_ref[bi]                 # (N, 1) per-row attention-map scale

        # ----- transformer layer 0: PreNorm(Attention) + residual -----
        xn = layernorm(xe, g1, bln1)

        att = jnp.zeros((N, DMODEL), jnp.float32)
        for h in range(NUM_HEADS):       # static unroll over heads; weight-ref slicing
            q = jnp.dot(xn, wq_ref[h], preferred_element_type=jnp.float32)   # (N, DH)
            k = jnp.dot(xn, wk_ref[h], preferred_element_type=jnp.float32)   # (N, DH)
            v = jnp.dot(xn, wv_ref[h], preferred_element_type=jnp.float32)   # (N, DH)

            # q @ k^T via dot_general (contract the head dim of both operands)
            dots = jax.lax.dot_general(
                q, k, (((1,), (1,)), ((), ())),
                preferred_element_type=jnp.float32) * SCALE                  # (N, N)
            dots = dots - jnp.max(dots, axis=-1, keepdims=True)
            e = jnp.exp(dots)
            probs = e * pl.reciprocal(jnp.sum(e, axis=-1, keepdims=True), approx=True)

            ho = jnp.dot(probs, v, preferred_element_type=jnp.float32)       # (N, DH)
            # accumulate directly through the output projection (no concat)
            att = att + jnp.dot(ho, wo_ref[h], preferred_element_type=jnp.float32)

        if ADD_MAP:
            # exact fold: (m*attn) @ v @ Wo + bo == m * ((attn@v) @ Wo) + bo
            att = mrow * att
        att = att + bo
        x1 = att + xe

        # ----- transformer layer 0: PreNorm(FeedForward) + residual -----
        xn2 = layernorm(x1, g2, bln2)
        hdn = jnp.dot(xn2, w1, preferred_element_type=jnp.float32) + b1
        hdn = jnp.maximum(hdn, 0.0)
        ff = jnp.dot(hdn, w2, preferred_element_type=jnp.float32) + b2
        x2 = ff + x1

        out_ref[bi] = x2.astype(out_ref.dtype)


# ----------------------------------- wrapper / glue ----------------------------------
def _const_index_map(ndim):
    return lambda b: (0,) * ndim


def _pick_batch_block(B_):
    """Batch elements per grid step.

    Single-TC chips (v5e/v6e): whole batch in one grid step (extra grid steps
    are pure serial-loop overhead).  Multi-TC chips (v7x): one element per
    step so the "parallel" grid axis shards across the TensorCores.
    """
    kind = ""
    try:
        kind = jax.devices()[0].device_kind.lower()
    except Exception:
        pass
    if B_ > 1 and "v7" in kind:
        return 1
    return B_


def vit_forward(x_nchw, a_map, pos, params):
    """x_nchw: (B, C, H, W); a_map: (B, H, W). Returns NCHW output (B, C, H, W)."""
    B_, C_, H_, W_ = x_nchw.shape
    p1, p2 = PATCH
    hb, wb = H_ // p1, W_ // p2

    # Rearrange 'b c (h p1) (w p2) -> b (h w) (p1 p2 c)'  (layout only)
    x_tok = x_nchw.reshape(B_, C_, hb, p1, wb, p2)
    x_tok = jnp.transpose(x_tok, (0, 2, 4, 3, 5, 1)).reshape(B_, hb * wb, p1 * p2 * C_)

    # Map_reshape: rearrange + max over the patch (trivial for 1x1 patches)
    m = a_map.reshape(B_, hb, p1, wb, p2)
    m = jnp.transpose(m, (0, 1, 3, 2, 4)).reshape(B_, hb * wb, p1 * p2)
    m = jnp.max(m, axis=-1)[..., None].astype(jnp.float32)      # (B, N, 1)

    # patch embedding + positional embedding in XLA (fuses with the rearrange;
    # keeps 4-lane-wide loads / 4-deep contractions out of the kernel hot path)
    xe = (x_tok.astype(jnp.float32) @ params["we"] + params["be"] + pos)
    xe = xe.astype(jnp.float32)
    # Dropout (emb_dropout) is identity in inference mode.

    # per-head weight views (trace-time, free)
    wqkv = params["wqkv"]
    wq = jnp.stack([wqkv[:, h * DIM_HEAD:(h + 1) * DIM_HEAD]
                    for h in range(NUM_HEADS)])                              # (H, D, DH)
    wk = jnp.stack([wqkv[:, INNER + h * DIM_HEAD:INNER + (h + 1) * DIM_HEAD]
                    for h in range(NUM_HEADS)])                              # (H, D, DH)
    wv = jnp.stack([wqkv[:, 2 * INNER + h * DIM_HEAD:2 * INNER + (h + 1) * DIM_HEAD]
                    for h in range(NUM_HEADS)])                              # (H, D, DH)
    wo_h = params["wo"].reshape(NUM_HEADS, DIM_HEAD, DMODEL)                 # (H, DH, D)

    param_list = [params["g1"], params["bln1"],
                  wq, wk, wv, wo_h, params["bo"],
                  params["g2"], params["bln2"],
                  params["w1"], params["b1"], params["w2"], params["b2"]]

    bb = _pick_batch_block(B_)
    grid = (B_ // bb,)

    in_specs = [
        pl.BlockSpec((bb, N, DMODEL), lambda b: (b, 0, 0)),   # embedded tokens
        pl.BlockSpec((bb, N, 1), lambda b: (b, 0, 0)),        # per-row map scale
    ] + [pl.BlockSpec(p.shape, _const_index_map(p.ndim)) for p in param_list]

    x2 = pl.pallas_call(
        vit_kernel,
        out_shape=jax.ShapeDtypeStruct((B_, N, DMODEL), jnp.float32),
        grid=grid,
        in_specs=in_specs,
        out_specs=pl.BlockSpec((bb, N, DMODEL), lambda b: (b, 0, 0)),
        compiler_params=pltpu.CompilerParams(dimension_semantics=("parallel",)),
    )(xe, m, *param_list)

    # recover_patch_embedding Linear (DMODEL -> PATCH_DIM=4) in XLA, then
    # rearrange 'b (h w) (p1 p2 c) -> b c (h p1) (w p2)'
    out_tok = x2 @ params["wr"] + params["br"]
    out = out_tok.reshape(B_, hb, wb, p1, p2, C_)
    out = jnp.transpose(out, (0, 5, 1, 3, 2, 4)).reshape(B_, C_, H_, W_)
    return out


# --------------------------- deterministic parameter setup ---------------------------
def init_params(key):
    ks = jax.random.split(key, 16)
    s = 0.05
    params = {
        "we":   jax.random.normal(ks[0], (PATCH_DIM, DMODEL), jnp.float32) * s,
        "be":   jax.random.normal(ks[1], (1, DMODEL), jnp.float32) * s,
        "g1":   jnp.ones((1, DMODEL), jnp.float32),
        "bln1": jnp.zeros((1, DMODEL), jnp.float32),
        "wqkv": jax.random.normal(ks[2], (DMODEL, 3 * INNER), jnp.float32) * s,
        "wo":   jax.random.normal(ks[3], (INNER, DMODEL), jnp.float32) * s,
        "bo":   jax.random.normal(ks[4], (1, DMODEL), jnp.float32) * s,
        "g2":   jnp.ones((1, DMODEL), jnp.float32),
        "bln2": jnp.zeros((1, DMODEL), jnp.float32),
        "w1":   jax.random.normal(ks[5], (DMODEL, MLP_DIM), jnp.float32) * s,
        "b1":   jax.random.normal(ks[6], (1, MLP_DIM), jnp.float32) * s,
        "w2":   jax.random.normal(ks[7], (MLP_DIM, DMODEL), jnp.float32) * s,
        "b2":   jax.random.normal(ks[8], (1, DMODEL), jnp.float32) * s,
        "wr":   jax.random.normal(ks[9], (DMODEL, PATCH_DIM), jnp.float32) * s,
        "br":   jax.random.normal(ks[10], (1, PATCH_DIM), jnp.float32) * s,
    }
    pos = jax.random.normal(ks[11], (1, N, DMODEL), jnp.float32)
    return params, pos


# ------------------------------- pure-JAX reference ----------------------------------
def ref_forward(x_nchw, a_map, pos, p):
    B_, C_, H_, W_ = x_nchw.shape
    p1, p2 = PATCH
    hb, wb = H_ // p1, W_ // p2
    x_tok = x_nchw.reshape(B_, C_, hb, p1, wb, p2)
    x_tok = jnp.transpose(x_tok, (0, 2, 4, 3, 5, 1)).reshape(B_, hb * wb, p1 * p2 * C_)
    m = a_map.reshape(B_, hb, p1, wb, p2)
    m = jnp.transpose(m, (0, 1, 3, 2, 4)).reshape(B_, hb * wb, p1 * p2)
    m = jnp.max(m, axis=-1)                                     # (B, N)

    xe = x_tok @ p["we"] + p["be"] + pos                        # (B, N, DMODEL)

    def ln(z, g, b):
        mu = jnp.mean(z, -1, keepdims=True)
        var = jnp.mean((z - mu) ** 2, -1, keepdims=True)
        return (z - mu) / jnp.sqrt(var + LN_EPS) * g + b

    xn = ln(xe, p["g1"], p["bln1"])
    qkv = xn @ p["wqkv"]
    q, k, v = jnp.split(qkv, 3, axis=-1)
    resh = lambda t: t.reshape(B_, N, NUM_HEADS, DIM_HEAD).transpose(0, 2, 1, 3)
    q, k, v = resh(q), resh(k), resh(v)
    dots = jnp.einsum("bhnd,bhmd->bhnm", q, k) * SCALE
    attn = jax.nn.softmax(dots, axis=-1)
    attn = attn * m[:, None, :, None]                           # map_attn scaling
    out = jnp.einsum("bhnm,bhmd->bhnd", attn, v)
    out = out.transpose(0, 2, 1, 3).reshape(B_, N, INNER)
    att = out @ p["wo"] + p["bo"]
    x1 = att + xe

    xn2 = ln(x1, p["g2"], p["bln2"])
    ff = jnp.maximum(xn2 @ p["w1"] + p["b1"], 0.0) @ p["w2"] + p["b2"]
    x2 = ff + x1

    out_tok = x2 @ p["wr"] + p["br"]
    out = out_tok.reshape(B_, hb, wb, p1, p2, C_)
    return jnp.transpose(out, (0, 5, 1, 3, 2, 4)).reshape(B_, C_, H_, W_)


# -------------------------------------- main ------------------------------------------
if __name__ == "__main__":
    key = jax.random.PRNGKey(0)
    k_x, k_m, k_p = jax.random.split(key, 3)

    x = jax.random.normal(k_x, (B, DIM, H, W), jnp.float32)      # NCHW input
    a_map = jax.random.uniform(k_m, (B, H, W), jnp.float32)      # attention map
    params, pos = init_params(k_p)

    out = vit_forward(x, a_map, pos, params)
    out = jax.block_until_ready(out)

    ref = jax.block_until_ready(ref_forward(x, a_map, pos, params))
    assert out.shape == (B, DIM, H, W)
    max_err = float(jnp.max(jnp.abs(out - ref)))
    assert max_err < 1e-2, f"mismatch vs reference: {max_err}"

    print("KERNEL_OK")
</pallas_src>

<mosaic_0001>
module attributes {stable_mosaic.version = 11 : i64} {
  func.func @vit_kernel(%arg0: i32, %arg1: memref<2x256x32xf32, #tpu.memory_space<vmem>>, %arg2: memref<2x256x1xf32, #tpu.memory_space<vmem>>, %arg3: memref<1x32xf32, #tpu.memory_space<vmem>>, %arg4: memref<1x32xf32, #tpu.memory_space<vmem>>, %arg5: memref<2x32x8xf32, #tpu.memory_space<vmem>>, %arg6: memref<2x32x8xf32, #tpu.memory_space<vmem>>, %arg7: memref<2x32x8xf32, #tpu.memory_space<vmem>>, %arg8: memref<2x8x32xf32, #tpu.memory_space<vmem>>, %arg9: memref<1x32xf32, #tpu.memory_space<vmem>>, %arg10: memref<1x32xf32, #tpu.memory_space<vmem>>, %arg11: memref<1x32xf32, #tpu.memory_space<vmem>>, %arg12: memref<32x128xf32, #tpu.memory_space<vmem>>, %arg13: memref<1x128xf32, #tpu.memory_space<vmem>>, %arg14: memref<128x32xf32, #tpu.memory_space<vmem>>, %arg15: memref<1x32xf32, #tpu.memory_space<vmem>>, %arg16: memref<2x256x32xf32, #tpu.memory_space<vmem>>) attributes {dimension_semantics = [#tpu.dimension_semantics<parallel>], iteration_bounds = array<i64: 1>, scalar_prefetch = 0 : i64, scratch_operands = 0 : i64, tpu.core_type = #tpu.core_type<tc>, window_params = [{transform_indices = @transform_0, window_bounds = array<i64: 2, 256, 32>}, {transform_indices = @transform_1, window_bounds = array<i64: 2, 256, 1>}, {pipeline_mode = #tpu.pipeline_mode<synchronous>, transform_indices = @transform_2, window_bounds = array<i64: 1, 32>}, {pipeline_mode = #tpu.pipeline_mode<synchronous>, transform_indices = @transform_3, window_bounds = array<i64: 1, 32>}, {pipeline_mode = #tpu.pipeline_mode<synchronous>, transform_indices = @transform_4, window_bounds = array<i64: 2, 32, 8>}, {pipeline_mode = #tpu.pipeline_mode<synchronous>, transform_indices = @transform_5, window_bounds = array<i64: 2, 32, 8>}, {pipeline_mode = #tpu.pipeline_mode<synchronous>, transform_indices = @transform_6, window_bounds = array<i64: 2, 32, 8>}, {pipeline_mode = #tpu.pipeline_mode<synchronous>, transform_indices = @transform_7, window_bounds = array<i64: 2, 8, 32>}, {pipeline_mode = #tpu.pipeline_mode<synchronous>, transform_indices = @transform_8, window_bounds = array<i64: 1, 32>}, {pipeline_mode = #tpu.pipeline_mode<synchronous>, transform_indices = @transform_9, window_bounds = array<i64: 1, 32>}, {pipeline_mode = #tpu.pipeline_mode<synchronous>, transform_indices = @transform_10, window_bounds = array<i64: 1, 32>}, {pipeline_mode = #tpu.pipeline_mode<synchronous>, transform_indices = @transform_11, window_bounds = array<i64: 32, 128>}, {pipeline_mode = #tpu.pipeline_mode<synchronous>, transform_indices = @transform_12, window_bounds = array<i64: 1, 128>}, {pipeline_mode = #tpu.pipeline_mode<synchronous>, transform_indices = @transform_13, window_bounds = array<i64: 128, 32>}, {pipeline_mode = #tpu.pipeline_mode<synchronous>, transform_indices = @transform_14, window_bounds = array<i64: 1, 32>}, {transform_indices = @transform_15, window_bounds = array<i64: 2, 256, 32>}]} {
    %c0 = arith.constant 0 : index
    %c0_0 = arith.constant 0 : index
    %0 = vector.load %arg3[%c0, %c0_0] : memref<1x32xf32, #tpu.memory_space<vmem>>, vector<1x32xf32>
    %c0_1 = arith.constant 0 : index
    %c0_2 = arith.constant 0 : index
    %1 = vector.load %arg4[%c0_1, %c0_2] : memref<1x32xf32, #tpu.memory_space<vmem>>, vector<1x32xf32>
    %c0_3 = arith.constant 0 : index
    %c0_4 = arith.constant 0 : index
    %2 = vector.load %arg10[%c0_3, %c0_4] : memref<1x32xf32, #tpu.memory_space<vmem>>, vector<1x32xf32>
    %c0_5 = arith.constant 0 : index
    %c0_6 = arith.constant 0 : index
    %3 = vector.load %arg11[%c0_5, %c0_6] : memref<1x32xf32, #tpu.memory_space<vmem>>, vector<1x32xf32>
    %c0_7 = arith.constant 0 : index
    %c0_8 = arith.constant 0 : index
    %4 = vector.load %arg9[%c0_7, %c0_8] : memref<1x32xf32, #tpu.memory_space<vmem>>, vector<1x32xf32>
    %c0_9 = arith.constant 0 : index
    %c0_10 = arith.constant 0 : index
    %5 = vector.load %arg12[%c0_9, %c0_10] : memref<32x128xf32, #tpu.memory_space<vmem>>, vector<32x128xf32>
    %c0_11 = arith.constant 0 : index
    %c0_12 = arith.constant 0 : index
    %6 = vector.load %arg13[%c0_11, %c0_12] : memref<1x128xf32, #tpu.memory_space<vmem>>, vector<1x128xf32>
    %c0_13 = arith.constant 0 : index
    %c0_14 = arith.constant 0 : index
    %7 = vector.load %arg14[%c0_13, %c0_14] : memref<128x32xf32, #tpu.memory_space<vmem>>, vector<128x32xf32>
    %c0_15 = arith.constant 0 : index
    %c0_16 = arith.constant 0 : index
    %8 = vector.load %arg15[%c0_15, %c0_16] : memref<1x32xf32, #tpu.memory_space<vmem>>, vector<1x32xf32>
    %c0_17 = arith.constant 0 : index
    %c0_18 = arith.constant 0 : index
    %c0_19 = arith.constant 0 : index
    %9 = vector.load %arg1[%c0_17, %c0_18, %c0_19] : memref<2x256x32xf32, #tpu.memory_space<vmem>>, vector<1x256x32xf32>
    %10 = vector.shape_cast %9 : vector<1x256x32xf32> to vector<256x32xf32>
    %c0_20 = arith.constant 0 : index
    %c0_21 = arith.constant 0 : index
    %c0_22 = arith.constant 0 : index
    %11 = vector.load %arg2[%c0_20, %c0_21, %c0_22] : memref<2x256x1xf32, #tpu.memory_space<vmem>>, vector<1x256x1xf32>
    %12 = vector.shape_cast %11 : vector<1x256x1xf32> to vector<256x1xf32>
    %cst = arith.constant dense<0.000000e+00> : vector<256xf32>
    %13 = vector.multi_reduction <add>, %10, %cst [1] : vector<256x32xf32> to vector<256xf32>
    %14 = vector.shape_cast %13 : vector<256xf32> to vector<256x1xf32>
    %cst_23 = arith.constant 3.200000e+01 : f32
    %15 = vector.broadcast %cst_23 : f32 to vector<256x1xf32>
    %16 = arith.divf %14, %15 : vector<256x1xf32>
    %17 = vector.broadcast %16 : vector<256x1xf32> to vector<256x32xf32>
    %18 = arith.subf %10, %17 : vector<256x32xf32>
    %19 = arith.mulf %18, %18 : vector<256x32xf32>
    %cst_24 = arith.constant dense<0.000000e+00> : vector<256xf32>
    %20 = vector.multi_reduction <add>, %19, %cst_24 [1] : vector<256x32xf32> to vector<256xf32>
    %21 = vector.shape_cast %20 : vector<256xf32> to vector<256x1xf32>
    %cst_25 = arith.constant 3.200000e+01 : f32
    %22 = vector.broadcast %cst_25 : f32 to vector<256x1xf32>
    %23 = arith.divf %21, %22 : vector<256x1xf32>
    %24 = vector.broadcast %16 : vector<256x1xf32> to vector<256x32xf32>
    %25 = arith.subf %10, %24 : vector<256x32xf32>
    %cst_26 = arith.constant 9.99999974E-6 : f32
    %26 = vector.broadcast %cst_26 : f32 to vector<256x1xf32>
    %27 = arith.addf %23, %26 : vector<256x1xf32>
    %28 = math.rsqrt %27 : vector<256x1xf32>
    %29 = vector.broadcast %28 : vector<256x1xf32> to vector<256x32xf32>
    %30 = arith.mulf %25, %29 : vector<256x32xf32>
    %31 = vector.broadcast %0 : vector<1x32xf32> to vector<256x32xf32>
    %32 = arith.mulf %30, %31 : vector<256x32xf32>
    %33 = vector.broadcast %1 : vector<1x32xf32> to vector<256x32xf32>
    %34 = arith.addf %32, %33 : vector<256x32xf32>
    %cst_27 = arith.constant 0.000000e+00 : f32
    %35 = vector.broadcast %cst_27 : f32 to vector<256x32xf32>
    %c0_28 = arith.constant 0 : index
    %c0_29 = arith.constant 0 : index
    %c0_30 = arith.constant 0 : index
    %36 = vector.load %arg5[%c0_28, %c0_29, %c0_30] : memref<2x32x8xf32, #tpu.memory_space<vmem>>, vector<1x32x8xf32>
    %37 = vector.shape_cast %36 : vector<1x32x8xf32> to vector<32x8xf32>
    %cst_31 = arith.constant dense<0.000000e+00> : vector<256x8xf32>
    %38 = tpu.matmul %34, %37, %cst_31 {dimension_numbers = #tpu.dot_dimension_numbers<[1], [0], [0], [1], [0, 0, 1, 1], [], []>} : vector<256x32xf32>, vector<32x8xf32>, vector<256x8xf32> -> vector<256x8xf32>
    %c0_32 = arith.constant 0 : index
    %c0_33 = arith.constant 0 : index
    %c0_34 = arith.constant 0 : index
    %39 = vector.load %arg6[%c0_32, %c0_33, %c0_34] : memref<2x32x8xf32, #tpu.memory_space<vmem>>, vector<1x32x8xf32>
    %40 = vector.shape_cast %39 : vector<1x32x8xf32> to vector<32x8xf32>
    %cst_35 = arith.constant dense<0.000000e+00> : vector<256x8xf32>
    %41 = tpu.matmul %34, %40, %cst_35 {dimension_numbers = #tpu.dot_dimension_numbers<[1], [0], [0], [1], [0, 0, 1, 1], [], []>} : vector<256x32xf32>, vector<32x8xf32>, vector<256x8xf32> -> vector<256x8xf32>
    %c0_36 = arith.constant 0 : index
    %c0_37 = arith.constant 0 : index
    %c0_38 = arith.constant 0 : index
    %42 = vector.load %arg7[%c0_36, %c0_37, %c0_38] : memref<2x32x8xf32, #tpu.memory_space<vmem>>, vector<1x32x8xf32>
    %43 = vector.shape_cast %42 : vector<1x32x8xf32> to vector<32x8xf32>
    %cst_39 = arith.constant dense<0.000000e+00> : vector<256x8xf32>
    %44 = tpu.matmul %34, %43, %cst_39 {dimension_numbers = #tpu.dot_dimension_numbers<[1], [0], [0], [1], [0, 0, 1, 1], [], []>} : vector<256x32xf32>, vector<32x8xf32>, vector<256x8xf32> -> vector<256x8xf32>
    %cst_40 = arith.constant dense<0.000000e+00> : vector<256x256xf32>
    %45 = tpu.matmul %38, %41, %cst_40 {dimension_numbers = #tpu.dot_dimension_numbers<[1], [1], [0], [0], [0, 0, 1, 0], [], []>} : vector<256x8xf32>, vector<256x8xf32>, vector<256x256xf32> -> vector<256x256xf32>
    %cst_41 = arith.constant 0.353553385 : f32
    %46 = vector.broadcast %cst_41 : f32 to vector<256x256xf32>
    %47 = arith.mulf %45, %46 : vector<256x256xf32>
    %cst_42 = arith.constant dense<0xFF800000> : vector<256xf32>
    %48 = vector.multi_reduction <maximumf>, %47, %cst_42 [1] : vector<256x256xf32> to vector<256xf32>
    %49 = vector.shape_cast %48 : vector<256xf32> to vector<256x1xf32>
    %50 = vector.broadcast %49 : vector<256x1xf32> to vector<256x256xf32>
    %51 = arith.subf %47, %50 : vector<256x256xf32>
    %52 = math.exp %51 : vector<256x256xf32>
    %cst_43 = arith.constant dense<0.000000e+00> : vector<256xf32>
    %53 = vector.multi_reduction <add>, %52, %cst_43 [1] : vector<256x256xf32> to vector<256xf32>
    %54 = vector.shape_cast %53 : vector<256xf32> to vector<256x1xf32>
    %55 = tpu.reciprocal %54 {approx = true} : vector<256x1xf32> -> vector<256x1xf32>
    %56 = vector.broadcast %55 : vector<256x1xf32> to vector<256x256xf32>
    %57 = arith.mulf %52, %56 : vector<256x256xf32>
    %cst_44 = arith.constant dense<0.000000e+00> : vector<256x8xf32>
    %58 = tpu.matmul %57, %44, %cst_44 {dimension_numbers = #tpu.dot_dimension_numbers<[1], [0], [0], [1], [0, 0, 1, 1], [], []>} : vector<256x256xf32>, vector<256x8xf32>, vector<256x8xf32> -> vector<256x8xf32>
    %c0_45 = arith.constant 0 : index
    %c0_46 = arith.constant 0 : index
    %c0_47 = arith.constant 0 : index
    %59 = vector.load %arg8[%c0_45, %c0_46, %c0_47] : memref<2x8x32xf32, #tpu.memory_space<vmem>>, vector<1x8x32xf32>
    %60 = vector.shape_cast %59 : vector<1x8x32xf32> to vector<8x32xf32>
    %cst_48 = arith.constant dense<0.000000e+00> : vector<256x32xf32>
    %61 = tpu.matmul %58, %60, %cst_48 {dimension_numbers = #tpu.dot_dimension_numbers<[1], [0], [0], [1], [0, 0, 1, 1], [], []>} : vector<256x8xf32>, vector<8x32xf32>, vector<256x32xf32> -> vector<256x32xf32>
    %62 = arith.addf %35, %61 : vector<256x32xf32>
    %c1 = arith.constant 1 : index
    %c0_49 = arith.constant 0 : index
    %c0_50 = arith.constant 0 : index
    %63 = vector.load %arg5[%c1, %c0_49, %c0_50] : memref<2x32x8xf32, #tpu.memory_space<vmem>>, vector<1x32x8xf32>
    %64 = vector.shape_cast %63 : vector<1x32x8xf32> to vector<32x8xf32>
    %cst_51 = arith.constant dense<0.000000e+00> : vector<256x8xf32>
    %65 = tpu.matmul %34, %64, %cst_51 {dimension_numbers = #tpu.dot_dimension_numbers<[1], [0], [0], [1], [0, 0, 1, 1], [], []>} : vector<256x32xf32>, vector<32x8xf32>, vector<256x8xf32> -> vector<256x8xf32>
    %c1_52 = arith.constant 1 : index
    %c0_53 = arith.constant 0 : index
    %c0_54 = arith.constant 0 : index
    %66 = vector.load %arg6[%c1_52, %c0_53, %c0_54] : memref<2x32x8xf32, #tpu.memory_space<vmem>>, vector<1x32x8xf32>
    %67 = vector.shape_cast %66 : vector<1x32x8xf32> to vector<32x8xf32>
    %cst_55 = arith.constant dense<0.000000e+00> : vector<256x8xf32>
    %68 = tpu.matmul %34, %67, %cst_55 {dimension_numbers = #tpu.dot_dimension_numbers<[1], [0], [0], [1], [0, 0, 1, 1], [], []>} : vector<256x32xf32>, vector<32x8xf32>, vector<256x8xf32> -> vector<256x8xf32>
    %c1_56 = arith.constant 1 : index
    %c0_57 = arith.constant 0 : index
    %c0_58 = arith.constant 0 : index
    %69 = vector.load %arg7[%c1_56, %c0_57, %c0_58] : memref<2x32x8xf32, #tpu.memory_space<vmem>>, vector<1x32x8xf32>
    %70 = vector.shape_cast %69 : vector<1x32x8xf32> to vector<32x8xf32>
    %cst_59 = arith.constant dense<0.000000e+00> : vector<256x8xf32>
    %71 = tpu.matmul %34, %70, %cst_59 {dimension_numbers = #tpu.dot_dimension_numbers<[1], [0], [0], [1], [0, 0, 1, 1], [], []>} : vector<256x32xf32>, vector<32x8xf32>, vector<256x8xf32> -> vector<256x8xf32>
    %cst_60 = arith.constant dense<0.000000e+00> : vector<256x256xf32>
    %72 = tpu.matmul %65, %68, %cst_60 {dimension_numbers = #tpu.dot_dimension_numbers<[1], [1], [0], [0], [0, 0, 1, 0], [], []>} : vector<256x8xf32>, vector<256x8xf32>, vector<256x256xf32> -> vector<256x256xf32>
    %cst_61 = arith.constant 0.353553385 : f32
    %73 = vector.broadcast %cst_61 : f32 to vector<256x256xf32>
    %74 = arith.mulf %72, %73 : vector<256x256xf32>
    %cst_62 = arith.constant dense<0xFF800000> : vector<256xf32>
    %75 = vector.multi_reduction <maximumf>, %74, %cst_62 [1] : vector<256x256xf32> to vector<256xf32>
    %76 = vector.shape_cast %75 : vector<256xf32> to vector<256x1xf32>
    %77 = vector.broadcast %76 : vector<256x1xf32> to vector<256x256xf32>
    %78 = arith.subf %74, %77 : vector<256x256xf32>
    %79 = math.exp %78 : vector<256x256xf32>
    %cst_63 = arith.constant dense<0.000000e+00> : vector<256xf32>
    %80 = vector.multi_reduction <add>, %79, %cst_63 [1] : vector<256x256xf32> to vector<256xf32>
    %81 = vector.shape_cast %80 : vector<256xf32> to vector<256x1xf32>
    %82 = tpu.reciprocal %81 {approx = true} : vector<256x1xf32> -> vector<256x1xf32>
    %83 = vector.broadcast %82 : vector<256x1xf32> to vector<256x256xf32>
    %84 = arith.mulf %79, %83 : vector<256x256xf32>
    %cst_64 = arith.constant dense<0.000000e+00> : vector<256x8xf32>
    %85 = tpu.matmul %84, %71, %cst_64 {dimension_numbers = #tpu.dot_dimension_numbers<[1], [0], [0], [1], [0, 0, 1, 1], [], []>} : vector<256x256xf32>, vector<256x8xf32>, vector<256x8xf32> -> vector<256x8xf32>
    %c1_65 = arith.constant 1 : index
    %c0_66 = arith.constant 0 : index
    %c0_67 = arith.constant 0 : index
    %86 = vector.load %arg8[%c1_65, %c0_66, %c0_67] : memref<2x8x32xf32, #tpu.memory_space<vmem>>, vector<1x8x32xf32>
    %87 = vector.shape_cast %86 : vector<1x8x32xf32> to vector<8x32xf32>
    %cst_68 = arith.constant dense<0.000000e+00> : vector<256x32xf32>
    %88 = tpu.matmul %85, %87, %cst_68 {dimension_numbers = #tpu.dot_dimension_numbers<[1], [0], [0], [1], [0, 0, 1, 1], [], []>} : vector<256x8xf32>, vector<8x32xf32>, vector<256x32xf32> -> vector<256x32xf32>
    %89 = arith.addf %62, %88 : vector<256x32xf32>
    %90 = vector.broadcast %12 : vector<256x1xf32> to vector<256x32xf32>
    %91 = arith.mulf %90, %89 : vector<256x32xf32>
    %92 = vector.broadcast %4 : vector<1x32xf32> to vector<256x32xf32>
    %93 = arith.addf %91, %92 : vector<256x32xf32>
    %94 = arith.addf %93, %10 : vector<256x32xf32>
    %cst_69 = arith.constant dense<0.000000e+00> : vector<256xf32>
    %95 = vector.multi_reduction <add>, %94, %cst_69 [1] : vector<256x32xf32> to vector<256xf32>
    %96 = vector.shape_cast %95 : vector<256xf32> to vector<256x1xf32>
    %cst_70 = arith.constant 3.200000e+01 : f32
    %97 = vector.broadcast %cst_70 : f32 to vector<256x1xf32>
    %98 = arith.divf %96, %97 : vector<256x1xf32>
    %99 = vector.broadcast %98 : vector<256x1xf32> to vector<256x32xf32>
    %100 = arith.subf %94, %99 : vector<256x32xf32>
    %101 = arith.mulf %100, %100 : vector<256x32xf32>
    %cst_71 = arith.constant dense<0.000000e+00> : vector<256xf32>
    %102 = vector.multi_reduction <add>, %101, %cst_71 [1] : vector<256x32xf32> to vector<256xf32>
    %103 = vector.shape_cast %102 : vector<256xf32> to vector<256x1xf32>
    %cst_72 = arith.constant 3.200000e+01 : f32
    %104 = vector.broadcast %cst_72 : f32 to vector<256x1xf32>
    %105 = arith.divf %103, %104 : vector<256x1xf32>
    %106 = vector.broadcast %98 : vector<256x1xf32> to vector<256x32xf32>
    %107 = arith.subf %94, %106 : vector<256x32xf32>
    %cst_73 = arith.constant 9.99999974E-6 : f32
    %108 = vector.broadcast %cst_73 : f32 to vector<256x1xf32>
    %109 = arith.addf %105, %108 : vector<256x1xf32>
    %110 = math.rsqrt %109 : vector<256x1xf32>
    %111 = vector.broadcast %110 : vector<256x1xf32> to vector<256x32xf32>
    %112 = arith.mulf %107, %111 : vector<256x32xf32>
    %113 = vector.broadcast %2 : vector<1x32xf32> to vector<256x32xf32>
    %114 = arith.mulf %112, %113 : vector<256x32xf32>
    %115 = vector.broadcast %3 : vector<1x32xf32> to vector<256x32xf32>
    %116 = arith.addf %114, %115 : vector<256x32xf32>
    %cst_74 = arith.constant dense<0.000000e+00> : vector<256x128xf32>
    %117 = tpu.matmul %116, %5, %cst_74 {dimension_numbers = #tpu.dot_dimension_numbers<[1], [0], [0], [1], [0, 0, 1, 1], [], []>} : vector<256x32xf32>, vector<32x128xf32>, vector<256x128xf32> -> vector<256x128xf32>
    %118 = vector.broadcast %6 : vector<1x128xf32> to vector<256x128xf32>
    %119 = arith.addf %117, %118 : vector<256x128xf32>
    %cst_75 = arith.constant 0.000000e+00 : f32
    %120 = vector.broadcast %cst_75 : f32 to vector<256x128xf32>
    %121 = arith.maximumf %119, %120 : vector<256x128xf32>
    %cst_76 = arith.constant dense<0.000000e+00> : vector<256x32xf32>
    %122 = tpu.matmul %121, %7, %cst_76 {dimension_numbers = #tpu.dot_dimension_numbers<[1], [0], [0], [1], [0, 0, 1, 1], [], []>} : vector<256x128xf32>, vector<128x32xf32>, vector<256x32xf32> -> vector<256x32xf32>
    %123 = vector.broadcast %8 : vector<1x32xf32> to vector<256x32xf32>
    %124 = arith.addf %122, %123 : vector<256x32xf32>
    %125 = arith.addf %124, %94 : vector<256x32xf32>
    %c0_77 = arith.constant 0 : index
    %c0_78 = arith.constant 0 : index
    %c0_79 = arith.constant 0 : index
    %126 = vector.load %arg16[%c0_77, %c0_78, %c0_79] : memref<2x256x32xf32, #tpu.memory_space<vmem>>, vector<1x256x32xf32>
    %127 = vector.shape_cast %126 : vector<1x256x32xf32> to vector<256x32xf32>
    %128 = vector.shape_cast %125 : vector<256x32xf32> to vector<1x256x32xf32>
    tpu.vector_store %arg16[%c0_77, %c0_78, %c0_79], %128 {strides = array<i32>} : memref<2x256x32xf32, #tpu.memory_space<vmem>>, vector<1x256x32xf32>,
    %c1_80 = arith.constant 1 : index
    %c0_81 = arith.constant 0 : index
    %c0_82 = arith.constant 0 : index
    %129 = vector.load %arg1[%c1_80, %c0_81, %c0_82] : memref<2x256x32xf32, #tpu.memory_space<vmem>>, vector<1x256x32xf32>
    %130 = vector.shape_cast %129 : vector<1x256x32xf32> to vector<256x32xf32>
    %c1_83 = arith.constant 1 : index
    %c0_84 = arith.constant 0 : index
    %c0_85 = arith.constant 0 : index
    %131 = vector.load %arg2[%c1_83, %c0_84, %c0_85] : memref<2x256x1xf32, #tpu.memory_space<vmem>>, vector<1x256x1xf32>
    %132 = vector.shape_cast %131 : vector<1x256x1xf32> to vector<256x1xf32>
    %cst_86 = arith.constant dense<0.000000e+00> : vector<256xf32>
    %133 = vector.multi_reduction <add>, %130, %cst_86 [1] : vector<256x32xf32> to vector<256xf32>
    %134 = vector.shape_cast %133 : vector<256xf32> to vector<256x1xf32>
    %cst_87 = arith.constant 3.200000e+01 : f32
    %135 = vector.broadcast %cst_87 : f32 to vector<256x1xf32>
    %136 = arith.divf %134, %135 : vector<256x1xf32>
    %137 = vector.broadcast %136 : vector<256x1xf32> to vector<256x32xf32>
    %138 = arith.subf %130, %137 : vector<256x32xf32>
    %139 = arith.mulf %138, %138 : vector<256x32xf32>
    %cst_88 = arith.constant dense<0.000000e+00> : vector<256xf32>
    %140 = vector.multi_reduction <add>, %139, %cst_88 [1] : vector<256x32xf32> to vector<256xf32>
    %141 = vector.shape_cast %140 : vector<256xf32> to vector<256x1xf32>
    %cst_89 = arith.constant 3.200000e+01 : f32
    %142 = vector.broadcast %cst_89 : f32 to vector<256x1xf32>
    %143 = arith.divf %141, %142 : vector<256x1xf32>
    %144 = vector.broadcast %136 : vector<256x1xf32> to vector<256x32xf32>
    %145 = arith.subf %130, %144 : vector<256x32xf32>
    %cst_90 = arith.constant 9.99999974E-6 : f32
    %146 = vector.broadcast %cst_90 : f32 to vector<256x1xf32>
    %147 = arith.addf %143, %146 : vector<256x1xf32>
    %148 = math.rsqrt %147 : vector<256x1xf32>
    %149 = vector.broadcast %148 : vector<256x1xf32> to vector<256x32xf32>
    %150 = arith.mulf %145, %149 : vector<256x32xf32>
    %151 = vector.broadcast %0 : vector<1x32xf32> to vector<256x32xf32>
    %152 = arith.mulf %150, %151 : vector<256x32xf32>
    %153 = vector.broadcast %1 : vector<1x32xf32> to vector<256x32xf32>
    %154 = arith.addf %152, %153 : vector<256x32xf32>
    %cst_91 = arith.constant 0.000000e+00 : f32
    %155 = vector.broadcast %cst_91 : f32 to vector<256x32xf32>
    %c0_92 = arith.constant 0 : index
    %c0_93 = arith.constant 0 : index
    %c0_94 = arith.constant 0 : index
    %156 = vector.load %arg5[%c0_92, %c0_93, %c0_94] : memref<2x32x8xf32, #tpu.memory_space<vmem>>, vector<1x32x8xf32>
    %157 = vector.shape_cast %156 : vector<1x32x8xf32> to vector<32x8xf32>
    %cst_95 = arith.constant dense<0.000000e+00> : vector<256x8xf32>
    %158 = tpu.matmul %154, %157, %cst_95 {dimension_numbers = #tpu.dot_dimension_numbers<[1], [0], [0], [1], [0, 0, 1, 1], [], []>} : vector<256x32xf32>, vector<32x8xf32>, vector<256x8xf32> -> vector<256x8xf32>
    %c0_96 = arith.constant 0 : index
    %c0_97 = arith.constant 0 : index
    %c0_98 = arith.constant 0 : index
    %159 = vector.load %arg6[%c0_96, %c0_97, %c0_98] : memref<2x32x8xf32, #tpu.memory_space<vmem>>, vector<1x32x8xf32>
    %160 = vector.shape_cast %159 : vector<1x32x8xf32> to vector<32x8xf32>
    %cst_99 = arith.constant dense<0.000000e+00> : vector<256x8xf32>
    %161 = tpu.matmul %154, %160, %cst_99 {dimension_numbers = #tpu.dot_dimension_numbers<[1], [0], [0], [1], [0, 0, 1, 1], [], []>} : vector<256x32xf32>, vector<32x8xf32>, vector<256x8xf32> -> vector<256x8xf32>
    %c0_100 = arith.constant 0 : index
    %c0_101 = arith.constant 0 : index
    %c0_102 = arith.constant 0 : index
    %162 = vector.load %arg7[%c0_100, %c0_101, %c0_102] : memref<2x32x8xf32, #tpu.memory_space<vmem>>, vector<1x32x8xf32>
    %163 = vector.shape_cast %162 : vector<1x32x8xf32> to vector<32x8xf32>
    %cst_103 = arith.constant dense<0.000000e+00> : vector<256x8xf32>
    %164 = tpu.matmul %154, %163, %cst_103 {dimension_numbers = #tpu.dot_dimension_numbers<[1], [0], [0], [1], [0, 0, 1, 1], [], []>} : vector<256x32xf32>, vector<32x8xf32>, vector<256x8xf32> -> vector<256x8xf32>
    %cst_104 = arith.constant dense<0.000000e+00> : vector<256x256xf32>
    %165 = tpu.matmul %158, %161, %cst_104 {dimension_numbers = #tpu.dot_dimension_numbers<[1], [1], [0], [0], [0, 0, 1, 0], [], []>} : vector<256x8xf32>, vector<256x8xf32>, vector<256x256xf32> -> vector<256x256xf32>
    %cst_105 = arith.constant 0.353553385 : f32
    %166 = vector.broadcast %cst_105 : f32 to vector<256x256xf32>
    %167 = arith.mulf %165, %166 : vector<256x256xf32>
    %cst_106 = arith.constant dense<0xFF800000> : vector<256xf32>
    %168 = vector.multi_reduction <maximumf>, %167, %cst_106 [1] : vector<256x256xf32> to vector<256xf32>
    %169 = vector.shape_cast %168 : vector<256xf32> to vector<256x1xf32>
    %170 = vector.broadcast %169 : vector<256x1xf32> to vector<256x256xf32>
    %171 = arith.subf %167, %170 : vector<256x256xf32>
    %172 = math.exp %171 : vector<256x256xf32>
    %cst_107 = arith.constant dense<0.000000e+00> : vector<256xf32>
    %173 = vector.multi_reduction <add>, %172, %cst_107 [1] : vector<256x256xf32> to vector<256xf32>
    %174 = vector.shape_cast %173 : vector<256xf32> to vector<256x1xf32>
    %175 = tpu.reciprocal %174 {approx = true} : vector<256x1xf32> -> vector<256x1xf32>
    %176 = vector.broadcast %175 : vector<256x1xf32> to vector<256x256xf32>
    %177 = arith.mulf %172, %176 : vector<256x256xf32>
    %cst_108 = arith.constant dense<0.000000e+00> : vector<256x8xf32>
    %178 = tpu.matmul %177, %164, %cst_108 {dimension_numbers = #tpu.dot_dimension_numbers<[1], [0], [0], [1], [0, 0, 1, 1], [], []>} : vector<256x256xf32>, vector<256x8xf32>, vector<256x8xf32> -> vector<256x8xf32>
    %c0_109 = arith.constant 0 : index
    %c0_110 = arith.constant 0 : index
    %c0_111 = arith.constant 0 : index
    %179 = vector.load %arg8[%c0_109, %c0_110, %c0_111] : memref<2x8x32xf32, #tpu.memory_space<vmem>>, vector<1x8x32xf32>
    %180 = vector.shape_cast %179 : vector<1x8x32xf32> to vector<8x32xf32>
    %cst_112 = arith.constant dense<0.000000e+00> : vector<256x32xf32>
    %181 = tpu.matmul %178, %180, %cst_112 {dimension_numbers = #tpu.dot_dimension_numbers<[1], [0], [0], [1], [0, 0, 1, 1], [], []>} : vector<256x8xf32>, vector<8x32xf32>, vector<256x32xf32> -> vector<256x32xf32>
    %182 = arith.addf %155, %181 : vector<256x32xf32>
    %c1_113 = arith.constant 1 : index
    %c0_114 = arith.constant 0 : index
    %c0_115 = arith.constant 0 : index
    %183 = vector.load %arg5[%c1_113, %c0_114, %c0_115] : memref<2x32x8xf32, #tpu.memory_space<vmem>>, vector<1x32x8xf32>
    %184 = vector.shape_cast %183 : vector<1x32x8xf32> to vector<32x8xf32>
    %cst_116 = arith.constant dense<0.000000e+00> : vector<256x8xf32>
    %185 = tpu.matmul %154, %184, %cst_116 {dimension_numbers = #tpu.dot_dimension_numbers<[1], [0], [0], [1], [0, 0, 1, 1], [], []>} : vector<256x32xf32>, vector<32x8xf32>, vector<256x8xf32> -> vector<256x8xf32>
    %c1_117 = arith.constant 1 : index
    %c0_118 = arith.constant 0 : index
    %c0_119 = arith.constant 0 : index
    %186 = vector.load %arg6[%c1_117, %c0_118, %c0_119] : memref<2x32x8xf32, #tpu.memory_space<vmem>>, vector<1x32x8xf32>
    %187 = vector.shape_cast %186 : vector<1x32x8xf32> to vector<32x8xf32>
    %cst_120 = arith.constant dense<0.000000e+00> : vector<256x8xf32>
    %188 = tpu.matmul %154, %187, %cst_120 {dimension_numbers = #tpu.dot_dimension_numbers<[1], [0], [0], [1], [0, 0, 1, 1], [], []>} : vector<256x32xf32>, vector<32x8xf32>, vector<256x8xf32> -> vector<256x8xf32>
    %c1_121 = arith.constant 1 : index
    %c0_122 = arith.constant 0 : index
    %c0_123 = arith.constant 0 : index
    %189 = vector.load %arg7[%c1_121, %c0_122, %c0_123] : memref<2x32x8xf32, #tpu.memory_space<vmem>>, vector<1x32x8xf32>
    %190 = vector.shape_cast %189 : vector<1x32x8xf32> to vector<32x8xf32>
    %cst_124 = arith.constant dense<0.000000e+00> : vector<256x8xf32>
    %191 = tpu.matmul %154, %190, %cst_124 {dimension_numbers = #tpu.dot_dimension_numbers<[1], [0], [0], [1], [0, 0, 1, 1], [], []>} : vector<256x32xf32>, vector<32x8xf32>, vector<256x8xf32> -> vector<256x8xf32>
    %cst_125 = arith.constant dense<0.000000e+00> : vector<256x256xf32>
    %192 = tpu.matmul %185, %188, %cst_125 {dimension_numbers = #tpu.dot_dimension_numbers<[1], [1], [0], [0], [0, 0, 1, 0], [], []>} : vector<256x8xf32>, vector<256x8xf32>, vector<256x256xf32> -> vector<256x256xf32>
    %cst_126 = arith.constant 0.353553385 : f32
    %193 = vector.broadcast %cst_126 : f32 to vector<256x256xf32>
    %194 = arith.mulf %192, %193 : vector<256x256xf32>
    %cst_127 = arith.constant dense<0xFF800000> : vector<256xf32>
    %195 = vector.multi_reduction <maximumf>, %194, %cst_127 [1] : vector<256x256xf32> to vector<256xf32>
    %196 = vector.shape_cast %195 : vector<256xf32> to vector<256x1xf32>
    %197 = vector.broadcast %196 : vector<256x1xf32> to vector<256x256xf32>
    %198 = arith.subf %194, %197 : vector<256x256xf32>
    %199 = math.exp %198 : vector<256x256xf32>
    %cst_128 = arith.constant dense<0.000000e+00> : vector<256xf32>
    %200 = vector.multi_reduction <add>, %199, %cst_128 [1] : vector<256x256xf32> to vector<256xf32>
    %201 = vector.shape_cast %200 : vector<256xf32> to vector<256x1xf32>
    %202 = tpu.reciprocal %201 {approx = true} : vector<256x1xf32> -> vector<256x1xf32>
    %203 = vector.broadcast %202 : vector<256x1xf32> to vector<256x256xf32>
    %204 = arith.mulf %199, %203 : vector<256x256xf32>
    %cst_129 = arith.constant dense<0.000000e+00> : vector<256x8xf32>
    %205 = tpu.matmul %204, %191, %cst_129 {dimension_numbers = #tpu.dot_dimension_numbers<[1], [0], [0], [1], [0, 0, 1, 1], [], []>} : vector<256x256xf32>, vector<256x8xf32>, vector<256x8xf32> -> vector<256x8xf32>
    %c1_130 = arith.constant 1 : index
    %c0_131 = arith.constant 0 : index
    %c0_132 = arith.constant 0 : index
    %206 = vector.load %arg8[%c1_130, %c0_131, %c0_132] : memref<2x8x32xf32, #tpu.memory_space<vmem>>, vector<1x8x32xf32>
    %207 = vector.shape_cast %206 : vector<1x8x32xf32> to vector<8x32xf32>
    %cst_133 = arith.constant dense<0.000000e+00> : vector<256x32xf32>
    %208 = tpu.matmul %205, %207, %cst_133 {dimension_numbers = #tpu.dot_dimension_numbers<[1], [0], [0], [1], [0, 0, 1, 1], [], []>} : vector<256x8xf32>, vector<8x32xf32>, vector<256x32xf32> -> vector<256x32xf32>
    %209 = arith.addf %182, %208 : vector<256x32xf32>
    %210 = vector.broadcast %132 : vector<256x1xf32> to vector<256x32xf32>
    %211 = arith.mulf %210, %209 : vector<256x32xf32>
    %212 = vector.broadcast %4 : vector<1x32xf32> to vector<256x32xf32>
    %213 = arith.addf %211, %212 : vector<256x32xf32>
    %214 = arith.addf %213, %130 : vector<256x32xf32>
    %cst_134 = arith.constant dense<0.000000e+00> : vector<256xf32>
    %215 = vector.multi_reduction <add>, %214, %cst_134 [1] : vector<256x32xf32> to vector<256xf32>
    %216 = vector.shape_cast %215 : vector<256xf32> to vector<256x1xf32>
    %cst_135 = arith.constant 3.200000e+01 : f32
    %217 = vector.broadcast %cst_135 : f32 to vector<256x1xf32>
    %218 = arith.divf %216, %217 : vector<256x1xf32>
    %219 = vector.broadcast %218 : vector<256x1xf32> to vector<256x32xf32>
    %220 = arith.subf %214, %219 : vector<256x32xf32>
    %221 = arith.mulf %220, %220 : vector<256x32xf32>
    %cst_136 = arith.constant dense<0.000000e+00> : vector<256xf32>
    %222 = vector.multi_reduction <add>, %221, %cst_136 [1] : vector<256x32xf32> to vector<256xf32>
    %223 = vector.shape_cast %222 : vector<256xf32> to vector<256x1xf32>
    %cst_137 = arith.constant 3.200000e+01 : f32
    %224 = vector.broadcast %cst_137 : f32 to vector<256x1xf32>
    %225 = arith.divf %223, %224 : vector<256x1xf32>
    %226 = vector.broadcast %218 : vector<256x1xf32> to vector<256x32xf32>
    %227 = arith.subf %214, %226 : vector<256x32xf32>
    %cst_138 = arith.constant 9.99999974E-6 : f32
    %228 = vector.broadcast %cst_138 : f32 to vector<256x1xf32>
    %229 = arith.addf %225, %228 : vector<256x1xf32>
    %230 = math.rsqrt %229 : vector<256x1xf32>
    %231 = vector.broadcast %230 : vector<256x1xf32> to vector<256x32xf32>
    %232 = arith.mulf %227, %231 : vector<256x32xf32>
    %233 = vector.broadcast %2 : vector<1x32xf32> to vector<256x32xf32>
    %234 = arith.mulf %232, %233 : vector<256x32xf32>
    %235 = vector.broadcast %3 : vector<1x32xf32> to vector<256x32xf32>
    %236 = arith.addf %234, %235 : vector<256x32xf32>
    %cst_139 = arith.constant dense<0.000000e+00> : vector<256x128xf32>
    %237 = tpu.matmul %236, %5, %cst_139 {dimension_numbers = #tpu.dot_dimension_numbers<[1], [0], [0], [1], [0, 0, 1, 1], [], []>} : vector<256x32xf32>, vector<32x128xf32>, vector<256x128xf32> -> vector<256x128xf32>
    %238 = vector.broadcast %6 : vector<1x128xf32> to vector<256x128xf32>
    %239 = arith.addf %237, %238 : vector<256x128xf32>
    %cst_140 = arith.constant 0.000000e+00 : f32
    %240 = vector.broadcast %cst_140 : f32 to vector<256x128xf32>
    %241 = arith.maximumf %239, %240 : vector<256x128xf32>
    %cst_141 = arith.constant dense<0.000000e+00> : vector<256x32xf32>
    %242 = tpu.matmul %241, %7, %cst_141 {dimension_numbers = #tpu.dot_dimension_numbers<[1], [0], [0], [1], [0, 0, 1, 1], [], []>} : vector<256x128xf32>, vector<128x32xf32>, vector<256x32xf32> -> vector<256x32xf32>
    %243 = vector.broadcast %8 : vector<1x32xf32> to vector<256x32xf32>
    %244 = arith.addf %242, %243 : vector<256x32xf32>
    %245 = arith.addf %244, %214 : vector<256x32xf32>
    %c1_142 = arith.constant 1 : index
    %c0_143 = arith.constant 0 : index
    %c0_144 = arith.constant 0 : index
    %246 = vector.load %arg16[%c1_142, %c0_143, %c0_144] : memref<2x256x32xf32, #tpu.memory_space<vmem>>, vector<1x256x32xf32>
    %247 = vector.shape_cast %246 : vector<1x256x32xf32> to vector<256x32xf32>
    %248 = vector.shape_cast %245 : vector<256x32xf32> to vector<1x256x32xf32>
    tpu.vector_store %arg16[%c1_142, %c0_143, %c0_144], %248 {strides = array<i32>} : memref<2x256x32xf32, #tpu.memory_space<vmem>>, vector<1x256x32xf32>,
    return
  }
  func.func @transform_0(%arg0: i32) -> (i32, i32, i32) {
    %c0_i32 = arith.constant 0 : i32
    %c0_i32_0 = arith.constant 0 : i32
    %c0_i32_1 = arith.constant 0 : i32
    return %arg0, %c0_i32, %c0_i32_0 : i32, i32, i32
  }
  func.func @transform_1(%arg0: i32) -> (i32, i32, i32) {
    %c0_i32 = arith.constant 0 : i32
    %c0_i32_0 = arith.constant 0 : i32
    %c0_i32_1 = arith.constant 0 : i32
    return %arg0, %c0_i32, %c0_i32_0 : i32, i32, i32
  }
  func.func @transform_2(%arg0: i32) -> (i32, i32) {
    %c0_i32 = arith.constant 0 : i32
    %c0_i32_0 = arith.constant 0 : i32
    %c0_i32_1 = arith.constant 0 : i32
    return %c0_i32, %c0_i32_0 : i32, i32
  }
  func.func @transform_3(%arg0: i32) -> (i32, i32) {
    %c0_i32 = arith.constant 0 : i32
    %c0_i32_0 = arith.constant 0 : i32
    %c0_i32_1 = arith.constant 0 : i32
    return %c0_i32, %c0_i32_0 : i32, i32
  }
  func.func @transform_4(%arg0: i32) -> (i32, i32, i32) {
    %c0_i32 = arith.constant 0 : i32
    %c0_i32_0 = arith.constant 0 : i32
    %c0_i32_1 = arith.constant 0 : i32
    %c0_i32_2 = arith.constant 0 : i32
    return %c0_i32, %c0_i32_0, %c0_i32_1 : i32, i32, i32
  }
  func.func @transform_5(%arg0: i32) -> (i32, i32, i32) {
    %c0_i32 = arith.constant 0 : i32
    %c0_i32_0 = arith.constant 0 : i32
    %c0_i32_1 = arith.constant 0 : i32
    %c0_i32_2 = arith.constant 0 : i32
    return %c0_i32, %c0_i32_0, %c0_i32_1 : i32, i32, i32
  }
  func.func @transform_6(%arg0: i32) -> (i32, i32, i32) {
    %c0_i32 = arith.constant 0 : i32
    %c0_i32_0 = arith.constant 0 : i32
    %c0_i32_1 = arith.constant 0 : i32
    %c0_i32_2 = arith.constant 0 : i32
    return %c0_i32, %c0_i32_0, %c0_i32_1 : i32, i32, i32
  }
  func.func @transform_7(%arg0: i32) -> (i32, i32, i32) {
    %c0_i32 = arith.constant 0 : i32
    %c0_i32_0 = arith.constant 0 : i32
    %c0_i32_1 = arith.constant 0 : i32
    %c0_i32_2 = arith.constant 0 : i32
    return %c0_i32, %c0_i32_0, %c0_i32_1 : i32, i32, i32
  }
  func.func @transform_8(%arg0: i32) -> (i32, i32) {
    %c0_i32 = arith.constant 0 : i32
    %c0_i32_0 = arith.constant 0 : i32
    %c0_i32_1 = arith.constant 0 : i32
    return %c0_i32, %c0_i32_0 : i32, i32
  }
  func.func @transform_9(%arg0: i32) -> (i32, i32) {
    %c0_i32 = arith.constant 0 : i32
    %c0_i32_0 = arith.constant 0 : i32
    %c0_i32_1 = arith.constant 0 : i32
    return %c0_i32, %c0_i32_0 : i32, i32
  }
  func.func @transform_10(%arg0: i32) -> (i32, i32) {
    %c0_i32 = arith.constant 0 : i32
    %c0_i32_0 = arith.constant 0 : i32
    %c0_i32_1 = arith.constant 0 : i32
    return %c0_i32, %c0_i32_0 : i32, i32
  }
  func.func @transform_11(%arg0: i32) -> (i32, i32) {
    %c0_i32 = arith.constant 0 : i32
    %c0_i32_0 = arith.constant 0 : i32
    %c0_i32_1 = arith.constant 0 : i32
    return %c0_i32, %c0_i32_0 : i32, i32
  }
  func.func @transform_12(%arg0: i32) -> (i32, i32) {
    %c0_i32 = arith.constant 0 : i32
    %c0_i32_0 = arith.constant 0 : i32
    %c0_i32_1 = arith.constant 0 : i32
    return %c0_i32, %c0_i32_0 : i32, i32
  }
  func.func @transform_13(%arg0: i32) -> (i32, i32) {
    %c0_i32 = arith.constant 0 : i32
    %c0_i32_0 = arith.constant 0 : i32
    %c0_i32_1 = arith.constant 0 : i32
    return %c0_i32, %c0_i32_0 : i32, i32
  }
  func.func @transform_14(%arg0: i32) -> (i32, i32) {
    %c0_i32 = arith.constant 0 : i32
    %c0_i32_0 = arith.constant 0 : i32
    %c0_i32_1 = arith.constant 0 : i32
    return %c0_i32, %c0_i32_0 : i32, i32
  }
  func.func @transform_15(%arg0: i32) -> (i32, i32, i32) {
    %c0_i32 = arith.constant 0 : i32
    %c0_i32_0 = arith.constant 0 : i32
    %c0_i32_1 = arith.constant 0 : i32
    return %arg0, %c0_i32, %c0_i32_0 : i32, i32, i32
  }
}

</mosaic_0001>

<llo_original>
// kernel: tpu_custom_call.1
$region0: #{tpu_custom_call.1}
  #allocation0 [shape = 'u32[]', space=smem, size = 0x4, offset = 0x4, fixed_abs, tag = 'smem constant byte address 0x4 - core index']
  #allocation1 [shape = 'u32[72,128]{1,0:T(1,128)}', space=vmem, size = 0x9000, scoped, tag = 'internal scratch']
  %s0 = inlined_call_operand.vmem [shape: f32[2,256,32], index: 0, kind: input, shape index: {}]
  %s1 = inlined_call_operand.vmem [shape: f32[2,256,1], index: 1, kind: input, shape index: {}]
  %s2 = inlined_call_operand.vmem [shape: f32[1,32], index: 2, kind: input, shape index: {}]
  %s3 = inlined_call_operand.vmem [shape: f32[1,32], index: 3, kind: input, shape index: {}]
  %s4 = inlined_call_operand.vmem [shape: f32[2,32,8], index: 4, kind: input, shape index: {}]
  %s5 = inlined_call_operand.vmem [shape: f32[2,32,8], index: 5, kind: input, shape index: {}]
  %s6 = inlined_call_operand.vmem [shape: f32[2,32,8], index: 6, kind: input, shape index: {}]
  %s7 = inlined_call_operand.vmem [shape: f32[2,8,32], index: 7, kind: input, shape index: {}]
  %s8 = inlined_call_operand.vmem [shape: f32[1,32], index: 8, kind: input, shape index: {}]
  %s9 = inlined_call_operand.vmem [shape: f32[1,32], index: 9, kind: input, shape index: {}]
  %s10 = inlined_call_operand.vmem [shape: f32[1,32], index: 10, kind: input, shape index: {}]
  %s11 = inlined_call_operand.vmem [shape: f32[32,128], index: 11, kind: input, shape index: {}]
  %s12 = inlined_call_operand.vmem [shape: f32[1,128], index: 12, kind: input, shape index: {}]
  %s13 = inlined_call_operand.vmem [shape: f32[128,32], index: 13, kind: input, shape index: {}]
  %s14 = inlined_call_operand.vmem [shape: f32[1,32], index: 14, kind: input, shape index: {}]
  %s15 = inlined_call_operand.vmem [shape: f32[2,256,32], index: 15, kind: output, shape index: {}]
  %s16 = sld [smem:[#allocation0]]
  $region70: #{tpu_custom_call.1} parent=0
    _
  %s18 = ssub.s32 1, %s16
  %s19 = scalar_select 0, %s18, %s16
  // Predicated region
  $region2: #{tpu_custom_call.1} parent=0 // pred_check
    _
  $region3: #{tpu_custom_call.1} parent=0 // pred_check_branch
    %21 = sbr.rel (0) target = $region5
  $region4: #{tpu_custom_call.1} parent=0 // pred_region
    _
  $region5: #{tpu_custom_call.1} parent=0 // pred_fallthru
    _
  // Predicated region
  $region6: #{tpu_custom_call.1} parent=0 // pred_check
    _
  $region7: #{tpu_custom_call.1} parent=0 // pred_check_branch
    %23 = sbr.rel (0) target = $region9
  $region8: #{tpu_custom_call.1} parent=0 // pred_region
    _
  $region9: #{tpu_custom_call.1} parent=0 // pred_fallthru
    _
  // Predicated region
  $region10: #{tpu_custom_call.1} parent=0 // pred_check
    _
  $region11: #{tpu_custom_call.1} parent=0 // pred_check_branch
    %25 = sbr.rel (0) target = $region13
  $region12: #{tpu_custom_call.1} parent=0 // pred_region
    _
  $region13: #{tpu_custom_call.1} parent=0 // pred_fallthru
    _
  // Predicated region
  $region14: #{tpu_custom_call.1} parent=0 // pred_check
    _
  $region15: #{tpu_custom_call.1} parent=0 // pred_check_branch
    %27 = sbr.rel (0) target = $region17
  $region16: #{tpu_custom_call.1} parent=0 // pred_region
    _
  $region17: #{tpu_custom_call.1} parent=0 // pred_fallthru
    _
  // Predicated region
  $region18: #{tpu_custom_call.1} parent=0 // pred_check
    _
  $region19: #{tpu_custom_call.1} parent=0 // pred_check_branch
    %29 = sbr.rel (0) target = $region21
  $region20: #{tpu_custom_call.1} parent=0 // pred_region
    _
  $region21: #{tpu_custom_call.1} parent=0 // pred_fallthru
    _
  // Predicated region
  $region22: #{tpu_custom_call.1} parent=0 // pred_check
    _
  $region23: #{tpu_custom_call.1} parent=0 // pred_check_branch
    %31 = sbr.rel (0) target = $region25
  $region24: #{tpu_custom_call.1} parent=0 // pred_region
    _
  $region25: #{tpu_custom_call.1} parent=0 // pred_fallthru
    _
  // Predicated region
  $region26: #{tpu_custom_call.1} parent=0 // pred_check
    _
  $region27: #{tpu_custom_call.1} parent=0 // pred_check_branch
    %33 = sbr.rel (0) target = $region29
  $region28: #{tpu_custom_call.1} parent=0 // pred_region
    _
  $region29: #{tpu_custom_call.1} parent=0 // pred_fallthru
    _
  // Predicated region
  $region30: #{tpu_custom_call.1} parent=0 // pred_check
    _
  $region31: #{tpu_custom_call.1} parent=0 // pred_check_branch
    %35 = sbr.rel (0) target = $region33
  $region32: #{tpu_custom_call.1} parent=0 // pred_region
    _
  $region33: #{tpu_custom_call.1} parent=0 // pred_fallthru
    _
  // Predicated region
  $region34: #{tpu_custom_call.1} parent=0 // pred_check
    _
  $region35: #{tpu_custom_call.1} parent=0 // pred_check_branch
    %37 = sbr.rel (0) target = $region37
  $region36: #{tpu_custom_call.1} parent=0 // pred_region
    _
  $region37: #{tpu_custom_call.1} parent=0 // pred_fallthru
    _
  // Predicated region
  $region38: #{tpu_custom_call.1} parent=0 // pred_check
    _
  $region39: #{tpu_custom_call.1} parent=0 // pred_check_branch
    %39 = sbr.rel (0) target = $region41
  $region40: #{tpu_custom_call.1} parent=0 // pred_region
    _
  $region41: #{tpu_custom_call.1} parent=0 // pred_fallthru
    _
  // Predicated region
  $region42: #{tpu_custom_call.1} parent=0 // pred_check
    _
  $region43: #{tpu_custom_call.1} parent=0 // pred_check_branch
    %41 = sbr.rel (0) target = $region45
  $region44: #{tpu_custom_call.1} parent=0 // pred_region
    _
  $region45: #{tpu_custom_call.1} parent=0 // pred_fallthru
    _
  // Predicated region
  $region46: #{tpu_custom_call.1} parent=0 // pred_check
    _
  $region47: #{tpu_custom_call.1} parent=0 // pred_check_branch
    %43 = sbr.rel (0) target = $region49
  $region48: #{tpu_custom_call.1} parent=0 // pred_region
    _
  $region49: #{tpu_custom_call.1} parent=0 // pred_fallthru
    _
  // Predicated region
  $region50: #{tpu_custom_call.1} parent=0 // pred_check
    _
  $region51: #{tpu_custom_call.1} parent=0 // pred_check_branch
    %45 = sbr.rel (0) target = $region53
  $region52: #{tpu_custom_call.1} parent=0 // pred_region
    _
  $region53: #{tpu_custom_call.1} parent=0 // pred_fallthru
    _
  // Predicated region
  $region54: #{tpu_custom_call.1} parent=0 // pred_check
    _
  $region55: #{tpu_custom_call.1} parent=0 // pred_check_branch
    %47 = sbr.rel (0) target = $region57
  $region56: #{tpu_custom_call.1} parent=0 // pred_region
    _
  $region57: #{tpu_custom_call.1} parent=0 // pred_fallthru
    _
  // Predicated region
  $region58: #{tpu_custom_call.1} parent=0 // pred_check
    _
  $region59: #{tpu_custom_call.1} parent=0 // pred_check_branch
    %49 = sbr.rel (0) target = $region61
  $region60: #{tpu_custom_call.1} parent=0 // pred_region
    _
  $region61: #{tpu_custom_call.1} parent=0 // pred_fallthru
    _
  %v50 = vld [vmem:[%s2] sm:$0x1]
  %v51 = vld [vmem:[%s3] sm:$0x1]
  %v52 = vld [vmem:[%s9] sm:$0x1]
  %v53 = vld [vmem:[%s10] sm:$0x1]
  %v54 = vld [vmem:[%s8] sm:$0x1]
  %v55 = vld [vmem:[%s11] sm:$0xff]
  %v56 = vld [vmem:[%s11 + $0x8] sm:$0xff]
  %v57 = vld [vmem:[%s11 + $0x10] sm:$0xff]
  %v58 = vld [vmem:[%s11 + $0x18] sm:$0xff]
  %v59 = vld [vmem:[%s12] sm:$0x1]
  %v60 = vld [vmem:[%s13] sm:$0xff]
  %v61 = vld [vmem:[%s13 + $0x8] sm:$0xff]
  %v62 = vld [vmem:[%s13 + $0x10] sm:$0xff]
  %v63 = vld [vmem:[%s13 + $0x18] sm:$0xff]
  %v64 = vld [vmem:[%s13 + $0x20] sm:$0xff]
  %v65 = vld [vmem:[%s13 + $0x28] sm:$0xff]
  %v66 = vld [vmem:[%s13 + $0x30] sm:$0xff]
  %v67 = vld [vmem:[%s13 + $0x38] sm:$0xff]
  %v68 = vld [vmem:[%s13 + $0x40] sm:$0xff]
  %v69 = vld [vmem:[%s13 + $0x48] sm:$0xff]
  %v70 = vld [vmem:[%s13 + $0x50] sm:$0xff]
  %v71 = vld [vmem:[%s13 + $0x58] sm:$0xff]
  %v72 = vld [vmem:[%s13 + $0x60] sm:$0xff]
  %v73 = vld [vmem:[%s13 + $0x68] sm:$0xff]
  %v74 = vld [vmem:[%s13 + $0x70] sm:$0xff]
  %v75 = vld [vmem:[%s13 + $0x78] sm:$0xff]
  %v76 = vld [vmem:[%s14] sm:$0x1]
  %v77 = vld [vmem:[%s0] sm:$0xff]
  %v78 = vld [vmem:[%s0 + $0x8] sm:$0xff]
  %v79 = vld [vmem:[%s0 + $0x10] sm:$0xff]
  %v80 = vld [vmem:[%s0 + $0x18] sm:$0xff]
  %v81 = vld [vmem:[%s0 + $0x20] sm:$0xff]
  %v82 = vld [vmem:[%s0 + $0x28] sm:$0xff]
  %v83 = vld [vmem:[%s0 + $0x30] sm:$0xff]
  %v84 = vld [vmem:[%s0 + $0x38] sm:$0xff]
  %v85 = vld [vmem:[%s0 + $0x40] sm:$0xff]
  %v86 = vld [vmem:[%s0 + $0x48] sm:$0xff]
  %v87 = vld [vmem:[%s0 + $0x50] sm:$0xff]
  %v88 = vld [vmem:[%s0 + $0x58] sm:$0xff]
  %v89 = vld [vmem:[%s0 + $0x60] sm:$0xff]
  %v90 = vld [vmem:[%s0 + $0x68] sm:$0xff]
  %v91 = vld [vmem:[%s0 + $0x70] sm:$0xff]
  %v92 = vld [vmem:[%s0 + $0x78] sm:$0xff]
  %v93 = vld [vmem:[%s0 + $0x80] sm:$0xff]
  %v94 = vld [vmem:[%s0 + $0x88] sm:$0xff]
  %v95 = vld [vmem:[%s0 + $0x90] sm:$0xff]
  %v96 = vld [vmem:[%s0 + $0x98] sm:$0xff]
  %v97 = vld [vmem:[%s0 + $0xa0] sm:$0xff]
  %v98 = vld [vmem:[%s0 + $0xa8] sm:$0xff]
  %v99 = vld [vmem:[%s0 + $0xb0] sm:$0xff]
  %v100 = vld [vmem:[%s0 + $0xb8] sm:$0xff]
  %v101 = vld [vmem:[%s0 + $0xc0] sm:$0xff]
  %v102 = vld [vmem:[%s0 + $0xc8] sm:$0xff]
  %v103 = vld [vmem:[%s0 + $0xd0] sm:$0xff]
  %v104 = vld [vmem:[%s0 + $0xd8] sm:$0xff]
  %v105 = vld [vmem:[%s0 + $0xe0] sm:$0xff]
  %v106 = vld [vmem:[%s0 + $0xe8] sm:$0xff]
  %v107 = vld [vmem:[%s0 + $0xf0] sm:$0xff]
  %v108 = vld [vmem:[%s0 + $0xf8] sm:$0xff]
  %v109 = vld [vmem:[%s1] sm:$0xff]
  %v110 = vld [vmem:[%s1 + $0x8] sm:$0xff]
  %v111 = vld [vmem:[%s1 + $0x10] sm:$0xff]
  %v112 = vld [vmem:[%s1 + $0x18] sm:$0xff]
  %v113 = vld [vmem:[%s1 + $0x20] sm:$0xff]
  %v114 = vld [vmem:[%s1 + $0x28] sm:$0xff]
  %v115 = vld [vmem:[%s1 + $0x30] sm:$0xff]
  %v116 = vld [vmem:[%s1 + $0x38] sm:$0xff]
  %v117 = vld [vmem:[%s1 + $0x40] sm:$0xff]
  %v118 = vld [vmem:[%s1 + $0x48] sm:$0xff]
  %v119 = vld [vmem:[%s1 + $0x50] sm:$0xff]
  %v120 = vld [vmem:[%s1 + $0x58] sm:$0xff]
  %v121 = vld [vmem:[%s1 + $0x60] sm:$0xff]
  %v122 = vld [vmem:[%s1 + $0x68] sm:$0xff]
  %v123 = vld [vmem:[%s1 + $0x70] sm:$0xff]
  %v124 = vld [vmem:[%s1 + $0x78] sm:$0xff]
  %v125 = vld [vmem:[%s1 + $0x80] sm:$0xff]
  %v126 = vld [vmem:[%s1 + $0x88] sm:$0xff]
  %v127 = vld [vmem:[%s1 + $0x90] sm:$0xff]
  %v128 = vld [vmem:[%s1 + $0x98] sm:$0xff]
  %v129 = vld [vmem:[%s1 + $0xa0] sm:$0xff]
  %v130 = vld [vmem:[%s1 + $0xa8] sm:$0xff]
  %v131 = vld [vmem:[%s1 + $0xb0] sm:$0xff]
  %v132 = vld [vmem:[%s1 + $0xb8] sm:$0xff]
  %v133 = vld [vmem:[%s1 + $0xc0] sm:$0xff]
  %v134 = vld [vmem:[%s1 + $0xc8] sm:$0xff]
  %v135 = vld [vmem:[%s1 + $0xd0] sm:$0xff]
  %v136 = vld [vmem:[%s1 + $0xd8] sm:$0xff]
  %v137 = vld [vmem:[%s1 + $0xe0] sm:$0xff]
  %v138 = vld [vmem:[%s1 + $0xe8] sm:$0xff]
  %v139 = vld [vmem:[%s1 + $0xf0] sm:$0xff]
  %v140 = vld [vmem:[%s1 + $0xf8] sm:$0xff]
  %vm141 = vcmask 261120
  %v142 = vsel %vm141, %v77, 0.0
  %143 = vadd.xlane.f32.xlu0 %v142
  %v144 = vpop.xlane.xlu0 %143
  %v145 = vsel %vm141, %v78, 0.0
  %146 = vadd.xlane.f32.xlu0 %v145
  %v147 = vpop.xlane.xlu0 %146
  %v148 = vsel %vm141, %v79, 0.0
  %149 = vadd.xlane.f32.xlu0 %v148
  %v150 = vpop.xlane.xlu0 %149
  %v151 = vsel %vm141, %v80, 0.0
  %152 = vadd.xlane.f32.xlu0 %v151
  %v153 = vpop.xlane.xlu0 %152
  %v154 = vsel %vm141, %v81, 0.0
  %155 = vadd.xlane.f32.xlu0 %v154
  %v156 = vpop.xlane.xlu0 %155
  %v157 = vsel %vm141, %v82, 0.0
  %158 = vadd.xlane.f32.xlu0 %v157
  %v159 = vpop.xlane.xlu0 %158
  %v160 = vsel %vm141, %v83, 0.0
  %161 = vadd.xlane.f32.xlu0 %v160
  %v162 = vpop.xlane.xlu0 %161
  %v163 = vsel %vm141, %v84, 0.0
  %164 = vadd.xlane.f32.xlu0 %v163
  %v165 = vpop.xlane.xlu0 %164
  %v166 = vsel %vm141, %v85, 0.0
  %167 = vadd.xlane.f32.xlu0 %v166
  %v168 = vpop.xlane.xlu0 %167
  %v169 = vsel %vm141, %v86, 0.0
  %170 = vadd.xlane.f32.xlu0 %v169
  %v171 = vpop.xlane.xlu0 %170
  %v172 = vsel %vm141, %v87, 0.0
  %173 = vadd.xlane.f32.xlu0 %v172
  %v174 = vpop.xlane.xlu0 %173
  %v175 = vsel %vm141, %v88, 0.0
  %176 = vadd.xlane.f32.xlu0 %v175
  %v177 = vpop.xlane.xlu0 %176
  %v178 = vsel %vm141, %v89, 0.0
  %179 = vadd.xlane.f32.xlu0 %v178
  %v180 = vpop.xlane.xlu0 %179
  %v181 = vsel %vm141, %v90, 0.0
  %182 = vadd.xlane.f32.xlu0 %v181
  %v183 = vpop.xlane.xlu0 %182
  %v184 = vsel %vm141, %v91, 0.0
  %185 = vadd.xlane.f32.xlu0 %v184
  %v186 = vpop.xlane.xlu0 %185
  %v187 = vsel %vm141, %v92, 0.0
  %188 = vadd.xlane.f32.xlu0 %v187
  %v189 = vpop.xlane.xlu0 %188
  %v190 = vsel %vm141, %v93, 0.0
  %191 = vadd.xlane.f32.xlu0 %v190
  %v192 = vpop.xlane.xlu0 %191
  %v193 = vsel %vm141, %v94, 0.0
  %194 = vadd.xlane.f32.xlu0 %v193
  %v195 = vpop.xlane.xlu0 %194
  %v196 = vsel %vm141, %v95, 0.0
  %197 = vadd.xlane.f32.xlu0 %v196
  %v198 = vpop.xlane.xlu0 %197
  %v199 = vsel %vm141, %v96, 0.0
  %200 = vadd.xlane.f32.xlu0 %v199
  %v201 = vpop.xlane.xlu0 %200
  %v202 = vsel %vm141, %v97, 0.0
  %203 = vadd.xlane.f32.xlu0 %v202
  %v204 = vpop.xlane.xlu0 %203
  %v205 = vsel %vm141, %v98, 0.0
  %206 = vadd.xlane.f32.xlu0 %v205
  %v207 = vpop.xlane.xlu0 %206
  %v208 = vsel %vm141, %v99, 0.0
  %209 = vadd.xlane.f32.xlu0 %v208
  %v210 = vpop.xlane.xlu0 %209
  %v211 = vsel %vm141, %v100, 0.0
  %212 = vadd.xlane.f32.xlu0 %v211
  %v213 = vpop.xlane.xlu0 %212
  %v214 = vsel %vm141, %v101, 0.0
  %215 = vadd.xlane.f32.xlu0 %v214
  %v216 = vpop.xlane.xlu0 %215
  %v217 = vsel %vm141, %v102, 0.0
  %218 = vadd.xlane.f32.xlu0 %v217
  %v219 = vpop.xlane.xlu0 %218
  %v220 = vsel %vm141, %v103, 0.0
  %221 = vadd.xlane.f32.xlu0 %v220
  %v222 = vpop.xlane.xlu0 %221
  %v223 = vsel %vm141, %v104, 0.0
  %224 = vadd.xlane.f32.xlu0 %v223
  %v225 = vpop.xlane.xlu0 %224
  %v226 = vsel %vm141, %v105, 0.0
  %227 = vadd.xlane.f32.xlu0 %v226
  %v228 = vpop.xlane.xlu0 %227
  %v229 = vsel %vm141, %v106, 0.0
  %230 = vadd.xlane.f32.xlu0 %v229
  %v231 = vpop.xlane.xlu0 %230
  %v232 = vsel %vm141, %v107, 0.0
  %233 = vadd.xlane.f32.xlu0 %v232
  %v234 = vpop.xlane.xlu0 %233
  %v235 = vsel %vm141, %v108, 0.0
  %236 = vadd.xlane.f32.xlu0 %v235
  %v237 = vpop.xlane.xlu0 %236
  %v238 = vrcp.pop 32.0
  %v239 = vmul.f32 32.0, %v238
  %v240 = vsub.f32 1.0, %v239
  %v241 = vmul.f32 %v238, %v240
  %v242 = vadd.f32 %v238, %v241
  %vm243 = vweird.f32 %v238
  %v244 = vsel %vm243, %v238, %v242
  %v245 = vmul.f32 %v144, %v244
  %v246 = vmul.f32 %v147, %v244
  %v247 = vmul.f32 %v150, %v244
  %v248 = vmul.f32 %v153, %v244
  %v249 = vmul.f32 %v156, %v244
  %v250 = vmul.f32 %v159, %v244
  %v251 = vmul.f32 %v162, %v244
  %v252 = vmul.f32 %v165, %v244
  %v253 = vmul.f32 %v168, %v244
  %v254 = vmul.f32 %v171, %v244
  %v255 = vmul.f32 %v174, %v244
  %v256 = vmul.f32 %v177, %v244
  %v257 = vmul.f32 %v180, %v244
  %v258 = vmul.f32 %v183, %v244
  %v259 = vmul.f32 %v186, %v244
  %v260 = vmul.f32 %v189, %v244
  %v261 = vmul.f32 %v192, %v244
  %v262 = vmul.f32 %v195, %v244
  %v263 = vmul.f32 %v198, %v244
  %v264 = vmul.f32 %v201, %v244
  %v265 = vmul.f32 %v204, %v244
  %v266 = vmul.f32 %v207, %v244
  %v267 = vmul.f32 %v210, %v244
  %v268 = vmul.f32 %v213, %v244
  %v269 = vmul.f32 %v216, %v244
  %v270 = vmul.f32 %v219, %v244
  %v271 = vmul.f32 %v222, %v244
  %v272 = vmul.f32 %v225, %v244
  %v273 = vmul.f32 %v228, %v244
  %v274 = vmul.f32 %v231, %v244
  %v275 = vmul.f32 %v234, %v244
  %v276 = vmul.f32 %v237, %v244
  %v277 = vsub.f32 %v77, %v245
  %v278 = vsub.f32 %v78, %v246
  %v279 = vsub.f32 %v79, %v247
  %v280 = vsub.f32 %v80, %v248
  %v281 = vsub.f32 %v81, %v249
  %v282 = vsub.f32 %v82, %v250
  %v283 = vsub.f32 %v83, %v251
  %v284 = vsub.f32 %v84, %v252
  %v285 = vsub.f32 %v85, %v253
  %v286 = vsub.f32 %v86, %v254
  %v287 = vsub.f32 %v87, %v255
  %v288 = vsub.f32 %v88, %v256
  %v289 = vsub.f32 %v89, %v257
  %v290 = vsub.f32 %v90, %v258
  %v291 = vsub.f32 %v91, %v259
  %v292 = vsub.f32 %v92, %v260
  %v293 = vsub.f32 %v93, %v261
  %v294 = vsub.f32 %v94, %v262
  %v295 = vsub.f32 %v95, %v263
  %v296 = vsub.f32 %v96, %v264
  %v297 = vsub.f32 %v97, %v265
  %v298 = vsub.f32 %v98, %v266
  %v299 = vsub.f32 %v99, %v267
  %v300 = vsub.f32 %v100, %v268
  %v301 = vsub.f32 %v101, %v269
  %v302 = vsub.f32 %v102, %v270
  %v303 = vsub.f32 %v103, %v271
  %v304 = vsub.f32 %v104, %v272
  %v305 = vsub.f32 %v105, %v273
  %v306 = vsub.f32 %v106, %v274
  %v307 = vsub.f32 %v107, %v275
  %v308 = vsub.f32 %v108, %v276
  %v309 = vmul.f32 %v277, %v277
  %v310 = vmul.f32 %v278, %v278
  %v311 = vmul.f32 %v279, %v279
  %v312 = vmul.f32 %v280, %v280
  %v313 = vmul.f32 %v281, %v281
  %v314 = vmul.f32 %v282, %v282
  %v315 = vmul.f32 %v283, %v283
  %v316 = vmul.f32 %v284, %v284
  %v317 = vmul.f32 %v285, %v285
  %v318 = vmul.f32 %v286, %v286
  %v319 = vmul.f32 %v287, %v287
  %v320 = vmul.f32 %v288, %v288
  %v321 = vmul.f32 %v289, %v289
  %v322 = vmul.f32 %v290, %v290
  %v323 = vmul.f32 %v291, %v291
  %v324 = vmul.f32 %v292, %v292
  %v325 = vmul.f32 %v293, %v293
  %v326 = vmul.f32 %v294, %v294
  %v327 = vmul.f32 %v295, %v295
  %v328 = vmul.f32 %v296, %v296
  %v329 = vmul.f32 %v297, %v297
  %v330 = vmul.f32 %v298, %v298
  %v331 = vmul.f32 %v299, %v299
  %v332 = vmul.f32 %v300, %v300
  %v333 = vmul.f32 %v301, %v301
  %v334 = vmul.f32 %v302, %v302
  %v335 = vmul.f32 %v303, %v303
  %v336 = vmul.f32 %v304, %v304
  %v337 = vmul.f32 %v305, %v305
  %v338 = vmul.f32 %v306, %v306
  %v339 = vmul.f32 %v307, %v307
  %v340 = vmul.f32 %v308, %v308
  %v341 = vsel %vm141, %v309, 0.0
  %342 = vadd.xlane.f32.xlu0 %v341
  %v343 = vpop.xlane.xlu0 %342
  %v344 = vsel %vm141, %v310, 0.0
  %345 = vadd.xlane.f32.xlu0 %v344
  %v346 = vpop.xlane.xlu0 %345
  %v347 = vsel %vm141, %v311, 0.0
  %348 = vadd.xlane.f32.xlu0 %v347
  %v349 = vpop.xlane.xlu0 %348
  %v350 = vsel %vm141, %v312, 0.0
  %351 = vadd.xlane.f32.xlu0 %v350
  %v352 = vpop.xlane.xlu0 %351
  %v353 = vsel %vm141, %v313, 0.0
  %354 = vadd.xlane.f32.xlu0 %v353
  %v355 = vpop.xlane.xlu0 %354
  %v356 = vsel %vm141, %v314, 0.0
  %357 = vadd.xlane.f32.xlu0 %v356
  %v358 = vpop.xlane.xlu0 %357
  %v359 = vsel %vm141, %v315, 0.0
  %360 = vadd.xlane.f32.xlu0 %v359
  %v361 = vpop.xlane.xlu0 %360
  %v362 = vsel %vm141, %v316, 0.0
  %363 = vadd.xlane.f32.xlu0 %v362
  %v364 = vpop.xlane.xlu0 %363
  %v365 = vsel %vm141, %v317, 0.0
  %366 = vadd.xlane.f32.xlu0 %v365
  %v367 = vpop.xlane.xlu0 %366
  %v368 = vsel %vm141, %v318, 0.0
  %369 = vadd.xlane.f32.xlu0 %v368
  %v370 = vpop.xlane.xlu0 %369
  %v371 = vsel %vm141, %v319, 0.0
  %372 = vadd.xlane.f32.xlu0 %v371
  %v373 = vpop.xlane.xlu0 %372
  %v374 = vsel %vm141, %v320, 0.0
  %375 = vadd.xlane.f32.xlu0 %v374
  %v376 = vpop.xlane.xlu0 %375
  %v377 = vsel %vm141, %v321, 0.0
  %378 = vadd.xlane.f32.xlu0 %v377
  %v379 = vpop.xlane.xlu0 %378
  %v380 = vsel %vm141, %v322, 0.0
  %381 = vadd.xlane.f32.xlu0 %v380
  %v382 = vpop.xlane.xlu0 %381
  %v383 = vsel %vm141, %v323, 0.0
  %384 = vadd.xlane.f32.xlu0 %v383
  %v385 = vpop.xlane.xlu0 %384
  %v386 = vsel %vm141, %v324, 0.0
  %387 = vadd.xlane.f32.xlu0 %v386
  %v388 = vpop.xlane.xlu0 %387
  %v389 = vsel %vm141, %v325, 0.0
  %390 = vadd.xlane.f32.xlu0 %v389
  %v391 = vpop.xlane.xlu0 %390
  %v392 = vsel %vm141, %v326, 0.0
  %393 = vadd.xlane.f32.xlu0 %v392
  %v394 = vpop.xlane.xlu0 %393
  %v395 = vsel %vm141, %v327, 0.0
  %396 = vadd.xlane.f32.xlu0 %v395
  %v397 = vpop.xlane.xlu0 %396
  %v398 = vsel %vm141, %v328, 0.0
  %399 = vadd.xlane.f32.xlu0 %v398
  %v400 = vpop.xlane.xlu0 %399
  %v401 = vsel %vm141, %v329, 0.0
  %402 = vadd.xlane.f32.xlu0 %v401
  %v403 = vpop.xlane.xlu0 %402
  %v404 = vsel %vm141, %v330, 0.0
  %405 = vadd.xlane.f32.xlu0 %v404
  %v406 = vpop.xlane.xlu0 %405
  %v407 = vsel %vm141, %v331, 0.0
  %408 = vadd.xlane.f32.xlu0 %v407
  %v409 = vpop.xlane.xlu0 %408
  %v410 = vsel %vm141, %v332, 0.0
  %411 = vadd.xlane.f32.xlu0 %v410
  %v412 = vpop.xlane.xlu0 %411
  %v413 = vsel %vm141, %v333, 0.0
  %414 = vadd.xlane.f32.xlu0 %v413
  %v415 = vpop.xlane.xlu0 %414
  %v416 = vsel %vm141, %v334, 0.0
  %417 = vadd.xlane.f32.xlu0 %v416
  %v418 = vpop.xlane.xlu0 %417
  %v419 = vsel %vm141, %v335, 0.0
  %420 = vadd.xlane.f32.xlu0 %v419
  %v421 = vpop.xlane.xlu0 %420
  %v422 = vsel %vm141, %v336, 0.0
  %423 = vadd.xlane.f32.xlu0 %v422
  %v424 = vpop.xlane.xlu0 %423
  %v425 = vsel %vm141, %v337, 0.0
  %426 = vadd.xlane.f32.xlu0 %v425
  %v427 = vpop.xlane.xlu0 %426
  %v428 = vsel %vm141, %v338, 0.0
  %429 = vadd.xlane.f32.xlu0 %v428
  %v430 = vpop.xlane.xlu0 %429
  %v431 = vsel %vm141, %v339, 0.0
  %432 = vadd.xlane.f32.xlu0 %v431
  %v433 = vpop.xlane.xlu0 %432
  %v434 = vsel %vm141, %v340, 0.0
  %435 = vadd.xlane.f32.xlu0 %v434
  %v436 = vpop.xlane.xlu0 %435
  %v437 = vmul.f32 %v343, %v244
  %v438 = vmul.f32 %v346, %v244
  %v439 = vmul.f32 %v349, %v244
  %v440 = vmul.f32 %v352, %v244
  %v441 = vmul.f32 %v355, %v244
  %v442 = vmul.f32 %v358, %v244
  %v443 = vmul.f32 %v361, %v244
  %v444 = vmul.f32 %v364, %v244
  %v445 = vmul.f32 %v367, %v244
  %v446 = vmul.f32 %v370, %v244
  %v447 = vmul.f32 %v373, %v244
  %v448 = vmul.f32 %v376, %v244
  %v449 = vmul.f32 %v379, %v244
  %v450 = vmul.f32 %v382, %v244
  %v451 = vmul.f32 %v385, %v244
  %v452 = vmul.f32 %v388, %v244
  %v453 = vmul.f32 %v391, %v244
  %v454 = vmul.f32 %v394, %v244
  %v455 = vmul.f32 %v397, %v244
  %v456 = vmul.f32 %v400, %v244
  %v457 = vmul.f32 %v403, %v244
  %v458 = vmul.f32 %v406, %v244
  %v459 = vmul.f32 %v409, %v244
  %v460 = vmul.f32 %v412, %v244
  %v461 = vmul.f32 %v415, %v244
  %v462 = vmul.f32 %v418, %v244
  %v463 = vmul.f32 %v421, %v244
  %v464 = vmul.f32 %v424, %v244
  %v465 = vmul.f32 %v427, %v244
  %v466 = vmul.f32 %v430, %v244
  %v467 = vmul.f32 %v433, %v244
  %v468 = vmul.f32 %v436, %v244
  %v469 = vadd.f32 %v437, 1e-05
  %v470 = vadd.f32 %v438, 1e-05
  %v471 = vadd.f32 %v439, 1e-05
  %v472 = vadd.f32 %v440, 1e-05
  %v473 = vadd.f32 %v441, 1e-05
  %v474 = vadd.f32 %v442, 1e-05
  %v475 = vadd.f32 %v443, 1e-05
  %v476 = vadd.f32 %v444, 1e-05
  %v477 = vadd.f32 %v445, 1e-05
  %v478 = vadd.f32 %v446, 1e-05
  %v479 = vadd.f32 %v447, 1e-05
  %v480 = vadd.f32 %v448, 1e-05
  %v481 = vadd.f32 %v449, 1e-05
  %v482 = vadd.f32 %v450, 1e-05
  %v483 = vadd.f32 %v451, 1e-05
  %v484 = vadd.f32 %v452, 1e-05
  %v485 = vadd.f32 %v453, 1e-05
  %v486 = vadd.f32 %v454, 1e-05
  %v487 = vadd.f32 %v455, 1e-05
  %v488 = vadd.f32 %v456, 1e-05
  %v489 = vadd.f32 %v457, 1e-05
  %v490 = vadd.f32 %v458, 1e-05
  %v491 = vadd.f32 %v459, 1e-05
  %v492 = vadd.f32 %v460, 1e-05
  %v493 = vadd.f32 %v461, 1e-05
  %v494 = vadd.f32 %v462, 1e-05
  %v495 = vadd.f32 %v463, 1e-05
  %v496 = vadd.f32 %v464, 1e-05
  %v497 = vadd.f32 %v465, 1e-05
  %v498 = vadd.f32 %v466, 1e-05
  %v499 = vadd.f32 %v467, 1e-05
  %v500 = vadd.f32 %v468, 1e-05
  %v501 = vrsqrt.pop %v469
  %v502 = vmul.f32 %v501, %v469
  %v503 = vmul.f32 %v502, %v501
  %v504 = vmul.f32 0.5, %v503
  %v505 = vsub.f32 1.5, %v504
  %v506 = vmul.f32 %v501, %v505
  %vm507 = vweird.f32 %v469
  %vm508 = vweird.f32 %v501
  %vm509 = vmor %vm507, %vm508
  %v510 = vsel %vm509, %v501, %v506
  %v511 = vrsqrt.pop %v470
  %v512 = vmul.f32 %v511, %v470
  %v513 = vmul.f32 %v512, %v511
  %v514 = vmul.f32 0.5, %v513
  %v515 = vsub.f32 1.5, %v514
  %v516 = vmul.f32 %v511, %v515
  %vm517 = vweird.f32 %v470
  %vm518 = vweird.f32 %v511
  %vm519 = vmor %vm517, %vm518
  %v520 = vsel %vm519, %v511, %v516
  %v521 = vrsqrt.pop %v471
  %v522 = vmul.f32 %v521, %v471
  %v523 = vmul.f32 %v522, %v521
  %v524 = vmul.f32 0.5, %v523
  %v525 = vsub.f32 1.5, %v524
  %v526 = vmul.f32 %v521, %v525
  %vm527 = vweird.f32 %v471
  %vm528 = vweird.f32 %v521
  %vm529 = vmor %vm527, %vm528
  %v530 = vsel %vm529, %v521, %v526
  %v531 = vrsqrt.pop %v472
  %v532 = vmul.f32 %v531, %v472
  %v533 = vmul.f32 %v532, %v531
  %v534 = vmul.f32 0.5, %v533
  %v535 = vsub.f32 1.5, %v534
  %v536 = vmul.f32 %v531, %v535
  %vm537 = vweird.f32 %v472
  %vm538 = vweird.f32 %v531
  %vm539 = vmor %vm537, %vm538
  %v540 = vsel %vm539, %v531, %v536
  %v541 = vrsqrt.pop %v473
  %v542 = vmul.f32 %v541, %v473
  %v543 = vmul.f32 %v542, %v541
  %v544 = vmul.f32 0.5, %v543
  %v545 = vsub.f32 1.5, %v544
  %v546 = vmul.f32 %v541, %v545
  %vm547 = vweird.f32 %v473
  %vm548 = vweird.f32 %v541
  %vm549 = vmor %vm547, %vm548
  %v550 = vsel %vm549, %v541, %v546
  %v551 = vrsqrt.pop %v474
  %v552 = vmul.f32 %v551, %v474
  %v553 = vmul.f32 %v552, %v551
  %v554 = vmul.f32 0.5, %v553
  %v555 = vsub.f32 1.5, %v554
  %v556 = vmul.f32 %v551, %v555
  %vm557 = vweird.f32 %v474
  %vm558 = vweird.f32 %v551
  %vm559 = vmor %vm557, %vm558
  %v560 = vsel %vm559, %v551, %v556
  %v561 = vrsqrt.pop %v475
  %v562 = vmul.f32 %v561, %v475
  %v563 = vmul.f32 %v562, %v561
  %v564 = vmul.f32 0.5, %v563
  %v565 = vsub.f32 1.5, %v564
  %v566 = vmul.f32 %v561, %v565
  %vm567 = vweird.f32 %v475
  %vm568 = vweird.f32 %v561
  %vm569 = vmor %vm567, %vm568
  %v570 = vsel %vm569, %v561, %v566
  %v571 = vrsqrt.pop %v476
  %v572 = vmul.f32 %v571, %v476
  %v573 = vmul.f32 %v572, %v571
  %v574 = vmul.f32 0.5, %v573
  %v575 = vsub.f32 1.5, %v574
  %v576 = vmul.f32 %v571, %v575
  %vm577 = vweird.f32 %v476
  %vm578 = vweird.f32 %v571
  %vm579 = vmor %vm577, %vm578
  %v580 = vsel %vm579, %v571, %v576
  %v581 = vrsqrt.pop %v477
  %v582 = vmul.f32 %v581, %v477
  %v583 = vmul.f32 %v582, %v581
  %v584 = vmul.f32 0.5, %v583
  %v585 = vsub.f32 1.5, %v584
  %v586 = vmul.f32 %v581, %v585
  %vm587 = vweird.f32 %v477
  %vm588 = vweird.f32 %v581
  %vm589 = vmor %vm587, %vm588
  %v590 = vsel %vm589, %v581, %v586
  %v591 = vrsqrt.pop %v478
  %v592 = vmul.f32 %v591, %v478
  %v593 = vmul.f32 %v592, %v591
  %v594 = vmul.f32 0.5, %v593
  %v595 = vsub.f32 1.5, %v594
  %v596 = vmul.f32 %v591, %v595
  %vm597 = vweird.f32 %v478
  %vm598 = vweird.f32 %v591
  %vm599 = vmor %vm597, %vm598
  %v600 = vsel %vm599, %v591, %v596
  %v601 = vrsqrt.pop %v479
  %v602 = vmul.f32 %v601, %v479
  %v603 = vmul.f32 %v602, %v601
  %v604 = vmul.f32 0.5, %v603
  %v605 = vsub.f32 1.5, %v604
  %v606 = vmul.f32 %v601, %v605
  %vm607 = vweird.f32 %v479
  %vm608 = vweird.f32 %v601
  %vm609 = vmor %vm607, %vm608
  %v610 = vsel %vm609, %v601, %v606
  %v611 = vrsqrt.pop %v480
  %v612 = vmul.f32 %v611, %v480
  %v613 = vmul.f32 %v612, %v611
  %v614 = vmul.f32 0.5, %v613
  %v615 = vsub.f32 1.5, %v614
  %v616 = vmul.f32 %v611, %v615
  %vm617 = vweird.f32 %v480
  %vm618 = vweird.f32 %v611
  %vm619 = vmor %vm617, %vm618
  %v620 = vsel %vm619, %v611, %v616
  %v621 = vrsqrt.pop %v481
  %v622 = vmul.f32 %v621, %v481
  %v623 = vmul.f32 %v622, %v621
  %v624 = vmul.f32 0.5, %v623
  %v625 = vsub.f32 1.5, %v624
  %v626 = vmul.f32 %v621, %v625
  %vm627 = vweird.f32 %v481
  %vm628 = vweird.f32 %v621
  %vm629 = vmor %vm627, %vm628
  %v630 = vsel %vm629, %v621, %v626
  %v631 = vrsqrt.pop %v482
  %v632 = vmul.f32 %v631, %v482
  %v633 = vmul.f32 %v632, %v631
  %v634 = vmul.f32 0.5, %v633
  %v635 = vsub.f32 1.5, %v634
  %v636 = vmul.f32 %v631, %v635
  %vm637 = vweird.f32 %v482
  %vm638 = vweird.f32 %v631
  %vm639 = vmor %vm637, %vm638
  %v640 = vsel %vm639, %v631, %v636
  %v641 = vrsqrt.pop %v483
  %v642 = vmul.f32 %v641, %v483
  %v643 = vmul.f32 %v642, %v641
  %v644 = vmul.f32 0.5, %v643
  %v645 = vsub.f32 1.5, %v644
  %v646 = vmul.f32 %v641, %v645
  %vm647 = vweird.f32 %v483
  %vm648 = vweird.f32 %v641
  %vm649 = vmor %vm647, %vm648
  %v650 = vsel %vm649, %v641, %v646
  %v651 = vrsqrt.pop %v484
  %v652 = vmul.f32 %v651, %v484
  %v653 = vmul.f32 %v652, %v651
  %v654 = vmul.f32 0.5, %v653
  %v655 = vsub.f32 1.5, %v654
  %v656 = vmul.f32 %v651, %v655
  %vm657 = vweird.f32 %v484
  %vm658 = vweird.f32 %v651
  %vm659 = vmor %vm657, %vm658
  %v660 = vsel %vm659, %v651, %v656
  %v661 = vrsqrt.pop %v485
  %v662 = vmul.f32 %v661, %v485
  %v663 = vmul.f32 %v662, %v661
  %v664 = vmul.f32 0.5, %v663
  %v665 = vsub.f32 1.5, %v664
  %v666 = vmul.f32 %v661, %v665
  %vm667 = vweird.f32 %v485
  %vm668 = vweird.f32 %v661
  %vm669 = vmor %vm667, %vm668
  %v670 = vsel %vm669, %v661, %v666
  %v671 = vrsqrt.pop %v486
  %v672 = vmul.f32 %v671, %v486
  %v673 = vmul.f32 %v672, %v671
  %v674 = vmul.f32 0.5, %v673
  %v675 = vsub.f32 1.5, %v674
  %v676 = vmul.f32 %v671, %v675
  %vm677 = vweird.f32 %v486
  %vm678 = vweird.f32 %v671
  %vm679 = vmor %vm677, %vm678
  %v680 = vsel %vm679, %v671, %v676
  %v681 = vrsqrt.pop %v487
  %v682 = vmul.f32 %v681, %v487
  %v683 = vmul.f32 %v682, %v681
  %v684 = vmul.f32 0.5, %v683
  %v685 = vsub.f32 1.5, %v684
  %v686 = vmul.f32 %v681, %v685
  %vm687 = vweird.f32 %v487
  %vm688 = vweird.f32 %v681
  %vm689 = vmor %vm687, %vm688
  %v690 = vsel %vm689, %v681, %v686
  %v691 = vrsqrt.pop %v488
  %v692 = vmul.f32 %v691, %v488
  %v693 = vmul.f32 %v692, %v691
  %v694 = vmul.f32 0.5, %v693
  %v695 = vsub.f32 1.5, %v694
  %v696 = vmul.f32 %v691, %v695
  %vm697 = vweird.f32 %v488
  %vm698 = vweird.f32 %v691
  %vm699 = vmor %vm697, %vm698
  %v700 = vsel %vm699, %v691, %v696
  %v701 = vrsqrt.pop %v489
  %v702 = vmul.f32 %v701, %v489
  %v703 = vmul.f32 %v702, %v701
  %v704 = vmul.f32 0.5, %v703
  %v705 = vsub.f32 1.5, %v704
  %v706 = vmul.f32 %v701, %v705
  %vm707 = vweird.f32 %v489
  %vm708 = vweird.f32 %v701
  %vm709 = vmor %vm707, %vm708
  %v710 = vsel %vm709, %v701, %v706
  %v711 = vrsqrt.pop %v490
  %v712 = vmul.f32 %v711, %v490
  %v713 = vmul.f32 %v712, %v711
  %v714 = vmul.f32 0.5, %v713
  %v715 = vsub.f32 1.5, %v714
  %v716 = vmul.f32 %v711, %v715
  %vm717 = vweird.f32 %v490
  %vm718 = vweird.f32 %v711
  %vm719 = vmor %vm717, %vm718
  %v720 = vsel %vm719, %v711, %v716
  %v721 = vrsqrt.pop %v491
  %v722 = vmul.f32 %v721, %v491
  %v723 = vmul.f32 %v722, %v721
  %v724 = vmul.f32 0.5, %v723
  %v725 = vsub.f32 1.5, %v724
  %v726 = vmul.f32 %v721, %v725
  %vm727 = vweird.f32 %v491
  %vm728 = vweird.f32 %v721
  %vm729 = vmor %vm727, %vm728
  %v730 = vsel %vm729, %v721, %v726
  %v731 = vrsqrt.pop %v492
  %v732 = vmul.f32 %v731, %v492
  %v733 = vmul.f32 %v732, %v731
  %v734 = vmul.f32 0.5, %v733
  %v735 = vsub.f32 1.5, %v734
  %v736 = vmul.f32 %v731, %v735
  %vm737 = vweird.f32 %v492
  %vm738 = vweird.f32 %v731
  %vm739 = vmor %vm737, %vm738
  %v740 = vsel %vm739, %v731, %v736
  %v741 = vrsqrt.pop %v493
  %v742 = vmul.f32 %v741, %v493
  %v743 = vmul.f32 %v742, %v741
  %v744 = vmul.f32 0.5, %v743
  %v745 = vsub.f32 1.5, %v744
  %v746 = vmul.f32 %v741, %v745
  %vm747 = vweird.f32 %v493
  %vm748 = vweird.f32 %v741
  %vm749 = vmor %vm747, %vm748
  %v750 = vsel %vm749, %v741, %v746
  %v751 = vrsqrt.pop %v494
  %v752 = vmul.f32 %v751, %v494
  %v753 = vmul.f32 %v752, %v751
  %v754 = vmul.f32 0.5, %v753
  %v755 = vsub.f32 1.5, %v754
  %v756 = vmul.f32 %v751, %v755
  %vm757 = vweird.f32 %v494
  %vm758 = vweird.f32 %v751
  %vm759 = vmor %vm757, %vm758
  %v760 = vsel %vm759, %v751, %v756
  %v761 = vrsqrt.pop %v495
  %v762 = vmul.f32 %v761, %v495
  %v763 = vmul.f32 %v762, %v761
  %v764 = vmul.f32 0.5, %v763
  %v765 = vsub.f32 1.5, %v764
  %v766 = vmul.f32 %v761, %v765
  %vm767 = vweird.f32 %v495
  %vm768 = vweird.f32 %v761
  %vm769 = vmor %vm767, %vm768
  %v770 = vsel %vm769, %v761, %v766
  %v771 = vrsqrt.pop %v496
  %v772 = vmul.f32 %v771, %v496
  %v773 = vmul.f32 %v772, %v771
  %v774 = vmul.f32 0.5, %v773
  %v775 = vsub.f32 1.5, %v774
  %v776 = vmul.f32 %v771, %v775
  %vm777 = vweird.f32 %v496
  %vm778 = vweird.f32 %v771
  %vm779 = vmor %vm777, %vm778
  %v780 = vsel %vm779, %v771, %v776
  %v781 = vrsqrt.pop %v497
  %v782 = vmul.f32 %v781, %v497
  %v783 = vmul.f32 %v782, %v781
  %v784 = vmul.f32 0.5, %v783
  %v785 = vsub.f32 1.5, %v784
  %v786 = vmul.f32 %v781, %v785
  %vm787 = vweird.f32 %v497
  %vm788 = vweird.f32 %v781
  %vm789 = vmor %vm787, %vm788
  %v790 = vsel %vm789, %v781, %v786
  %v791 = vrsqrt.pop %v498
  %v792 = vmul.f32 %v791, %v498
  %v793 = vmul.f32 %v792, %v791
  %v794 = vmul.f32 0.5, %v793
  %v795 = vsub.f32 1.5, %v794
  %v796 = vmul.f32 %v791, %v795
  %vm797 = vweird.f32 %v498
  %vm798 = vweird.f32 %v791
  %vm799 = vmor %vm797, %vm798
  %v800 = vsel %vm799, %v791, %v796
  %v801 = vrsqrt.pop %v499
  %v802 = vmul.f32 %v801, %v499
  %v803 = vmul.f32 %v802, %v801
  %v804 = vmul.f32 0.5, %v803
  %v805 = vsub.f32 1.5, %v804
  %v806 = vmul.f32 %v801, %v805
  %vm807 = vweird.f32 %v499
  %vm808 = vweird.f32 %v801
  %vm809 = vmor %vm807, %vm808
  %v810 = vsel %vm809, %v801, %v806
  %v811 = vrsqrt.pop %v500
  %v812 = vmul.f32 %v811, %v500
  %v813 = vmul.f32 %v812, %v811
  %v814 = vmul.f32 0.5, %v813
  %v815 = vsub.f32 1.5, %v814
  %v816 = vmul.f32 %v811, %v815
  %vm817 = vweird.f32 %v500
  %vm818 = vweird.f32 %v811
  %vm819 = vmor %vm817, %vm818
  %v820 = vsel %vm819, %v811, %v816
  %v821 = vmul.f32 %v277, %v510
  %v822 = vmul.f32 %v278, %v520
  %v823 = vmul.f32 %v279, %v530
  %v824 = vmul.f32 %v280, %v540
  %v825 = vmul.f32 %v281, %v550
  %v826 = vmul.f32 %v282, %v560
  %v827 = vmul.f32 %v283, %v570
  %v828 = vmul.f32 %v284, %v580
  %v829 = vmul.f32 %v285, %v590
  %v830 = vmul.f32 %v286, %v600
  %v831 = vmul.f32 %v287, %v610
  %v832 = vmul.f32 %v288, %v620
  %v833 = vmul.f32 %v289, %v630
  %v834 = vmul.f32 %v290, %v640
  %v835 = vmul.f32 %v291, %v650
  %v836 = vmul.f32 %v292, %v660
  %v837 = vmul.f32 %v293, %v670
  %v838 = vmul.f32 %v294, %v680
  %v839 = vmul.f32 %v295, %v690
  %v840 = vmul.f32 %v296, %v700
  %v841 = vmul.f32 %v297, %v710
  %v842 = vmul.f32 %v298, %v720
  %v843 = vmul.f32 %v299, %v730
  %v844 = vmul.f32 %v300, %v740
  %v845 = vmul.f32 %v301, %v750
  %v846 = vmul.f32 %v302, %v760
  %v847 = vmul.f32 %v303, %v770
  %v848 = vmul.f32 %v304, %v780
  %v849 = vmul.f32 %v305, %v790
  %v850 = vmul.f32 %v306, %v800
  %v851 = vmul.f32 %v307, %v810
  %v852 = vmul.f32 %v308, %v820
  %v854 = vperm.slane %v50, 0
  %v856 = vmul.f32 %v821, %v854
  %v857 = vmul.f32 %v822, %v854
  %v858 = vmul.f32 %v823, %v854
  %v859 = vmul.f32 %v824, %v854
  %v860 = vmul.f32 %v825, %v854
  %v861 = vmul.f32 %v826, %v854
  %v862 = vmul.f32 %v827, %v854
  %v863 = vmul.f32 %v828, %v854
  %v864 = vmul.f32 %v829, %v854
  %v865 = vmul.f32 %v830, %v854
  %v866 = vmul.f32 %v831, %v854
  %v867 = vmul.f32 %v832, %v854
  %v868 = vmul.f32 %v833, %v854
  %v869 = vmul.f32 %v834, %v854
  %v870 = vmul.f32 %v835, %v854
  %v871 = vmul.f32 %v836, %v854
  %v872 = vmul.f32 %v837, %v854
  %v873 = vmul.f32 %v838, %v854
  %v874 = vmul.f32 %v839, %v854
  %v875 = vmul.f32 %v840, %v854
  %v876 = vmul.f32 %v841, %v854
  %v877 = vmul.f32 %v842, %v854
  %v878 = vmul.f32 %v843, %v854
  %v879 = vmul.f32 %v844, %v854
  %v880 = vmul.f32 %v845, %v854
  %v881 = vmul.f32 %v846, %v854
  %v882 = vmul.f32 %v847, %v854
  %v883 = vmul.f32 %v848, %v854
  %v884 = vmul.f32 %v849, %v854
  %v885 = vmul.f32 %v850, %v854
  %v886 = vmul.f32 %v851, %v854
  %v887 = vmul.f32 %v852, %v854
  %v889 = vperm.slane %v51, 0
  %v891 = vadd.f32 %v856, %v889
  %v892 = vadd.f32 %v857, %v889
  %v893 = vadd.f32 %v858, %v889
  %v894 = vadd.f32 %v859, %v889
  %v895 = vadd.f32 %v860, %v889
  %v896 = vadd.f32 %v861, %v889
  %v897 = vadd.f32 %v862, %v889
  %v898 = vadd.f32 %v863, %v889
  %v899 = vadd.f32 %v864, %v889
  %v900 = vadd.f32 %v865, %v889
  %v901 = vadd.f32 %v866, %v889
  %v902 = vadd.f32 %v867, %v889
  %v903 = vadd.f32 %v868, %v889
  %v904 = vadd.f32 %v869, %v889
  %v905 = vadd.f32 %v870, %v889
  %v906 = vadd.f32 %v871, %v889
  %v907 = vadd.f32 %v872, %v889
  %v908 = vadd.f32 %v873, %v889
  %v909 = vadd.f32 %v874, %v889
  %v910 = vadd.f32 %v875, %v889
  %v911 = vadd.f32 %v876, %v889
  %v912 = vadd.f32 %v877, %v889
  %v913 = vadd.f32 %v878, %v889
  %v914 = vadd.f32 %v879, %v889
  %v915 = vadd.f32 %v880, %v889
  %v916 = vadd.f32 %v881, %v889
  %v917 = vadd.f32 %v882, %v889
  %v918 = vadd.f32 %v883, %v889
  %v919 = vadd.f32 %v884, %v889
  %v920 = vadd.f32 %v885, %v889
  %v921 = vadd.f32 %v886, %v889
  %v922 = vadd.f32 %v887, %v889
  %v923 = vld [vmem:[%s4] sm:$0xff]
  %v924 = vld [vmem:[%s4 + $0x8] sm:$0xff]
  %v925 = vld [vmem:[%s4 + $0x10] sm:$0xff]
  %v926 = vld [vmem:[%s4 + $0x18] sm:$0xff]
  %v928 = vsel %vm141, %v891, 0
  %v931 = vsel %vm141, %v892, 0
  %v934 = vsel %vm141, %v893, 0
  %v937 = vsel %vm141, %v894, 0
  %v940 = vsel %vm141, %v895, 0
  %v943 = vsel %vm141, %v896, 0
  %v946 = vsel %vm141, %v897, 0
  %v949 = vsel %vm141, %v898, 0
  %v952 = vsel %vm141, %v899, 0
  %v955 = vsel %vm141, %v900, 0
  %v958 = vsel %vm141, %v901, 0
  %v961 = vsel %vm141, %v902, 0
  %v964 = vsel %vm141, %v903, 0
  %v967 = vsel %vm141, %v904, 0
  %v970 = vsel %vm141, %v905, 0
  %v973 = vsel %vm141, %v906, 0
  %v976 = vsel %vm141, %v907, 0
  %v979 = vsel %vm141, %v908, 0
  %v982 = vsel %vm141, %v909, 0
  %v985 = vsel %vm141, %v910, 0
  %v988 = vsel %vm141, %v911, 0
  %v991 = vsel %vm141, %v912, 0
  %v994 = vsel %vm141, %v913, 0
  %v997 = vsel %vm141, %v914, 0
  %v1000 = vsel %vm141, %v915, 0
  %v1003 = vsel %vm141, %v916, 0
  %v1006 = vsel %vm141, %v917, 0
  %v1009 = vsel %vm141, %v918, 0
  %v1012 = vsel %vm141, %v919, 0
  %v1015 = vsel %vm141, %v920, 0
  %v1018 = vsel %vm141, %v921, 0
  %v1021 = vsel %vm141, %v922, 0
  %1023 = vmatpush.msra.mxu0 0.0
  %1024 = vmatpush.msra.mxu0 0.0
  %1025 = vmatpush.msra.mxu0 0.0
  %1026 = vmatpush.msra.mxu0 0.0
  %1027 = vmatpush.msra.mxu0 0.0
  %1028 = vmatpush.msra.mxu0 0.0
  %1029 = vmatpush.msra.mxu0 0.0
  %1030 = vmatpush.msra.mxu0 0.0
  %1031 = vmatpush.msra.mxu0 0.0
  %1032 = vmatpush.msra.mxu0 0.0
  %1033 = vmatpush.msra.mxu0 0.0
  %1034 = vmatpush.msra.mxu0 0.0
  %1035 = vmatpush.msra.mxu0 %v926
  %1036 = vmatpush.msra.mxu0 %v925
  %1037 = vmatpush.msra.mxu0 %v924
  %1038 = vmatpush.msra.mxu0 %v923
  %1039 = vmatmul.f32.gmra.mxu0 %v928
  %v1040 = vpop.f32.mrf.mxu0
  %v1041 = vadd.f32 0.0, %v1040
  %1042 = vmatmul.f32.gmra.mxu0 %v931
  %v1043 = vpop.f32.mrf.mxu0
  %v1044 = vadd.f32 0.0, %v1043
  %1045 = vmatmul.f32.gmra.mxu0 %v934
  %v1046 = vpop.f32.mrf.mxu0
  %v1047 = vadd.f32 0.0, %v1046
  %1048 = vmatmul.f32.gmra.mxu0 %v937
  %v1049 = vpop.f32.mrf.mxu0
  %v1050 = vadd.f32 0.0, %v1049
  %1051 = vmatmul.f32.gmra.mxu0 %v940
  %v1052 = vpop.f32.mrf.mxu0
  %v1053 = vadd.f32 0.0, %v1052
  %1054 = vmatmul.f32.gmra.mxu0 %v943
  %v1055 = vpop.f32.mrf.mxu0
  %v1056 = vadd.f32 0.0, %v1055
  %1057 = vmatmul.f32.gmra.mxu0 %v946
  %v1058 = vpop.f32.mrf.mxu0
  %v1059 = vadd.f32 0.0, %v1058
  %1060 = vmatmul.f32.gmra.mxu0 %v949
  %v1061 = vpop.f32.mrf.mxu0
  %v1062 = vadd.f32 0.0, %v1061
  %1063 = vmatmul.f32.gmra.mxu0 %v952
  %v1064 = vpop.f32.mrf.mxu0
  %v1065 = vadd.f32 0.0, %v1064
  %1066 = vmatmul.f32.gmra.mxu0 %v955
  %v1067 = vpop.f32.mrf.mxu0
  %v1068 = vadd.f32 0.0, %v1067
  %1069 = vmatmul.f32.gmra.mxu0 %v958
  %v1070 = vpop.f32.mrf.mxu0
  %v1071 = vadd.f32 0.0, %v1070
  %1072 = vmatmul.f32.gmra.mxu0 %v961
  %v1073 = vpop.f32.mrf.mxu0
  %v1074 = vadd.f32 0.0, %v1073
  %1075 = vmatmul.f32.gmra.mxu0 %v964
  %v1076 = vpop.f32.mrf.mxu0
  %v1077 = vadd.f32 0.0, %v1076
  %1078 = vmatmul.f32.gmra.mxu0 %v967
  %v1079 = vpop.f32.mrf.mxu0
  %v1080 = vadd.f32 0.0, %v1079
  %1081 = vmatmul.f32.gmra.mxu0 %v970
  %v1082 = vpop.f32.mrf.mxu0
  %v1083 = vadd.f32 0.0, %v1082
  %1084 = vmatmul.f32.gmra.mxu0 %v973
  %v1085 = vpop.f32.mrf.mxu0
  %v1086 = vadd.f32 0.0, %v1085
  %1087 = vmatmul.f32.gmra.mxu0 %v976
  %v1088 = vpop.f32.mrf.mxu0
  %v1089 = vadd.f32 0.0, %v1088
  %1090 = vmatmul.f32.gmra.mxu0 %v979
  %v1091 = vpop.f32.mrf.mxu0
  %v1092 = vadd.f32 0.0, %v1091
  %1093 = vmatmul.f32.gmra.mxu0 %v982
  %v1094 = vpop.f32.mrf.mxu0
  %v1095 = vadd.f32 0.0, %v1094
  %1096 = vmatmul.f32.gmra.mxu0 %v985
  %v1097 = vpop.f32.mrf.mxu0
  %v1098 = vadd.f32 0.0, %v1097
  %1099 = vmatmul.f32.gmra.mxu0 %v988
  %v1100 = vpop.f32.mrf.mxu0
  %v1101 = vadd.f32 0.0, %v1100
  %1102 = vmatmul.f32.gmra.mxu0 %v991
  %v1103 = vpop.f32.mrf.mxu0
  %v1104 = vadd.f32 0.0, %v1103
  %1105 = vmatmul.f32.gmra.mxu0 %v994
  %v1106 = vpop.f32.mrf.mxu0
  %v1107 = vadd.f32 0.0, %v1106
  %1108 = vmatmul.f32.gmra.mxu0 %v997
  %v1109 = vpop.f32.mrf.mxu0
  %v1110 = vadd.f32 0.0, %v1109
  %1111 = vmatmul.f32.gmra.mxu0 %v1000
  %v1112 = vpop.f32.mrf.mxu0
  %v1113 = vadd.f32 0.0, %v1112
  %1114 = vmatmul.f32.gmra.mxu0 %v1003
  %v1115 = vpop.f32.mrf.mxu0
  %v1116 = vadd.f32 0.0, %v1115
  %1117 = vmatmul.f32.gmra.mxu0 %v1006
  %v1118 = vpop.f32.mrf.mxu0
  %v1119 = vadd.f32 0.0, %v1118
  %1120 = vmatmul.f32.gmra.mxu0 %v1009
  %v1121 = vpop.f32.mrf.mxu0
  %v1122 = vadd.f32 0.0, %v1121
  %1123 = vmatmul.f32.gmra.mxu0 %v1012
  %v1124 = vpop.f32.mrf.mxu0
  %v1125 = vadd.f32 0.0, %v1124
  %1126 = vmatmul.f32.gmra.mxu0 %v1015
  %v1127 = vpop.f32.mrf.mxu0
  %v1128 = vadd.f32 0.0, %v1127
  %1129 = vmatmul.f32.gmra.mxu0 %v1018
  %v1130 = vpop.f32.mrf.mxu0
  %v1131 = vadd.f32 0.0, %v1130
  %1132 = vmatmul.f32.gmra.mxu0 %v1021
  %v1133 = vpop.f32.mrf.mxu0
  %v1134 = vadd.f32 0.0, %v1133
  %1135 = vdwg.mxu0
  %v1136 = vld [vmem:[%s5] sm:$0xff]
  %v1137 = vld [vmem:[%s5 + $0x8] sm:$0xff]
  %v1138 = vld [vmem:[%s5 + $0x10] sm:$0xff]
  %v1139 = vld [vmem:[%s5 + $0x18] sm:$0xff]
  %1140 = vmatpush.msra.mxu0 0.0
  %1141 = vmatpush.msra.mxu0 0.0
  %1142 = vmatpush.msra.mxu0 0.0
  %1143 = vmatpush.msra.mxu0 0.0
  %1144 = vmatpush.msra.mxu0 0.0
  %1145 = vmatpush.msra.mxu0 0.0
  %1146 = vmatpush.msra.mxu0 0.0
  %1147 = vmatpush.msra.mxu0 0.0
  %1148 = vmatpush.msra.mxu0 0.0
  %1149 = vmatpush.msra.mxu0 0.0
  %1150 = vmatpush.msra.mxu0 0.0
  %1151 = vmatpush.msra.mxu0 0.0
  %1152 = vmatpush.msra.mxu0 %v1139
  %1153 = vmatpush.msra.mxu0 %v1138
  %1154 = vmatpush.msra.mxu0 %v1137
  %1155 = vmatpush.msra.mxu0 %v1136
  %1156 = vmatmul.f32.gmra.mxu0 %v928
  %v1157 = vpop.f32.mrf.mxu0
  %v1158 = vadd.f32 0.0, %v1157
  %1159 = vmatmul.f32.gmra.mxu0 %v931
  %v1160 = vpop.f32.mrf.mxu0
  %v1161 = vadd.f32 0.0, %v1160
  %1162 = vmatmul.f32.gmra.mxu0 %v934
  %v1163 = vpop.f32.mrf.mxu0
  %v1164 = vadd.f32 0.0, %v1163
  %1165 = vmatmul.f32.gmra.mxu0 %v937
  %v1166 = vpop.f32.mrf.mxu0
  %v1167 = vadd.f32 0.0, %v1166
  %1168 = vmatmul.f32.gmra.mxu0 %v940
  %v1169 = vpop.f32.mrf.mxu0
  %v1170 = vadd.f32 0.0, %v1169
  %1171 = vmatmul.f32.gmra.mxu0 %v943
  %v1172 = vpop.f32.mrf.mxu0
  %v1173 = vadd.f32 0.0, %v1172
  %1174 = vmatmul.f32.gmra.mxu0 %v946
  %v1175 = vpop.f32.mrf.mxu0
  %v1176 = vadd.f32 0.0, %v1175
  %1177 = vmatmul.f32.gmra.mxu0 %v949
  %v1178 = vpop.f32.mrf.mxu0
  %v1179 = vadd.f32 0.0, %v1178
  %1180 = vmatmul.f32.gmra.mxu0 %v952
  %v1181 = vpop.f32.mrf.mxu0
  %v1182 = vadd.f32 0.0, %v1181
  %1183 = vmatmul.f32.gmra.mxu0 %v955
  %v1184 = vpop.f32.mrf.mxu0
  %v1185 = vadd.f32 0.0, %v1184
  %1186 = vmatmul.f32.gmra.mxu0 %v958
  %v1187 = vpop.f32.mrf.mxu0
  %v1188 = vadd.f32 0.0, %v1187
  %1189 = vmatmul.f32.gmra.mxu0 %v961
  %v1190 = vpop.f32.mrf.mxu0
  %v1191 = vadd.f32 0.0, %v1190
  %1192 = vmatmul.f32.gmra.mxu0 %v964
  %v1193 = vpop.f32.mrf.mxu0
  %v1194 = vadd.f32 0.0, %v1193
  %1195 = vmatmul.f32.gmra.mxu0 %v967
  %v1196 = vpop.f32.mrf.mxu0
  %v1197 = vadd.f32 0.0, %v1196
  %1198 = vmatmul.f32.gmra.mxu0 %v970
  %v1199 = vpop.f32.mrf.mxu0
  %v1200 = vadd.f32 0.0, %v1199
  %1201 = vmatmul.f32.gmra.mxu0 %v973
  %v1202 = vpop.f32.mrf.mxu0
  %v1203 = vadd.f32 0.0, %v1202
  %1204 = vmatmul.f32.gmra.mxu0 %v976
  %v1205 = vpop.f32.mrf.mxu0
  %v1206 = vadd.f32 0.0, %v1205
  %1207 = vmatmul.f32.gmra.mxu0 %v979
  %v1208 = vpop.f32.mrf.mxu0
  %v1209 = vadd.f32 0.0, %v1208
  %1210 = vmatmul.f32.gmra.mxu0 %v982
  %v1211 = vpop.f32.mrf.mxu0
  %v1212 = vadd.f32 0.0, %v1211
  %1213 = vmatmul.f32.gmra.mxu0 %v985
  %v1214 = vpop.f32.mrf.mxu0
  %v1215 = vadd.f32 0.0, %v1214
  %1216 = vmatmul.f32.gmra.mxu0 %v988
  %v1217 = vpop.f32.mrf.mxu0
  %v1218 = vadd.f32 0.0, %v1217
  %1219 = vmatmul.f32.gmra.mxu0 %v991
  %v1220 = vpop.f32.mrf.mxu0
  %v1221 = vadd.f32 0.0, %v1220
  %1222 = vmatmul.f32.gmra.mxu0 %v994
  %v1223 = vpop.f32.mrf.mxu0
  %v1224 = vadd.f32 0.0, %v1223
  %1225 = vmatmul.f32.gmra.mxu0 %v997
  %v1226 = vpop.f32.mrf.mxu0
  %v1227 = vadd.f32 0.0, %v1226
  %1228 = vmatmul.f32.gmra.mxu0 %v1000
  %v1229 = vpop.f32.mrf.mxu0
  %v1230 = vadd.f32 0.0, %v1229
  %1231 = vmatmul.f32.gmra.mxu0 %v1003
  %v1232 = vpop.f32.mrf.mxu0
  %v1233 = vadd.f32 0.0, %v1232
  %1234 = vmatmul.f32.gmra.mxu0 %v1006
  %v1235 = vpop.f32.mrf.mxu0
  %v1236 = vadd.f32 0.0, %v1235
  %1237 = vmatmul.f32.gmra.mxu0 %v1009
  %v1238 = vpop.f32.mrf.mxu0
  %v1239 = vadd.f32 0.0, %v1238
  %1240 = vmatmul.f32.gmra.mxu0 %v1012
  %v1241 = vpop.f32.mrf.mxu0
  %v1242 = vadd.f32 0.0, %v1241
  %1243 = vmatmul.f32.gmra.mxu0 %v1015
  %v1244 = vpop.f32.mrf.mxu0
  %v1245 = vadd.f32 0.0, %v1244
  %1246 = vmatmul.f32.gmra.mxu0 %v1018
  %v1247 = vpop.f32.mrf.mxu0
  %v1248 = vadd.f32 0.0, %v1247
  %1249 = vmatmul.f32.gmra.mxu0 %v1021
  %v1250 = vpop.f32.mrf.mxu0
  %v1251 = vadd.f32 0.0, %v1250
  %1252 = vdwg.mxu0
  %v1253 = vld [vmem:[%s6] sm:$0xff]
  %v1254 = vld [vmem:[%s6 + $0x8] sm:$0xff]
  %v1255 = vld [vmem:[%s6 + $0x10] sm:$0xff]
  %v1256 = vld [vmem:[%s6 + $0x18] sm:$0xff]
  %1257 = vmatpush.msra.mxu0 0.0
  %1258 = vmatpush.msra.mxu0 0.0
  %1259 = vmatpush.msra.mxu0 0.0
  %1260 = vmatpush.msra.mxu0 0.0
  %1261 = vmatpush.msra.mxu0 0.0
  %1262 = vmatpush.msra.mxu0 0.0
  %1263 = vmatpush.msra.mxu0 0.0
  %1264 = vmatpush.msra.mxu0 0.0
  %1265 = vmatpush.msra.mxu0 0.0
  %1266 = vmatpush.msra.mxu0 0.0
  %1267 = vmatpush.msra.mxu0 0.0
  %1268 = vmatpush.msra.mxu0 0.0
  %1269 = vmatpush.msra.mxu0 %v1256
  %1270 = vmatpush.msra.mxu0 %v1255
  %1271 = vmatpush.msra.mxu0 %v1254
  %1272 = vmatpush.msra.mxu0 %v1253
  %1273 = vmatmul.f32.gmra.mxu0 %v928
  %v1274 = vpop.f32.mrf.mxu0
  %v1275 = vadd.f32 0.0, %v1274
  %1276 = vmatmul.f32.gmra.mxu0 %v931
  %v1277 = vpop.f32.mrf.mxu0
  %v1278 = vadd.f32 0.0, %v1277
  %1279 = vmatmul.f32.gmra.mxu0 %v934
  %v1280 = vpop.f32.mrf.mxu0
  %v1281 = vadd.f32 0.0, %v1280
  %1282 = vmatmul.f32.gmra.mxu0 %v937
  %v1283 = vpop.f32.mrf.mxu0
  %v1284 = vadd.f32 0.0, %v1283
  %1285 = vmatmul.f32.gmra.mxu0 %v940
  %v1286 = vpop.f32.mrf.mxu0
  %v1287 = vadd.f32 0.0, %v1286
  %1288 = vmatmul.f32.gmra.mxu0 %v943
  %v1289 = vpop.f32.mrf.mxu0
  %v1290 = vadd.f32 0.0, %v1289
  %1291 = vmatmul.f32.gmra.mxu0 %v946
  %v1292 = vpop.f32.mrf.mxu0
  %v1293 = vadd.f32 0.0, %v1292
  %1294 = vmatmul.f32.gmra.mxu0 %v949
  %v1295 = vpop.f32.mrf.mxu0
  %v1296 = vadd.f32 0.0, %v1295
  %1297 = vmatmul.f32.gmra.mxu0 %v952
  %v1298 = vpop.f32.mrf.mxu0
  %v1299 = vadd.f32 0.0, %v1298
  %1300 = vmatmul.f32.gmra.mxu0 %v955
  %v1301 = vpop.f32.mrf.mxu0
  %v1302 = vadd.f32 0.0, %v1301
  %1303 = vmatmul.f32.gmra.mxu0 %v958
  %v1304 = vpop.f32.mrf.mxu0
  %v1305 = vadd.f32 0.0, %v1304
  %1306 = vmatmul.f32.gmra.mxu0 %v961
  %v1307 = vpop.f32.mrf.mxu0
  %v1308 = vadd.f32 0.0, %v1307
  %1309 = vmatmul.f32.gmra.mxu0 %v964
  %v1310 = vpop.f32.mrf.mxu0
  %v1311 = vadd.f32 0.0, %v1310
  %1312 = vmatmul.f32.gmra.mxu0 %v967
  %v1313 = vpop.f32.mrf.mxu0
  %v1314 = vadd.f32 0.0, %v1313
  %1315 = vmatmul.f32.gmra.mxu0 %v970
  %v1316 = vpop.f32.mrf.mxu0
  %v1317 = vadd.f32 0.0, %v1316
  %1318 = vmatmul.f32.gmra.mxu0 %v973
  %v1319 = vpop.f32.mrf.mxu0
  %v1320 = vadd.f32 0.0, %v1319
  %1321 = vmatmul.f32.gmra.mxu0 %v976
  %v1322 = vpop.f32.mrf.mxu0
  %v1323 = vadd.f32 0.0, %v1322
  %1324 = vmatmul.f32.gmra.mxu0 %v979
  %v1325 = vpop.f32.mrf.mxu0
  %v1326 = vadd.f32 0.0, %v1325
  %1327 = vmatmul.f32.gmra.mxu0 %v982
  %v1328 = vpop.f32.mrf.mxu0
  %v1329 = vadd.f32 0.0, %v1328
  %1330 = vmatmul.f32.gmra.mxu0 %v985
  %v1331 = vpop.f32.mrf.mxu0
  %v1332 = vadd.f32 0.0, %v1331
  %1333 = vmatmul.f32.gmra.mxu0 %v988
  %v1334 = vpop.f32.mrf.mxu0
  %v1335 = vadd.f32 0.0, %v1334
  %1336 = vmatmul.f32.gmra.mxu0 %v991
  %v1337 = vpop.f32.mrf.mxu0
  %v1338 = vadd.f32 0.0, %v1337
  %1339 = vmatmul.f32.gmra.mxu0 %v994
  %v1340 = vpop.f32.mrf.mxu0
  %v1341 = vadd.f32 0.0, %v1340
  %1342 = vmatmul.f32.gmra.mxu0 %v997
  %v1343 = vpop.f32.mrf.mxu0
  %v1344 = vadd.f32 0.0, %v1343
  %1345 = vmatmul.f32.gmra.mxu0 %v1000
  %v1346 = vpop.f32.mrf.mxu0
  %v1347 = vadd.f32 0.0, %v1346
  %1348 = vmatmul.f32.gmra.mxu0 %v1003
  %v1349 = vpop.f32.mrf.mxu0
  %v1350 = vadd.f32 0.0, %v1349
  %1351 = vmatmul.f32.gmra.mxu0 %v1006
  %v1352 = vpop.f32.mrf.mxu0
  %v1353 = vadd.f32 0.0, %v1352
  %1354 = vmatmul.f32.gmra.mxu0 %v1009
  %v1355 = vpop.f32.mrf.mxu0
  %v1356 = vadd.f32 0.0, %v1355
  %1357 = vmatmul.f32.gmra.mxu0 %v1012
  %v1358 = vpop.f32.mrf.mxu0
  %v1359 = vadd.f32 0.0, %v1358
  %1360 = vmatmul.f32.gmra.mxu0 %v1015
  %v1361 = vpop.f32.mrf.mxu0
  %v1362 = vadd.f32 0.0, %v1361
  %1363 = vmatmul.f32.gmra.mxu0 %v1018
  %v1364 = vpop.f32.mrf.mxu0
  %v1365 = vadd.f32 0.0, %v1364
  %1366 = vmatmul.f32.gmra.mxu0 %v1021
  %v1367 = vpop.f32.mrf.mxu0
  %v1368 = vadd.f32 0.0, %v1367
  %1369 = vdwg.mxu0
  %vm1370 = vcmask 64512
  %v1372 = vsel %vm1370, %v1041, 0
  %v1375 = vsel %vm1370, %v1044, 0
  %v1378 = vsel %vm1370, %v1047, 0
  %v1381 = vsel %vm1370, %v1050, 0
  %v1384 = vsel %vm1370, %v1053, 0
  %v1387 = vsel %vm1370, %v1056, 0
  %v1390 = vsel %vm1370, %v1059, 0
  %v1393 = vsel %vm1370, %v1062, 0
  %v1396 = vsel %vm1370, %v1065, 0
  %v1399 = vsel %vm1370, %v1068, 0
  %v1402 = vsel %vm1370, %v1071, 0
  %v1405 = vsel %vm1370, %v1074, 0
  %v1408 = vsel %vm1370, %v1077, 0
  %v1411 = vsel %vm1370, %v1080, 0
  %v1414 = vsel %vm1370, %v1083, 0
  %v1417 = vsel %vm1370, %v1086, 0
  %v1420 = vsel %vm1370, %v1089, 0
  %v1423 = vsel %vm1370, %v1092, 0
  %v1426 = vsel %vm1370, %v1095, 0
  %v1429 = vsel %vm1370, %v1098, 0
  %v1432 = vsel %vm1370, %v1101, 0
  %v1435 = vsel %vm1370, %v1104, 0
  %v1438 = vsel %vm1370, %v1107, 0
  %v1441 = vsel %vm1370, %v1110, 0
  %v1444 = vsel %vm1370, %v1113, 0
  %v1447 = vsel %vm1370, %v1116, 0
  %v1450 = vsel %vm1370, %v1119, 0
  %v1453 = vsel %vm1370, %v1122, 0
  %v1456 = vsel %vm1370, %v1125, 0
  %v1459 = vsel %vm1370, %v1128, 0
  %v1462 = vsel %vm1370, %v1131, 0
  %v1465 = vsel %vm1370, %v1134, 0
  %v1468 = vsel %vm1370, %v1158, 0
  %v1471 = vsel %vm1370, %v1161, 0
  %v1474 = vsel %vm1370, %v1164, 0
  %v1477 = vsel %vm1370, %v1167, 0
  %v1480 = vsel %vm1370, %v1170, 0
  %v1483 = vsel %vm1370, %v1173, 0
  %v1486 = vsel %vm1370, %v1176, 0
  %v1489 = vsel %vm1370, %v1179, 0
  %v1492 = vsel %vm1370, %v1182, 0
  %v1495 = vsel %vm1370, %v1185, 0
  %v1498 = vsel %vm1370, %v1188, 0
  %v1501 = vsel %vm1370, %v1191, 0
  %v1504 = vsel %vm1370, %v1194, 0
  %v1507 = vsel %vm1370, %v1197, 0
  %v1510 = vsel %vm1370, %v1200, 0
  %v1513 = vsel %vm1370, %v1203, 0
  %v1516 = vsel %vm1370, %v1206, 0
  %v1519 = vsel %vm1370, %v1209, 0
  %v1522 = vsel %vm1370, %v1212, 0
  %v1525 = vsel %vm1370, %v1215, 0
  %v1528 = vsel %vm1370, %v1218, 0
  %v1531 = vsel %vm1370, %v1221, 0
  %v1534 = vsel %vm1370, %v1224, 0
  %v1537 = vsel %vm1370, %v1227, 0
  %v1540 = vsel %vm1370, %v1230, 0
  %v1543 = vsel %vm1370, %v1233, 0
  %v1546 = vsel %vm1370, %v1236, 0
  %v1549 = vsel %vm1370, %v1239, 0
  %v1552 = vsel %vm1370, %v1242, 0
  %v1555 = vsel %vm1370, %v1245, 0
  %v1558 = vsel %vm1370, %v1248, 0
  %v1561 = vsel %vm1370, %v1251, 0
  %1563 = vmatpush.xpose.msra.mxu0 %v1513
  %1564 = vmatpush.xpose.msra.mxu0 %v1510
  %1565 = vmatpush.xpose.msra.mxu0 %v1507
  %1566 = vmatpush.xpose.msra.mxu0 %v1504
  %1567 = vmatpush.xpose.msra.mxu0 %v1501
  %1568 = vmatpush.xpose.msra.mxu0 %v1498
  %1569 = vmatpush.xpose.msra.mxu0 %v1495
  %1570 = vmatpush.xpose.msra.mxu0 %v1492
  %1571 = vmatpush.xpose.msra.mxu0 %v1489
  %1572 = vmatpush.xpose.msra.mxu0 %v1486
  %1573 = vmatpush.xpose.msra.mxu0 %v1483
  %1574 = vmatpush.xpose.msra.mxu0 %v1480
  %1575 = vmatpush.xpose.msra.mxu0 %v1477
  %1576 = vmatpush.xpose.msra.mxu0 %v1474
  %1577 = vmatpush.xpose.msra.mxu0 %v1471
  %1578 = vmatpush.xpose.msra.mxu0 %v1468
  %1579 = vmatmul.f32.gmra.mxu0 %v1372
  %v1580 = vpop.f32.mrf.mxu0
  %v1581 = vadd.f32 0.0, %v1580
  %1582 = vmatmul.f32.gmra.mxu0 %v1375
  %v1583 = vpop.f32.mrf.mxu0
  %v1584 = vadd.f32 0.0, %v1583
  %1585 = vmatmul.f32.gmra.mxu0 %v1378
  %v1586 = vpop.f32.mrf.mxu0
  %v1587 = vadd.f32 0.0, %v1586
  %1588 = vmatmul.f32.gmra.mxu0 %v1381
  %v1589 = vpop.f32.mrf.mxu0
  %v1590 = vadd.f32 0.0, %v1589
  %1591 = vmatmul.f32.gmra.mxu0 %v1384
  %v1592 = vpop.f32.mrf.mxu0
  %v1593 = vadd.f32 0.0, %v1592
  %1594 = vmatmul.f32.gmra.mxu0 %v1387
  %v1595 = vpop.f32.mrf.mxu0
  %v1596 = vadd.f32 0.0, %v1595
  %1597 = vmatmul.f32.gmra.mxu0 %v1390
  %v1598 = vpop.f32.mrf.mxu0
  %v1599 = vadd.f32 0.0, %v1598
  %1600 = vmatmul.f32.gmra.mxu0 %v1393
  %v1601 = vpop.f32.mrf.mxu0
  %v1602 = vadd.f32 0.0, %v1601
  %1603 = vmatmul.f32.gmra.mxu0 %v1396
  %v1604 = vpop.f32.mrf.mxu0
  %v1605 = vadd.f32 0.0, %v1604
  %1606 = vmatmul.f32.gmra.mxu0 %v1399
  %v1607 = vpop.f32.mrf.mxu0
  %v1608 = vadd.f32 0.0, %v1607
  %1609 = vmatmul.f32.gmra.mxu0 %v1402
  %v1610 = vpop.f32.mrf.mxu0
  %v1611 = vadd.f32 0.0, %v1610
  %1612 = vmatmul.f32.gmra.mxu0 %v1405
  %v1613 = vpop.f32.mrf.mxu0
  %v1614 = vadd.f32 0.0, %v1613
  %1615 = vmatmul.f32.gmra.mxu0 %v1408
  %v1616 = vpop.f32.mrf.mxu0
  %v1617 = vadd.f32 0.0, %v1616
  %1618 = vmatmul.f32.gmra.mxu0 %v1411
  %v1619 = vpop.f32.mrf.mxu0
  %v1620 = vadd.f32 0.0, %v1619
  %1621 = vmatmul.f32.gmra.mxu0 %v1414
  %v1622 = vpop.f32.mrf.mxu0
  %v1623 = vadd.f32 0.0, %v1622
  %1624 = vmatmul.f32.gmra.mxu0 %v1417
  %v1625 = vpop.f32.mrf.mxu0
  %v1626 = vadd.f32 0.0, %v1625
  %1627 = vmatmul.f32.gmra.mxu0 %v1420
  %v1628 = vpop.f32.mrf.mxu0
  %v1629 = vadd.f32 0.0, %v1628
  %1630 = vmatmul.f32.gmra.mxu0 %v1423
  %v1631 = vpop.f32.mrf.mxu0
  %v1632 = vadd.f32 0.0, %v1631
  %1633 = vmatmul.f32.gmra.mxu0 %v1426
  %v1634 = vpop.f32.mrf.mxu0
  %v1635 = vadd.f32 0.0, %v1634
  %1636 = vmatmul.f32.gmra.mxu0 %v1429
  %v1637 = vpop.f32.mrf.mxu0
  %v1638 = vadd.f32 0.0, %v1637
  %1639 = vmatmul.f32.gmra.mxu0 %v1432
  %v1640 = vpop.f32.mrf.mxu0
  %v1641 = vadd.f32 0.0, %v1640
  %1642 = vmatmul.f32.gmra.mxu0 %v1435
  %v1643 = vpop.f32.mrf.mxu0
  %v1644 = vadd.f32 0.0, %v1643
  %1645 = vmatmul.f32.gmra.mxu0 %v1438
  %v1646 = vpop.f32.mrf.mxu0
  %v1647 = vadd.f32 0.0, %v1646
  %1648 = vmatmul.f32.gmra.mxu0 %v1441
  %v1649 = vpop.f32.mrf.mxu0
  %v1650 = vadd.f32 0.0, %v1649
  %1651 = vmatmul.f32.gmra.mxu0 %v1444
  %v1652 = vpop.f32.mrf.mxu0
  %v1653 = vadd.f32 0.0, %v1652
  %1654 = vmatmul.f32.gmra.mxu0 %v1447
  %v1655 = vpop.f32.mrf.mxu0
  %v1656 = vadd.f32 0.0, %v1655
  %1657 = vmatmul.f32.gmra.mxu0 %v1450
  %v1658 = vpop.f32.mrf.mxu0
  %v1659 = vadd.f32 0.0, %v1658
  %1660 = vmatmul.f32.gmra.mxu0 %v1453
  %v1661 = vpop.f32.mrf.mxu0
  %v1662 = vadd.f32 0.0, %v1661
  %1663 = vmatmul.f32.gmra.mxu0 %v1456
  %v1664 = vpop.f32.mrf.mxu0
  %v1665 = vadd.f32 0.0, %v1664
  %1666 = vmatmul.f32.gmra.mxu0 %v1459
  %v1667 = vpop.f32.mrf.mxu0
  %v1668 = vadd.f32 0.0, %v1667
  %1669 = vmatmul.f32.gmra.mxu0 %v1462
  %v1670 = vpop.f32.mrf.mxu0
  %v1671 = vadd.f32 0.0, %v1670
  %1672 = vmatmul.f32.gmra.mxu0 %v1465
  %v1673 = vpop.f32.mrf.mxu0
  %v1674 = vadd.f32 0.0, %v1673
  %1675 = vdwg.mxu0
  %1676 = vmatpush.xpose.msra.mxu0 %v1561
  %1677 = vmatpush.xpose.msra.mxu0 %v1558
  %1678 = vmatpush.xpose.msra.mxu0 %v1555
  %1679 = vmatpush.xpose.msra.mxu0 %v1552
  %1680 = vmatpush.xpose.msra.mxu0 %v1549
  %1681 = vmatpush.xpose.msra.mxu0 %v1546
  %1682 = vmatpush.xpose.msra.mxu0 %v1543
  %1683 = vmatpush.xpose.msra.mxu0 %v1540
  %1684 = vmatpush.xpose.msra.mxu0 %v1537
  %1685 = vmatpush.xpose.msra.mxu0 %v1534
  %1686 = vmatpush.xpose.msra.mxu0 %v1531
  %1687 = vmatpush.xpose.msra.mxu0 %v1528
  %1688 = vmatpush.xpose.msra.mxu0 %v1525
  %1689 = vmatpush.xpose.msra.mxu0 %v1522
  %1690 = vmatpush.xpose.msra.mxu0 %v1519
  %1691 = vmatpush.xpose.msra.mxu0 %v1516
  %1692 = vmatmul.f32.gmra.mxu0 %v1372
  %v1693 = vpop.f32.mrf.mxu0
  %v1694 = vadd.f32 0.0, %v1693
  %1695 = vmatmul.f32.gmra.mxu0 %v1375
  %v1696 = vpop.f32.mrf.mxu0
  %v1697 = vadd.f32 0.0, %v1696
  %1698 = vmatmul.f32.gmra.mxu0 %v1378
  %v1699 = vpop.f32.mrf.mxu0
  %v1700 = vadd.f32 0.0, %v1699
  %1701 = vmatmul.f32.gmra.mxu0 %v1381
  %v1702 = vpop.f32.mrf.mxu0
  %v1703 = vadd.f32 0.0, %v1702
  %1704 = vmatmul.f32.gmra.mxu0 %v1384
  %v1705 = vpop.f32.mrf.mxu0
  %v1706 = vadd.f32 0.0, %v1705
  %1707 = vmatmul.f32.gmra.mxu0 %v1387
  %v1708 = vpop.f32.mrf.mxu0
  %v1709 = vadd.f32 0.0, %v1708
  %1710 = vmatmul.f32.gmra.mxu0 %v1390
  %v1711 = vpop.f32.mrf.mxu0
  %v1712 = vadd.f32 0.0, %v1711
  %1713 = vmatmul.f32.gmra.mxu0 %v1393
  %v1714 = vpop.f32.mrf.mxu0
  %v1715 = vadd.f32 0.0, %v1714
  %1716 = vmatmul.f32.gmra.mxu0 %v1396
  %v1717 = vpop.f32.mrf.mxu0
  %v1718 = vadd.f32 0.0, %v1717
  %1719 = vmatmul.f32.gmra.mxu0 %v1399
  %v1720 = vpop.f32.mrf.mxu0
  %v1721 = vadd.f32 0.0, %v1720
  %1722 = vmatmul.f32.gmra.mxu0 %v1402
  %v1723 = vpop.f32.mrf.mxu0
  %v1724 = vadd.f32 0.0, %v1723
  %1725 = vmatmul.f32.gmra.mxu0 %v1405
  %v1726 = vpop.f32.mrf.mxu0
  %v1727 = vadd.f32 0.0, %v1726
  %1728 = vmatmul.f32.gmra.mxu0 %v1408
  %v1729 = vpop.f32.mrf.mxu0
  %v1730 = vadd.f32 0.0, %v1729
  %1731 = vmatmul.f32.gmra.mxu0 %v1411
  %v1732 = vpop.f32.mrf.mxu0
  %v1733 = vadd.f32 0.0, %v1732
  %1734 = vmatmul.f32.gmra.mxu0 %v1414
  %v1735 = vpop.f32.mrf.mxu0
  %v1736 = vadd.f32 0.0, %v1735
  %1737 = vmatmul.f32.gmra.mxu0 %v1417
  %v1738 = vpop.f32.mrf.mxu0
  %v1739 = vadd.f32 0.0, %v1738
  %1740 = vmatmul.f32.gmra.mxu0 %v1420
  %v1741 = vpop.f32.mrf.mxu0
  %v1742 = vadd.f32 0.0, %v1741
  %1743 = vmatmul.f32.gmra.mxu0 %v1423
  %v1744 = vpop.f32.mrf.mxu0
  %v1745 = vadd.f32 0.0, %v1744
  %1746 = vmatmul.f32.gmra.mxu0 %v1426
  %v1747 = vpop.f32.mrf.mxu0
  %v1748 = vadd.f32 0.0, %v1747
  %1749 = vmatmul.f32.gmra.mxu0 %v1429
  %v1750 = vpop.f32.mrf.mxu0
  %v1751 = vadd.f32 0.0, %v1750
  %1752 = vmatmul.f32.gmra.mxu0 %v1432
  %v1753 = vpop.f32.mrf.mxu0
  %v1754 = vadd.f32 0.0, %v1753
  %1755 = vmatmul.f32.gmra.mxu0 %v1435
  %v1756 = vpop.f32.mrf.mxu0
  %v1757 = vadd.f32 0.0, %v1756
  %1758 = vmatmul.f32.gmra.mxu0 %v1438
  %v1759 = vpop.f32.mrf.mxu0
  %v1760 = vadd.f32 0.0, %v1759
  %1761 = vmatmul.f32.gmra.mxu0 %v1441
  %v1762 = vpop.f32.mrf.mxu0
  %v1763 = vadd.f32 0.0, %v1762
  %1764 = vmatmul.f32.gmra.mxu0 %v1444
  %v1765 = vpop.f32.mrf.mxu0
  %v1766 = vadd.f32 0.0, %v1765
  %1767 = vmatmul.f32.gmra.mxu0 %v1447
  %v1768 = vpop.f32.mrf.mxu0
  %v1769 = vadd.f32 0.0, %v1768
  %1770 = vmatmul.f32.gmra.mxu0 %v1450
  %v1771 = vpop.f32.mrf.mxu0
  %v1772 = vadd.f32 0.0, %v1771
  %1773 = vmatmul.f32.gmra.mxu0 %v1453
  %v1774 = vpop.f32.mrf.mxu0
  %v1775 = vadd.f32 0.0, %v1774
  %1776 = vmatmul.f32.gmra.mxu0 %v1456
  %v1777 = vpop.f32.mrf.mxu0
  %v1778 = vadd.f32 0.0, %v1777
  %1779 = vmatmul.f32.gmra.mxu0 %v1459
  %v1780 = vpop.f32.mrf.mxu0
  %v1781 = vadd.f32 0.0, %v1780
  %1782 = vmatmul.f32.gmra.mxu0 %v1462
  %v1783 = vpop.f32.mrf.mxu0
  %v1784 = vadd.f32 0.0, %v1783
  %1785 = vmatmul.f32.gmra.mxu0 %v1465
  %v1786 = vpop.f32.mrf.mxu0
  %v1787 = vadd.f32 0.0, %v1786
  %1788 = vdwg.mxu0
  %v1789 = vmul.f32 %v1581, 0.35355338
  %v1790 = vmul.f32 %v1694, 0.35355338
  %v1791 = vmul.f32 %v1584, 0.35355338
  %v1792 = vmul.f32 %v1697, 0.35355338
  %v1793 = vmul.f32 %v1587, 0.35355338
  %v1794 = vmul.f32 %v1700, 0.35355338
  %v1795 = vmul.f32 %v1590, 0.35355338
  %v1796 = vmul.f32 %v1703, 0.35355338
  %v1797 = vmul.f32 %v1593, 0.35355338
  %v1798 = vmul.f32 %v1706, 0.35355338
  %v1799 = vmul.f32 %v1596, 0.35355338
  %v1800 = vmul.f32 %v1709, 0.35355338
  %v1801 = vmul.f32 %v1599, 0.35355338
  %v1802 = vmul.f32 %v1712, 0.35355338
  %v1803 = vmul.f32 %v1602, 0.35355338
  %v1804 = vmul.f32 %v1715, 0.35355338
  %v1805 = vmul.f32 %v1605, 0.35355338
  %v1806 = vmul.f32 %v1718, 0.35355338
  %v1807 = vmul.f32 %v1608, 0.35355338
  %v1808 = vmul.f32 %v1721, 0.35355338
  %v1809 = vmul.f32 %v1611, 0.35355338
  %v1810 = vmul.f32 %v1724, 0.35355338
  %v1811 = vmul.f32 %v1614, 0.35355338
  %v1812 = vmul.f32 %v1727, 0.35355338
  %v1813 = vmul.f32 %v1617, 0.35355338
  %v1814 = vmul.f32 %v1730, 0.35355338
  %v1815 = vmul.f32 %v1620, 0.35355338
  %v1816 = vmul.f32 %v1733, 0.35355338
  %v1817 = vmul.f32 %v1623, 0.35355338
  %v1818 = vmul.f32 %v1736, 0.35355338
  %v1819 = vmul.f32 %v1626, 0.35355338
  %v1820 = vmul.f32 %v1739, 0.35355338
  %v1821 = vmul.f32 %v1629, 0.35355338
  %v1822 = vmul.f32 %v1742, 0.35355338
  %v1823 = vmul.f32 %v1632, 0.35355338
  %v1824 = vmul.f32 %v1745, 0.35355338
  %v1825 = vmul.f32 %v1635, 0.35355338
  %v1826 = vmul.f32 %v1748, 0.35355338
  %v1827 = vmul.f32 %v1638, 0.35355338
  %v1828 = vmul.f32 %v1751, 0.35355338
  %v1829 = vmul.f32 %v1641, 0.35355338
  %v1830 = vmul.f32 %v1754, 0.35355338
  %v1831 = vmul.f32 %v1644, 0.35355338
  %v1832 = vmul.f32 %v1757, 0.35355338
  %v1833 = vmul.f32 %v1647, 0.35355338
  %v1834 = vmul.f32 %v1760, 0.35355338
  %v1835 = vmul.f32 %v1650, 0.35355338
  %v1836 = vmul.f32 %v1763, 0.35355338
  %v1837 = vmul.f32 %v1653, 0.35355338
  %v1838 = vmul.f32 %v1766, 0.35355338
  %v1839 = vmul.f32 %v1656, 0.35355338
  %v1840 = vmul.f32 %v1769, 0.35355338
  %v1841 = vmul.f32 %v1659, 0.35355338
  %v1842 = vmul.f32 %v1772, 0.35355338
  %v1843 = vmul.f32 %v1662, 0.35355338
  %v1844 = vmul.f32 %v1775, 0.35355338
  %v1845 = vmul.f32 %v1665, 0.35355338
  %v1846 = vmul.f32 %v1778, 0.35355338
  %v1847 = vmul.f32 %v1668, 0.35355338
  %v1848 = vmul.f32 %v1781, 0.35355338
  %v1849 = vmul.f32 %v1671, 0.35355338
  %v1850 = vmul.f32 %v1784, 0.35355338
  %v1851 = vmul.f32 %v1674, 0.35355338
  %v1852 = vmul.f32 %v1787, 0.35355338
  %v1853 = vmax.f32 %v1789, %v1790
  %1854 = vmax.xlane.f32.xlu0 %v1853
  %v1855 = vpop.xlane.xlu0 %1854
  %v1856 = vmax.f32 %v1791, %v1792
  %1857 = vmax.xlane.f32.xlu0 %v1856
  %v1858 = vpop.xlane.xlu0 %1857
  %v1859 = vmax.f32 %v1793, %v1794
  %1860 = vmax.xlane.f32.xlu0 %v1859
  %v1861 = vpop.xlane.xlu0 %1860
  %v1862 = vmax.f32 %v1795, %v1796
  %1863 = vmax.xlane.f32.xlu0 %v1862
  %v1864 = vpop.xlane.xlu0 %1863
  %v1865 = vmax.f32 %v1797, %v1798
  %1866 = vmax.xlane.f32.xlu0 %v1865
  %v1867 = vpop.xlane.xlu0 %1866
  %v1868 = vmax.f32 %v1799, %v1800
  %1869 = vmax.xlane.f32.xlu0 %v1868
  %v1870 = vpop.xlane.xlu0 %1869
  %v1871 = vmax.f32 %v1801, %v1802
  %1872 = vmax.xlane.f32.xlu0 %v1871
  %v1873 = vpop.xlane.xlu0 %1872
  %v1874 = vmax.f32 %v1803, %v1804
  %1875 = vmax.xlane.f32.xlu0 %v1874
  %v1876 = vpop.xlane.xlu0 %1875
  %v1877 = vmax.f32 %v1805, %v1806
  %1878 = vmax.xlane.f32.xlu0 %v1877
  %v1879 = vpop.xlane.xlu0 %1878
  %v1880 = vmax.f32 %v1807, %v1808
  %1881 = vmax.xlane.f32.xlu0 %v1880
  %v1882 = vpop.xlane.xlu0 %1881
  %v1883 = vmax.f32 %v1809, %v1810
  %1884 = vmax.xlane.f32.xlu0 %v1883
  %v1885 = vpop.xlane.xlu0 %1884
  %v1886 = vmax.f32 %v1811, %v1812
  %1887 = vmax.xlane.f32.xlu0 %v1886
  %v1888 = vpop.xlane.xlu0 %1887
  %v1889 = vmax.f32 %v1813, %v1814
  %1890 = vmax.xlane.f32.xlu0 %v1889
  %v1891 = vpop.xlane.xlu0 %1890
  %v1892 = vmax.f32 %v1815, %v1816
  %1893 = vmax.xlane.f32.xlu0 %v1892
  %v1894 = vpop.xlane.xlu0 %1893
  %v1895 = vmax.f32 %v1817, %v1818
  %1896 = vmax.xlane.f32.xlu0 %v1895
  %v1897 = vpop.xlane.xlu0 %1896
  %v1898 = vmax.f32 %v1819, %v1820
  %1899 = vmax.xlane.f32.xlu0 %v1898
  %v1900 = vpop.xlane.xlu0 %1899
  %v1901 = vmax.f32 %v1821, %v1822
  %1902 = vmax.xlane.f32.xlu0 %v1901
  %v1903 = vpop.xlane.xlu0 %1902
  %v1904 = vmax.f32 %v1823, %v1824
  %1905 = vmax.xlane.f32.xlu0 %v1904
  %v1906 = vpop.xlane.xlu0 %1905
  %v1907 = vmax.f32 %v1825, %v1826
  %1908 = vmax.xlane.f32.xlu0 %v1907
  %v1909 = vpop.xlane.xlu0 %1908
  %v1910 = vmax.f32 %v1827, %v1828
  %1911 = vmax.xlane.f32.xlu0 %v1910
  %v1912 = vpop.xlane.xlu0 %1911
  %v1913 = vmax.f32 %v1829, %v1830
  %1914 = vmax.xlane.f32.xlu0 %v1913
  %v1915 = vpop.xlane.xlu0 %1914
  %v1916 = vmax.f32 %v1831, %v1832
  %1917 = vmax.xlane.f32.xlu0 %v1916
  %v1918 = vpop.xlane.xlu0 %1917
  %v1919 = vmax.f32 %v1833, %v1834
  %1920 = vmax.xlane.f32.xlu0 %v1919
  %v1921 = vpop.xlane.xlu0 %1920
  %v1922 = vmax.f32 %v1835, %v1836
  %1923 = vmax.xlane.f32.xlu0 %v1922
  %v1924 = vpop.xlane.xlu0 %1923
  %v1925 = vmax.f32 %v1837, %v1838
  %1926 = vmax.xlane.f32.xlu0 %v1925
  %v1927 = vpop.xlane.xlu0 %1926
  %v1928 = vmax.f32 %v1839, %v1840
  %1929 = vmax.xlane.f32.xlu0 %v1928
  %v1930 = vpop.xlane.xlu0 %1929
  %v1931 = vmax.f32 %v1841, %v1842
  %1932 = vmax.xlane.f32.xlu0 %v1931
  %v1933 = vpop.xlane.xlu0 %1932
  %v1934 = vmax.f32 %v1843, %v1844
  %1935 = vmax.xlane.f32.xlu0 %v1934
  %v1936 = vpop.xlane.xlu0 %1935
  %v1937 = vmax.f32 %v1845, %v1846
  %1938 = vmax.xlane.f32.xlu0 %v1937
  %v1939 = vpop.xlane.xlu0 %1938
  %v1940 = vmax.f32 %v1847, %v1848
  %1941 = vmax.xlane.f32.xlu0 %v1940
  %v1942 = vpop.xlane.xlu0 %1941
  %v1943 = vmax.f32 %v1849, %v1850
  %1944 = vmax.xlane.f32.xlu0 %v1943
  %v1945 = vpop.xlane.xlu0 %1944
  %v1946 = vmax.f32 %v1851, %v1852
  %1947 = vmax.xlane.f32.xlu0 %v1946
  %v1948 = vpop.xlane.xlu0 %1947
  %v1949 = vsub.f32 %v1789, %v1855
  %v1950 = vsub.f32 %v1790, %v1855
  %v1951 = vsub.f32 %v1791, %v1858
  %v1952 = vsub.f32 %v1792, %v1858
  %v1953 = vsub.f32 %v1793, %v1861
  %v1954 = vsub.f32 %v1794, %v1861
  %v1955 = vsub.f32 %v1795, %v1864
  %v1956 = vsub.f32 %v1796, %v1864
  %v1957 = vsub.f32 %v1797, %v1867
  %v1958 = vsub.f32 %v1798, %v1867
  %v1959 = vsub.f32 %v1799, %v1870
  %v1960 = vsub.f32 %v1800, %v1870
  %v1961 = vsub.f32 %v1801, %v1873
  %v1962 = vsub.f32 %v1802, %v1873
  %v1963 = vsub.f32 %v1803, %v1876
  %v1964 = vsub.f32 %v1804, %v1876
  %v1965 = vsub.f32 %v1805, %v1879
  %v1966 = vsub.f32 %v1806, %v1879
  %v1967 = vsub.f32 %v1807, %v1882
  %v1968 = vsub.f32 %v1808, %v1882
  %v1969 = vsub.f32 %v1809, %v1885
  %v1970 = vsub.f32 %v1810, %v1885
  %v1971 = vsub.f32 %v1811, %v1888
  %v1972 = vsub.f32 %v1812, %v1888
  %v1973 = vsub.f32 %v1813, %v1891
  %v1974 = vsub.f32 %v1814, %v1891
  %v1975 = vsub.f32 %v1815, %v1894
  %v1976 = vsub.f32 %v1816, %v1894
  %v1977 = vsub.f32 %v1817, %v1897
  %v1978 = vsub.f32 %v1818, %v1897
  %v1979 = vsub.f32 %v1819, %v1900
  %v1980 = vsub.f32 %v1820, %v1900
  %v1981 = vsub.f32 %v1821, %v1903
  %v1982 = vsub.f32 %v1822, %v1903
  %v1983 = vsub.f32 %v1823, %v1906
  %v1984 = vsub.f32 %v1824, %v1906
  %v1985 = vsub.f32 %v1825, %v1909
  %v1986 = vsub.f32 %v1826, %v1909
  %v1987 = vsub.f32 %v1827, %v1912
  %v1988 = vsub.f32 %v1828, %v1912
  %v1989 = vsub.f32 %v1829, %v1915
  %v1990 = vsub.f32 %v1830, %v1915
  %v1991 = vsub.f32 %v1831, %v1918
  %v1992 = vsub.f32 %v1832, %v1918
  %v1993 = vsub.f32 %v1833, %v1921
  %v1994 = vsub.f32 %v1834, %v1921
  %v1995 = vsub.f32 %v1835, %v1924
  %v1996 = vsub.f32 %v1836, %v1924
  %v1997 = vsub.f32 %v1837, %v1927
  %v1998 = vsub.f32 %v1838, %v1927
  %v1999 = vsub.f32 %v1839, %v1930
  %v2000 = vsub.f32 %v1840, %v1930
  %v2001 = vsub.f32 %v1841, %v1933
  %v2002 = vsub.f32 %v1842, %v1933
  %v2003 = vsub.f32 %v1843, %v1936
  %v2004 = vsub.f32 %v1844, %v1936
  %v2005 = vsub.f32 %v1845, %v1939
  %v2006 = vsub.f32 %v1846, %v1939
  %v2007 = vsub.f32 %v1847, %v1942
  %v2008 = vsub.f32 %v1848, %v1942
  %v2009 = vsub.f32 %v1849, %v1945
  %v2010 = vsub.f32 %v1850, %v1945
  %v2011 = vsub.f32 %v1851, %v1948
  %v2012 = vsub.f32 %v1852, %v1948
  %v2013 = vmul.f32 %v1949, 1.442695
  %v2014 = vpow.pop %v2013
  %v2015 = vmul.f32 %v1950, 1.442695
  %v2016 = vpow.pop %v2015
  %v2017 = vmul.f32 %v1951, 1.442695
  %v2018 = vpow.pop %v2017
  %v2019 = vmul.f32 %v1952, 1.442695
  %v2020 = vpow.pop %v2019
  %v2021 = vmul.f32 %v1953, 1.442695
  %v2022 = vpow.pop %v2021
  %v2023 = vmul.f32 %v1954, 1.442695
  %v2024 = vpow.pop %v2023
  %v2025 = vmul.f32 %v1955, 1.442695
  %v2026 = vpow.pop %v2025
  %v2027 = vmul.f32 %v1956, 1.442695
  %v2028 = vpow.pop %v2027
  %v2029 = vmul.f32 %v1957, 1.442695
  %v2030 = vpow.pop %v2029
  %v2031 = vmul.f32 %v1958, 1.442695
  %v2032 = vpow.pop %v2031
  %v2033 = vmul.f32 %v1959, 1.442695
  %v2034 = vpow.pop %v2033
  %v2035 = vmul.f32 %v1960, 1.442695
  %v2036 = vpow.pop %v2035
  %v2037 = vmul.f32 %v1961, 1.442695
  %v2038 = vpow.pop %v2037
  %v2039 = vmul.f32 %v1962, 1.442695
  %v2040 = vpow.pop %v2039
  %v2041 = vmul.f32 %v1963, 1.442695
  %v2042 = vpow.pop %v2041
  %v2043 = vmul.f32 %v1964, 1.442695
  %v2044 = vpow.pop %v2043
  %v2045 = vmul.f32 %v1965, 1.442695
  %v2046 = vpow.pop %v2045
  %v2047 = vmul.f32 %v1966, 1.442695
  %v2048 = vpow.pop %v2047
  %v2049 = vmul.f32 %v1967, 1.442695
  %v2050 = vpow.pop %v2049
  %v2051 = vmul.f32 %v1968, 1.442695
  %v2052 = vpow.pop %v2051
  %v2053 = vmul.f32 %v1969, 1.442695
  %v2054 = vpow.pop %v2053
  %v2055 = vmul.f32 %v1970, 1.442695
  %v2056 = vpow.pop %v2055
  %v2057 = vmul.f32 %v1971, 1.442695
  %v2058 = vpow.pop %v2057
  %v2059 = vmul.f32 %v1972, 1.442695
  %v2060 = vpow.pop %v2059
  %v2061 = vmul.f32 %v1973, 1.442695
  %v2062 = vpow.pop %v2061
  %v2063 = vmul.f32 %v1974, 1.442695
  %v2064 = vpow.pop %v2063
  %v2065 = vmul.f32 %v1975, 1.442695
  %v2066 = vpow.pop %v2065
  %v2067 = vmul.f32 %v1976, 1.442695
  %v2068 = vpow.pop %v2067
  %v2069 = vmul.f32 %v1977, 1.442695
  %v2070 = vpow.pop %v2069
  %v2071 = vmul.f32 %v1978, 1.442695
  %v2072 = vpow.pop %v2071
  %v2073 = vmul.f32 %v1979, 1.442695
  %v2074 = vpow.pop %v2073
  %v2075 = vmul.f32 %v1980, 1.442695
  %v2076 = vpow.pop %v2075
  %v2077 = vmul.f32 %v1981, 1.442695
  %v2078 = vpow.pop %v2077
  %v2079 = vmul.f32 %v1982, 1.442695
  %v2080 = vpow.pop %v2079
  %v2081 = vmul.f32 %v1983, 1.442695
  %v2082 = vpow.pop %v2081
  %v2083 = vmul.f32 %v1984, 1.442695
  %v2084 = vpow.pop %v2083
  %v2085 = vmul.f32 %v1985, 1.442695
  %v2086 = vpow.pop %v2085
  %v2087 = vmul.f32 %v1986, 1.442695
  %v2088 = vpow.pop %v2087
  %v2089 = vmul.f32 %v1987, 1.442695
  %v2090 = vpow.pop %v2089
  %v2091 = vmul.f32 %v1988, 1.442695
  %v2092 = vpow.pop %v2091
  %v2093 = vmul.f32 %v1989, 1.442695
  %v2094 = vpow.pop %v2093
  %v2095 = vmul.f32 %v1990, 1.442695
  %v2096 = vpow.pop %v2095
  %v2097 = vmul.f32 %v1991, 1.442695
  %v2098 = vpow.pop %v2097
  %v2099 = vmul.f32 %v1992, 1.442695
  %v2100 = vpow.pop %v2099
  %v2101 = vmul.f32 %v1993, 1.442695
  %v2102 = vpow.pop %v2101
  %v2103 = vmul.f32 %v1994, 1.442695
  %v2104 = vpow.pop %v2103
  %v2105 = vmul.f32 %v1995, 1.442695
  %v2106 = vpow.pop %v2105
  %v2107 = vmul.f32 %v1996, 1.442695
  %v2108 = vpow.pop %v2107
  %v2109 = vmul.f32 %v1997, 1.442695
  %v2110 = vpow.pop %v2109
  %v2111 = vmul.f32 %v1998, 1.442695
  %v2112 = vpow.pop %v2111
  %v2113 = vmul.f32 %v1999, 1.442695
  %v2114 = vpow.pop %v2113
  %v2115 = vmul.f32 %v2000, 1.442695
  %v2116 = vpow.pop %v2115
  %v2117 = vmul.f32 %v2001, 1.442695
  %v2118 = vpow.pop %v2117
  %v2119 = vmul.f32 %v2002, 1.442695
  %v2120 = vpow.pop %v2119
  %v2121 = vmul.f32 %v2003, 1.442695
  %v2122 = vpow.pop %v2121
  %v2123 = vmul.f32 %v2004, 1.442695
  %v2124 = vpow.pop %v2123
  %v2125 = vmul.f32 %v2005, 1.442695
  %v2126 = vpow.pop %v2125
  %v2127 = vmul.f32 %v2006, 1.442695
  %v2128 = vpow.pop %v2127
  %v2129 = vmul.f32 %v2007, 1.442695
  %v2130 = vpow.pop %v2129
  %v2131 = vmul.f32 %v2008, 1.442695
  %v2132 = vpow.pop %v2131
  %v2133 = vmul.f32 %v2009, 1.442695
  %v2134 = vpow.pop %v2133
  %v2135 = vmul.f32 %v2010, 1.442695
  %v2136 = vpow.pop %v2135
  %v2137 = vmul.f32 %v2011, 1.442695
  %v2138 = vpow.pop %v2137
  %v2139 = vmul.f32 %v2012, 1.442695
  %v2140 = vpow.pop %v2139
  %v2141 = vadd.f32 %v2014, %v2016
  %2142 = vadd.xlane.f32.xlu0 %v2141
  %v2143 = vpop.xlane.xlu0 %2142
  %v2144 = vadd.f32 %v2018, %v2020
  %2145 = vadd.xlane.f32.xlu0 %v2144
  %v2146 = vpop.xlane.xlu0 %2145
  %v2147 = vadd.f32 %v2022, %v2024
  %2148 = vadd.xlane.f32.xlu0 %v2147
  %v2149 = vpop.xlane.xlu0 %2148
  %v2150 = vadd.f32 %v2026, %v2028
  %2151 = vadd.xlane.f32.xlu0 %v2150
  %v2152 = vpop.xlane.xlu0 %2151
  %v2153 = vadd.f32 %v2030, %v2032
  %2154 = vadd.xlane.f32.xlu0 %v2153
  %v2155 = vpop.xlane.xlu0 %2154
  %v2156 = vadd.f32 %v2034, %v2036
  %2157 = vadd.xlane.f32.xlu0 %v2156
  %v2158 = vpop.xlane.xlu0 %2157
  %v2159 = vadd.f32 %v2038, %v2040
  %2160 = vadd.xlane.f32.xlu0 %v2159
  %v2161 = vpop.xlane.xlu0 %2160
  %v2162 = vadd.f32 %v2042, %v2044
  %2163 = vadd.xlane.f32.xlu0 %v2162
  %v2164 = vpop.xlane.xlu0 %2163
  %v2165 = vadd.f32 %v2046, %v2048
  %2166 = vadd.xlane.f32.xlu0 %v2165
  %v2167 = vpop.xlane.xlu0 %2166
  %v2168 = vadd.f32 %v2050, %v2052
  %2169 = vadd.xlane.f32.xlu0 %v2168
  %v2170 = vpop.xlane.xlu0 %2169
  %v2171 = vadd.f32 %v2054, %v2056
  %2172 = vadd.xlane.f32.xlu0 %v2171
  %v2173 = vpop.xlane.xlu0 %2172
  %v2174 = vadd.f32 %v2058, %v2060
  %2175 = vadd.xlane.f32.xlu0 %v2174
  %v2176 = vpop.xlane.xlu0 %2175
  %v2177 = vadd.f32 %v2062, %v2064
  %2178 = vadd.xlane.f32.xlu0 %v2177
  %v2179 = vpop.xlane.xlu0 %2178
  %v2180 = vadd.f32 %v2066, %v2068
  %2181 = vadd.xlane.f32.xlu0 %v2180
  %v2182 = vpop.xlane.xlu0 %2181
  %v2183 = vadd.f32 %v2070, %v2072
  %2184 = vadd.xlane.f32.xlu0 %v2183
  %v2185 = vpop.xlane.xlu0 %2184
  %v2186 = vadd.f32 %v2074, %v2076
  %2187 = vadd.xlane.f32.xlu0 %v2186
  %v2188 = vpop.xlane.xlu0 %2187
  %v2189 = vadd.f32 %v2078, %v2080
  %2190 = vadd.xlane.f32.xlu0 %v2189
  %v2191 = vpop.xlane.xlu0 %2190
  %v2192 = vadd.f32 %v2082, %v2084
  %2193 = vadd.xlane.f32.xlu0 %v2192
  %v2194 = vpop.xlane.xlu0 %2193
  %v2195 = vadd.f32 %v2086, %v2088
  %2196 = vadd.xlane.f32.xlu0 %v2195
  %v2197 = vpop.xlane.xlu0 %2196
  %v2198 = vadd.f32 %v2090, %v2092
  %2199 = vadd.xlane.f32.xlu0 %v2198
  %v2200 = vpop.xlane.xlu0 %2199
  %v2201 = vadd.f32 %v2094, %v2096
  %2202 = vadd.xlane.f32.xlu0 %v2201
  %v2203 = vpop.xlane.xlu0 %2202
  %v2204 = vadd.f32 %v2098, %v2100
  %2205 = vadd.xlane.f32.xlu0 %v2204
  %v2206 = vpop.xlane.xlu0 %2205
  %v2207 = vadd.f32 %v2102, %v2104
  %2208 = vadd.xlane.f32.xlu0 %v2207
  %v2209 = vpop.xlane.xlu0 %2208
  %v2210 = vadd.f32 %v2106, %v2108
  %2211 = vadd.xlane.f32.xlu0 %v2210
  %v2212 = vpop.xlane.xlu0 %2211
  %v2213 = vadd.f32 %v2110, %v2112
  %2214 = vadd.xlane.f32.xlu0 %v2213
  %v2215 = vpop.xlane.xlu0 %2214
  %v2216 = vadd.f32 %v2114, %v2116
  %2217 = vadd.xlane.f32.xlu0 %v2216
  %v2218 = vpop.xlane.xlu0 %2217
  %v2219 = vadd.f32 %v2118, %v2120
  %2220 = vadd.xlane.f32.xlu0 %v2219
  %v2221 = vpop.xlane.xlu0 %2220
  %v2222 = vadd.f32 %v2122, %v2124
  %2223 = vadd.xlane.f32.xlu0 %v2222
  %v2224 = vpop.xlane.xlu0 %2223
  %v2225 = vadd.f32 %v2126, %v2128
  %2226 = vadd.xlane.f32.xlu0 %v2225
  %v2227 = vpop.xlane.xlu0 %2226
  %v2228 = vadd.f32 %v2130, %v2132
  %2229 = vadd.xlane.f32.xlu0 %v2228
  %v2230 = vpop.xlane.xlu0 %2229
  %v2231 = vadd.f32 %v2134, %v2136
  %2232 = vadd.xlane.f32.xlu0 %v2231
  %v2233 = vpop.xlane.xlu0 %2232
  %v2234 = vadd.f32 %v2138, %v2140
  %2235 = vadd.xlane.f32.xlu0 %v2234
  %v2236 = vpop.xlane.xlu0 %2235
  %v2237 = vrcp.pop %v2143
  %v2238 = vrcp.pop %v2146
  %v2239 = vrcp.pop %v2149
  %v2240 = vrcp.pop %v2152
  %v2241 = vrcp.pop %v2155
  %v2242 = vrcp.pop %v2158
  %v2243 = vrcp.pop %v2161
  %v2244 = vrcp.pop %v2164
  %v2245 = vrcp.pop %v2167
  %v2246 = vrcp.pop %v2170
  %v2247 = vrcp.pop %v2173
  %v2248 = vrcp.pop %v2176
  %v2249 = vrcp.pop %v2179
  %v2250 = vrcp.pop %v2182
  %v2251 = vrcp.pop %v2185
  %v2252 = vrcp.pop %v2188
  %v2253 = vrcp.pop %v2191
  %v2254 = vrcp.pop %v2194
  %v2255 = vrcp.pop %v2197
  %v2256 = vrcp.pop %v2200
  %v2257 = vrcp.pop %v2203
  %v2258 = vrcp.pop %v2206
  %v2259 = vrcp.pop %v2209
  %v2260 = vrcp.pop %v2212
  %v2261 = vrcp.pop %v2215
  %v2262 = vrcp.pop %v2218
  %v2263 = vrcp.pop %v2221
  %v2264 = vrcp.pop %v2224
  %v2265 = vrcp.pop %v2227
  %v2266 = vrcp.pop %v2230
  %v2267 = vrcp.pop %v2233
  %v2268 = vrcp.pop %v2236
  %v2269 = vmul.f32 %v2014, %v2237
  %v2270 = vmul.f32 %v2016, %v2237
  %v2271 = vmul.f32 %v2018, %v2238
  %v2272 = vmul.f32 %v2020, %v2238
  %v2273 = vmul.f32 %v2022, %v2239
  %v2274 = vmul.f32 %v2024, %v2239
  %v2275 = vmul.f32 %v2026, %v2240
  %v2276 = vmul.f32 %v2028, %v2240
  %v2277 = vmul.f32 %v2030, %v2241
  %v2278 = vmul.f32 %v2032, %v2241
  %v2279 = vmul.f32 %v2034, %v2242
  %v2280 = vmul.f32 %v2036, %v2242
  %v2281 = vmul.f32 %v2038, %v2243
  %v2282 = vmul.f32 %v2040, %v2243
  %v2283 = vmul.f32 %v2042, %v2244
  %v2284 = vmul.f32 %v2044, %v2244
  %v2285 = vmul.f32 %v2046, %v2245
  %v2286 = vmul.f32 %v2048, %v2245
  %v2287 = vmul.f32 %v2050, %v2246
  %v2288 = vmul.f32 %v2052, %v2246
  %v2289 = vmul.f32 %v2054, %v2247
  %v2290 = vmul.f32 %v2056, %v2247
  %v2291 = vmul.f32 %v2058, %v2248
  %v2292 = vmul.f32 %v2060, %v2248
  %v2293 = vmul.f32 %v2062, %v2249
  %v2294 = vmul.f32 %v2064, %v2249
  %v2295 = vmul.f32 %v2066, %v2250
  %v2296 = vmul.f32 %v2068, %v2250
  %v2297 = vmul.f32 %v2070, %v2251
  %v2298 = vmul.f32 %v2072, %v2251
  %v2299 = vmul.f32 %v2074, %v2252
  %v2300 = vmul.f32 %v2076, %v2252
  %v2301 = vmul.f32 %v2078, %v2253
  %v2302 = vmul.f32 %v2080, %v2253
  %v2303 = vmul.f32 %v2082, %v2254
  %v2304 = vmul.f32 %v2084, %v2254
  %v2305 = vmul.f32 %v2086, %v2255
  %v2306 = vmul.f32 %v2088, %v2255
  %v2307 = vmul.f32 %v2090, %v2256
  %v2308 = vmul.f32 %v2092, %v2256
  %v2309 = vmul.f32 %v2094, %v2257
  %v2310 = vmul.f32 %v2096, %v2257
  %v2311 = vmul.f32 %v2098, %v2258
  %v2312 = vmul.f32 %v2100, %v2258
  %v2313 = vmul.f32 %v2102, %v2259
  %v2314 = vmul.f32 %v2104, %v2259
  %v2315 = vmul.f32 %v2106, %v2260
  %v2316 = vmul.f32 %v2108, %v2260
  %v2317 = vmul.f32 %v2110, %v2261
  %v2318 = vmul.f32 %v2112, %v2261
  %v2319 = vmul.f32 %v2114, %v2262
  %v2320 = vmul.f32 %v2116, %v2262
  %v2321 = vmul.f32 %v2118, %v2263
  %v2322 = vmul.f32 %v2120, %v2263
  %v2323 = vmul.f32 %v2122, %v2264
  %v2324 = vmul.f32 %v2124, %v2264
  %v2325 = vmul.f32 %v2126, %v2265
  %v2326 = vmul.f32 %v2128, %v2265
  %v2327 = vmul.f32 %v2130, %v2266
  %v2328 = vmul.f32 %v2132, %v2266
  %v2329 = vmul.f32 %v2134, %v2267
  %v2330 = vmul.f32 %v2136, %v2267
  %v2331 = vmul.f32 %v2138, %v2268
  %v2332 = vmul.f32 %v2140, %v2268
  %2333 = vmatpush.msra.mxu0 %v1320
  %2334 = vmatpush.msra.mxu0 %v1317
  %2335 = vmatpush.msra.mxu0 %v1314
  %2336 = vmatpush.msra.mxu0 %v1311
  %2337 = vmatpush.msra.mxu0 %v1308
  %2338 = vmatpush.msra.mxu0 %v1305
  %2339 = vmatpush.msra.mxu0 %v1302
  %2340 = vmatpush.msra.mxu0 %v1299
  %2341 = vmatpush.msra.mxu0 %v1296
  %2342 = vmatpush.msra.mxu0 %v1293
  %2343 = vmatpush.msra.mxu0 %v1290
  %2344 = vmatpush.msra.mxu0 %v1287
  %2345 = vmatpush.msra.mxu0 %v1284
  %2346 = vmatpush.msra.mxu0 %v1281
  %2347 = vmatpush.msra.mxu0 %v1278
  %2348 = vmatpush.msra.mxu0 %v1275
  %2349 = vmatmul.f32.gmra.mxu0 %v2269
  %v2350 = vpop.f32.mrf.mxu0
  %v2351 = vadd.f32 0.0, %v2350
  %2352 = vmatmul.f32.gmra.mxu0 %v2271
  %v2353 = vpop.f32.mrf.mxu0
  %v2354 = vadd.f32 0.0, %v2353
  %2355 = vmatmul.f32.gmra.mxu0 %v2273
  %v2356 = vpop.f32.mrf.mxu0
  %v2357 = vadd.f32 0.0, %v2356
  %2358 = vmatmul.f32.gmra.mxu0 %v2275
  %v2359 = vpop.f32.mrf.mxu0
  %v2360 = vadd.f32 0.0, %v2359
  %2361 = vmatmul.f32.gmra.mxu0 %v2277
  %v2362 = vpop.f32.mrf.mxu0
  %v2363 = vadd.f32 0.0, %v2362
  %2364 = vmatmul.f32.gmra.mxu0 %v2279
  %v2365 = vpop.f32.mrf.mxu0
  %v2366 = vadd.f32 0.0, %v2365
  %2367 = vmatmul.f32.gmra.mxu0 %v2281
  %v2368 = vpop.f32.mrf.mxu0
  %v2369 = vadd.f32 0.0, %v2368
  %2370 = vmatmul.f32.gmra.mxu0 %v2283
  %v2371 = vpop.f32.mrf.mxu0
  %v2372 = vadd.f32 0.0, %v2371
  %2373 = vmatmul.f32.gmra.mxu0 %v2285
  %v2374 = vpop.f32.mrf.mxu0
  %v2375 = vadd.f32 0.0, %v2374
  %2376 = vmatmul.f32.gmra.mxu0 %v2287
  %v2377 = vpop.f32.mrf.mxu0
  %v2378 = vadd.f32 0.0, %v2377
  %2379 = vmatmul.f32.gmra.mxu0 %v2289
  %v2380 = vpop.f32.mrf.mxu0
  %v2381 = vadd.f32 0.0, %v2380
  %2382 = vmatmul.f32.gmra.mxu0 %v2291
  %v2383 = vpop.f32.mrf.mxu0
  %v2384 = vadd.f32 0.0, %v2383
  %2385 = vmatmul.f32.gmra.mxu0 %v2293
  %v2386 = vpop.f32.mrf.mxu0
  %v2387 = vadd.f32 0.0, %v2386
  %2388 = vmatmul.f32.gmra.mxu0 %v2295
  %v2389 = vpop.f32.mrf.mxu0
  %v2390 = vadd.f32 0.0, %v2389
  %2391 = vmatmul.f32.gmra.mxu0 %v2297
  %v2392 = vpop.f32.mrf.mxu0
  %v2393 = vadd.f32 0.0, %v2392
  %2394 = vmatmul.f32.gmra.mxu0 %v2299
  %v2395 = vpop.f32.mrf.mxu0
  %v2396 = vadd.f32 0.0, %v2395
  %2397 = vmatmul.f32.gmra.mxu0 %v2301
  %v2398 = vpop.f32.mrf.mxu0
  %v2399 = vadd.f32 0.0, %v2398
  %2400 = vmatmul.f32.gmra.mxu0 %v2303
  %v2401 = vpop.f32.mrf.mxu0
  %v2402 = vadd.f32 0.0, %v2401
  %2403 = vmatmul.f32.gmra.mxu0 %v2305
  %v2404 = vpop.f32.mrf.mxu0
  %v2405 = vadd.f32 0.0, %v2404
  %2406 = vmatmul.f32.gmra.mxu0 %v2307
  %v2407 = vpop.f32.mrf.mxu0
  %v2408 = vadd.f32 0.0, %v2407
  %2409 = vmatmul.f32.gmra.mxu0 %v2309
  %v2410 = vpop.f32.mrf.mxu0
  %v2411 = vadd.f32 0.0, %v2410
  %2412 = vmatmul.f32.gmra.mxu0 %v2311
  %v2413 = vpop.f32.mrf.mxu0
  %v2414 = vadd.f32 0.0, %v2413
  %2415 = vmatmul.f32.gmra.mxu0 %v2313
  %v2416 = vpop.f32.mrf.mxu0
  %v2417 = vadd.f32 0.0, %v2416
  %2418 = vmatmul.f32.gmra.mxu0 %v2315
  %v2419 = vpop.f32.mrf.mxu0
  %v2420 = vadd.f32 0.0, %v2419
  %2421 = vmatmul.f32.gmra.mxu0 %v2317
  %v2422 = vpop.f32.mrf.mxu0
  %v2423 = vadd.f32 0.0, %v2422
  %2424 = vmatmul.f32.gmra.mxu0 %v2319
  %v2425 = vpop.f32.mrf.mxu0
  %v2426 = vadd.f32 0.0, %v2425
  %2427 = vmatmul.f32.gmra.mxu0 %v2321
  %v2428 = vpop.f32.mrf.mxu0
  %v2429 = vadd.f32 0.0, %v2428
  %2430 = vmatmul.f32.gmra.mxu0 %v2323
  %v2431 = vpop.f32.mrf.mxu0
  %v2432 = vadd.f32 0.0, %v2431
  %2433 = vmatmul.f32.gmra.mxu0 %v2325
  %v2434 = vpop.f32.mrf.mxu0
  %v2435 = vadd.f32 0.0, %v2434
  %2436 = vmatmul.f32.gmra.mxu0 %v2327
  %v2437 = vpop.f32.mrf.mxu0
  %v2438 = vadd.f32 0.0, %v2437
  %2439 = vmatmul.f32.gmra.mxu0 %v2329
  %v2440 = vpop.f32.mrf.mxu0
  %v2441 = vadd.f32 0.0, %v2440
  %2442 = vmatmul.f32.gmra.mxu0 %v2331
  %v2443 = vpop.f32.mrf.mxu0
  %v2444 = vadd.f32 0.0, %v2443
  %2445 = vdwg.mxu0
  %2446 = vmatpush.msra.mxu0 %v1368
  %2447 = vmatpush.msra.mxu0 %v1365
  %2448 = vmatpush.msra.mxu0 %v1362
  %2449 = vmatpush.msra.mxu0 %v1359
  %2450 = vmatpush.msra.mxu0 %v1356
  %2451 = vmatpush.msra.mxu0 %v1353
  %2452 = vmatpush.msra.mxu0 %v1350
  %2453 = vmatpush.msra.mxu0 %v1347
  %2454 = vmatpush.msra.mxu0 %v1344
  %2455 = vmatpush.msra.mxu0 %v1341
  %2456 = vmatpush.msra.mxu0 %v1338
  %2457 = vmatpush.msra.mxu0 %v1335
  %2458 = vmatpush.msra.mxu0 %v1332
  %2459 = vmatpush.msra.mxu0 %v1329
  %2460 = vmatpush.msra.mxu0 %v1326
  %2461 = vmatpush.msra.mxu0 %v1323
  %2462 = vmatmul.f32.gmra.mxu0 %v2270
  %v2463 = vpop.f32.mrf.mxu0
  %v2464 = vadd.f32 %v2351, %v2463
  %2465 = vmatmul.f32.gmra.mxu0 %v2272
  %v2466 = vpop.f32.mrf.mxu0
  %v2467 = vadd.f32 %v2354, %v2466
  %2468 = vmatmul.f32.gmra.mxu0 %v2274
  %v2469 = vpop.f32.mrf.mxu0
  %v2470 = vadd.f32 %v2357, %v2469
  %2471 = vmatmul.f32.gmra.mxu0 %v2276
  %v2472 = vpop.f32.mrf.mxu0
  %v2473 = vadd.f32 %v2360, %v2472
  %2474 = vmatmul.f32.gmra.mxu0 %v2278
  %v2475 = vpop.f32.mrf.mxu0
  %v2476 = vadd.f32 %v2363, %v2475
  %2477 = vmatmul.f32.gmra.mxu0 %v2280
  %v2478 = vpop.f32.mrf.mxu0
  %v2479 = vadd.f32 %v2366, %v2478
  %2480 = vmatmul.f32.gmra.mxu0 %v2282
  %v2481 = vpop.f32.mrf.mxu0
  %v2482 = vadd.f32 %v2369, %v2481
  %2483 = vmatmul.f32.gmra.mxu0 %v2284
  %v2484 = vpop.f32.mrf.mxu0
  %v2485 = vadd.f32 %v2372, %v2484
  %2486 = vmatmul.f32.gmra.mxu0 %v2286
  %v2487 = vpop.f32.mrf.mxu0
  %v2488 = vadd.f32 %v2375, %v2487
  %2489 = vmatmul.f32.gmra.mxu0 %v2288
  %v2490 = vpop.f32.mrf.mxu0
  %v2491 = vadd.f32 %v2378, %v2490
  %2492 = vmatmul.f32.gmra.mxu0 %v2290
  %v2493 = vpop.f32.mrf.mxu0
  %v2494 = vadd.f32 %v2381, %v2493
  %2495 = vmatmul.f32.gmra.mxu0 %v2292
  %v2496 = vpop.f32.mrf.mxu0
  %v2497 = vadd.f32 %v2384, %v2496
  %2498 = vmatmul.f32.gmra.mxu0 %v2294
  %v2499 = vpop.f32.mrf.mxu0
  %v2500 = vadd.f32 %v2387, %v2499
  %2501 = vmatmul.f32.gmra.mxu0 %v2296
  %v2502 = vpop.f32.mrf.mxu0
  %v2503 = vadd.f32 %v2390, %v2502
  %2504 = vmatmul.f32.gmra.mxu0 %v2298
  %v2505 = vpop.f32.mrf.mxu0
  %v2506 = vadd.f32 %v2393, %v2505
  %2507 = vmatmul.f32.gmra.mxu0 %v2300
  %v2508 = vpop.f32.mrf.mxu0
  %v2509 = vadd.f32 %v2396, %v2508
  %2510 = vmatmul.f32.gmra.mxu0 %v2302
  %v2511 = vpop.f32.mrf.mxu0
  %v2512 = vadd.f32 %v2399, %v2511
  %2513 = vmatmul.f32.gmra.mxu0 %v2304
  %v2514 = vpop.f32.mrf.mxu0
  %v2515 = vadd.f32 %v2402, %v2514
  %2516 = vmatmul.f32.gmra.mxu0 %v2306
  %v2517 = vpop.f32.mrf.mxu0
  %v2518 = vadd.f32 %v2405, %v2517
  %2519 = vmatmul.f32.gmra.mxu0 %v2308
  %v2520 = vpop.f32.mrf.mxu0
  %v2521 = vadd.f32 %v2408, %v2520
  %2522 = vmatmul.f32.gmra.mxu0 %v2310
  %v2523 = vpop.f32.mrf.mxu0
  %v2524 = vadd.f32 %v2411, %v2523
  %2525 = vmatmul.f32.gmra.mxu0 %v2312
  %v2526 = vpop.f32.mrf.mxu0
  %v2527 = vadd.f32 %v2414, %v2526
  %2528 = vmatmul.f32.gmra.mxu0 %v2314
  %v2529 = vpop.f32.mrf.mxu0
  %v2530 = vadd.f32 %v2417, %v2529
  %2531 = vmatmul.f32.gmra.mxu0 %v2316
  %v2532 = vpop.f32.mrf.mxu0
  %v2533 = vadd.f32 %v2420, %v2532
  %2534 = vmatmul.f32.gmra.mxu0 %v2318
  %v2535 = vpop.f32.mrf.mxu0
  %v2536 = vadd.f32 %v2423, %v2535
  %2537 = vmatmul.f32.gmra.mxu0 %v2320
  %v2538 = vpop.f32.mrf.mxu0
  %v2539 = vadd.f32 %v2426, %v2538
  %2540 = vmatmul.f32.gmra.mxu0 %v2322
  %v2541 = vpop.f32.mrf.mxu0
  %v2542 = vadd.f32 %v2429, %v2541
  %2543 = vmatmul.f32.gmra.mxu0 %v2324
  %v2544 = vpop.f32.mrf.mxu0
  %v2545 = vadd.f32 %v2432, %v2544
  %2546 = vmatmul.f32.gmra.mxu0 %v2326
  %v2547 = vpop.f32.mrf.mxu0
  %v2548 = vadd.f32 %v2435, %v2547
  %2549 = vmatmul.f32.gmra.mxu0 %v2328
  %v2550 = vpop.f32.mrf.mxu0
  %v2551 = vadd.f32 %v2438, %v2550
  %2552 = vmatmul.f32.gmra.mxu0 %v2330
  %v2553 = vpop.f32.mrf.mxu0
  %v2554 = vadd.f32 %v2441, %v2553
  %2555 = vmatmul.f32.gmra.mxu0 %v2332
  %v2556 = vpop.f32.mrf.mxu0
  %v2557 = vadd.f32 %v2444, %v2556
  %2558 = vdwg.mxu0
  %v2559 = vld [vmem:[%s7] sm:$0xff]
  %s2560 = scalar_lea.vmem %s4, 32
  %v2561 = vld [vmem:[%s2560] sm:$0xff]
  %v2562 = vld [vmem:[%s2560 + $0x8] sm:$0xff]
  %v2563 = vld [vmem:[%s2560 + $0x10] sm:$0xff]
  %v2564 = vld [vmem:[%s2560 + $0x18] sm:$0xff]
  %2565 = vmatpush.msra.mxu0 0.0
  %2566 = vmatpush.msra.mxu0 0.0
  %2567 = vmatpush.msra.mxu0 0.0
  %2568 = vmatpush.msra.mxu0 0.0
  %2569 = vmatpush.msra.mxu0 0.0
  %2570 = vmatpush.msra.mxu0 0.0
  %2571 = vmatpush.msra.mxu0 0.0
  %2572 = vmatpush.msra.mxu0 0.0
  %2573 = vmatpush.msra.mxu0 0.0
  %2574 = vmatpush.msra.mxu0 0.0
  %2575 = vmatpush.msra.mxu0 0.0
  %2576 = vmatpush.msra.mxu0 0.0
  %2577 = vmatpush.msra.mxu0 %v2564
  %2578 = vmatpush.msra.mxu0 %v2563
  %2579 = vmatpush.msra.mxu0 %v2562
  %2580 = vmatpush.msra.mxu0 %v2561
  %2581 = vmatmul.f32.gmra.mxu0 %v928
  %v2582 = vpop.f32.mrf.mxu0
  %v2583 = vadd.f32 0.0, %v2582
  %2584 = vmatmul.f32.gmra.mxu0 %v931
  %v2585 = vpop.f32.mrf.mxu0
  %v2586 = vadd.f32 0.0, %v2585
  %2587 = vmatmul.f32.gmra.mxu0 %v934
  %v2588 = vpop.f32.mrf.mxu0
  %v2589 = vadd.f32 0.0, %v2588
  %2590 = vmatmul.f32.gmra.mxu0 %v937
  %v2591 = vpop.f32.mrf.mxu0
  %v2592 = vadd.f32 0.0, %v2591
  %2593 = vmatmul.f32.gmra.mxu0 %v940
  %v2594 = vpop.f32.mrf.mxu0
  %v2595 = vadd.f32 0.0, %v2594
  %2596 = vmatmul.f32.gmra.mxu0 %v943
  %v2597 = vpop.f32.mrf.mxu0
  %v2598 = vadd.f32 0.0, %v2597
  %2599 = vmatmul.f32.gmra.mxu0 %v946
  %v2600 = vpop.f32.mrf.mxu0
  %v2601 = vadd.f32 0.0, %v2600
  %2602 = vmatmul.f32.gmra.mxu0 %v949
  %v2603 = vpop.f32.mrf.mxu0
  %v2604 = vadd.f32 0.0, %v2603
  %2605 = vmatmul.f32.gmra.mxu0 %v952
  %v2606 = vpop.f32.mrf.mxu0
  %v2607 = vadd.f32 0.0, %v2606
  %2608 = vmatmul.f32.gmra.mxu0 %v955
  %v2609 = vpop.f32.mrf.mxu0
  %v2610 = vadd.f32 0.0, %v2609
  %2611 = vmatmul.f32.gmra.mxu0 %v958
  %v2612 = vpop.f32.mrf.mxu0
  %v2613 = vadd.f32 0.0, %v2612
  %2614 = vmatmul.f32.gmra.mxu0 %v961
  %v2615 = vpop.f32.mrf.mxu0
  %v2616 = vadd.f32 0.0, %v2615
  %2617 = vmatmul.f32.gmra.mxu0 %v964
  %v2618 = vpop.f32.mrf.mxu0
  %v2619 = vadd.f32 0.0, %v2618
  %2620 = vmatmul.f32.gmra.mxu0 %v967
  %v2621 = vpop.f32.mrf.mxu0
  %v2622 = vadd.f32 0.0, %v2621
  %2623 = vmatmul.f32.gmra.mxu0 %v970
  %v2624 = vpop.f32.mrf.mxu0
  %v2625 = vadd.f32 0.0, %v2624
  %2626 = vmatmul.f32.gmra.mxu0 %v973
  %v2627 = vpop.f32.mrf.mxu0
  %v2628 = vadd.f32 0.0, %v2627
  %2629 = vmatmul.f32.gmra.mxu0 %v976
  %v2630 = vpop.f32.mrf.mxu0
  %v2631 = vadd.f32 0.0, %v2630
  %2632 = vmatmul.f32.gmra.mxu0 %v979
  %v2633 = vpop.f32.mrf.mxu0
  %v2634 = vadd.f32 0.0, %v2633
  %2635 = vmatmul.f32.gmra.mxu0 %v982
  %v2636 = vpop.f32.mrf.mxu0
  %v2637 = vadd.f32 0.0, %v2636
  %2638 = vmatmul.f32.gmra.mxu0 %v985
  %v2639 = vpop.f32.mrf.mxu0
  %v2640 = vadd.f32 0.0, %v2639
  %2641 = vmatmul.f32.gmra.mxu0 %v988
  %v2642 = vpop.f32.mrf.mxu0
  %v2643 = vadd.f32 0.0, %v2642
  %2644 = vmatmul.f32.gmra.mxu0 %v991
  %v2645 = vpop.f32.mrf.mxu0
  %v2646 = vadd.f32 0.0, %v2645
  %2647 = vmatmul.f32.gmra.mxu0 %v994
  %v2648 = vpop.f32.mrf.mxu0
  %v2649 = vadd.f32 0.0, %v2648
  %2650 = vmatmul.f32.gmra.mxu0 %v997
  %v2651 = vpop.f32.mrf.mxu0
  %v2652 = vadd.f32 0.0, %v2651
  %2653 = vmatmul.f32.gmra.mxu0 %v1000
  %v2654 = vpop.f32.mrf.mxu0
  %v2655 = vadd.f32 0.0, %v2654
  %2656 = vmatmul.f32.gmra.mxu0 %v1003
  %v2657 = vpop.f32.mrf.mxu0
  %v2658 = vadd.f32 0.0, %v2657
  %2659 = vmatmul.f32.gmra.mxu0 %v1006
  %v2660 = vpop.f32.mrf.mxu0
  %v2661 = vadd.f32 0.0, %v2660
  %2662 = vmatmul.f32.gmra.mxu0 %v1009
  %v2663 = vpop.f32.mrf.mxu0
  %v2664 = vadd.f32 0.0, %v2663
  %2665 = vmatmul.f32.gmra.mxu0 %v1012
  %v2666 = vpop.f32.mrf.mxu0
  %v2667 = vadd.f32 0.0, %v2666
  %2668 = vmatmul.f32.gmra.mxu0 %v1015
  %v2669 = vpop.f32.mrf.mxu0
  %v2670 = vadd.f32 0.0, %v2669
  %2671 = vmatmul.f32.gmra.mxu0 %v1018
  %v2672 = vpop.f32.mrf.mxu0
  %v2673 = vadd.f32 0.0, %v2672
  %2674 = vmatmul.f32.gmra.mxu0 %v1021
  %v2675 = vpop.f32.mrf.mxu0
  %v2676 = vadd.f32 0.0, %v2675
  %2677 = vdwg.mxu0
  %s2678 = scalar_lea.vmem %s5, 32
  %v2679 = vld [vmem:[%s2678] sm:$0xff]
  %v2680 = vld [vmem:[%s2678 + $0x8] sm:$0xff]
  %v2681 = vld [vmem:[%s2678 + $0x10] sm:$0xff]
  %v2682 = vld [vmem:[%s2678 + $0x18] sm:$0xff]
  %2683 = vmatpush.msra.mxu0 0.0
  %2684 = vmatpush.msra.mxu0 0.0
  %2685 = vmatpush.msra.mxu0 0.0
  %2686 = vmatpush.msra.mxu0 0.0
  %2687 = vmatpush.msra.mxu0 0.0
  %2688 = vmatpush.msra.mxu0 0.0
  %2689 = vmatpush.msra.mxu0 0.0
  %2690 = vmatpush.msra.mxu0 0.0
  %2691 = vmatpush.msra.mxu0 0.0
  %2692 = vmatpush.msra.mxu0 0.0
  %2693 = vmatpush.msra.mxu0 0.0
  %2694 = vmatpush.msra.mxu0 0.0
  %2695 = vmatpush.msra.mxu0 %v2682
  %2696 = vmatpush.msra.mxu0 %v2681
  %2697 = vmatpush.msra.mxu0 %v2680
  %2698 = vmatpush.msra.mxu0 %v2679
  %2699 = vmatmul.f32.gmra.mxu0 %v928
  %v2700 = vpop.f32.mrf.mxu0
  %v2701 = vadd.f32 0.0, %v2700
  %2702 = vmatmul.f32.gmra.mxu0 %v931
  %v2703 = vpop.f32.mrf.mxu0
  %v2704 = vadd.f32 0.0, %v2703
  %2705 = vmatmul.f32.gmra.mxu0 %v934
  %v2706 = vpop.f32.mrf.mxu0
  %v2707 = vadd.f32 0.0, %v2706
  %2708 = vmatmul.f32.gmra.mxu0 %v937
  %v2709 = vpop.f32.mrf.mxu0
  %v2710 = vadd.f32 0.0, %v2709
  %2711 = vmatmul.f32.gmra.mxu0 %v940
  %v2712 = vpop.f32.mrf.mxu0
  %v2713 = vadd.f32 0.0, %v2712
  %2714 = vmatmul.f32.gmra.mxu0 %v943
  %v2715 = vpop.f32.mrf.mxu0
  %v2716 = vadd.f32 0.0, %v2715
  %2717 = vmatmul.f32.gmra.mxu0 %v946
  %v2718 = vpop.f32.mrf.mxu0
  %v2719 = vadd.f32 0.0, %v2718
  %2720 = vmatmul.f32.gmra.mxu0 %v949
  %v2721 = vpop.f32.mrf.mxu0
  %v2722 = vadd.f32 0.0, %v2721
  %2723 = vmatmul.f32.gmra.mxu0 %v952
  %v2724 = vpop.f32.mrf.mxu0
  %v2725 = vadd.f32 0.0, %v2724
  %2726 = vmatmul.f32.gmra.mxu0 %v955
  %v2727 = vpop.f32.mrf.mxu0
  %v2728 = vadd.f32 0.0, %v2727
  %2729 = vmatmul.f32.gmra.mxu0 %v958
  %v2730 = vpop.f32.mrf.mxu0
  %v2731 = vadd.f32 0.0, %v2730
  %2732 = vmatmul.f32.gmra.mxu0 %v961
  %v2733 = vpop.f32.mrf.mxu0
  %v2734 = vadd.f32 0.0, %v2733
  %2735 = vmatmul.f32.gmra.mxu0 %v964
  %v2736 = vpop.f32.mrf.mxu0
  %v2737 = vadd.f32 0.0, %v2736
  %2738 = vmatmul.f32.gmra.mxu0 %v967
  %v2739 = vpop.f32.mrf.mxu0
  %v2740 = vadd.f32 0.0, %v2739
  %2741 = vmatmul.f32.gmra.mxu0 %v970
  %v2742 = vpop.f32.mrf.mxu0
  %v2743 = vadd.f32 0.0, %v2742
  %2744 = vmatmul.f32.gmra.mxu0 %v973
  %v2745 = vpop.f32.mrf.mxu0
  %v2746 = vadd.f32 0.0, %v2745
  %2747 = vmatmul.f32.gmra.mxu0 %v976
  %v2748 = vpop.f32.mrf.mxu0
  %v2749 = vadd.f32 0.0, %v2748
  %2750 = vmatmul.f32.gmra.mxu0 %v979
  %v2751 = vpop.f32.mrf.mxu0
  %v2752 = vadd.f32 0.0, %v2751
  %2753 = vmatmul.f32.gmra.mxu0 %v982
  %v2754 = vpop.f32.mrf.mxu0
  %v2755 = vadd.f32 0.0, %v2754
  %2756 = vmatmul.f32.gmra.mxu0 %v985
  %v2757 = vpop.f32.mrf.mxu0
  %v2758 = vadd.f32 0.0, %v2757
  %2759 = vmatmul.f32.gmra.mxu0 %v988
  %v2760 = vpop.f32.mrf.mxu0
  %v2761 = vadd.f32 0.0, %v2760
  %2762 = vmatmul.f32.gmra.mxu0 %v991
  %v2763 = vpop.f32.mrf.mxu0
  %v2764 = vadd.f32 0.0, %v2763
  %2765 = vmatmul.f32.gmra.mxu0 %v994
  %v2766 = vpop.f32.mrf.mxu0
  %v2767 = vadd.f32 0.0, %v2766
  %2768 = vmatmul.f32.gmra.mxu0 %v997
  %v2769 = vpop.f32.mrf.mxu0
  %v2770 = vadd.f32 0.0, %v2769
  %2771 = vmatmul.f32.gmra.mxu0 %v1000
  %v2772 = vpop.f32.mrf.mxu0
  %v2773 = vadd.f32 0.0, %v2772
  %2774 = vmatmul.f32.gmra.mxu0 %v1003
  %v2775 = vpop.f32.mrf.mxu0
  %v2776 = vadd.f32 0.0, %v2775
  %2777 = vmatmul.f32.gmra.mxu0 %v1006
  %v2778 = vpop.f32.mrf.mxu0
  %v2779 = vadd.f32 0.0, %v2778
  %2780 = vmatmul.f32.gmra.mxu0 %v1009
  %v2781 = vpop.f32.mrf.mxu0
  %v2782 = vadd.f32 0.0, %v2781
  %2783 = vmatmul.f32.gmra.mxu0 %v1012
  %v2784 = vpop.f32.mrf.mxu0
  %v2785 = vadd.f32 0.0, %v2784
  %2786 = vmatmul.f32.gmra.mxu0 %v1015
  %v2787 = vpop.f32.mrf.mxu0
  %v2788 = vadd.f32 0.0, %v2787
  %2789 = vmatmul.f32.gmra.mxu0 %v1018
  %v2790 = vpop.f32.mrf.mxu0
  %v2791 = vadd.f32 0.0, %v2790
  %2792 = vmatmul.f32.gmra.mxu0 %v1021
  %v2793 = vpop.f32.mrf.mxu0
  %v2794 = vadd.f32 0.0, %v2793
  %2795 = vdwg.mxu0
  %s2796 = scalar_lea.vmem %s6, 32
  %v2797 = vld [vmem:[%s2796] sm:$0xff]
  %v2798 = vld [vmem:[%s2796 + $0x8] sm:$0xff]
  %v2799 = vld [vmem:[%s2796 + $0x10] sm:$0xff]
  %v2800 = vld [vmem:[%s2796 + $0x18] sm:$0xff]
  %2801 = vmatpush.msra.mxu0 0.0
  %2802 = vmatpush.msra.mxu0 0.0
  %2803 = vmatpush.msra.mxu0 0.0
  %2804 = vmatpush.msra.mxu0 0.0
  %2805 = vmatpush.msra.mxu0 0.0
  %2806 = vmatpush.msra.mxu0 0.0
  %2807 = vmatpush.msra.mxu0 0.0
  %2808 = vmatpush.msra.mxu0 0.0
  %2809 = vmatpush.msra.mxu0 0.0
  %2810 = vmatpush.msra.mxu0 0.0
  %2811 = vmatpush.msra.mxu0 0.0
  %2812 = vmatpush.msra.mxu0 0.0
  %2813 = vmatpush.msra.mxu0 %v2800
  %2814 = vmatpush.msra.mxu0 %v2799
  %2815 = vmatpush.msra.mxu0 %v2798
  %2816 = vmatpush.msra.mxu0 %v2797
  %2817 = vmatmul.f32.gmra.mxu0 %v928
  %v2818 = vpop.f32.mrf.mxu0
  %v2819 = vadd.f32 0.0, %v2818
  %2820 = vmatmul.f32.gmra.mxu0 %v931
  %v2821 = vpop.f32.mrf.mxu0
  %v2822 = vadd.f32 0.0, %v2821
  %2823 = vmatmul.f32.gmra.mxu0 %v934
  %v2824 = vpop.f32.mrf.mxu0
  %v2825 = vadd.f32 0.0, %v2824
  %2826 = vmatmul.f32.gmra.mxu0 %v937
  %v2827 = vpop.f32.mrf.mxu0
  %v2828 = vadd.f32 0.0, %v2827
  %2829 = vmatmul.f32.gmra.mxu0 %v940
  %v2830 = vpop.f32.mrf.mxu0
  %v2831 = vadd.f32 0.0, %v2830
  %2832 = vmatmul.f32.gmra.mxu0 %v943
  %v2833 = vpop.f32.mrf.mxu0
  %v2834 = vadd.f32 0.0, %v2833
  %2835 = vmatmul.f32.gmra.mxu0 %v946
  %v2836 = vpop.f32.mrf.mxu0
  %v2837 = vadd.f32 0.0, %v2836
  %2838 = vmatmul.f32.gmra.mxu0 %v949
  %v2839 = vpop.f32.mrf.mxu0
  %v2840 = vadd.f32 0.0, %v2839
  %2841 = vmatmul.f32.gmra.mxu0 %v952
  %v2842 = vpop.f32.mrf.mxu0
  %v2843 = vadd.f32 0.0, %v2842
  %2844 = vmatmul.f32.gmra.mxu0 %v955
  %v2845 = vpop.f32.mrf.mxu0
  %v2846 = vadd.f32 0.0, %v2845
  %2847 = vmatmul.f32.gmra.mxu0 %v958
  %v2848 = vpop.f32.mrf.mxu0
  %v2849 = vadd.f32 0.0, %v2848
  %2850 = vmatmul.f32.gmra.mxu0 %v961
  %v2851 = vpop.f32.mrf.mxu0
  %v2852 = vadd.f32 0.0, %v2851
  %2853 = vmatmul.f32.gmra.mxu0 %v964
  %v2854 = vpop.f32.mrf.mxu0
  %v2855 = vadd.f32 0.0, %v2854
  %2856 = vmatmul.f32.gmra.mxu0 %v967
  %v2857 = vpop.f32.mrf.mxu0
  %v2858 = vadd.f32 0.0, %v2857
  %2859 = vmatmul.f32.gmra.mxu0 %v970
  %v2860 = vpop.f32.mrf.mxu0
  %v2861 = vadd.f32 0.0, %v2860
  %2862 = vmatmul.f32.gmra.mxu0 %v973
  %v2863 = vpop.f32.mrf.mxu0
  %v2864 = vadd.f32 0.0, %v2863
  %2865 = vmatmul.f32.gmra.mxu0 %v976
  %v2866 = vpop.f32.mrf.mxu0
  %v2867 = vadd.f32 0.0, %v2866
  %2868 = vmatmul.f32.gmra.mxu0 %v979
  %v2869 = vpop.f32.mrf.mxu0
  %v2870 = vadd.f32 0.0, %v2869
  %2871 = vmatmul.f32.gmra.mxu0 %v982
  %v2872 = vpop.f32.mrf.mxu0
  %v2873 = vadd.f32 0.0, %v2872
  %2874 = vmatmul.f32.gmra.mxu0 %v985
  %v2875 = vpop.f32.mrf.mxu0
  %v2876 = vadd.f32 0.0, %v2875
  %2877 = vmatmul.f32.gmra.mxu0 %v988
  %v2878 = vpop.f32.mrf.mxu0
  %v2879 = vadd.f32 0.0, %v2878
  %2880 = vmatmul.f32.gmra.mxu0 %v991
  %v2881 = vpop.f32.mrf.mxu0
  %v2882 = vadd.f32 0.0, %v2881
  %2883 = vmatmul.f32.gmra.mxu0 %v994
  %v2884 = vpop.f32.mrf.mxu0
  %v2885 = vadd.f32 0.0, %v2884
  %2886 = vmatmul.f32.gmra.mxu0 %v997
  %v2887 = vpop.f32.mrf.mxu0
  %v2888 = vadd.f32 0.0, %v2887
  %2889 = vmatmul.f32.gmra.mxu0 %v1000
  %v2890 = vpop.f32.mrf.mxu0
  %v2891 = vadd.f32 0.0, %v2890
  %2892 = vmatmul.f32.gmra.mxu0 %v1003
  %v2893 = vpop.f32.mrf.mxu0
  %v2894 = vadd.f32 0.0, %v2893
  %2895 = vmatmul.f32.gmra.mxu0 %v1006
  %v2896 = vpop.f32.mrf.mxu0
  %v2897 = vadd.f32 0.0, %v2896
  %2898 = vmatmul.f32.gmra.mxu0 %v1009
  %v2899 = vpop.f32.mrf.mxu0
  %v2900 = vadd.f32 0.0, %v2899
  %2901 = vmatmul.f32.gmra.mxu0 %v1012
  %v2902 = vpop.f32.mrf.mxu0
  %v2903 = vadd.f32 0.0, %v2902
  %2904 = vmatmul.f32.gmra.mxu0 %v1015
  %v2905 = vpop.f32.mrf.mxu0
  %v2906 = vadd.f32 0.0, %v2905
  %2907 = vmatmul.f32.gmra.mxu0 %v1018
  %v2908 = vpop.f32.mrf.mxu0
  %v2909 = vadd.f32 0.0, %v2908
  %2910 = vmatmul.f32.gmra.mxu0 %v1021
  %v2911 = vpop.f32.mrf.mxu0
  %v2912 = vadd.f32 0.0, %v2911
  %2913 = vdwg.mxu0
  %v2915 = vsel %vm1370, %v2583, 0
  %v2918 = vsel %vm1370, %v2586, 0
  %v2921 = vsel %vm1370, %v2589, 0
  %v2924 = vsel %vm1370, %v2592, 0
  %v2927 = vsel %vm1370, %v2595, 0
  %v2930 = vsel %vm1370, %v2598, 0
  %v2933 = vsel %vm1370, %v2601, 0
  %v2936 = vsel %vm1370, %v2604, 0
  %v2939 = vsel %vm1370, %v2607, 0
  %v2942 = vsel %vm1370, %v2610, 0
  %v2945 = vsel %vm1370, %v2613, 0
  %v2948 = vsel %vm1370, %v2616, 0
  %v2951 = vsel %vm1370, %v2619, 0
  %v2954 = vsel %vm1370, %v2622, 0
  %v2957 = vsel %vm1370, %v2625, 0
  %v2960 = vsel %vm1370, %v2628, 0
  %v2963 = vsel %vm1370, %v2631, 0
  %v2966 = vsel %vm1370, %v2634, 0
  %v2969 = vsel %vm1370, %v2637, 0
  %v2972 = vsel %vm1370, %v2640, 0
  %v2975 = vsel %vm1370, %v2643, 0
  %v2978 = vsel %vm1370, %v2646, 0
  %v2981 = vsel %vm1370, %v2649, 0
  %v2984 = vsel %vm1370, %v2652, 0
  %v2987 = vsel %vm1370, %v2655, 0
  %v2990 = vsel %vm1370, %v2658, 0
  %v2993 = vsel %vm1370, %v2661, 0
  %v2996 = vsel %vm1370, %v2664, 0
  %v2999 = vsel %vm1370, %v2667, 0
  %v3002 = vsel %vm1370, %v2670, 0
  %v3005 = vsel %vm1370, %v2673, 0
  %v3008 = vsel %vm1370, %v2676, 0
  %v3011 = vsel %vm1370, %v2701, 0
  %v3014 = vsel %vm1370, %v2704, 0
  %v3017 = vsel %vm1370, %v2707, 0
  %v3020 = vsel %vm1370, %v2710, 0
  %v3023 = vsel %vm1370, %v2713, 0
  %v3026 = vsel %vm1370, %v2716, 0
  %v3029 = vsel %vm1370, %v2719, 0
  %v3032 = vsel %vm1370, %v2722, 0
  %v3035 = vsel %vm1370, %v2725, 0
  %v3038 = vsel %vm1370, %v2728, 0
  %v3041 = vsel %vm1370, %v2731, 0
  %v3044 = vsel %vm1370, %v2734, 0
  %v3047 = vsel %vm1370, %v2737, 0
  %v3050 = vsel %vm1370, %v2740, 0
  %v3053 = vsel %vm1370, %v2743, 0
  %v3056 = vsel %vm1370, %v2746, 0
  %v3059 = vsel %vm1370, %v2749, 0
  %v3062 = vsel %vm1370, %v2752, 0
  %v3065 = vsel %vm1370, %v2755, 0
  %v3068 = vsel %vm1370, %v2758, 0
  %v3071 = vsel %vm1370, %v2761, 0
  %v3074 = vsel %vm1370, %v2764, 0
  %v3077 = vsel %vm1370, %v2767, 0
  %v3080 = vsel %vm1370, %v2770, 0
  %v3083 = vsel %vm1370, %v2773, 0
  %v3086 = vsel %vm1370, %v2776, 0
  %v3089 = vsel %vm1370, %v2779, 0
  %v3092 = vsel %vm1370, %v2782, 0
  %v3095 = vsel %vm1370, %v2785, 0
  %v3098 = vsel %vm1370, %v2788, 0
  %v3101 = vsel %vm1370, %v2791, 0
  %v3104 = vsel %vm1370, %v2794, 0
  %3106 = vmatpush.xpose.msra.mxu0 %v3056
  %3107 = vmatpush.xpose.msra.mxu0 %v3053
  %3108 = vmatpush.xpose.msra.mxu0 %v3050
  %3109 = vmatpush.xpose.msra.mxu0 %v3047
  %3110 = vmatpush.xpose.msra.mxu0 %v3044
  %3111 = vmatpush.xpose.msra.mxu0 %v3041
  %3112 = vmatpush.xpose.msra.mxu0 %v3038
  %3113 = vmatpush.xpose.msra.mxu0 %v3035
  %3114 = vmatpush.xpose.msra.mxu0 %v3032
  %3115 = vmatpush.xpose.msra.mxu0 %v3029
  %3116 = vmatpush.xpose.msra.mxu0 %v3026
  %3117 = vmatpush.xpose.msra.mxu0 %v3023
  %3118 = vmatpush.xpose.msra.mxu0 %v3020
  %3119 = vmatpush.xpose.msra.mxu0 %v3017
  %3120 = vmatpush.xpose.msra.mxu0 %v3014
  %3121 = vmatpush.xpose.msra.mxu0 %v3011
  %3122 = vmatmul.f32.gmra.mxu0 %v2915
  %v3123 = vpop.f32.mrf.mxu0
  %v3124 = vadd.f32 0.0, %v3123
  %3125 = vmatmul.f32.gmra.mxu0 %v2918
  %v3126 = vpop.f32.mrf.mxu0
  %v3127 = vadd.f32 0.0, %v3126
  %3128 = vmatmul.f32.gmra.mxu0 %v2921
  %v3129 = vpop.f32.mrf.mxu0
  %v3130 = vadd.f32 0.0, %v3129
  %3131 = vmatmul.f32.gmra.mxu0 %v2924
  %v3132 = vpop.f32.mrf.mxu0
  %v3133 = vadd.f32 0.0, %v3132
  %3134 = vmatmul.f32.gmra.mxu0 %v2927
  %v3135 = vpop.f32.mrf.mxu0
  %v3136 = vadd.f32 0.0, %v3135
  %3137 = vmatmul.f32.gmra.mxu0 %v2930
  %v3138 = vpop.f32.mrf.mxu0
  %v3139 = vadd.f32 0.0, %v3138
  %3140 = vmatmul.f32.gmra.mxu0 %v2933
  %v3141 = vpop.f32.mrf.mxu0
  %v3142 = vadd.f32 0.0, %v3141
  %3143 = vmatmul.f32.gmra.mxu0 %v2936
  %v3144 = vpop.f32.mrf.mxu0
  %v3145 = vadd.f32 0.0, %v3144
  %3146 = vmatmul.f32.gmra.mxu0 %v2939
  %v3147 = vpop.f32.mrf.mxu0
  %v3148 = vadd.f32 0.0, %v3147
  %3149 = vmatmul.f32.gmra.mxu0 %v2942
  %v3150 = vpop.f32.mrf.mxu0
  %v3151 = vadd.f32 0.0, %v3150
  %3152 = vmatmul.f32.gmra.mxu0 %v2945
  %v3153 = vpop.f32.mrf.mxu0
  %v3154 = vadd.f32 0.0, %v3153
  %3155 = vmatmul.f32.gmra.mxu0 %v2948
  %v3156 = vpop.f32.mrf.mxu0
  %v3157 = vadd.f32 0.0, %v3156
  %3158 = vmatmul.f32.gmra.mxu0 %v2951
  %v3159 = vpop.f32.mrf.mxu0
  %v3160 = vadd.f32 0.0, %v3159
  %3161 = vmatmul.f32.gmra.mxu0 %v2954
  %v3162 = vpop.f32.mrf.mxu0
  %v3163 = vadd.f32 0.0, %v3162
  %3164 = vmatmul.f32.gmra.mxu0 %v2957
  %v3165 = vpop.f32.mrf.mxu0
  %v3166 = vadd.f32 0.0, %v3165
  %3167 = vmatmul.f32.gmra.mxu0 %v2960
  %v3168 = vpop.f32.mrf.mxu0
  %v3169 = vadd.f32 0.0, %v3168
  %3170 = vmatmul.f32.gmra.mxu0 %v2963
  %v3171 = vpop.f32.mrf.mxu0
  %v3172 = vadd.f32 0.0, %v3171
  %3173 = vmatmul.f32.gmra.mxu0 %v2966
  %v3174 = vpop.f32.mrf.mxu0
  %v3175 = vadd.f32 0.0, %v3174
  %3176 = vmatmul.f32.gmra.mxu0 %v2969
  %v3177 = vpop.f32.mrf.mxu0
  %v3178 = vadd.f32 0.0, %v3177
  %3179 = vmatmul.f32.gmra.mxu0 %v2972
  %v3180 = vpop.f32.mrf.mxu0
  %v3181 = vadd.f32 0.0, %v3180
  %3182 = vmatmul.f32.gmra.mxu0 %v2975
  %v3183 = vpop.f32.mrf.mxu0
  %v3184 = vadd.f32 0.0, %v3183
  %3185 = vmatmul.f32.gmra.mxu0 %v2978
  %v3186 = vpop.f32.mrf.mxu0
  %v3187 = vadd.f32 0.0, %v3186
  %3188 = vmatmul.f32.gmra.mxu0 %v2981
  %v3189 = vpop.f32.mrf.mxu0
  %v3190 = vadd.f32 0.0, %v3189
  %3191 = vmatmul.f32.gmra.mxu0 %v2984
  %v3192 = vpop.f32.mrf.mxu0
  %v3193 = vadd.f32 0.0, %v3192
  %3194 = vmatmul.f32.gmra.mxu0 %v2987
  %v3195 = vpop.f32.mrf.mxu0
  %v3196 = vadd.f32 0.0, %v3195
  %3197 = vmatmul.f32.gmra.mxu0 %v2990
  %v3198 = vpop.f32.mrf.mxu0
  %v3199 = vadd.f32 0.0, %v3198
  %3200 = vmatmul.f32.gmra.mxu0 %v2993
  %v3201 = vpop.f32.mrf.mxu0
  %v3202 = vadd.f32 0.0, %v3201
  %3203 = vmatmul.f32.gmra.mxu0 %v2996
  %v3204 = vpop.f32.mrf.mxu0
  %v3205 = vadd.f32 0.0, %v3204
  %3206 = vmatmul.f32.gmra.mxu0 %v2999
  %v3207 = vpop.f32.mrf.mxu0
  %v3208 = vadd.f32 0.0, %v3207
  %3209 = vmatmul.f32.gmra.mxu0 %v3002
  %v3210 = vpop.f32.mrf.mxu0
  %v3211 = vadd.f32 0.0, %v3210
  %3212 = vmatmul.f32.gmra.mxu0 %v3005
  %v3213 = vpop.f32.mrf.mxu0
  %v3214 = vadd.f32 0.0, %v3213
  %3215 = vmatmul.f32.gmra.mxu0 %v3008
  %v3216 = vpop.f32.mrf.mxu0
  %v3217 = vadd.f32 0.0, %v3216
  %3218 = vdwg.mxu0
  %3219 = vmatpush.xpose.msra.mxu0 %v3104
  %3220 = vmatpush.xpose.msra.mxu0 %v3101
  %3221 = vmatpush.xpose.msra.mxu0 %v3098
  %3222 = vmatpush.xpose.msra.mxu0 %v3095
  %3223 = vmatpush.xpose.msra.mxu0 %v3092
  %3224 = vmatpush.xpose.msra.mxu0 %v3089
  %3225 = vmatpush.xpose.msra.mxu0 %v3086
  %3226 = vmatpush.xpose.msra.mxu0 %v3083
  %3227 = vmatpush.xpose.msra.mxu0 %v3080
  %3228 = vmatpush.xpose.msra.mxu0 %v3077
  %3229 = vmatpush.xpose.msra.mxu0 %v3074
  %3230 = vmatpush.xpose.msra.mxu0 %v3071
  %3231 = vmatpush.xpose.msra.mxu0 %v3068
  %3232 = vmatpush.xpose.msra.mxu0 %v3065
  %3233 = vmatpush.xpose.msra.mxu0 %v3062
  %3234 = vmatpush.xpose.msra.mxu0 %v3059
  %3235 = vmatmul.f32.gmra.mxu0 %v2915
  %v3236 = vpop.f32.mrf.mxu0
  %v3237 = vadd.f32 0.0, %v3236
  %3238 = vmatmul.f32.gmra.mxu0 %v2918
  %v3239 = vpop.f32.mrf.mxu0
  %v3240 = vadd.f32 0.0, %v3239
  %3241 = vmatmul.f32.gmra.mxu0 %v2921
  %v3242 = vpop.f32.mrf.mxu0
  %v3243 = vadd.f32 0.0, %v3242
  %3244 = vmatmul.f32.gmra.mxu0 %v2924
  %v3245 = vpop.f32.mrf.mxu0
  %v3246 = vadd.f32 0.0, %v3245
  %3247 = vmatmul.f32.gmra.mxu0 %v2927
  %v3248 = vpop.f32.mrf.mxu0
  %v3249 = vadd.f32 0.0, %v3248
  %3250 = vmatmul.f32.gmra.mxu0 %v2930
  %v3251 = vpop.f32.mrf.mxu0
  %v3252 = vadd.f32 0.0, %v3251
  %3253 = vmatmul.f32.gmra.mxu0 %v2933
  %v3254 = vpop.f32.mrf.mxu0
  %v3255 = vadd.f32 0.0, %v3254
  %3256 = vmatmul.f32.gmra.mxu0 %v2936
  %v3257 = vpop.f32.mrf.mxu0
  %v3258 = vadd.f32 0.0, %v3257
  %3259 = vmatmul.f32.gmra.mxu0 %v2939
  %v3260 = vpop.f32.mrf.mxu0
  %v3261 = vadd.f32 0.0, %v3260
  %3262 = vmatmul.f32.gmra.mxu0 %v2942
  %v3263 = vpop.f32.mrf.mxu0
  %v3264 = vadd.f32 0.0, %v3263
  %3265 = vmatmul.f32.gmra.mxu0 %v2945
  %v3266 = vpop.f32.mrf.mxu0
  %v3267 = vadd.f32 0.0, %v3266
  %3268 = vmatmul.f32.gmra.mxu0 %v2948
  %v3269 = vpop.f32.mrf.mxu0
  %v3270 = vadd.f32 0.0, %v3269
  %3271 = vmatmul.f32.gmra.mxu0 %v2951
  %v3272 = vpop.f32.mrf.mxu0
  %v3273 = vadd.f32 0.0, %v3272
  %3274 = vmatmul.f32.gmra.mxu0 %v2954
  %v3275 = vpop.f32.mrf.mxu0
  %v3276 = vadd.f32 0.0, %v3275
  %3277 = vmatmul.f32.gmra.mxu0 %v2957
  %v3278 = vpop.f32.mrf.mxu0
  %v3279 = vadd.f32 0.0, %v3278
  %3280 = vmatmul.f32.gmra.mxu0 %v2960
  %v3281 = vpop.f32.mrf.mxu0
  %v3282 = vadd.f32 0.0, %v3281
  %3283 = vmatmul.f32.gmra.mxu0 %v2963
  %v3284 = vpop.f32.mrf.mxu0
  %v3285 = vadd.f32 0.0, %v3284
  %3286 = vmatmul.f32.gmra.mxu0 %v2966
  %v3287 = vpop.f32.mrf.mxu0
  %v3288 = vadd.f32 0.0, %v3287
  %3289 = vmatmul.f32.gmra.mxu0 %v2969
  %v3290 = vpop.f32.mrf.mxu0
  %v3291 = vadd.f32 0.0, %v3290
  %3292 = vmatmul.f32.gmra.mxu0 %v2972
  %v3293 = vpop.f32.mrf.mxu0
  %v3294 = vadd.f32 0.0, %v3293
  %3295 = vmatmul.f32.gmra.mxu0 %v2975
  %v3296 = vpop.f32.mrf.mxu0
  %v3297 = vadd.f32 0.0, %v3296
  %3298 = vmatmul.f32.gmra.mxu0 %v2978
  %v3299 = vpop.f32.mrf.mxu0
  %v3300 = vadd.f32 0.0, %v3299
  %3301 = vmatmul.f32.gmra.mxu0 %v2981
  %v3302 = vpop.f32.mrf.mxu0
  %v3303 = vadd.f32 0.0, %v3302
  %3304 = vmatmul.f32.gmra.mxu0 %v2984
  %v3305 = vpop.f32.mrf.mxu0
  %v3306 = vadd.f32 0.0, %v3305
  %3307 = vmatmul.f32.gmra.mxu0 %v2987
  %v3308 = vpop.f32.mrf.mxu0
  %v3309 = vadd.f32 0.0, %v3308
  %3310 = vmatmul.f32.gmra.mxu0 %v2990
  %v3311 = vpop.f32.mrf.mxu0
  %v3312 = vadd.f32 0.0, %v3311
  %3313 = vmatmul.f32.gmra.mxu0 %v2993
  %v3314 = vpop.f32.mrf.mxu0
  %v3315 = vadd.f32 0.0, %v3314
  %3316 = vmatmul.f32.gmra.mxu0 %v2996
  %v3317 = vpop.f32.mrf.mxu0
  %v3318 = vadd.f32 0.0, %v3317
  %3319 = vmatmul.f32.gmra.mxu0 %v2999
  %v3320 = vpop.f32.mrf.mxu0
  %v3321 = vadd.f32 0.0, %v3320
  %3322 = vmatmul.f32.gmra.mxu0 %v3002
  %v3323 = vpop.f32.mrf.mxu0
  %v3324 = vadd.f32 0.0, %v3323
  %3325 = vmatmul.f32.gmra.mxu0 %v3005
  %v3326 = vpop.f32.mrf.mxu0
  %v3327 = vadd.f32 0.0, %v3326
  %3328 = vmatmul.f32.gmra.mxu0 %v3008
  %v3329 = vpop.f32.mrf.mxu0
  %v3330 = vadd.f32 0.0, %v3329
  %3331 = vdwg.mxu0
  %v3332 = vmul.f32 %v3124, 0.35355338
  %v3333 = vmul.f32 %v3237, 0.35355338
  %v3334 = vmul.f32 %v3127, 0.35355338
  %v3335 = vmul.f32 %v3240, 0.35355338
  %v3336 = vmul.f32 %v3130, 0.35355338
  %v3337 = vmul.f32 %v3243, 0.35355338
  %v3338 = vmul.f32 %v3133, 0.35355338
  %v3339 = vmul.f32 %v3246, 0.35355338
  %v3340 = vmul.f32 %v3136, 0.35355338
  %v3341 = vmul.f32 %v3249, 0.35355338
  %v3342 = vmul.f32 %v3139, 0.35355338
  %v3343 = vmul.f32 %v3252, 0.35355338
  %v3344 = vmul.f32 %v3142, 0.35355338
  %v3345 = vmul.f32 %v3255, 0.35355338
  %v3346 = vmul.f32 %v3145, 0.35355338
  %v3347 = vmul.f32 %v3258, 0.35355338
  %v3348 = vmul.f32 %v3148, 0.35355338
  %v3349 = vmul.f32 %v3261, 0.35355338
  %v3350 = vmul.f32 %v3151, 0.35355338
  %v3351 = vmul.f32 %v3264, 0.35355338
  %v3352 = vmul.f32 %v3154, 0.35355338
  %v3353 = vmul.f32 %v3267, 0.35355338
  %v3354 = vmul.f32 %v3157, 0.35355338
  %v3355 = vmul.f32 %v3270, 0.35355338
  %v3356 = vmul.f32 %v3160, 0.35355338
  %v3357 = vmul.f32 %v3273, 0.35355338
  %v3358 = vmul.f32 %v3163, 0.35355338
  %v3359 = vmul.f32 %v3276, 0.35355338
  %v3360 = vmul.f32 %v3166, 0.35355338
  %v3361 = vmul.f32 %v3279, 0.35355338
  %v3362 = vmul.f32 %v3169, 0.35355338
  %v3363 = vmul.f32 %v3282, 0.35355338
  %v3364 = vmul.f32 %v3172, 0.35355338
  %v3365 = vmul.f32 %v3285, 0.35355338
  %v3366 = vmul.f32 %v3175, 0.35355338
  %v3367 = vmul.f32 %v3288, 0.35355338
  %v3368 = vmul.f32 %v3178, 0.35355338
  %v3369 = vmul.f32 %v3291, 0.35355338
  %v3370 = vmul.f32 %v3181, 0.35355338
  %v3371 = vmul.f32 %v3294, 0.35355338
  %v3372 = vmul.f32 %v3184, 0.35355338
  %v3373 = vmul.f32 %v3297, 0.35355338
  %v3374 = vmul.f32 %v3187, 0.35355338
  %v3375 = vmul.f32 %v3300, 0.35355338
  %v3376 = vmul.f32 %v3190, 0.35355338
  %v3377 = vmul.f32 %v3303, 0.35355338
  %v3378 = vmul.f32 %v3193, 0.35355338
  %v3379 = vmul.f32 %v3306, 0.35355338
  %v3380 = vmul.f32 %v3196, 0.35355338
  %v3381 = vmul.f32 %v3309, 0.35355338
  %v3382 = vmul.f32 %v3199, 0.35355338
  %v3383 = vmul.f32 %v3312, 0.35355338
  %v3384 = vmul.f32 %v3202, 0.35355338
  %v3385 = vmul.f32 %v3315, 0.35355338
  %v3386 = vmul.f32 %v3205, 0.35355338
  %v3387 = vmul.f32 %v3318, 0.35355338
  %v3388 = vmul.f32 %v3208, 0.35355338
  %v3389 = vmul.f32 %v3321, 0.35355338
  %v3390 = vmul.f32 %v3211, 0.35355338
  %v3391 = vmul.f32 %v3324, 0.35355338
  %v3392 = vmul.f32 %v3214, 0.35355338
  %v3393 = vmul.f32 %v3327, 0.35355338
  %v3394 = vmul.f32 %v3217, 0.35355338
  %v3395 = vmul.f32 %v3330, 0.35355338
  %v3396 = vmax.f32 %v3332, %v3333
  %3397 = vmax.xlane.f32.xlu0 %v3396
  %v3398 = vpop.xlane.xlu0 %3397
  %v3399 = vmax.f32 %v3334, %v3335
  %3400 = vmax.xlane.f32.xlu0 %v3399
  %v3401 = vpop.xlane.xlu0 %3400
  %v3402 = vmax.f32 %v3336, %v3337
  %3403 = vmax.xlane.f32.xlu0 %v3402
  %v3404 = vpop.xlane.xlu0 %3403
  %v3405 = vmax.f32 %v3338, %v3339
  %3406 = vmax.xlane.f32.xlu0 %v3405
  %v3407 = vpop.xlane.xlu0 %3406
  %v3408 = vmax.f32 %v3340, %v3341
  %3409 = vmax.xlane.f32.xlu0 %v3408
  %v3410 = vpop.xlane.xlu0 %3409
  %v3411 = vmax.f32 %v3342, %v3343
  %3412 = vmax.xlane.f32.xlu0 %v3411
  %v3413 = vpop.xlane.xlu0 %3412
  %v3414 = vmax.f32 %v3344, %v3345
  %3415 = vmax.xlane.f32.xlu0 %v3414
  %v3416 = vpop.xlane.xlu0 %3415
  %v3417 = vmax.f32 %v3346, %v3347
  %3418 = vmax.xlane.f32.xlu0 %v3417
  %v3419 = vpop.xlane.xlu0 %3418
  %v3420 = vmax.f32 %v3348, %v3349
  %3421 = vmax.xlane.f32.xlu0 %v3420
  %v3422 = vpop.xlane.xlu0 %3421
  %v3423 = vmax.f32 %v3350, %v3351
  %3424 = vmax.xlane.f32.xlu0 %v3423
  %v3425 = vpop.xlane.xlu0 %3424
  %v3426 = vmax.f32 %v3352, %v3353
  %3427 = vmax.xlane.f32.xlu0 %v3426
  %v3428 = vpop.xlane.xlu0 %3427
  %v3429 = vmax.f32 %v3354, %v3355
  %3430 = vmax.xlane.f32.xlu0 %v3429
  %v3431 = vpop.xlane.xlu0 %3430
  %v3432 = vmax.f32 %v3356, %v3357
  %3433 = vmax.xlane.f32.xlu0 %v3432
  %v3434 = vpop.xlane.xlu0 %3433
  %v3435 = vmax.f32 %v3358, %v3359
  %3436 = vmax.xlane.f32.xlu0 %v3435
  %v3437 = vpop.xlane.xlu0 %3436
  %v3438 = vmax.f32 %v3360, %v3361
  %3439 = vmax.xlane.f32.xlu0 %v3438
  %v3440 = vpop.xlane.xlu0 %3439
  %v3441 = vmax.f32 %v3362, %v3363
  %3442 = vmax.xlane.f32.xlu0 %v3441
  %v3443 = vpop.xlane.xlu0 %3442
  %v3444 = vmax.f32 %v3364, %v3365
  %3445 = vmax.xlane.f32.xlu0 %v3444
  %v3446 = vpop.xlane.xlu0 %3445
  %v3447 = vmax.f32 %v3366, %v3367
  %3448 = vmax.xlane.f32.xlu0 %v3447
  %v3449 = vpop.xlane.xlu0 %3448
  %v3450 = vmax.f32 %v3368, %v3369
  %3451 = vmax.xlane.f32.xlu0 %v3450
  %v3452 = vpop.xlane.xlu0 %3451
  %v3453 = vmax.f32 %v3370, %v3371
  %3454 = vmax.xlane.f32.xlu0 %v3453
  %v3455 = vpop.xlane.xlu0 %3454
  %v3456 = vmax.f32 %v3372, %v3373
  %3457 = vmax.xlane.f32.xlu0 %v3456
  %v3458 = vpop.xlane.xlu0 %3457
  %v3459 = vmax.f32 %v3374, %v3375
  %3460 = vmax.xlane.f32.xlu0 %v3459
  %v3461 = vpop.xlane.xlu0 %3460
  %v3462 = vmax.f32 %v3376, %v3377
  %3463 = vmax.xlane.f32.xlu0 %v3462
  %v3464 = vpop.xlane.xlu0 %3463
  %v3465 = vmax.f32 %v3378, %v3379
  %3466 = vmax.xlane.f32.xlu0 %v3465
  %v3467 = vpop.xlane.xlu0 %3466
  %v3468 = vmax.f32 %v3380, %v3381
  %3469 = vmax.xlane.f32.xlu0 %v3468
  %v3470 = vpop.xlane.xlu0 %3469
  %v3471 = vmax.f32 %v3382, %v3383
  %3472 = vmax.xlane.f32.xlu0 %v3471
  %v3473 = vpop.xlane.xlu0 %3472
  %v3474 = vmax.f32 %v3384, %v3385
  %3475 = vmax.xlane.f32.xlu0 %v3474
  %v3476 = vpop.xlane.xlu0 %3475
  %v3477 = vmax.f32 %v3386, %v3387
  %3478 = vmax.xlane.f32.xlu0 %v3477
  %v3479 = vpop.xlane.xlu0 %3478
  %v3480 = vmax.f32 %v3388, %v3389
  %3481 = vmax.xlane.f32.xlu0 %v3480
  %v3482 = vpop.xlane.xlu0 %3481
  %v3483 = vmax.f32 %v3390, %v3391
  %3484 = vmax.xlane.f32.xlu0 %v3483
  %v3485 = vpop.xlane.xlu0 %3484
  %v3486 = vmax.f32 %v3392, %v3393
  %3487 = vmax.xlane.f32.xlu0 %v3486
  %v3488 = vpop.xlane.xlu0 %3487
  %v3489 = vmax.f32 %v3394, %v3395
  %3490 = vmax.xlane.f32.xlu0 %v3489
  %v3491 = vpop.xlane.xlu0 %3490
  %v3492 = vsub.f32 %v3332, %v3398
  %v3493 = vsub.f32 %v3333, %v3398
  %v3494 = vsub.f32 %v3334, %v3401
  %v3495 = vsub.f32 %v3335, %v3401
  %v3496 = vsub.f32 %v3336, %v3404
  %v3497 = vsub.f32 %v3337, %v3404
  %v3498 = vsub.f32 %v3338, %v3407
  %v3499 = vsub.f32 %v3339, %v3407
  %v3500 = vsub.f32 %v3340, %v3410
  %v3501 = vsub.f32 %v3341, %v3410
  %v3502 = vsub.f32 %v3342, %v3413
  %v3503 = vsub.f32 %v3343, %v3413
  %v3504 = vsub.f32 %v3344, %v3416
  %v3505 = vsub.f32 %v3345, %v3416
  %v3506 = vsub.f32 %v3346, %v3419
  %v3507 = vsub.f32 %v3347, %v3419
  %v3508 = vsub.f32 %v3348, %v3422
  %v3509 = vsub.f32 %v3349, %v3422
  %v3510 = vsub.f32 %v3350, %v3425
  %v3511 = vsub.f32 %v3351, %v3425
  %v3512 = vsub.f32 %v3352, %v3428
  %v3513 = vsub.f32 %v3353, %v3428
  %v3514 = vsub.f32 %v3354, %v3431
  %v3515 = vsub.f32 %v3355, %v3431
  %v3516 = vsub.f32 %v3356, %v3434
  %v3517 = vsub.f32 %v3357, %v3434
  %v3518 = vsub.f32 %v3358, %v3437
  %v3519 = vsub.f32 %v3359, %v3437
  %v3520 = vsub.f32 %v3360, %v3440
  %v3521 = vsub.f32 %v3361, %v3440
  %v3522 = vsub.f32 %v3362, %v3443
  %v3523 = vsub.f32 %v3363, %v3443
  %v3524 = vsub.f32 %v3364, %v3446
  %v3525 = vsub.f32 %v3365, %v3446
  %v3526 = vsub.f32 %v3366, %v3449
  %v3527 = vsub.f32 %v3367, %v3449
  %v3528 = vsub.f32 %v3368, %v3452
  %v3529 = vsub.f32 %v3369, %v3452
  %v3530 = vsub.f32 %v3370, %v3455
  %v3531 = vsub.f32 %v3371, %v3455
  %v3532 = vsub.f32 %v3372, %v3458
  %v3533 = vsub.f32 %v3373, %v3458
  %v3534 = vsub.f32 %v3374, %v3461
  %v3535 = vsub.f32 %v3375, %v3461
  %v3536 = vsub.f32 %v3376, %v3464
  %v3537 = vsub.f32 %v3377, %v3464
  %v3538 = vsub.f32 %v3378, %v3467
  %v3539 = vsub.f32 %v3379, %v3467
  %v3540 = vsub.f32 %v3380, %v3470
  %v3541 = vsub.f32 %v3381, %v3470
  %v3542 = vsub.f32 %v3382, %v3473
  %v3543 = vsub.f32 %v3383, %v3473
  %v3544 = vsub.f32 %v3384, %v3476
  %v3545 = vsub.f32 %v3385, %v3476
  %v3546 = vsub.f32 %v3386, %v3479
  %v3547 = vsub.f32 %v3387, %v3479
  %v3548 = vsub.f32 %v3388, %v3482
  %v3549 = vsub.f32 %v3389, %v3482
  %v3550 = vsub.f32 %v3390, %v3485
  %v3551 = vsub.f32 %v3391, %v3485
  %v3552 = vsub.f32 %v3392, %v3488
  %v3553 = vsub.f32 %v3393, %v3488
  %v3554 = vsub.f32 %v3394, %v3491
  %v3555 = vsub.f32 %v3395, %v3491
  %v3556 = vmul.f32 %v3492, 1.442695
  %v3557 = vpow.pop %v3556
  %v3558 = vmul.f32 %v3493, 1.442695
  %v3559 = vpow.pop %v3558
  %v3560 = vmul.f32 %v3494, 1.442695
  %v3561 = vpow.pop %v3560
  %v3562 = vmul.f32 %v3495, 1.442695
  %v3563 = vpow.pop %v3562
  %v3564 = vmul.f32 %v3496, 1.442695
  %v3565 = vpow.pop %v3564
  %v3566 = vmul.f32 %v3497, 1.442695
  %v3567 = vpow.pop %v3566
  %v3568 = vmul.f32 %v3498, 1.442695
  %v3569 = vpow.pop %v3568
  %v3570 = vmul.f32 %v3499, 1.442695
  %v3571 = vpow.pop %v3570
  %v3572 = vmul.f32 %v3500, 1.442695
  %v3573 = vpow.pop %v3572
  %v3574 = vmul.f32 %v3501, 1.442695
  %v3575 = vpow.pop %v3574
  %v3576 = vmul.f32 %v3502, 1.442695
  %v3577 = vpow.pop %v3576
  %v3578 = vmul.f32 %v3503, 1.442695
  %v3579 = vpow.pop %v3578
  %v3580 = vmul.f32 %v3504, 1.442695
  %v3581 = vpow.pop %v3580
  %v3582 = vmul.f32 %v3505, 1.442695
  %v3583 = vpow.pop %v3582
  %v3584 = vmul.f32 %v3506, 1.442695
  %v3585 = vpow.pop %v3584
  %v3586 = vmul.f32 %v3507, 1.442695
  %v3587 = vpow.pop %v3586
  %v3588 = vmul.f32 %v3508, 1.442695
  %v3589 = vpow.pop %v3588
  %v3590 = vmul.f32 %v3509, 1.442695
  %v3591 = vpow.pop %v3590
  %v3592 = vmul.f32 %v3510, 1.442695
  %v3593 = vpow.pop %v3592
  %v3594 = vmul.f32 %v3511, 1.442695
  %v3595 = vpow.pop %v3594
  %v3596 = vmul.f32 %v3512, 1.442695
  %v3597 = vpow.pop %v3596
  %v3598 = vmul.f32 %v3513, 1.442695
  %v3599 = vpow.pop %v3598
  %v3600 = vmul.f32 %v3514, 1.442695
  %v3601 = vpow.pop %v3600
  %v3602 = vmul.f32 %v3515, 1.442695
  %v3603 = vpow.pop %v3602
  %v3604 = vmul.f32 %v3516, 1.442695
  %v3605 = vpow.pop %v3604
  %v3606 = vmul.f32 %v3517, 1.442695
  %v3607 = vpow.pop %v3606
  %v3608 = vmul.f32 %v3518, 1.442695
  %v3609 = vpow.pop %v3608
  %v3610 = vmul.f32 %v3519, 1.442695
  %v3611 = vpow.pop %v3610
  %v3612 = vmul.f32 %v3520, 1.442695
  %v3613 = vpow.pop %v3612
  %v3614 = vmul.f32 %v3521, 1.442695
  %v3615 = vpow.pop %v3614
  %v3616 = vmul.f32 %v3522, 1.442695
  %v3617 = vpow.pop %v3616
  %v3618 = vmul.f32 %v3523, 1.442695
  %v3619 = vpow.pop %v3618
  %v3620 = vmul.f32 %v3524, 1.442695
  %v3621 = vpow.pop %v3620
  %v3622 = vmul.f32 %v3525, 1.442695
  %v3623 = vpow.pop %v3622
  %v3624 = vmul.f32 %v3526, 1.442695
  %v3625 = vpow.pop %v3624
  %v3626 = vmul.f32 %v3527, 1.442695
  %v3627 = vpow.pop %v3626
  %v3628 = vmul.f32 %v3528, 1.442695
  %v3629 = vpow.pop %v3628
  %v3630 = vmul.f32 %v3529, 1.442695
  %v3631 = vpow.pop %v3630
  %v3632 = vmul.f32 %v3530, 1.442695
  %v3633 = vpow.pop %v3632
  %v3634 = vmul.f32 %v3531, 1.442695
  %v3635 = vpow.pop %v3634
  %v3636 = vmul.f32 %v3532, 1.442695
  %v3637 = vpow.pop %v3636
  %v3638 = vmul.f32 %v3533, 1.442695
  %v3639 = vpow.pop %v3638
  %v3640 = vmul.f32 %v3534, 1.442695
  %v3641 = vpow.pop %v3640
  %v3642 = vmul.f32 %v3535, 1.442695
  %v3643 = vpow.pop %v3642
  %v3644 = vmul.f32 %v3536, 1.442695
  %v3645 = vpow.pop %v3644
  %v3646 = vmul.f32 %v3537, 1.442695
  %v3647 = vpow.pop %v3646
  %v3648 = vmul.f32 %v3538, 1.442695
  %v3649 = vpow.pop %v3648
  %v3650 = vmul.f32 %v3539, 1.442695
  %v3651 = vpow.pop %v3650
  %v3652 = vmul.f32 %v3540, 1.442695
  %v3653 = vpow.pop %v3652
  %v3654 = vmul.f32 %v3541, 1.442695
  %v3655 = vpow.pop %v3654
  %v3656 = vmul.f32 %v3542, 1.442695
  %v3657 = vpow.pop %v3656
  %v3658 = vmul.f32 %v3543, 1.442695
  %v3659 = vpow.pop %v3658
  %v3660 = vmul.f32 %v3544, 1.442695
  %v3661 = vpow.pop %v3660
  %v3662 = vmul.f32 %v3545, 1.442695
  %v3663 = vpow.pop %v3662
  %v3664 = vmul.f32 %v3546, 1.442695
  %v3665 = vpow.pop %v3664
  %v3666 = vmul.f32 %v3547, 1.442695
  %v3667 = vpow.pop %v3666
  %v3668 = vmul.f32 %v3548, 1.442695
  %v3669 = vpow.pop %v3668
  %v3670 = vmul.f32 %v3549, 1.442695
  %v3671 = vpow.pop %v3670
  %v3672 = vmul.f32 %v3550, 1.442695
  %v3673 = vpow.pop %v3672
  %v3674 = vmul.f32 %v3551, 1.442695
  %v3675 = vpow.pop %v3674
  %v3676 = vmul.f32 %v3552, 1.442695
  %v3677 = vpow.pop %v3676
  %v3678 = vmul.f32 %v3553, 1.442695
  %v3679 = vpow.pop %v3678
  %v3680 = vmul.f32 %v3554, 1.442695
  %v3681 = vpow.pop %v3680
  %v3682 = vmul.f32 %v3555, 1.442695
  %v3683 = vpow.pop %v3682
  %v3684 = vadd.f32 %v3557, %v3559
  %3685 = vadd.xlane.f32.xlu0 %v3684
  %v3686 = vpop.xlane.xlu0 %3685
  %v3687 = vadd.f32 %v3561, %v3563
  %3688 = vadd.xlane.f32.xlu0 %v3687
  %v3689 = vpop.xlane.xlu0 %3688
  %v3690 = vadd.f32 %v3565, %v3567
  %3691 = vadd.xlane.f32.xlu0 %v3690
  %v3692 = vpop.xlane.xlu0 %3691
  %v3693 = vadd.f32 %v3569, %v3571
  %3694 = vadd.xlane.f32.xlu0 %v3693
  %v3695 = vpop.xlane.xlu0 %3694
  %v3696 = vadd.f32 %v3573, %v3575
  %3697 = vadd.xlane.f32.xlu0 %v3696
  %v3698 = vpop.xlane.xlu0 %3697
  %v3699 = vadd.f32 %v3577, %v3579
  %3700 = vadd.xlane.f32.xlu0 %v3699
  %v3701 = vpop.xlane.xlu0 %3700
  %v3702 = vadd.f32 %v3581, %v3583
  %3703 = vadd.xlane.f32.xlu0 %v3702
  %v3704 = vpop.xlane.xlu0 %3703
  %v3705 = vadd.f32 %v3585, %v3587
  %3706 = vadd.xlane.f32.xlu0 %v3705
  %v3707 = vpop.xlane.xlu0 %3706
  %v3708 = vadd.f32 %v3589, %v3591
  %3709 = vadd.xlane.f32.xlu0 %v3708
  %v3710 = vpop.xlane.xlu0 %3709
  %v3711 = vadd.f32 %v3593, %v3595
  %3712 = vadd.xlane.f32.xlu0 %v3711
  %v3713 = vpop.xlane.xlu0 %3712
  %v3714 = vadd.f32 %v3597, %v3599
  %3715 = vadd.xlane.f32.xlu0 %v3714
  %v3716 = vpop.xlane.xlu0 %3715
  %v3717 = vadd.f32 %v3601, %v3603
  %3718 = vadd.xlane.f32.xlu0 %v3717
  %v3719 = vpop.xlane.xlu0 %3718
  %v3720 = vadd.f32 %v3605, %v3607
  %3721 = vadd.xlane.f32.xlu0 %v3720
  %v3722 = vpop.xlane.xlu0 %3721
  %v3723 = vadd.f32 %v3609, %v3611
  %3724 = vadd.xlane.f32.xlu0 %v3723
  %v3725 = vpop.xlane.xlu0 %3724
  %v3726 = vadd.f32 %v3613, %v3615
  %3727 = vadd.xlane.f32.xlu0 %v3726
  %v3728 = vpop.xlane.xlu0 %3727
  %v3729 = vadd.f32 %v3617, %v3619
  %3730 = vadd.xlane.f32.xlu0 %v3729
  %v3731 = vpop.xlane.xlu0 %3730
  %v3732 = vadd.f32 %v3621, %v3623
  %3733 = vadd.xlane.f32.xlu0 %v3732
  %v3734 = vpop.xlane.xlu0 %3733
  %v3735 = vadd.f32 %v3625, %v3627
  %3736 = vadd.xlane.f32.xlu0 %v3735
  %v3737 = vpop.xlane.xlu0 %3736
  %v3738 = vadd.f32 %v3629, %v3631
  %3739 = vadd.xlane.f32.xlu0 %v3738
  %v3740 = vpop.xlane.xlu0 %3739
  %v3741 = vadd.f32 %v3633, %v3635
  %3742 = vadd.xlane.f32.xlu0 %v3741
  %v3743 = vpop.xlane.xlu0 %3742
  %v3744 = vadd.f32 %v3637, %v3639
  %3745 = vadd.xlane.f32.xlu0 %v3744
  %v3746 = vpop.xlane.xlu0 %3745
  %v3747 = vadd.f32 %v3641, %v3643
  %3748 = vadd.xlane.f32.xlu0 %v3747
  %v3749 = vpop.xlane.xlu0 %3748
  %v3750 = vadd.f32 %v3645, %v3647
  %3751 = vadd.xlane.f32.xlu0 %v3750
  %v3752 = vpop.xlane.xlu0 %3751
  %v3753 = vadd.f32 %v3649, %v3651
  %3754 = vadd.xlane.f32.xlu0 %v3753
  %v3755 = vpop.xlane.xlu0 %3754
  %v3756 = vadd.f32 %v3653, %v3655
  %3757 = vadd.xlane.f32.xlu0 %v3756
  %v3758 = vpop.xlane.xlu0 %3757
  %v3759 = vadd.f32 %v3657, %v3659
  %3760 = vadd.xlane.f32.xlu0 %v3759
  %v3761 = vpop.xlane.xlu0 %3760
  %v3762 = vadd.f32 %v3661, %v3663
  %3763 = vadd.xlane.f32.xlu0 %v3762
  %v3764 = vpop.xlane.xlu0 %3763
  %v3765 = vadd.f32 %v3665, %v3667
  %3766 = vadd.xlane.f32.xlu0 %v3765
  %v3767 = vpop.xlane.xlu0 %3766
  %v3768 = vadd.f32 %v3669, %v3671
  %3769 = vadd.xlane.f32.xlu0 %v3768
  %v3770 = vpop.xlane.xlu0 %3769
  %v3771 = vadd.f32 %v3673, %v3675
  %3772 = vadd.xlane.f32.xlu0 %v3771
  %v3773 = vpop.xlane.xlu0 %3772
  %v3774 = vadd.f32 %v3677, %v3679
  %3775 = vadd.xlane.f32.xlu0 %v3774
  %v3776 = vpop.xlane.xlu0 %3775
  %v3777 = vadd.f32 %v3681, %v3683
  %3778 = vadd.xlane.f32.xlu0 %v3777
  %v3779 = vpop.xlane.xlu0 %3778
  %v3780 = vrcp.pop %v3686
  %v3781 = vrcp.pop %v3689
  %v3782 = vrcp.pop %v3692
  %v3783 = vrcp.pop %v3695
  %v3784 = vrcp.pop %v3698
  %v3785 = vrcp.pop %v3701
  %v3786 = vrcp.pop %v3704
  %v3787 = vrcp.pop %v3707
  %v3788 = vrcp.pop %v3710
  %v3789 = vrcp.pop %v3713
  %v3790 = vrcp.pop %v3716
  %v3791 = vrcp.pop %v3719
  %v3792 = vrcp.pop %v3722
  %v3793 = vrcp.pop %v3725
  %v3794 = vrcp.pop %v3728
  %v3795 = vrcp.pop %v3731
  %v3796 = vrcp.pop %v3734
  %v3797 = vrcp.pop %v3737
  %v3798 = vrcp.pop %v3740
  %v3799 = vrcp.pop %v3743
  %v3800 = vrcp.pop %v3746
  %v3801 = vrcp.pop %v3749
  %v3802 = vrcp.pop %v3752
  %v3803 = vrcp.pop %v3755
  %v3804 = vrcp.pop %v3758
  %v3805 = vrcp.pop %v3761
  %v3806 = vrcp.pop %v3764
  %v3807 = vrcp.pop %v3767
  %v3808 = vrcp.pop %v3770
  %v3809 = vrcp.pop %v3773
  %v3810 = vrcp.pop %v3776
  %v3811 = vrcp.pop %v3779
  %v3812 = vmul.f32 %v3557, %v3780
  %v3813 = vmul.f32 %v3559, %v3780
  %v3814 = vmul.f32 %v3561, %v3781
  %v3815 = vmul.f32 %v3563, %v3781
  %v3816 = vmul.f32 %v3565, %v3782
  %v3817 = vmul.f32 %v3567, %v3782
  %v3818 = vmul.f32 %v3569, %v3783
  %v3819 = vmul.f32 %v3571, %v3783
  %v3820 = vmul.f32 %v3573, %v3784
  %v3821 = vmul.f32 %v3575, %v3784
  %v3822 = vmul.f32 %v3577, %v3785
  %v3823 = vmul.f32 %v3579, %v3785
  %v3824 = vmul.f32 %v3581, %v3786
  %v3825 = vmul.f32 %v3583, %v3786
  %v3826 = vmul.f32 %v3585, %v3787
  %v3827 = vmul.f32 %v3587, %v3787
  %v3828 = vmul.f32 %v3589, %v3788
  %v3829 = vmul.f32 %v3591, %v3788
  %v3830 = vmul.f32 %v3593, %v3789
  %v3831 = vmul.f32 %v3595, %v3789
  %v3832 = vmul.f32 %v3597, %v3790
  %v3833 = vmul.f32 %v3599, %v3790
  %v3834 = vmul.f32 %v3601, %v3791
  %v3835 = vmul.f32 %v3603, %v3791
  %v3836 = vmul.f32 %v3605, %v3792
  %v3837 = vmul.f32 %v3607, %v3792
  %v3838 = vmul.f32 %v3609, %v3793
  %v3839 = vmul.f32 %v3611, %v3793
  %v3840 = vmul.f32 %v3613, %v3794
  %v3841 = vmul.f32 %v3615, %v3794
  %v3842 = vmul.f32 %v3617, %v3795
  %v3843 = vmul.f32 %v3619, %v3795
  %v3844 = vmul.f32 %v3621, %v3796
  %v3845 = vmul.f32 %v3623, %v3796
  %v3846 = vmul.f32 %v3625, %v3797
  %v3847 = vmul.f32 %v3627, %v3797
  %v3848 = vmul.f32 %v3629, %v3798
  %v3849 = vmul.f32 %v3631, %v3798
  %v3850 = vmul.f32 %v3633, %v3799
  %v3851 = vmul.f32 %v3635, %v3799
  %v3852 = vmul.f32 %v3637, %v3800
  %v3853 = vmul.f32 %v3639, %v3800
  %v3854 = vmul.f32 %v3641, %v3801
  %v3855 = vmul.f32 %v3643, %v3801
  %v3856 = vmul.f32 %v3645, %v3802
  %v3857 = vmul.f32 %v3647, %v3802
  %v3858 = vmul.f32 %v3649, %v3803
  %v3859 = vmul.f32 %v3651, %v3803
  %v3860 = vmul.f32 %v3653, %v3804
  %v3861 = vmul.f32 %v3655, %v3804
  %v3862 = vmul.f32 %v3657, %v3805
  %v3863 = vmul.f32 %v3659, %v3805
  %v3864 = vmul.f32 %v3661, %v3806
  %v3865 = vmul.f32 %v3663, %v3806
  %v3866 = vmul.f32 %v3665, %v3807
  %v3867 = vmul.f32 %v3667, %v3807
  %v3868 = vmul.f32 %v3669, %v3808
  %v3869 = vmul.f32 %v3671, %v3808
  %v3870 = vmul.f32 %v3673, %v3809
  %v3871 = vmul.f32 %v3675, %v3809
  %v3872 = vmul.f32 %v3677, %v3810
  %v3873 = vmul.f32 %v3679, %v3810
  %v3874 = vmul.f32 %v3681, %v3811
  %v3875 = vmul.f32 %v3683, %v3811
  %3876 = vmatpush.msra.mxu0 %v2864
  %3877 = vmatpush.msra.mxu0 %v2861
  %3878 = vmatpush.msra.mxu0 %v2858
  %3879 = vmatpush.msra.mxu0 %v2855
  %3880 = vmatpush.msra.mxu0 %v2852
  %3881 = vmatpush.msra.mxu0 %v2849
  %3882 = vmatpush.msra.mxu0 %v2846
  %3883 = vmatpush.msra.mxu0 %v2843
  %3884 = vmatpush.msra.mxu0 %v2840
  %3885 = vmatpush.msra.mxu0 %v2837
  %3886 = vmatpush.msra.mxu0 %v2834
  %3887 = vmatpush.msra.mxu0 %v2831
  %3888 = vmatpush.msra.mxu0 %v2828
  %3889 = vmatpush.msra.mxu0 %v2825
  %3890 = vmatpush.msra.mxu0 %v2822
  %3891 = vmatpush.msra.mxu0 %v2819
  %3892 = vmatmul.f32.gmra.mxu0 %v3812
  %v3893 = vpop.f32.mrf.mxu0
  %v3894 = vadd.f32 0.0, %v3893
  %3895 = vmatmul.f32.gmra.mxu0 %v3814
  %v3896 = vpop.f32.mrf.mxu0
  %v3897 = vadd.f32 0.0, %v3896
  %3898 = vmatmul.f32.gmra.mxu0 %v3816
  %v3899 = vpop.f32.mrf.mxu0
  %v3900 = vadd.f32 0.0, %v3899
  %3901 = vmatmul.f32.gmra.mxu0 %v3818
  %v3902 = vpop.f32.mrf.mxu0
  %v3903 = vadd.f32 0.0, %v3902
  %3904 = vmatmul.f32.gmra.mxu0 %v3820
  %v3905 = vpop.f32.mrf.mxu0
  %v3906 = vadd.f32 0.0, %v3905
  %3907 = vmatmul.f32.gmra.mxu0 %v3822
  %v3908 = vpop.f32.mrf.mxu0
  %v3909 = vadd.f32 0.0, %v3908
  %3910 = vmatmul.f32.gmra.mxu0 %v3824
  %v3911 = vpop.f32.mrf.mxu0
  %v3912 = vadd.f32 0.0, %v3911
  %3913 = vmatmul.f32.gmra.mxu0 %v3826
  %v3914 = vpop.f32.mrf.mxu0
  %v3915 = vadd.f32 0.0, %v3914
  %3916 = vmatmul.f32.gmra.mxu0 %v3828
  %v3917 = vpop.f32.mrf.mxu0
  %v3918 = vadd.f32 0.0, %v3917
  %3919 = vmatmul.f32.gmra.mxu0 %v3830
  %v3920 = vpop.f32.mrf.mxu0
  %v3921 = vadd.f32 0.0, %v3920
  %3922 = vmatmul.f32.gmra.mxu0 %v3832
  %v3923 = vpop.f32.mrf.mxu0
  %v3924 = vadd.f32 0.0, %v3923
  %3925 = vmatmul.f32.gmra.mxu0 %v3834
  %v3926 = vpop.f32.mrf.mxu0
  %v3927 = vadd.f32 0.0, %v3926
  %3928 = vmatmul.f32.gmra.mxu0 %v3836
  %v3929 = vpop.f32.mrf.mxu0
  %v3930 = vadd.f32 0.0, %v3929
  %3931 = vmatmul.f32.gmra.mxu0 %v3838
  %v3932 = vpop.f32.mrf.mxu0
  %v3933 = vadd.f32 0.0, %v3932
  %3934 = vmatmul.f32.gmra.mxu0 %v3840
  %v3935 = vpop.f32.mrf.mxu0
  %v3936 = vadd.f32 0.0, %v3935
  %3937 = vmatmul.f32.gmra.mxu0 %v3842
  %v3938 = vpop.f32.mrf.mxu0
  %v3939 = vadd.f32 0.0, %v3938
  %3940 = vmatmul.f32.gmra.mxu0 %v3844
  %v3941 = vpop.f32.mrf.mxu0
  %v3942 = vadd.f32 0.0, %v3941
  %3943 = vmatmul.f32.gmra.mxu0 %v3846
  %v3944 = vpop.f32.mrf.mxu0
  %v3945 = vadd.f32 0.0, %v3944
  %3946 = vmatmul.f32.gmra.mxu0 %v3848
  %v3947 = vpop.f32.mrf.mxu0
  %v3948 = vadd.f32 0.0, %v3947
  %3949 = vmatmul.f32.gmra.mxu0 %v3850
  %v3950 = vpop.f32.mrf.mxu0
  %v3951 = vadd.f32 0.0, %v3950
  %3952 = vmatmul.f32.gmra.mxu0 %v3852
  %v3953 = vpop.f32.mrf.mxu0
  %v3954 = vadd.f32 0.0, %v3953
  %3955 = vmatmul.f32.gmra.mxu0 %v3854
  %v3956 = vpop.f32.mrf.mxu0
  %v3957 = vadd.f32 0.0, %v3956
  %3958 = vmatmul.f32.gmra.mxu0 %v3856
  %v3959 = vpop.f32.mrf.mxu0
  %v3960 = vadd.f32 0.0, %v3959
  %3961 = vmatmul.f32.gmra.mxu0 %v3858
  %v3962 = vpop.f32.mrf.mxu0
  %v3963 = vadd.f32 0.0, %v3962
  %3964 = vmatmul.f32.gmra.mxu0 %v3860
  %v3965 = vpop.f32.mrf.mxu0
  %v3966 = vadd.f32 0.0, %v3965
  %3967 = vmatmul.f32.gmra.mxu0 %v3862
  %v3968 = vpop.f32.mrf.mxu0
  %v3969 = vadd.f32 0.0, %v3968
  %3970 = vmatmul.f32.gmra.mxu0 %v3864
  %v3971 = vpop.f32.mrf.mxu0
  %v3972 = vadd.f32 0.0, %v3971
  %3973 = vmatmul.f32.gmra.mxu0 %v3866
  %v3974 = vpop.f32.mrf.mxu0
  %v3975 = vadd.f32 0.0, %v3974
  %3976 = vmatmul.f32.gmra.mxu0 %v3868
  %v3977 = vpop.f32.mrf.mxu0
  %v3978 = vadd.f32 0.0, %v3977
  %3979 = vmatmul.f32.gmra.mxu0 %v3870
  %v3980 = vpop.f32.mrf.mxu0
  %v3981 = vadd.f32 0.0, %v3980
  %3982 = vmatmul.f32.gmra.mxu0 %v3872
  %v3983 = vpop.f32.mrf.mxu0
  %v3984 = vadd.f32 0.0, %v3983
  %3985 = vmatmul.f32.gmra.mxu0 %v3874
  %v3986 = vpop.f32.mrf.mxu0
  %v3987 = vadd.f32 0.0, %v3986
  %3988 = vdwg.mxu0
  %3989 = vmatpush.msra.mxu0 %v2912
  %3990 = vmatpush.msra.mxu0 %v2909
  %3991 = vmatpush.msra.mxu0 %v2906
  %3992 = vmatpush.msra.mxu0 %v2903
  %3993 = vmatpush.msra.mxu0 %v2900
  %3994 = vmatpush.msra.mxu0 %v2897
  %3995 = vmatpush.msra.mxu0 %v2894
  %3996 = vmatpush.msra.mxu0 %v2891
  %3997 = vmatpush.msra.mxu0 %v2888
  %3998 = vmatpush.msra.mxu0 %v2885
  %3999 = vmatpush.msra.mxu0 %v2882
  %4000 = vmatpush.msra.mxu0 %v2879
  %4001 = vmatpush.msra.mxu0 %v2876
  %4002 = vmatpush.msra.mxu0 %v2873
  %4003 = vmatpush.msra.mxu0 %v2870
  %4004 = vmatpush.msra.mxu0 %v2867
  %4005 = vmatmul.f32.gmra.mxu0 %v3813
  %v4006 = vpop.f32.mrf.mxu0
  %v4007 = vadd.f32 %v3894, %v4006
  %4008 = vmatmul.f32.gmra.mxu0 %v3815
  %v4009 = vpop.f32.mrf.mxu0
  %v4010 = vadd.f32 %v3897, %v4009
  %4011 = vmatmul.f32.gmra.mxu0 %v3817
  %v4012 = vpop.f32.mrf.mxu0
  %v4013 = vadd.f32 %v3900, %v4012
  %4014 = vmatmul.f32.gmra.mxu0 %v3819
  %v4015 = vpop.f32.mrf.mxu0
  %v4016 = vadd.f32 %v3903, %v4015
  %4017 = vmatmul.f32.gmra.mxu0 %v3821
  %v4018 = vpop.f32.mrf.mxu0
  %v4019 = vadd.f32 %v3906, %v4018
  %4020 = vmatmul.f32.gmra.mxu0 %v3823
  %v4021 = vpop.f32.mrf.mxu0
  %v4022 = vadd.f32 %v3909, %v4021
  %4023 = vmatmul.f32.gmra.mxu0 %v3825
  %v4024 = vpop.f32.mrf.mxu0
  %v4025 = vadd.f32 %v3912, %v4024
  %4026 = vmatmul.f32.gmra.mxu0 %v3827
  %v4027 = vpop.f32.mrf.mxu0
  %v4028 = vadd.f32 %v3915, %v4027
  %4029 = vmatmul.f32.gmra.mxu0 %v3829
  %v4030 = vpop.f32.mrf.mxu0
  %v4031 = vadd.f32 %v3918, %v4030
  %4032 = vmatmul.f32.gmra.mxu0 %v3831
  %v4033 = vpop.f32.mrf.mxu0
  %v4034 = vadd.f32 %v3921, %v4033
  %4035 = vmatmul.f32.gmra.mxu0 %v3833
  %v4036 = vpop.f32.mrf.mxu0
  %v4037 = vadd.f32 %v3924, %v4036
  %4038 = vmatmul.f32.gmra.mxu0 %v3835
  %v4039 = vpop.f32.mrf.mxu0
  %v4040 = vadd.f32 %v3927, %v4039
  %4041 = vmatmul.f32.gmra.mxu0 %v3837
  %v4042 = vpop.f32.mrf.mxu0
  %v4043 = vadd.f32 %v3930, %v4042
  %4044 = vmatmul.f32.gmra.mxu0 %v3839
  %v4045 = vpop.f32.mrf.mxu0
  %v4046 = vadd.f32 %v3933, %v4045
  %4047 = vmatmul.f32.gmra.mxu0 %v3841
  %v4048 = vpop.f32.mrf.mxu0
  %v4049 = vadd.f32 %v3936, %v4048
  %4050 = vmatmul.f32.gmra.mxu0 %v3843
  %v4051 = vpop.f32.mrf.mxu0
  %v4052 = vadd.f32 %v3939, %v4051
  %4053 = vmatmul.f32.gmra.mxu0 %v3845
  %v4054 = vpop.f32.mrf.mxu0
  %v4055 = vadd.f32 %v3942, %v4054
  %4056 = vmatmul.f32.gmra.mxu0 %v3847
  %v4057 = vpop.f32.mrf.mxu0
  %v4058 = vadd.f32 %v3945, %v4057
  %4059 = vmatmul.f32.gmra.mxu0 %v3849
  %v4060 = vpop.f32.mrf.mxu0
  %v4061 = vadd.f32 %v3948, %v4060
  %4062 = vmatmul.f32.gmra.mxu0 %v3851
  %v4063 = vpop.f32.mrf.mxu0
  %v4064 = vadd.f32 %v3951, %v4063
  %4065 = vmatmul.f32.gmra.mxu0 %v3853
  %v4066 = vpop.f32.mrf.mxu0
  %v4067 = vadd.f32 %v3954, %v4066
  %4068 = vmatmul.f32.gmra.mxu0 %v3855
  %v4069 = vpop.f32.mrf.mxu0
  %v4070 = vadd.f32 %v3957, %v4069
  %4071 = vmatmul.f32.gmra.mxu0 %v3857
  %v4072 = vpop.f32.mrf.mxu0
  %v4073 = vadd.f32 %v3960, %v4072
  %4074 = vmatmul.f32.gmra.mxu0 %v3859
  %v4075 = vpop.f32.mrf.mxu0
  %v4076 = vadd.f32 %v3963, %v4075
  %4077 = vmatmul.f32.gmra.mxu0 %v3861
  %v4078 = vpop.f32.mrf.mxu0
  %v4079 = vadd.f32 %v3966, %v4078
  %4080 = vmatmul.f32.gmra.mxu0 %v3863
  %v4081 = vpop.f32.mrf.mxu0
  %v4082 = vadd.f32 %v3969, %v4081
  %4083 = vmatmul.f32.gmra.mxu0 %v3865
  %v4084 = vpop.f32.mrf.mxu0
  %v4085 = vadd.f32 %v3972, %v4084
  %4086 = vmatmul.f32.gmra.mxu0 %v3867
  %v4087 = vpop.f32.mrf.mxu0
  %v4088 = vadd.f32 %v3975, %v4087
  %4089 = vmatmul.f32.gmra.mxu0 %v3869
  %v4090 = vpop.f32.mrf.mxu0
  %v4091 = vadd.f32 %v3978, %v4090
  %4092 = vmatmul.f32.gmra.mxu0 %v3871
  %v4093 = vpop.f32.mrf.mxu0
  %v4094 = vadd.f32 %v3981, %v4093
  %4095 = vmatmul.f32.gmra.mxu0 %v3873
  %v4096 = vpop.f32.mrf.mxu0
  %v4097 = vadd.f32 %v3984, %v4096
  %4098 = vmatmul.f32.gmra.mxu0 %v3875
  %v4099 = vpop.f32.mrf.mxu0
  %v4100 = vadd.f32 %v3987, %v4099
  %4101 = vdwg.mxu0
  %s4102 = scalar_lea.vmem %s7, 8
  %v4103 = vld [vmem:[%s4102] sm:$0xff]
  %v4105 = vsel %vm1370, %v4007, 0
  %v4108 = vsel %vm1370, %v4010, 0
  %v4111 = vsel %vm1370, %v4013, 0
  %v4114 = vsel %vm1370, %v4016, 0
  %v4117 = vsel %vm1370, %v4019, 0
  %v4120 = vsel %vm1370, %v4022, 0
  %v4123 = vsel %vm1370, %v4025, 0
  %v4126 = vsel %vm1370, %v4028, 0
  %v4129 = vsel %vm1370, %v4031, 0
  %v4132 = vsel %vm1370, %v4034, 0
  %v4135 = vsel %vm1370, %v4037, 0
  %v4138 = vsel %vm1370, %v4040, 0
  %v4141 = vsel %vm1370, %v4043, 0
  %v4144 = vsel %vm1370, %v4046, 0
  %v4147 = vsel %vm1370, %v4049, 0
  %v4150 = vsel %vm1370, %v4052, 0
  %v4153 = vsel %vm1370, %v4055, 0
  %v4156 = vsel %vm1370, %v4058, 0
  %v4159 = vsel %vm1370, %v4061, 0
  %v4162 = vsel %vm1370, %v4064, 0
  %v4165 = vsel %vm1370, %v4067, 0
  %v4168 = vsel %vm1370, %v4070, 0
  %v4171 = vsel %vm1370, %v4073, 0
  %v4174 = vsel %vm1370, %v4076, 0
  %v4177 = vsel %vm1370, %v4079, 0
  %v4180 = vsel %vm1370, %v4082, 0
  %v4183 = vsel %vm1370, %v4085, 0
  %v4186 = vsel %vm1370, %v4088, 0
  %v4189 = vsel %vm1370, %v4091, 0
  %v4192 = vsel %vm1370, %v4094, 0
  %v4195 = vsel %vm1370, %v4097, 0
  %v4198 = vsel %vm1370, %v4100, 0
  %4200 = vmatpush.msra.mxu0 0.0
  %4201 = vmatpush.msra.mxu0 0.0
  %4202 = vmatpush.msra.mxu0 0.0
  %4203 = vmatpush.msra.mxu0 0.0
  %4204 = vmatpush.msra.mxu0 0.0
  %4205 = vmatpush.msra.mxu0 0.0
  %4206 = vmatpush.msra.mxu0 0.0
  %4207 = vmatpush.msra.mxu0 0.0
  %4208 = vmatpush.msra.mxu0 0.0
  %4209 = vmatpush.msra.mxu0 0.0
  %4210 = vmatpush.msra.mxu0 0.0
  %4211 = vmatpush.msra.mxu0 0.0
  %4212 = vmatpush.msra.mxu0 0.0
  %4213 = vmatpush.msra.mxu0 0.0
  %4214 = vmatpush.msra.mxu0 0.0
  %4215 = vmatpush.msra.mxu0 %v4103
  %4216 = vmatmul.f32.gmra.mxu0 %v4105
  %v4217 = vpop.f32.mrf.mxu0
  %v4218 = vadd.f32 0.0, %v4217
  %4219 = vmatmul.f32.gmra.mxu0 %v4108
  %v4220 = vpop.f32.mrf.mxu0
  %v4221 = vadd.f32 0.0, %v4220
  %4222 = vmatmul.f32.gmra.mxu0 %v4111
  %v4223 = vpop.f32.mrf.mxu0
  %v4224 = vadd.f32 0.0, %v4223
  %4225 = vmatmul.f32.gmra.mxu0 %v4114
  %v4226 = vpop.f32.mrf.mxu0
  %v4227 = vadd.f32 0.0, %v4226
  %4228 = vmatmul.f32.gmra.mxu0 %v4117
  %v4229 = vpop.f32.mrf.mxu0
  %v4230 = vadd.f32 0.0, %v4229
  %4231 = vmatmul.f32.gmra.mxu0 %v4120
  %v4232 = vpop.f32.mrf.mxu0
  %v4233 = vadd.f32 0.0, %v4232
  %4234 = vmatmul.f32.gmra.mxu0 %v4123
  %v4235 = vpop.f32.mrf.mxu0
  %v4236 = vadd.f32 0.0, %v4235
  %4237 = vmatmul.f32.gmra.mxu0 %v4126
  %v4238 = vpop.f32.mrf.mxu0
  %v4239 = vadd.f32 0.0, %v4238
  %4240 = vmatmul.f32.gmra.mxu0 %v4129
  %v4241 = vpop.f32.mrf.mxu0
  %v4242 = vadd.f32 0.0, %v4241
  %4243 = vmatmul.f32.gmra.mxu0 %v4132
  %v4244 = vpop.f32.mrf.mxu0
  %v4245 = vadd.f32 0.0, %v4244
  %4246 = vmatmul.f32.gmra.mxu0 %v4135
  %v4247 = vpop.f32.mrf.mxu0
  %v4248 = vadd.f32 0.0, %v4247
  %4249 = vmatmul.f32.gmra.mxu0 %v4138
  %v4250 = vpop.f32.mrf.mxu0
  %v4251 = vadd.f32 0.0, %v4250
  %4252 = vmatmul.f32.gmra.mxu0 %v4141
  %v4253 = vpop.f32.mrf.mxu0
  %v4254 = vadd.f32 0.0, %v4253
  %4255 = vmatmul.f32.gmra.mxu0 %v4144
  %v4256 = vpop.f32.mrf.mxu0
  %v4257 = vadd.f32 0.0, %v4256
  %4258 = vmatmul.f32.gmra.mxu0 %v4147
  %v4259 = vpop.f32.mrf.mxu0
  %v4260 = vadd.f32 0.0, %v4259
  %4261 = vmatmul.f32.gmra.mxu0 %v4150
  %v4262 = vpop.f32.mrf.mxu0
  %v4263 = vadd.f32 0.0, %v4262
  %4264 = vmatmul.f32.gmra.mxu0 %v4153
  %v4265 = vpop.f32.mrf.mxu0
  %v4266 = vadd.f32 0.0, %v4265
  %4267 = vmatmul.f32.gmra.mxu0 %v4156
  %v4268 = vpop.f32.mrf.mxu0
  %v4269 = vadd.f32 0.0, %v4268
  %4270 = vmatmul.f32.gmra.mxu0 %v4159
  %v4271 = vpop.f32.mrf.mxu0
  %v4272 = vadd.f32 0.0, %v4271
  %4273 = vmatmul.f32.gmra.mxu0 %v4162
  %v4274 = vpop.f32.mrf.mxu0
  %v4275 = vadd.f32 0.0, %v4274
  %4276 = vmatmul.f32.gmra.mxu0 %v4165
  %v4277 = vpop.f32.mrf.mxu0
  %v4278 = vadd.f32 0.0, %v4277
  %4279 = vmatmul.f32.gmra.mxu0 %v4168
  %v4280 = vpop.f32.mrf.mxu0
  %v4281 = vadd.f32 0.0, %v4280
  %4282 = vmatmul.f32.gmra.mxu0 %v4171
  %v4283 = vpop.f32.mrf.mxu0
  %v4284 = vadd.f32 0.0, %v4283
  %4285 = vmatmul.f32.gmra.mxu0 %v4174
  %v4286 = vpop.f32.mrf.mxu0
  %v4287 = vadd.f32 0.0, %v4286
  %4288 = vmatmul.f32.gmra.mxu0 %v4177
  %v4289 = vpop.f32.mrf.mxu0
  %v4290 = vadd.f32 0.0, %v4289
  %4291 = vmatmul.f32.gmra.mxu0 %v4180
  %v4292 = vpop.f32.mrf.mxu0
  %v4293 = vadd.f32 0.0, %v4292
  %4294 = vmatmul.f32.gmra.mxu0 %v4183
  %v4295 = vpop.f32.mrf.mxu0
  %v4296 = vadd.f32 0.0, %v4295
  %4297 = vmatmul.f32.gmra.mxu0 %v4186
  %v4298 = vpop.f32.mrf.mxu0
  %v4299 = vadd.f32 0.0, %v4298
  %4300 = vmatmul.f32.gmra.mxu0 %v4189
  %v4301 = vpop.f32.mrf.mxu0
  %v4302 = vadd.f32 0.0, %v4301
  %4303 = vmatmul.f32.gmra.mxu0 %v4192
  %v4304 = vpop.f32.mrf.mxu0
  %v4305 = vadd.f32 0.0, %v4304
  %4306 = vmatmul.f32.gmra.mxu0 %v4195
  %v4307 = vpop.f32.mrf.mxu0
  %v4308 = vadd.f32 0.0, %v4307
  %4309 = vmatmul.f32.gmra.mxu0 %v4198
  %v4310 = vpop.f32.mrf.mxu0
  %v4311 = vadd.f32 0.0, %v4310
  %4312 = vdwg.mxu0
  %v4314 = vsel %vm1370, %v2464, 0
  %v4317 = vsel %vm1370, %v2467, 0
  %v4320 = vsel %vm1370, %v2470, 0
  %v4323 = vsel %vm1370, %v2473, 0
  %v4326 = vsel %vm1370, %v2476, 0
  %v4329 = vsel %vm1370, %v2479, 0
  %v4332 = vsel %vm1370, %v2482, 0
  %v4335 = vsel %vm1370, %v2485, 0
  %v4338 = vsel %vm1370, %v2488, 0
  %v4341 = vsel %vm1370, %v2491, 0
  %v4344 = vsel %vm1370, %v2494, 0
  %v4347 = vsel %vm1370, %v2497, 0
  %v4350 = vsel %vm1370, %v2500, 0
  %v4353 = vsel %vm1370, %v2503, 0
  %v4356 = vsel %vm1370, %v2506, 0
  %v4359 = vsel %vm1370, %v2509, 0
  %v4362 = vsel %vm1370, %v2512, 0
  %v4365 = vsel %vm1370, %v2515, 0
  %v4368 = vsel %vm1370, %v2518, 0
  %v4371 = vsel %vm1370, %v2521, 0
  %v4374 = vsel %vm1370, %v2524, 0
  %v4377 = vsel %vm1370, %v2527, 0
  %v4380 = vsel %vm1370, %v2530, 0
  %v4383 = vsel %vm1370, %v2533, 0
  %v4386 = vsel %vm1370, %v2536, 0
  %v4389 = vsel %vm1370, %v2539, 0
  %v4392 = vsel %vm1370, %v2542, 0
  %v4395 = vsel %vm1370, %v2545, 0
  %v4398 = vsel %vm1370, %v2548, 0
  %v4401 = vsel %vm1370, %v2551, 0
  %v4404 = vsel %vm1370, %v2554, 0
  %v4407 = vsel %vm1370, %v2557, 0
  %4409 = vmatpush.msra.mxu0 0.0
  %4410 = vmatpush.msra.mxu0 0.0
  %4411 = vmatpush.msra.mxu0 0.0
  %4412 = vmatpush.msra.mxu0 0.0
  %4413 = vmatpush.msra.mxu0 0.0
  %4414 = vmatpush.msra.mxu0 0.0
  %4415 = vmatpush.msra.mxu0 0.0
  %4416 = vmatpush.msra.mxu0 0.0
  %4417 = vmatpush.msra.mxu0 0.0
  %4418 = vmatpush.msra.mxu0 0.0
  %4419 = vmatpush.msra.mxu0 0.0
  %4420 = vmatpush.msra.mxu0 0.0
  %4421 = vmatpush.msra.mxu0 0.0
  %4422 = vmatpush.msra.mxu0 0.0
  %4423 = vmatpush.msra.mxu0 0.0
  %4424 = vmatpush.msra.mxu0 %v2559
  %4425 = vmatmul.f32.gmra.mxu0 %v4314
  %v4426 = vpop.f32.mrf.mxu0
  %v4427 = vadd.f32 %v4218, %v4426
  %4428 = vmatmul.f32.gmra.mxu0 %v4317
  %v4429 = vpop.f32.mrf.mxu0
  %v4430 = vadd.f32 %v4221, %v4429
  %4431 = vmatmul.f32.gmra.mxu0 %v4320
  %v4432 = vpop.f32.mrf.mxu0
  %v4433 = vadd.f32 %v4224, %v4432
  %4434 = vmatmul.f32.gmra.mxu0 %v4323
  %v4435 = vpop.f32.mrf.mxu0
  %v4436 = vadd.f32 %v4227, %v4435
  %4437 = vmatmul.f32.gmra.mxu0 %v4326
  %v4438 = vpop.f32.mrf.mxu0
  %v4439 = vadd.f32 %v4230, %v4438
  %4440 = vmatmul.f32.gmra.mxu0 %v4329
  %v4441 = vpop.f32.mrf.mxu0
  %v4442 = vadd.f32 %v4233, %v4441
  %4443 = vmatmul.f32.gmra.mxu0 %v4332
  %v4444 = vpop.f32.mrf.mxu0
  %v4445 = vadd.f32 %v4236, %v4444
  %4446 = vmatmul.f32.gmra.mxu0 %v4335
  %v4447 = vpop.f32.mrf.mxu0
  %v4448 = vadd.f32 %v4239, %v4447
  %4449 = vmatmul.f32.gmra.mxu0 %v4338
  %v4450 = vpop.f32.mrf.mxu0
  %v4451 = vadd.f32 %v4242, %v4450
  %4452 = vmatmul.f32.gmra.mxu0 %v4341
  %v4453 = vpop.f32.mrf.mxu0
  %v4454 = vadd.f32 %v4245, %v4453
  %4455 = vmatmul.f32.gmra.mxu0 %v4344
  %v4456 = vpop.f32.mrf.mxu0
  %v4457 = vadd.f32 %v4248, %v4456
  %4458 = vmatmul.f32.gmra.mxu0 %v4347
  %v4459 = vpop.f32.mrf.mxu0
  %v4460 = vadd.f32 %v4251, %v4459
  %4461 = vmatmul.f32.gmra.mxu0 %v4350
  %v4462 = vpop.f32.mrf.mxu0
  %v4463 = vadd.f32 %v4254, %v4462
  %4464 = vmatmul.f32.gmra.mxu0 %v4353
  %v4465 = vpop.f32.mrf.mxu0
  %v4466 = vadd.f32 %v4257, %v4465
  %4467 = vmatmul.f32.gmra.mxu0 %v4356
  %v4468 = vpop.f32.mrf.mxu0
  %v4469 = vadd.f32 %v4260, %v4468
  %4470 = vmatmul.f32.gmra.mxu0 %v4359
  %v4471 = vpop.f32.mrf.mxu0
  %v4472 = vadd.f32 %v4263, %v4471
  %4473 = vmatmul.f32.gmra.mxu0 %v4362
  %v4474 = vpop.f32.mrf.mxu0
  %v4475 = vadd.f32 %v4266, %v4474
  %4476 = vmatmul.f32.gmra.mxu0 %v4365
  %v4477 = vpop.f32.mrf.mxu0
  %v4478 = vadd.f32 %v4269, %v4477
  %4479 = vmatmul.f32.gmra.mxu0 %v4368
  %v4480 = vpop.f32.mrf.mxu0
  %v4481 = vadd.f32 %v4272, %v4480
  %4482 = vmatmul.f32.gmra.mxu0 %v4371
  %v4483 = vpop.f32.mrf.mxu0
  %v4484 = vadd.f32 %v4275, %v4483
  %4485 = vmatmul.f32.gmra.mxu0 %v4374
  %v4486 = vpop.f32.mrf.mxu0
  %v4487 = vadd.f32 %v4278, %v4486
  %4488 = vmatmul.f32.gmra.mxu0 %v4377
  %v4489 = vpop.f32.mrf.mxu0
  %v4490 = vadd.f32 %v4281, %v4489
  %4491 = vmatmul.f32.gmra.mxu0 %v4380
  %v4492 = vpop.f32.mrf.mxu0
  %v4493 = vadd.f32 %v4284, %v4492
  %4494 = vmatmul.f32.gmra.mxu0 %v4383
  %v4495 = vpop.f32.mrf.mxu0
  %v4496 = vadd.f32 %v4287, %v4495
  %4497 = vmatmul.f32.gmra.mxu0 %v4386
  %v4498 = vpop.f32.mrf.mxu0
  %v4499 = vadd.f32 %v4290, %v4498
  %4500 = vmatmul.f32.gmra.mxu0 %v4389
  %v4501 = vpop.f32.mrf.mxu0
  %v4502 = vadd.f32 %v4293, %v4501
  %4503 = vmatmul.f32.gmra.mxu0 %v4392
  %v4504 = vpop.f32.mrf.mxu0
  %v4505 = vadd.f32 %v4296, %v4504
  %4506 = vmatmul.f32.gmra.mxu0 %v4395
  %v4507 = vpop.f32.mrf.mxu0
  %v4508 = vadd.f32 %v4299, %v4507
  %4509 = vmatmul.f32.gmra.mxu0 %v4398
  %v4510 = vpop.f32.mrf.mxu0
  %v4511 = vadd.f32 %v4302, %v4510
  %4512 = vmatmul.f32.gmra.mxu0 %v4401
  %v4513 = vpop.f32.mrf.mxu0
  %v4514 = vadd.f32 %v4305, %v4513
  %4515 = vmatmul.f32.gmra.mxu0 %v4404
  %v4516 = vpop.f32.mrf.mxu0
  %v4517 = vadd.f32 %v4308, %v4516
  %4518 = vmatmul.f32.gmra.mxu0 %v4407
  %v4519 = vpop.f32.mrf.mxu0
  %v4520 = vadd.f32 %v4311, %v4519
  %4521 = vdwg.mxu0
  %4523 = vset.pattern.permute.xlu0 0
  %4524 = vperm.xlu0 %4523, %v109
  %v4525 = vpop.permute.xlu0 %4524
  %4528 = vset.pattern.permute.xlu0 0
  %4529 = vperm.xlu0 %4528, %v110
  %v4530 = vpop.permute.xlu0 %4529
  %4533 = vset.pattern.permute.xlu0 0
  %4534 = vperm.xlu0 %4533, %v111
  %v4535 = vpop.permute.xlu0 %4534
  %4538 = vset.pattern.permute.xlu0 0
  %4539 = vperm.xlu0 %4538, %v112
  %v4540 = vpop.permute.xlu0 %4539
  %4543 = vset.pattern.permute.xlu0 0
  %4544 = vperm.xlu0 %4543, %v113
  %v4545 = vpop.permute.xlu0 %4544
  %4548 = vset.pattern.permute.xlu0 0
  %4549 = vperm.xlu0 %4548, %v114
  %v4550 = vpop.permute.xlu0 %4549
  %4553 = vset.pattern.permute.xlu0 0
  %4554 = vperm.xlu0 %4553, %v115
  %v4555 = vpop.permute.xlu0 %4554
  %4558 = vset.pattern.permute.xlu0 0
  %4559 = vperm.xlu0 %4558, %v116
  %v4560 = vpop.permute.xlu0 %4559
  %4563 = vset.pattern.permute.xlu0 0
  %4564 = vperm.xlu0 %4563, %v117
  %v4565 = vpop.permute.xlu0 %4564
  %4568 = vset.pattern.permute.xlu0 0
  %4569 = vperm.xlu0 %4568, %v118
  %v4570 = vpop.permute.xlu0 %4569
  %4573 = vset.pattern.permute.xlu0 0
  %4574 = vperm.xlu0 %4573, %v119
  %v4575 = vpop.permute.xlu0 %4574
  %4578 = vset.pattern.permute.xlu0 0
  %4579 = vperm.xlu0 %4578, %v120
  %v4580 = vpop.permute.xlu0 %4579
  %4583 = vset.pattern.permute.xlu0 0
  %4584 = vperm.xlu0 %4583, %v121
  %v4585 = vpop.permute.xlu0 %4584
  %4588 = vset.pattern.permute.xlu0 0
  %4589 = vperm.xlu0 %4588, %v122
  %v4590 = vpop.permute.xlu0 %4589
  %4593 = vset.pattern.permute.xlu0 0
  %4594 = vperm.xlu0 %4593, %v123
  %v4595 = vpop.permute.xlu0 %4594
  %4598 = vset.pattern.permute.xlu0 0
  %4599 = vperm.xlu0 %4598, %v124
  %v4600 = vpop.permute.xlu0 %4599
  %4603 = vset.pattern.permute.xlu0 0
  %4604 = vperm.xlu0 %4603, %v125
  %v4605 = vpop.permute.xlu0 %4604
  %4608 = vset.pattern.permute.xlu0 0
  %4609 = vperm.xlu0 %4608, %v126
  %v4610 = vpop.permute.xlu0 %4609
  %4613 = vset.pattern.permute.xlu0 0
  %4614 = vperm.xlu0 %4613, %v127
  %v4615 = vpop.permute.xlu0 %4614
  %4618 = vset.pattern.permute.xlu0 0
  %4619 = vperm.xlu0 %4618, %v128
  %v4620 = vpop.permute.xlu0 %4619
  %4623 = vset.pattern.permute.xlu0 0
  %4624 = vperm.xlu0 %4623, %v129
  %v4625 = vpop.permute.xlu0 %4624
  %4628 = vset.pattern.permute.xlu0 0
  %4629 = vperm.xlu0 %4628, %v130
  %v4630 = vpop.permute.xlu0 %4629
  %4633 = vset.pattern.permute.xlu0 0
  %4634 = vperm.xlu0 %4633, %v131
  %v4635 = vpop.permute.xlu0 %4634
  %4638 = vset.pattern.permute.xlu0 0
  %4639 = vperm.xlu0 %4638, %v132
  %v4640 = vpop.permute.xlu0 %4639
  %4643 = vset.pattern.permute.xlu0 0
  %4644 = vperm.xlu0 %4643, %v133
  %v4645 = vpop.permute.xlu0 %4644
  %4648 = vset.pattern.permute.xlu0 0
  %4649 = vperm.xlu0 %4648, %v134
  %v4650 = vpop.permute.xlu0 %4649
  %4653 = vset.pattern.permute.xlu0 0
  %4654 = vperm.xlu0 %4653, %v135
  %v4655 = vpop.permute.xlu0 %4654
  %4658 = vset.pattern.permute.xlu0 0
  %4659 = vperm.xlu0 %4658, %v136
  %v4660 = vpop.permute.xlu0 %4659
  %4663 = vset.pattern.permute.xlu0 0
  %4664 = vperm.xlu0 %4663, %v137
  %v4665 = vpop.permute.xlu0 %4664
  %4668 = vset.pattern.permute.xlu0 0
  %4669 = vperm.xlu0 %4668, %v138
  %v4670 = vpop.permute.xlu0 %4669
  %4673 = vset.pattern.permute.xlu0 0
  %4674 = vperm.xlu0 %4673, %v139
  %v4675 = vpop.permute.xlu0 %4674
  %4678 = vset.pattern.permute.xlu0 0
  %4679 = vperm.xlu0 %4678, %v140
  %v4680 = vpop.permute.xlu0 %4679
  %v4682 = vmul.f32 %v4525, %v4427
  %v4683 = vmul.f32 %v4530, %v4430
  %v4684 = vmul.f32 %v4535, %v4433
  %v4685 = vmul.f32 %v4540, %v4436
  %v4686 = vmul.f32 %v4545, %v4439
  %v4687 = vmul.f32 %v4550, %v4442
  %v4688 = vmul.f32 %v4555, %v4445
  %v4689 = vmul.f32 %v4560, %v4448
  %v4690 = vmul.f32 %v4565, %v4451
  %v4691 = vmul.f32 %v4570, %v4454
  %v4692 = vmul.f32 %v4575, %v4457
  %v4693 = vmul.f32 %v4580, %v4460
  %v4694 = vmul.f32 %v4585, %v4463
  %v4695 = vmul.f32 %v4590, %v4466
  %v4696 = vmul.f32 %v4595, %v4469
  %v4697 = vmul.f32 %v4600, %v4472
  %v4698 = vmul.f32 %v4605, %v4475
  %v4699 = vmul.f32 %v4610, %v4478
  %v4700 = vmul.f32 %v4615, %v4481
  %v4701 = vmul.f32 %v4620, %v4484
  %v4702 = vmul.f32 %v4625, %v4487
  %v4703 = vmul.f32 %v4630, %v4490
  %v4704 = vmul.f32 %v4635, %v4493
  %v4705 = vmul.f32 %v4640, %v4496
  %v4706 = vmul.f32 %v4645, %v4499
  %v4707 = vmul.f32 %v4650, %v4502
  %v4708 = vmul.f32 %v4655, %v4505
  %v4709 = vmul.f32 %v4660, %v4508
  %v4710 = vmul.f32 %v4665, %v4511
  %v4711 = vmul.f32 %v4670, %v4514
  %v4712 = vmul.f32 %v4675, %v4517
  %v4713 = vmul.f32 %v4680, %v4520
  %v4715 = vperm.slane %v54, 0
  %v4717 = vadd.f32 %v4682, %v4715
  %v4718 = vadd.f32 %v4683, %v4715
  %v4719 = vadd.f32 %v4684, %v4715
  %v4720 = vadd.f32 %v4685, %v4715
  %v4721 = vadd.f32 %v4686, %v4715
  %v4722 = vadd.f32 %v4687, %v4715
  %v4723 = vadd.f32 %v4688, %v4715
  %v4724 = vadd.f32 %v4689, %v4715
  %v4725 = vadd.f32 %v4690, %v4715
  %v4726 = vadd.f32 %v4691, %v4715
  %v4727 = vadd.f32 %v4692, %v4715
  %v4728 = vadd.f32 %v4693, %v4715
  %v4729 = vadd.f32 %v4694, %v4715
  %v4730 = vadd.f32 %v4695, %v4715
  %v4731 = vadd.f32 %v4696, %v4715
  %v4732 = vadd.f32 %v4697, %v4715
  %v4733 = vadd.f32 %v4698, %v4715
  %v4734 = vadd.f32 %v4699, %v4715
  %v4735 = vadd.f32 %v4700, %v4715
  %v4736 = vadd.f32 %v4701, %v4715
  %v4737 = vadd.f32 %v4702, %v4715
  %v4738 = vadd.f32 %v4703, %v4715
  %v4739 = vadd.f32 %v4704, %v4715
  %v4740 = vadd.f32 %v4705, %v4715
  %v4741 = vadd.f32 %v4706, %v4715
  %v4742 = vadd.f32 %v4707, %v4715
  %v4743 = vadd.f32 %v4708, %v4715
  %v4744 = vadd.f32 %v4709, %v4715
  %v4745 = vadd.f32 %v4710, %v4715
  %v4746 = vadd.f32 %v4711, %v4715
  %v4747 = vadd.f32 %v4712, %v4715
  %v4748 = vadd.f32 %v4713, %v4715
  %v4749 = vadd.f32 %v4717, %v77
  %v4750 = vadd.f32 %v4718, %v78
  %v4751 = vadd.f32 %v4719, %v79
  %v4752 = vadd.f32 %v4720, %v80
  %v4753 = vadd.f32 %v4721, %v81
  %v4754 = vadd.f32 %v4722, %v82
  %v4755 = vadd.f32 %v4723, %v83
  %v4756 = vadd.f32 %v4724, %v84
  %v4757 = vadd.f32 %v4725, %v85
  %v4758 = vadd.f32 %v4726, %v86
  %v4759 = vadd.f32 %v4727, %v87
  %v4760 = vadd.f32 %v4728, %v88
  %v4761 = vadd.f32 %v4729, %v89
  %v4762 = vadd.f32 %v4730, %v90
  %v4763 = vadd.f32 %v4731, %v91
  %v4764 = vadd.f32 %v4732, %v92
  %v4765 = vadd.f32 %v4733, %v93
  %v4766 = vadd.f32 %v4734, %v94
  %v4767 = vadd.f32 %v4735, %v95
  %v4768 = vadd.f32 %v4736, %v96
  %v4769 = vadd.f32 %v4737, %v97
  %v4770 = vadd.f32 %v4738, %v98
  %v4771 = vadd.f32 %v4739, %v99
  %v4772 = vadd.f32 %v4740, %v100
  %v4773 = vadd.f32 %v4741, %v101
  %v4774 = vadd.f32 %v4742, %v102
  %v4775 = vadd.f32 %v4743, %v103
  %v4776 = vadd.f32 %v4744, %v104
  %v4777 = vadd.f32 %v4745, %v105
  %v4778 = vadd.f32 %v4746, %v106
  %v4779 = vadd.f32 %v4747, %v107
  %v4780 = vadd.f32 %v4748, %v108
  %v4781 = vsel %vm141, %v4749, 0.0
  %4782 = vadd.xlane.f32.xlu0 %v4781
  %v4783 = vpop.xlane.xlu0 %4782
  %v4784 = vsel %vm141, %v4750, 0.0
  %4785 = vadd.xlane.f32.xlu0 %v4784
  %v4786 = vpop.xlane.xlu0 %4785
  %v4787 = vsel %vm141, %v4751, 0.0
  %4788 = vadd.xlane.f32.xlu0 %v4787
  %v4789 = vpop.xlane.xlu0 %4788
  %v4790 = vsel %vm141, %v4752, 0.0
  %4791 = vadd.xlane.f32.xlu0 %v4790
  %v4792 = vpop.xlane.xlu0 %4791
  %v4793 = vsel %vm141, %v4753, 0.0
  %4794 = vadd.xlane.f32.xlu0 %v4793
  %v4795 = vpop.xlane.xlu0 %4794
  %v4796 = vsel %vm141, %v4754, 0.0
  %4797 = vadd.xlane.f32.xlu0 %v4796
  %v4798 = vpop.xlane.xlu0 %4797
  %v4799 = vsel %vm141, %v4755, 0.0
  %4800 = vadd.xlane.f32.xlu0 %v4799
  %v4801 = vpop.xlane.xlu0 %4800
  %v4802 = vsel %vm141, %v4756, 0.0
  %4803 = vadd.xlane.f32.xlu0 %v4802
  %v4804 = vpop.xlane.xlu0 %4803
  %v4805 = vsel %vm141, %v4757, 0.0
  %4806 = vadd.xlane.f32.xlu0 %v4805
  %v4807 = vpop.xlane.xlu0 %4806
  %v4808 = vsel %vm141, %v4758, 0.0
  %4809 = vadd.xlane.f32.xlu0 %v4808
  %v4810 = vpop.xlane.xlu0 %4809
  %v4811 = vsel %vm141, %v4759, 0.0
  %4812 = vadd.xlane.f32.xlu0 %v4811
  %v4813 = vpop.xlane.xlu0 %4812
  %v4814 = vsel %vm141, %v4760, 0.0
  %4815 = vadd.xlane.f32.xlu0 %v4814
  %v4816 = vpop.xlane.xlu0 %4815
  %v4817 = vsel %vm141, %v4761, 0.0
  %4818 = vadd.xlane.f32.xlu0 %v4817
  %v4819 = vpop.xlane.xlu0 %4818
  %v4820 = vsel %vm141, %v4762, 0.0
  %4821 = vadd.xlane.f32.xlu0 %v4820
  %v4822 = vpop.xlane.xlu0 %4821
  %v4823 = vsel %vm141, %v4763, 0.0
  %4824 = vadd.xlane.f32.xlu0 %v4823
  %v4825 = vpop.xlane.xlu0 %4824
  %v4826 = vsel %vm141, %v4764, 0.0
  %4827 = vadd.xlane.f32.xlu0 %v4826
  %v4828 = vpop.xlane.xlu0 %4827
  %v4829 = vsel %vm141, %v4765, 0.0
  %4830 = vadd.xlane.f32.xlu0 %v4829
  %v4831 = vpop.xlane.xlu0 %4830
  %v4832 = vsel %vm141, %v4766, 0.0
  %4833 = vadd.xlane.f32.xlu0 %v4832
  %v4834 = vpop.xlane.xlu0 %4833
  %v4835 = vsel %vm141, %v4767, 0.0
  %4836 = vadd.xlane.f32.xlu0 %v4835
  %v4837 = vpop.xlane.xlu0 %4836
  %v4838 = vsel %vm141, %v4768, 0.0
  %4839 = vadd.xlane.f32.xlu0 %v4838
  %v4840 = vpop.xlane.xlu0 %4839
  %v4841 = vsel %vm141, %v4769, 0.0
  %4842 = vadd.xlane.f32.xlu0 %v4841
  %v4843 = vpop.xlane.xlu0 %4842
  %v4844 = vsel %vm141, %v4770, 0.0
  %4845 = vadd.xlane.f32.xlu0 %v4844
  %v4846 = vpop.xlane.xlu0 %4845
  %v4847 = vsel %vm141, %v4771, 0.0
  %4848 = vadd.xlane.f32.xlu0 %v4847
  %v4849 = vpop.xlane.xlu0 %4848
  %v4850 = vsel %vm141, %v4772, 0.0
  %4851 = vadd.xlane.f32.xlu0 %v4850
  %v4852 = vpop.xlane.xlu0 %4851
  %v4853 = vsel %vm141, %v4773, 0.0
  %4854 = vadd.xlane.f32.xlu0 %v4853
  %v4855 = vpop.xlane.xlu0 %4854
  %v4856 = vsel %vm141, %v4774, 0.0
  %4857 = vadd.xlane.f32.xlu0 %v4856
  %v4858 = vpop.xlane.xlu0 %4857
  %v4859 = vsel %vm141, %v4775, 0.0
  %4860 = vadd.xlane.f32.xlu0 %v4859
  %v4861 = vpop.xlane.xlu0 %4860
  %v4862 = vsel %vm141, %v4776, 0.0
  %4863 = vadd.xlane.f32.xlu0 %v4862
  %v4864 = vpop.xlane.xlu0 %4863
  %v4865 = vsel %vm141, %v4777, 0.0
  %4866 = vadd.xlane.f32.xlu0 %v4865
  %v4867 = vpop.xlane.xlu0 %4866
  %v4868 = vsel %vm141, %v4778, 0.0
  %4869 = vadd.xlane.f32.xlu0 %v4868
  %v4870 = vpop.xlane.xlu0 %4869
  %v4871 = vsel %vm141, %v4779, 0.0
  %4872 = vadd.xlane.f32.xlu0 %v4871
  %v4873 = vpop.xlane.xlu0 %4872
  %v4874 = vsel %vm141, %v4780, 0.0
  %4875 = vadd.xlane.f32.xlu0 %v4874
  %v4876 = vpop.xlane.xlu0 %4875
  %v4877 = vmul.f32 %v4783, %v244
  %v4878 = vmul.f32 %v4786, %v244
  %v4879 = vmul.f32 %v4789, %v244
  %v4880 = vmul.f32 %v4792, %v244
  %v4881 = vmul.f32 %v4795, %v244
  %v4882 = vmul.f32 %v4798, %v244
  %v4883 = vmul.f32 %v4801, %v244
  %v4884 = vmul.f32 %v4804, %v244
  %v4885 = vmul.f32 %v4807, %v244
  %v4886 = vmul.f32 %v4810, %v244
  %v4887 = vmul.f32 %v4813, %v244
  %v4888 = vmul.f32 %v4816, %v244
  %v4889 = vmul.f32 %v4819, %v244
  %v4890 = vmul.f32 %v4822, %v244
  %v4891 = vmul.f32 %v4825, %v244
  %v4892 = vmul.f32 %v4828, %v244
  %v4893 = vmul.f32 %v4831, %v244
  %v4894 = vmul.f32 %v4834, %v244
  %v4895 = vmul.f32 %v4837, %v244
  %v4896 = vmul.f32 %v4840, %v244
  %v4897 = vmul.f32 %v4843, %v244
  %v4898 = vmul.f32 %v4846, %v244
  %v4899 = vmul.f32 %v4849, %v244
  %v4900 = vmul.f32 %v4852, %v244
  %v4901 = vmul.f32 %v4855, %v244
  %v4902 = vmul.f32 %v4858, %v244
  %v4903 = vmul.f32 %v4861, %v244
  %v4904 = vmul.f32 %v4864, %v244
  %v4905 = vmul.f32 %v4867, %v244
  %v4906 = vmul.f32 %v4870, %v244
  %v4907 = vmul.f32 %v4873, %v244
  %v4908 = vmul.f32 %v4876, %v244
  %v4909 = vsub.f32 %v4749, %v4877
  %v4910 = vsub.f32 %v4750, %v4878
  %v4911 = vsub.f32 %v4751, %v4879
  %v4912 = vsub.f32 %v4752, %v4880
  %v4913 = vsub.f32 %v4753, %v4881
  %v4914 = vsub.f32 %v4754, %v4882
  %v4915 = vsub.f32 %v4755, %v4883
  %v4916 = vsub.f32 %v4756, %v4884
  %v4917 = vsub.f32 %v4757, %v4885
  %v4918 = vsub.f32 %v4758, %v4886
  %v4919 = vsub.f32 %v4759, %v4887
  %v4920 = vsub.f32 %v4760, %v4888
  %v4921 = vsub.f32 %v4761, %v4889
  %v4922 = vsub.f32 %v4762, %v4890
  %v4923 = vsub.f32 %v4763, %v4891
  %v4924 = vsub.f32 %v4764, %v4892
  %v4925 = vsub.f32 %v4765, %v4893
  %v4926 = vsub.f32 %v4766, %v4894
  %v4927 = vsub.f32 %v4767, %v4895
  %v4928 = vsub.f32 %v4768, %v4896
  %v4929 = vsub.f32 %v4769, %v4897
  %v4930 = vsub.f32 %v4770, %v4898
  %v4931 = vsub.f32 %v4771, %v4899
  %v4932 = vsub.f32 %v4772, %v4900
  %v4933 = vsub.f32 %v4773, %v4901
  %v4934 = vsub.f32 %v4774, %v4902
  %v4935 = vsub.f32 %v4775, %v4903
  %v4936 = vsub.f32 %v4776, %v4904
  %v4937 = vsub.f32 %v4777, %v4905
  %v4938 = vsub.f32 %v4778, %v4906
  %v4939 = vsub.f32 %v4779, %v4907
  %v4940 = vsub.f32 %v4780, %v4908
  %v4941 = vmul.f32 %v4909, %v4909
  %v4942 = vmul.f32 %v4910, %v4910
  %v4943 = vmul.f32 %v4911, %v4911
  %v4944 = vmul.f32 %v4912, %v4912
  %v4945 = vmul.f32 %v4913, %v4913
  %v4946 = vmul.f32 %v4914, %v4914
  %v4947 = vmul.f32 %v4915, %v4915
  %v4948 = vmul.f32 %v4916, %v4916
  %v4949 = vmul.f32 %v4917, %v4917
  %v4950 = vmul.f32 %v4918, %v4918
  %v4951 = vmul.f32 %v4919, %v4919
  %v4952 = vmul.f32 %v4920, %v4920
  %v4953 = vmul.f32 %v4921, %v4921
  %v4954 = vmul.f32 %v4922, %v4922
  %v4955 = vmul.f32 %v4923, %v4923
  %v4956 = vmul.f32 %v4924, %v4924
  %v4957 = vmul.f32 %v4925, %v4925
  %v4958 = vmul.f32 %v4926, %v4926
  %v4959 = vmul.f32 %v4927, %v4927
  %v4960 = vmul.f32 %v4928, %v4928
  %v4961 = vmul.f32 %v4929, %v4929
  %v4962 = vmul.f32 %v4930, %v4930
  %v4963 = vmul.f32 %v4931, %v4931
  %v4964 = vmul.f32 %v4932, %v4932
  %v4965 = vmul.f32 %v4933, %v4933
  %v4966 = vmul.f32 %v4934, %v4934
  %v4967 = vmul.f32 %v4935, %v4935
  %v4968 = vmul.f32 %v4936, %v4936
  %v4969 = vmul.f32 %v4937, %v4937
  %v4970 = vmul.f32 %v4938, %v4938
  %v4971 = vmul.f32 %v4939, %v4939
  %v4972 = vmul.f32 %v4940, %v4940
  %v4973 = vsel %vm141, %v4941, 0.0
  %4974 = vadd.xlane.f32.xlu0 %v4973
  %v4975 = vpop.xlane.xlu0 %4974
  %v4976 = vsel %vm141, %v4942, 0.0
  %4977 = vadd.xlane.f32.xlu0 %v4976
  %v4978 = vpop.xlane.xlu0 %4977
  %v4979 = vsel %vm141, %v4943, 0.0
  %4980 = vadd.xlane.f32.xlu0 %v4979
  %v4981 = vpop.xlane.xlu0 %4980
  %v4982 = vsel %vm141, %v4944, 0.0
  %4983 = vadd.xlane.f32.xlu0 %v4982
  %v4984 = vpop.xlane.xlu0 %4983
  %v4985 = vsel %vm141, %v4945, 0.0
  %4986 = vadd.xlane.f32.xlu0 %v4985
  %v4987 = vpop.xlane.xlu0 %4986
  %v4988 = vsel %vm141, %v4946, 0.0
  %4989 = vadd.xlane.f32.xlu0 %v4988
  %v4990 = vpop.xlane.xlu0 %4989
  %v4991 = vsel %vm141, %v4947, 0.0
  %4992 = vadd.xlane.f32.xlu0 %v4991
  %v4993 = vpop.xlane.xlu0 %4992
  %v4994 = vsel %vm141, %v4948, 0.0
  %4995 = vadd.xlane.f32.xlu0 %v4994
  %v4996 = vpop.xlane.xlu0 %4995
  %v4997 = vsel %vm141, %v4949, 0.0
  %4998 = vadd.xlane.f32.xlu0 %v4997
  %v4999 = vpop.xlane.xlu0 %4998
  %v5000 = vsel %vm141, %v4950, 0.0
  %5001 = vadd.xlane.f32.xlu0 %v5000
  %v5002 = vpop.xlane.xlu0 %5001
  %v5003 = vsel %vm141, %v4951, 0.0
  %5004 = vadd.xlane.f32.xlu0 %v5003
  %v5005 = vpop.xlane.xlu0 %5004
  %v5006 = vsel %vm141, %v4952, 0.0
  %5007 = vadd.xlane.f32.xlu0 %v5006
  %v5008 = vpop.xlane.xlu0 %5007
  %v5009 = vsel %vm141, %v4953, 0.0
  %5010 = vadd.xlane.f32.xlu0 %v5009
  %v5011 = vpop.xlane.xlu0 %5010
  %v5012 = vsel %vm141, %v4954, 0.0
  %5013 = vadd.xlane.f32.xlu0 %v5012
  %v5014 = vpop.xlane.xlu0 %5013
  %v5015 = vsel %vm141, %v4955, 0.0
  %5016 = vadd.xlane.f32.xlu0 %v5015
  %v5017 = vpop.xlane.xlu0 %5016
  %v5018 = vsel %vm141, %v4956, 0.0
  %5019 = vadd.xlane.f32.xlu0 %v5018
  %v5020 = vpop.xlane.xlu0 %5019
  %v5021 = vsel %vm141, %v4957, 0.0
  %5022 = vadd.xlane.f32.xlu0 %v5021
  %v5023 = vpop.xlane.xlu0 %5022
  %v5024 = vsel %vm141, %v4958, 0.0
  %5025 = vadd.xlane.f32.xlu0 %v5024
  %v5026 = vpop.xlane.xlu0 %5025
  %v5027 = vsel %vm141, %v4959, 0.0
  %5028 = vadd.xlane.f32.xlu0 %v5027
  %v5029 = vpop.xlane.xlu0 %5028
  %v5030 = vsel %vm141, %v4960, 0.0
  %5031 = vadd.xlane.f32.xlu0 %v5030
  %v5032 = vpop.xlane.xlu0 %5031
  %v5033 = vsel %vm141, %v4961, 0.0
  %5034 = vadd.xlane.f32.xlu0 %v5033
  %v5035 = vpop.xlane.xlu0 %5034
  %v5036 = vsel %vm141, %v4962, 0.0
  %5037 = vadd.xlane.f32.xlu0 %v5036
  %v5038 = vpop.xlane.xlu0 %5037
  %v5039 = vsel %vm141, %v4963, 0.0
  %5040 = vadd.xlane.f32.xlu0 %v5039
  %v5041 = vpop.xlane.xlu0 %5040
  %v5042 = vsel %vm141, %v4964, 0.0
  %5043 = vadd.xlane.f32.xlu0 %v5042
  %v5044 = vpop.xlane.xlu0 %5043
  %v5045 = vsel %vm141, %v4965, 0.0
  %5046 = vadd.xlane.f32.xlu0 %v5045
  %v5047 = vpop.xlane.xlu0 %5046
  %v5048 = vsel %vm141, %v4966, 0.0
  %5049 = vadd.xlane.f32.xlu0 %v5048
  %v5050 = vpop.xlane.xlu0 %5049
  %v5051 = vsel %vm141, %v4967, 0.0
  %5052 = vadd.xlane.f32.xlu0 %v5051
  %v5053 = vpop.xlane.xlu0 %5052
  %v5054 = vsel %vm141, %v4968, 0.0
  %5055 = vadd.xlane.f32.xlu0 %v5054
  %v5056 = vpop.xlane.xlu0 %5055
  %v5057 = vsel %vm141, %v4969, 0.0
  %5058 = vadd.xlane.f32.xlu0 %v5057
  %v5059 = vpop.xlane.xlu0 %5058
  %v5060 = vsel %vm141, %v4970, 0.0
  %5061 = vadd.xlane.f32.xlu0 %v5060
  %v5062 = vpop.xlane.xlu0 %5061
  %v5063 = vsel %vm141, %v4971, 0.0
  %5064 = vadd.xlane.f32.xlu0 %v5063
  %v5065 = vpop.xlane.xlu0 %5064
  %v5066 = vsel %vm141, %v4972, 0.0
  %5067 = vadd.xlane.f32.xlu0 %v5066
  %v5068 = vpop.xlane.xlu0 %5067
  %v5069 = vmul.f32 %v4975, %v244
  %v5070 = vmul.f32 %v4978, %v244
  %v5071 = vmul.f32 %v4981, %v244
  %v5072 = vmul.f32 %v4984, %v244
  %v5073 = vmul.f32 %v4987, %v244
  %v5074 = vmul.f32 %v4990, %v244
  %v5075 = vmul.f32 %v4993, %v244
  %v5076 = vmul.f32 %v4996, %v244
  %v5077 = vmul.f32 %v4999, %v244
  %v5078 = vmul.f32 %v5002, %v244
  %v5079 = vmul.f32 %v5005, %v244
  %v5080 = vmul.f32 %v5008, %v244
  %v5081 = vmul.f32 %v5011, %v244
  %v5082 = vmul.f32 %v5014, %v244
  %v5083 = vmul.f32 %v5017, %v244
  %v5084 = vmul.f32 %v5020, %v244
  %v5085 = vmul.f32 %v5023, %v244
  %v5086 = vmul.f32 %v5026, %v244
  %v5087 = vmul.f32 %v5029, %v244
  %v5088 = vmul.f32 %v5032, %v244
  %v5089 = vmul.f32 %v5035, %v244
  %v5090 = vmul.f32 %v5038, %v244
  %v5091 = vmul.f32 %v5041, %v244
  %v5092 = vmul.f32 %v5044, %v244
  %v5093 = vmul.f32 %v5047, %v244
  %v5094 = vmul.f32 %v5050, %v244
  %v5095 = vmul.f32 %v5053, %v244
  %v5096 = vmul.f32 %v5056, %v244
  %v5097 = vmul.f32 %v5059, %v244
  %v5098 = vmul.f32 %v5062, %v244
  %v5099 = vmul.f32 %v5065, %v244
  %v5100 = vmul.f32 %v5068, %v244
  %v5101 = vadd.f32 %v5069, 1e-05
  %v5102 = vadd.f32 %v5070, 1e-05
  %v5103 = vadd.f32 %v5071, 1e-05
  %v5104 = vadd.f32 %v5072, 1e-05
  %v5105 = vadd.f32 %v5073, 1e-05
  %v5106 = vadd.f32 %v5074, 1e-05
  %v5107 = vadd.f32 %v5075, 1e-05
  %v5108 = vadd.f32 %v5076, 1e-05
  %v5109 = vadd.f32 %v5077, 1e-05
  %v5110 = vadd.f32 %v5078, 1e-05
  %v5111 = vadd.f32 %v5079, 1e-05
  %v5112 = vadd.f32 %v5080, 1e-05
  %v5113 = vadd.f32 %v5081, 1e-05
  %v5114 = vadd.f32 %v5082, 1e-05
  %v5115 = vadd.f32 %v5083, 1e-05
  %v5116 = vadd.f32 %v5084, 1e-05
  %v5117 = vadd.f32 %v5085, 1e-05
  %v5118 = vadd.f32 %v5086, 1e-05
  %v5119 = vadd.f32 %v5087, 1e-05
  %v5120 = vadd.f32 %v5088, 1e-05
  %v5121 = vadd.f32 %v5089, 1e-05
  %v5122 = vadd.f32 %v5090, 1e-05
  %v5123 = vadd.f32 %v5091, 1e-05
  %v5124 = vadd.f32 %v5092, 1e-05
  %v5125 = vadd.f32 %v5093, 1e-05
  %v5126 = vadd.f32 %v5094, 1e-05
  %v5127 = vadd.f32 %v5095, 1e-05
  %v5128 = vadd.f32 %v5096, 1e-05
  %v5129 = vadd.f32 %v5097, 1e-05
  %v5130 = vadd.f32 %v5098, 1e-05
  %v5131 = vadd.f32 %v5099, 1e-05
  %v5132 = vadd.f32 %v5100, 1e-05
  %v5133 = vrsqrt.pop %v5101
  %v5134 = vmul.f32 %v5133, %v5101
  %v5135 = vmul.f32 %v5134, %v5133
  %v5136 = vmul.f32 0.5, %v5135
  %v5137 = vsub.f32 1.5, %v5136
  %v5138 = vmul.f32 %v5133, %v5137
  %vm5139 = vweird.f32 %v5101
  %vm5140 = vweird.f32 %v5133
  %vm5141 = vmor %vm5139, %vm5140
  %v5142 = vsel %vm5141, %v5133, %v5138
  %v5143 = vrsqrt.pop %v5102
  %v5144 = vmul.f32 %v5143, %v5102
  %v5145 = vmul.f32 %v5144, %v5143
  %v5146 = vmul.f32 0.5, %v5145
  %v5147 = vsub.f32 1.5, %v5146
  %v5148 = vmul.f32 %v5143, %v5147
  %vm5149 = vweird.f32 %v5102
  %vm5150 = vweird.f32 %v5143
  %vm5151 = vmor %vm5149, %vm5150
  %v5152 = vsel %vm5151, %v5143, %v5148
  %v5153 = vrsqrt.pop %v5103
  %v5154 = vmul.f32 %v5153, %v5103
  %v5155 = vmul.f32 %v5154, %v5153
  %v5156 = vmul.f32 0.5, %v5155
  %v5157 = vsub.f32 1.5, %v5156
  %v5158 = vmul.f32 %v5153, %v5157
  %vm5159 = vweird.f32 %v5103
  %vm5160 = vweird.f32 %v5153
  %vm5161 = vmor %vm5159, %vm5160
  %v5162 = vsel %vm5161, %v5153, %v5158
  %v5163 = vrsqrt.pop %v5104
  %v5164 = vmul.f32 %v5163, %v5104
  %v5165 = vmul.f32 %v5164, %v5163
  %v5166 = vmul.f32 0.5, %v5165
  %v5167 = vsub.f32 1.5, %v5166
  %v5168 = vmul.f32 %v5163, %v5167
  %vm5169 = vweird.f32 %v5104
  %vm5170 = vweird.f32 %v5163
  %vm5171 = vmor %vm5169, %vm5170
  %v5172 = vsel %vm5171, %v5163, %v5168
  %v5173 = vrsqrt.pop %v5105
  %v5174 = vmul.f32 %v5173, %v5105
  %v5175 = vmul.f32 %v5174, %v5173
  %v5176 = vmul.f32 0.5, %v5175
  %v5177 = vsub.f32 1.5, %v5176
  %v5178 = vmul.f32 %v5173, %v5177
  %vm5179 = vweird.f32 %v5105
  %vm5180 = vweird.f32 %v5173
  %vm5181 = vmor %vm5179, %vm5180
  %v5182 = vsel %vm5181, %v5173, %v5178
  %v5183 = vrsqrt.pop %v5106
  %v5184 = vmul.f32 %v5183, %v5106
  %v5185 = vmul.f32 %v5184, %v5183
  %v5186 = vmul.f32 0.5, %v5185
  %v5187 = vsub.f32 1.5, %v5186
  %v5188 = vmul.f32 %v5183, %v5187
  %vm5189 = vweird.f32 %v5106
  %vm5190 = vweird.f32 %v5183
  %vm5191 = vmor %vm5189, %vm5190
  %v5192 = vsel %vm5191, %v5183, %v5188
  %v5193 = vrsqrt.pop %v5107
  %v5194 = vmul.f32 %v5193, %v5107
  %v5195 = vmul.f32 %v5194, %v5193
  %v5196 = vmul.f32 0.5, %v5195
  %v5197 = vsub.f32 1.5, %v5196
  %v5198 = vmul.f32 %v5193, %v5197
  %vm5199 = vweird.f32 %v5107
  %vm5200 = vweird.f32 %v5193
  %vm5201 = vmor %vm5199, %vm5200
  %v5202 = vsel %vm5201, %v5193, %v5198
  %v5203 = vrsqrt.pop %v5108
  %v5204 = vmul.f32 %v5203, %v5108
  %v5205 = vmul.f32 %v5204, %v5203
  %v5206 = vmul.f32 0.5, %v5205
  %v5207 = vsub.f32 1.5, %v5206
  %v5208 = vmul.f32 %v5203, %v5207
  %vm5209 = vweird.f32 %v5108
  %vm5210 = vweird.f32 %v5203
  %vm5211 = vmor %vm5209, %vm5210
  %v5212 = vsel %vm5211, %v5203, %v5208
  %v5213 = vrsqrt.pop %v5109
  %v5214 = vmul.f32 %v5213, %v5109
  %v5215 = vmul.f32 %v5214, %v5213
  %v5216 = vmul.f32 0.5, %v5215
  %v5217 = vsub.f32 1.5, %v5216
  %v5218 = vmul.f32 %v5213, %v5217
  %vm5219 = vweird.f32 %v5109
  %vm5220 = vweird.f32 %v5213
  %vm5221 = vmor %vm5219, %vm5220
  %v5222 = vsel %vm5221, %v5213, %v5218
  %v5223 = vrsqrt.pop %v5110
  %v5224 = vmul.f32 %v5223, %v5110
  %v5225 = vmul.f32 %v5224, %v5223
  %v5226 = vmul.f32 0.5, %v5225
  %v5227 = vsub.f32 1.5, %v5226
  %v5228 = vmul.f32 %v5223, %v5227
  %vm5229 = vweird.f32 %v5110
  %vm5230 = vweird.f32 %v5223
  %vm5231 = vmor %vm5229, %vm5230
  %v5232 = vsel %vm5231, %v5223, %v5228
  %v5233 = vrsqrt.pop %v5111
  %v5234 = vmul.f32 %v5233, %v5111
  %v5235 = vmul.f32 %v5234, %v5233
  %v5236 = vmul.f32 0.5, %v5235
  %v5237 = vsub.f32 1.5, %v5236
  %v5238 = vmul.f32 %v5233, %v5237
  %vm5239 = vweird.f32 %v5111
  %vm5240 = vweird.f32 %v5233
  %vm5241 = vmor %vm5239, %vm5240
  %v5242 = vsel %vm5241, %v5233, %v5238
  %v5243 = vrsqrt.pop %v5112
  %v5244 = vmul.f32 %v5243, %v5112
  %v5245 = vmul.f32 %v5244, %v5243
  %v5246 = vmul.f32 0.5, %v5245
  %v5247 = vsub.f32 1.5, %v5246
  %v5248 = vmul.f32 %v5243, %v5247
  %vm5249 = vweird.f32 %v5112
  %vm5250 = vweird.f32 %v5243
  %vm5251 = vmor %vm5249, %vm5250
  %v5252 = vsel %vm5251, %v5243, %v5248
  %v5253 = vrsqrt.pop %v5113
  %v5254 = vmul.f32 %v5253, %v5113
  %v5255 = vmul.f32 %v5254, %v5253
  %v5256 = vmul.f32 0.5, %v5255
  %v5257 = vsub.f32 1.5, %v5256
  %v5258 = vmul.f32 %v5253, %v5257
  %vm5259 = vweird.f32 %v5113
  %vm5260 = vweird.f32 %v5253
  %vm5261 = vmor %vm5259, %vm5260
  %v5262 = vsel %vm5261, %v5253, %v5258
  %v5263 = vrsqrt.pop %v5114
  %v5264 = vmul.f32 %v5263, %v5114
  %v5265 = vmul.f32 %v5264, %v5263
  %v5266 = vmul.f32 0.5, %v5265
  %v5267 = vsub.f32 1.5, %v5266
  %v5268 = vmul.f32 %v5263, %v5267
  %vm5269 = vweird.f32 %v5114
  %vm5270 = vweird.f32 %v5263
  %vm5271 = vmor %vm5269, %vm5270
  %v5272 = vsel %vm5271, %v5263, %v5268
  %v5273 = vrsqrt.pop %v5115
  %v5274 = vmul.f32 %v5273, %v5115
  %v5275 = vmul.f32 %v5274, %v5273
  %v5276 = vmul.f32 0.5, %v5275
  %v5277 = vsub.f32 1.5, %v5276
  %v5278 = vmul.f32 %v5273, %v5277
  %vm5279 = vweird.f32 %v5115
  %vm5280 = vweird.f32 %v5273
  %vm5281 = vmor %vm5279, %vm5280
  %v5282 = vsel %vm5281, %v5273, %v5278
  %v5283 = vrsqrt.pop %v5116
  %v5284 = vmul.f32 %v5283, %v5116
  %v5285 = vmul.f32 %v5284, %v5283
  %v5286 = vmul.f32 0.5, %v5285
  %v5287 = vsub.f32 1.5, %v5286
  %v5288 = vmul.f32 %v5283, %v5287
  %vm5289 = vweird.f32 %v5116
  %vm5290 = vweird.f32 %v5283
  %vm5291 = vmor %vm5289, %vm5290
  %v5292 = vsel %vm5291, %v5283, %v5288
  %v5293 = vrsqrt.pop %v5117
  %v5294 = vmul.f32 %v5293, %v5117
  %v5295 = vmul.f32 %v5294, %v5293
  %v5296 = vmul.f32 0.5, %v5295
  %v5297 = vsub.f32 1.5, %v5296
  %v5298 = vmul.f32 %v5293, %v5297
  %vm5299 = vweird.f32 %v5117
  %vm5300 = vweird.f32 %v5293
  %vm5301 = vmor %vm5299, %vm5300
  %v5302 = vsel %vm5301, %v5293, %v5298
  %v5303 = vrsqrt.pop %v5118
  %v5304 = vmul.f32 %v5303, %v5118
  %v5305 = vmul.f32 %v5304, %v5303
  %v5306 = vmul.f32 0.5, %v5305
  %v5307 = vsub.f32 1.5, %v5306
  %v5308 = vmul.f32 %v5303, %v5307
  %vm5309 = vweird.f32 %v5118
  %vm5310 = vweird.f32 %v5303
  %vm5311 = vmor %vm5309, %vm5310
  %v5312 = vsel %vm5311, %v5303, %v5308
  %v5313 = vrsqrt.pop %v5119
  %v5314 = vmul.f32 %v5313, %v5119
  %v5315 = vmul.f32 %v5314, %v5313
  %v5316 = vmul.f32 0.5, %v5315
  %v5317 = vsub.f32 1.5, %v5316
  %v5318 = vmul.f32 %v5313, %v5317
  %vm5319 = vweird.f32 %v5119
  %vm5320 = vweird.f32 %v5313
  %vm5321 = vmor %vm5319, %vm5320
  %v5322 = vsel %vm5321, %v5313, %v5318
  %v5323 = vrsqrt.pop %v5120
  %v5324 = vmul.f32 %v5323, %v5120
  %v5325 = vmul.f32 %v5324, %v5323
  %v5326 = vmul.f32 0.5, %v5325
  %v5327 = vsub.f32 1.5, %v5326
  %v5328 = vmul.f32 %v5323, %v5327
  %vm5329 = vweird.f32 %v5120
  %vm5330 = vweird.f32 %v5323
  %vm5331 = vmor %vm5329, %vm5330
  %v5332 = vsel %vm5331, %v5323, %v5328
  %v5333 = vrsqrt.pop %v5121
  %v5334 = vmul.f32 %v5333, %v5121
  %v5335 = vmul.f32 %v5334, %v5333
  %v5336 = vmul.f32 0.5, %v5335
  %v5337 = vsub.f32 1.5, %v5336
  %v5338 = vmul.f32 %v5333, %v5337
  %vm5339 = vweird.f32 %v5121
  %vm5340 = vweird.f32 %v5333
  %vm5341 = vmor %vm5339, %vm5340
  %v5342 = vsel %vm5341, %v5333, %v5338
  %v5343 = vrsqrt.pop %v5122
  %v5344 = vmul.f32 %v5343, %v5122
  %v5345 = vmul.f32 %v5344, %v5343
  %v5346 = vmul.f32 0.5, %v5345
  %v5347 = vsub.f32 1.5, %v5346
  %v5348 = vmul.f32 %v5343, %v5347
  %vm5349 = vweird.f32 %v5122
  %vm5350 = vweird.f32 %v5343
  %vm5351 = vmor %vm5349, %vm5350
  %v5352 = vsel %vm5351, %v5343, %v5348
  %v5353 = vrsqrt.pop %v5123
  %v5354 = vmul.f32 %v5353, %v5123
  %v5355 = vmul.f32 %v5354, %v5353
  %v5356 = vmul.f32 0.5, %v5355
  %v5357 = vsub.f32 1.5, %v5356
  %v5358 = vmul.f32 %v5353, %v5357
  %vm5359 = vweird.f32 %v5123
  %vm5360 = vweird.f32 %v5353
  %vm5361 = vmor %vm5359, %vm5360
  %v5362 = vsel %vm5361, %v5353, %v5358
  %v5363 = vrsqrt.pop %v5124
  %v5364 = vmul.f32 %v5363, %v5124
  %v5365 = vmul.f32 %v5364, %v5363
  %v5366 = vmul.f32 0.5, %v5365
  %v5367 = vsub.f32 1.5, %v5366
  %v5368 = vmul.f32 %v5363, %v5367
  %vm5369 = vweird.f32 %v5124
  %vm5370 = vweird.f32 %v5363
  %vm5371 = vmor %vm5369, %vm5370
  %v5372 = vsel %vm5371, %v5363, %v5368
  %v5373 = vrsqrt.pop %v5125
  %v5374 = vmul.f32 %v5373, %v5125
  %v5375 = vmul.f32 %v5374, %v5373
  %v5376 = vmul.f32 0.5, %v5375
  %v5377 = vsub.f32 1.5, %v5376
  %v5378 = vmul.f32 %v5373, %v5377
  %vm5379 = vweird.f32 %v5125
  %vm5380 = vweird.f32 %v5373
  %vm5381 = vmor %vm5379, %vm5380
  %v5382 = vsel %vm5381, %v5373, %v5378
  %v5383 = vrsqrt.pop %v5126
  %v5384 = vmul.f32 %v5383, %v5126
  %v5385 = vmul.f32 %v5384, %v5383
  %v5386 = vmul.f32 0.5, %v5385
  %v5387 = vsub.f32 1.5, %v5386
  %v5388 = vmul.f32 %v5383, %v5387
  %vm5389 = vweird.f32 %v5126
  %vm5390 = vweird.f32 %v5383
  %vm5391 = vmor %vm5389, %vm5390
  %v5392 = vsel %vm5391, %v5383, %v5388
  %v5393 = vrsqrt.pop %v5127
  %v5394 = vmul.f32 %v5393, %v5127
  %v5395 = vmul.f32 %v5394, %v5393
  %v5396 = vmul.f32 0.5, %v5395
  %v5397 = vsub.f32 1.5, %v5396
  %v5398 = vmul.f32 %v5393, %v5397
  %vm5399 = vweird.f32 %v5127
  %vm5400 = vweird.f32 %v5393
  %vm5401 = vmor %vm5399, %vm5400
  %v5402 = vsel %vm5401, %v5393, %v5398
  %v5403 = vrsqrt.pop %v5128
  %v5404 = vmul.f32 %v5403, %v5128
  %v5405 = vmul.f32 %v5404, %v5403
  %v5406 = vmul.f32 0.5, %v5405
  %v5407 = vsub.f32 1.5, %v5406
  %v5408 = vmul.f32 %v5403, %v5407
  %vm5409 = vweird.f32 %v5128
  %vm5410 = vweird.f32 %v5403
  %vm5411 = vmor %vm5409, %vm5410
  %v5412 = vsel %vm5411, %v5403, %v5408
  %v5413 = vrsqrt.pop %v5129
  %v5414 = vmul.f32 %v5413, %v5129
  %v5415 = vmul.f32 %v5414, %v5413
  %v5416 = vmul.f32 0.5, %v5415
  %v5417 = vsub.f32 1.5, %v5416
  %v5418 = vmul.f32 %v5413, %v5417
  %vm5419 = vweird.f32 %v5129
  %vm5420 = vweird.f32 %v5413
  %vm5421 = vmor %vm5419, %vm5420
  %v5422 = vsel %vm5421, %v5413, %v5418
  %v5423 = vrsqrt.pop %v5130
  %v5424 = vmul.f32 %v5423, %v5130
  %v5425 = vmul.f32 %v5424, %v5423
  %v5426 = vmul.f32 0.5, %v5425
  %v5427 = vsub.f32 1.5, %v5426
  %v5428 = vmul.f32 %v5423, %v5427
  %vm5429 = vweird.f32 %v5130
  %vm5430 = vweird.f32 %v5423
  %vm5431 = vmor %vm5429, %vm5430
  %v5432 = vsel %vm5431, %v5423, %v5428
  %v5433 = vrsqrt.pop %v5131
  %v5434 = vmul.f32 %v5433, %v5131
  %v5435 = vmul.f32 %v5434, %v5433
  %v5436 = vmul.f32 0.5, %v5435
  %v5437 = vsub.f32 1.5, %v5436
  %v5438 = vmul.f32 %v5433, %v5437
  %vm5439 = vweird.f32 %v5131
  %vm5440 = vweird.f32 %v5433
  %vm5441 = vmor %vm5439, %vm5440
  %v5442 = vsel %vm5441, %v5433, %v5438
  %v5443 = vrsqrt.pop %v5132
  %v5444 = vmul.f32 %v5443, %v5132
  %v5445 = vmul.f32 %v5444, %v5443
  %v5446 = vmul.f32 0.5, %v5445
  %v5447 = vsub.f32 1.5, %v5446
  %v5448 = vmul.f32 %v5443, %v5447
  %vm5449 = vweird.f32 %v5132
  %vm5450 = vweird.f32 %v5443
  %vm5451 = vmor %vm5449, %vm5450
  %v5452 = vsel %vm5451, %v5443, %v5448
  %v5453 = vmul.f32 %v4909, %v5142
  %v5454 = vmul.f32 %v4910, %v5152
  %v5455 = vmul.f32 %v4911, %v5162
  %v5456 = vmul.f32 %v4912, %v5172
  %v5457 = vmul.f32 %v4913, %v5182
  %v5458 = vmul.f32 %v4914, %v5192
  %v5459 = vmul.f32 %v4915, %v5202
  %v5460 = vmul.f32 %v4916, %v5212
  %v5461 = vmul.f32 %v4917, %v5222
  %v5462 = vmul.f32 %v4918, %v5232
  %v5463 = vmul.f32 %v4919, %v5242
  %v5464 = vmul.f32 %v4920, %v5252
  %v5465 = vmul.f32 %v4921, %v5262
  %v5466 = vmul.f32 %v4922, %v5272
  %v5467 = vmul.f32 %v4923, %v5282
  %v5468 = vmul.f32 %v4924, %v5292
  %v5469 = vmul.f32 %v4925, %v5302
  %v5470 = vmul.f32 %v4926, %v5312
  %v5471 = vmul.f32 %v4927, %v5322
  %v5472 = vmul.f32 %v4928, %v5332
  %v5473 = vmul.f32 %v4929, %v5342
  %v5474 = vmul.f32 %v4930, %v5352
  %v5475 = vmul.f32 %v4931, %v5362
  %v5476 = vmul.f32 %v4932, %v5372
  %v5477 = vmul.f32 %v4933, %v5382
  %v5478 = vmul.f32 %v4934, %v5392
  %v5479 = vmul.f32 %v4935, %v5402
  %v5480 = vmul.f32 %v4936, %v5412
  %v5481 = vmul.f32 %v4937, %v5422
  %v5482 = vmul.f32 %v4938, %v5432
  %v5483 = vmul.f32 %v4939, %v5442
  %v5484 = vmul.f32 %v4940, %v5452
  %v5486 = vperm.slane %v52, 0
  %v5488 = vmul.f32 %v5453, %v5486
  %v5489 = vmul.f32 %v5454, %v5486
  %v5490 = vmul.f32 %v5455, %v5486
  %v5491 = vmul.f32 %v5456, %v5486
  %v5492 = vmul.f32 %v5457, %v5486
  %v5493 = vmul.f32 %v5458, %v5486
  %v5494 = vmul.f32 %v5459, %v5486
  %v5495 = vmul.f32 %v5460, %v5486
  %v5496 = vmul.f32 %v5461, %v5486
  %v5497 = vmul.f32 %v5462, %v5486
  %v5498 = vmul.f32 %v5463, %v5486
  %v5499 = vmul.f32 %v5464, %v5486
  %v5500 = vmul.f32 %v5465, %v5486
  %v5501 = vmul.f32 %v5466, %v5486
  %v5502 = vmul.f32 %v5467, %v5486
  %v5503 = vmul.f32 %v5468, %v5486
  %v5504 = vmul.f32 %v5469, %v5486
  %v5505 = vmul.f32 %v5470, %v5486
  %v5506 = vmul.f32 %v5471, %v5486
  %v5507 = vmul.f32 %v5472, %v5486
  %v5508 = vmul.f32 %v5473, %v5486
  %v5509 = vmul.f32 %v5474, %v5486
  %v5510 = vmul.f32 %v5475, %v5486
  %v5511 = vmul.f32 %v5476, %v5486
  %v5512 = vmul.f32 %v5477, %v5486
  %v5513 = vmul.f32 %v5478, %v5486
  %v5514 = vmul.f32 %v5479, %v5486
  %v5515 = vmul.f32 %v5480, %v5486
  %v5516 = vmul.f32 %v5481, %v5486
  %v5517 = vmul.f32 %v5482, %v5486
  %v5518 = vmul.f32 %v5483, %v5486
  %v5519 = vmul.f32 %v5484, %v5486
  %v5521 = vperm.slane %v53, 0
  %v5523 = vadd.f32 %v5488, %v5521
  %v5524 = vadd.f32 %v5489, %v5521
  %v5525 = vadd.f32 %v5490, %v5521
  %v5526 = vadd.f32 %v5491, %v5521
  %v5527 = vadd.f32 %v5492, %v5521
  %v5528 = vadd.f32 %v5493, %v5521
  %v5529 = vadd.f32 %v5494, %v5521
  %v5530 = vadd.f32 %v5495, %v5521
  %v5531 = vadd.f32 %v5496, %v5521
  %v5532 = vadd.f32 %v5497, %v5521
  %v5533 = vadd.f32 %v5498, %v5521
  %v5534 = vadd.f32 %v5499, %v5521
  %v5535 = vadd.f32 %v5500, %v5521
  %v5536 = vadd.f32 %v5501, %v5521
  %v5537 = vadd.f32 %v5502, %v5521
  %v5538 = vadd.f32 %v5503, %v5521
  %v5539 = vadd.f32 %v5504, %v5521
  %v5540 = vadd.f32 %v5505, %v5521
  %v5541 = vadd.f32 %v5506, %v5521
  %v5542 = vadd.f32 %v5507, %v5521
  %v5543 = vadd.f32 %v5508, %v5521
  %v5544 = vadd.f32 %v5509, %v5521
  %v5545 = vadd.f32 %v5510, %v5521
  %v5546 = vadd.f32 %v5511, %v5521
  %v5547 = vadd.f32 %v5512, %v5521
  %v5548 = vadd.f32 %v5513, %v5521
  %v5549 = vadd.f32 %v5514, %v5521
  %v5550 = vadd.f32 %v5515, %v5521
  %v5551 = vadd.f32 %v5516, %v5521
  %v5552 = vadd.f32 %v5517, %v5521
  %v5553 = vadd.f32 %v5518, %v5521
  %v5554 = vadd.f32 %v5519, %v5521
  %v5556 = vperm.slane %v59, 0
  %v5559 = vsel %vm141, %v5523, 0
  %v5562 = vsel %vm141, %v5524, 0
  %v5565 = vsel %vm141, %v5525, 0
  %v5568 = vsel %vm141, %v5526, 0
  %v5571 = vsel %vm141, %v5527, 0
  %v5574 = vsel %vm141, %v5528, 0
  %v5577 = vsel %vm141, %v5529, 0
  %v5580 = vsel %vm141, %v5530, 0
  %v5583 = vsel %vm141, %v5531, 0
  %v5586 = vsel %vm141, %v5532, 0
  %v5589 = vsel %vm141, %v5533, 0
  %v5592 = vsel %vm141, %v5534, 0
  %v5595 = vsel %vm141, %v5535, 0
  %v5598 = vsel %vm141, %v5536, 0
  %v5601 = vsel %vm141, %v5537, 0
  %v5604 = vsel %vm141, %v5538, 0
  %v5607 = vsel %vm141, %v5539, 0
  %v5610 = vsel %vm141, %v5540, 0
  %v5613 = vsel %vm141, %v5541, 0
  %v5616 = vsel %vm141, %v5542, 0
  %v5619 = vsel %vm141, %v5543, 0
  %v5622 = vsel %vm141, %v5544, 0
  %v5625 = vsel %vm141, %v5545, 0
  %v5628 = vsel %vm141, %v5546, 0
  %v5631 = vsel %vm141, %v5547, 0
  %v5634 = vsel %vm141, %v5548, 0
  %v5637 = vsel %vm141, %v5549, 0
  %v5640 = vsel %vm141, %v5550, 0
  %v5643 = vsel %vm141, %v5551, 0
  %v5646 = vsel %vm141, %v5552, 0
  %v5649 = vsel %vm141, %v5553, 0
  %v5652 = vsel %vm141, %v5554, 0
  %5654 = vmatpush.msra.mxu0 0.0
  %5655 = vmatpush.msra.mxu0 0.0
  %5656 = vmatpush.msra.mxu0 0.0
  %5657 = vmatpush.msra.mxu0 0.0
  %5658 = vmatpush.msra.mxu0 0.0
  %5659 = vmatpush.msra.mxu0 0.0
  %5660 = vmatpush.msra.mxu0 0.0
  %5661 = vmatpush.msra.mxu0 0.0
  %5662 = vmatpush.msra.mxu0 0.0
  %5663 = vmatpush.msra.mxu0 0.0
  %5664 = vmatpush.msra.mxu0 0.0
  %5665 = vmatpush.msra.mxu0 0.0
  %5666 = vmatpush.msra.mxu0 %v58
  %5667 = vmatpush.msra.mxu0 %v57
  %5668 = vmatpush.msra.mxu0 %v56
  %5669 = vmatpush.msra.mxu0 %v55
  %5670 = vmatmul.f32.gmra.mxu0 %v5559
  %v5671 = vpop.f32.mrf.mxu0
  %v5672 = vadd.f32 %v5556, %v5671
  %5673 = vmatmul.f32.gmra.mxu0 %v5562
  %v5674 = vpop.f32.mrf.mxu0
  %v5675 = vadd.f32 %v5556, %v5674
  %5676 = vmatmul.f32.gmra.mxu0 %v5565
  %v5677 = vpop.f32.mrf.mxu0
  %v5678 = vadd.f32 %v5556, %v5677
  %5679 = vmatmul.f32.gmra.mxu0 %v5568
  %v5680 = vpop.f32.mrf.mxu0
  %v5681 = vadd.f32 %v5556, %v5680
  %5682 = vmatmul.f32.gmra.mxu0 %v5571
  %v5683 = vpop.f32.mrf.mxu0
  %v5684 = vadd.f32 %v5556, %v5683
  %5685 = vmatmul.f32.gmra.mxu0 %v5574
  %v5686 = vpop.f32.mrf.mxu0
  %v5687 = vadd.f32 %v5556, %v5686
  %5688 = vmatmul.f32.gmra.mxu0 %v5577
  %v5689 = vpop.f32.mrf.mxu0
  %v5690 = vadd.f32 %v5556, %v5689
  %5691 = vmatmul.f32.gmra.mxu0 %v5580
  %v5692 = vpop.f32.mrf.mxu0
  %v5693 = vadd.f32 %v5556, %v5692
  %5694 = vmatmul.f32.gmra.mxu0 %v5583
  %v5695 = vpop.f32.mrf.mxu0
  %v5696 = vadd.f32 %v5556, %v5695
  %5697 = vmatmul.f32.gmra.mxu0 %v5586
  %v5698 = vpop.f32.mrf.mxu0
  %v5699 = vadd.f32 %v5556, %v5698
  %5700 = vmatmul.f32.gmra.mxu0 %v5589
  %v5701 = vpop.f32.mrf.mxu0
  %v5702 = vadd.f32 %v5556, %v5701
  %5703 = vmatmul.f32.gmra.mxu0 %v5592
  %v5704 = vpop.f32.mrf.mxu0
  %v5705 = vadd.f32 %v5556, %v5704
  %5706 = vmatmul.f32.gmra.mxu0 %v5595
  %v5707 = vpop.f32.mrf.mxu0
  %v5708 = vadd.f32 %v5556, %v5707
  %5709 = vmatmul.f32.gmra.mxu0 %v5598
  %v5710 = vpop.f32.mrf.mxu0
  %v5711 = vadd.f32 %v5556, %v5710
  %5712 = vmatmul.f32.gmra.mxu0 %v5601
  %v5713 = vpop.f32.mrf.mxu0
  %v5714 = vadd.f32 %v5556, %v5713
  %5715 = vmatmul.f32.gmra.mxu0 %v5604
  %v5716 = vpop.f32.mrf.mxu0
  %v5717 = vadd.f32 %v5556, %v5716
  %5718 = vmatmul.f32.gmra.mxu0 %v5607
  %v5719 = vpop.f32.mrf.mxu0
  %v5720 = vadd.f32 %v5556, %v5719
  %5721 = vmatmul.f32.gmra.mxu0 %v5610
  %v5722 = vpop.f32.mrf.mxu0
  %v5723 = vadd.f32 %v5556, %v5722
  %5724 = vmatmul.f32.gmra.mxu0 %v5613
  %v5725 = vpop.f32.mrf.mxu0
  %v5726 = vadd.f32 %v5556, %v5725
  %5727 = vmatmul.f32.gmra.mxu0 %v5616
  %v5728 = vpop.f32.mrf.mxu0
  %v5729 = vadd.f32 %v5556, %v5728
  %5730 = vmatmul.f32.gmra.mxu0 %v5619
  %v5731 = vpop.f32.mrf.mxu0
  %v5732 = vadd.f32 %v5556, %v5731
  %5733 = vmatmul.f32.gmra.mxu0 %v5622
  %v5734 = vpop.f32.mrf.mxu0
  %v5735 = vadd.f32 %v5556, %v5734
  %5736 = vmatmul.f32.gmra.mxu0 %v5625
  %v5737 = vpop.f32.mrf.mxu0
  %v5738 = vadd.f32 %v5556, %v5737
  %5739 = vmatmul.f32.gmra.mxu0 %v5628
  %v5740 = vpop.f32.mrf.mxu0
  %v5741 = vadd.f32 %v5556, %v5740
  %5742 = vmatmul.f32.gmra.mxu0 %v5631
  %v5743 = vpop.f32.mrf.mxu0
  %v5744 = vadd.f32 %v5556, %v5743
  %5745 = vmatmul.f32.gmra.mxu0 %v5634
  %v5746 = vpop.f32.mrf.mxu0
  %v5747 = vadd.f32 %v5556, %v5746
  %5748 = vmatmul.f32.gmra.mxu0 %v5637
  %v5749 = vpop.f32.mrf.mxu0
  %v5750 = vadd.f32 %v5556, %v5749
  %5751 = vmatmul.f32.gmra.mxu0 %v5640
  %v5752 = vpop.f32.mrf.mxu0
  %v5753 = vadd.f32 %v5556, %v5752
  %5754 = vmatmul.f32.gmra.mxu0 %v5643
  %v5755 = vpop.f32.mrf.mxu0
  %v5756 = vadd.f32 %v5556, %v5755
  %5757 = vmatmul.f32.gmra.mxu0 %v5646
  %v5758 = vpop.f32.mrf.mxu0
  %v5759 = vadd.f32 %v5556, %v5758
  %5760 = vmatmul.f32.gmra.mxu0 %v5649
  %v5761 = vpop.f32.mrf.mxu0
  %v5762 = vadd.f32 %v5556, %v5761
  %5763 = vmatmul.f32.gmra.mxu0 %v5652
  %v5764 = vpop.f32.mrf.mxu0
  %v5765 = vadd.f32 %v5556, %v5764
  %5766 = vdwg.mxu0
  %v5767 = vmax.f32 %v5672, 0.0
  %v5768 = vmax.f32 %v5675, 0.0
  %v5769 = vmax.f32 %v5678, 0.0
  %v5770 = vmax.f32 %v5681, 0.0
  %v5771 = vmax.f32 %v5684, 0.0
  %v5772 = vmax.f32 %v5687, 0.0
  %v5773 = vmax.f32 %v5690, 0.0
  %v5774 = vmax.f32 %v5693, 0.0
  %v5775 = vmax.f32 %v5696, 0.0
  %v5776 = vmax.f32 %v5699, 0.0
  %v5777 = vmax.f32 %v5702, 0.0
  %v5778 = vmax.f32 %v5705, 0.0
  %v5779 = vmax.f32 %v5708, 0.0
  %v5780 = vmax.f32 %v5711, 0.0
  %v5781 = vmax.f32 %v5714, 0.0
  %v5782 = vmax.f32 %v5717, 0.0
  %v5783 = vmax.f32 %v5720, 0.0
  %v5784 = vmax.f32 %v5723, 0.0
  %v5785 = vmax.f32 %v5726, 0.0
  %v5786 = vmax.f32 %v5729, 0.0
  %v5787 = vmax.f32 %v5732, 0.0
  %v5788 = vmax.f32 %v5735, 0.0
  %v5789 = vmax.f32 %v5738, 0.0
  %v5790 = vmax.f32 %v5741, 0.0
  %v5791 = vmax.f32 %v5744, 0.0
  %v5792 = vmax.f32 %v5747, 0.0
  %v5793 = vmax.f32 %v5750, 0.0
  %v5794 = vmax.f32 %v5753, 0.0
  %v5795 = vmax.f32 %v5756, 0.0
  %v5796 = vmax.f32 %v5759, 0.0
  %v5797 = vmax.f32 %v5762, 0.0
  %v5798 = vmax.f32 %v5765, 0.0
  %v5800 = vperm.slane %v76, 0
  %5802 = vmatpush.msra.mxu0 %v75
  %5803 = vmatpush.msra.mxu0 %v74
  %5804 = vmatpush.msra.mxu0 %v73
  %5805 = vmatpush.msra.mxu0 %v72
  %5806 = vmatpush.msra.mxu0 %v71
  %5807 = vmatpush.msra.mxu0 %v70
  %5808 = vmatpush.msra.mxu0 %v69
  %5809 = vmatpush.msra.mxu0 %v68
  %5810 = vmatpush.msra.mxu0 %v67
  %5811 = vmatpush.msra.mxu0 %v66
  %5812 = vmatpush.msra.mxu0 %v65
  %5813 = vmatpush.msra.mxu0 %v64
  %5814 = vmatpush.msra.mxu0 %v63
  %5815 = vmatpush.msra.mxu0 %v62
  %5816 = vmatpush.msra.mxu0 %v61
  %5817 = vmatpush.msra.mxu0 %v60
  %5818 = vmatmul.f32.gmra.mxu0 %v5767
  %v5819 = vpop.f32.mrf.mxu0
  %v5820 = vadd.f32 %v5800, %v5819
  %5821 = vmatmul.f32.gmra.mxu0 %v5768
  %v5822 = vpop.f32.mrf.mxu0
  %v5823 = vadd.f32 %v5800, %v5822
  %5824 = vmatmul.f32.gmra.mxu0 %v5769
  %v5825 = vpop.f32.mrf.mxu0
  %v5826 = vadd.f32 %v5800, %v5825
  %5827 = vmatmul.f32.gmra.mxu0 %v5770
  %v5828 = vpop.f32.mrf.mxu0
  %v5829 = vadd.f32 %v5800, %v5828
  %5830 = vmatmul.f32.gmra.mxu0 %v5771
  %v5831 = vpop.f32.mrf.mxu0
  %v5832 = vadd.f32 %v5800, %v5831
  %5833 = vmatmul.f32.gmra.mxu0 %v5772
  %v5834 = vpop.f32.mrf.mxu0
  %v5835 = vadd.f32 %v5800, %v5834
  %5836 = vmatmul.f32.gmra.mxu0 %v5773
  %v5837 = vpop.f32.mrf.mxu0
  %v5838 = vadd.f32 %v5800, %v5837
  %5839 = vmatmul.f32.gmra.mxu0 %v5774
  %v5840 = vpop.f32.mrf.mxu0
  %v5841 = vadd.f32 %v5800, %v5840
  %5842 = vmatmul.f32.gmra.mxu0 %v5775
  %v5843 = vpop.f32.mrf.mxu0
  %v5844 = vadd.f32 %v5800, %v5843
  %5845 = vmatmul.f32.gmra.mxu0 %v5776
  %v5846 = vpop.f32.mrf.mxu0
  %v5847 = vadd.f32 %v5800, %v5846
  %5848 = vmatmul.f32.gmra.mxu0 %v5777
  %v5849 = vpop.f32.mrf.mxu0
  %v5850 = vadd.f32 %v5800, %v5849
  %5851 = vmatmul.f32.gmra.mxu0 %v5778
  %v5852 = vpop.f32.mrf.mxu0
  %v5853 = vadd.f32 %v5800, %v5852
  %5854 = vmatmul.f32.gmra.mxu0 %v5779
  %v5855 = vpop.f32.mrf.mxu0
  %v5856 = vadd.f32 %v5800, %v5855
  %5857 = vmatmul.f32.gmra.mxu0 %v5780
  %v5858 = vpop.f32.mrf.mxu0
  %v5859 = vadd.f32 %v5800, %v5858
  %5860 = vmatmul.f32.gmra.mxu0 %v5781
  %v5861 = vpop.f32.mrf.mxu0
  %v5862 = vadd.f32 %v5800, %v5861
  %5863 = vmatmul.f32.gmra.mxu0 %v5782
  %v5864 = vpop.f32.mrf.mxu0
  %v5865 = vadd.f32 %v5800, %v5864
  %5866 = vmatmul.f32.gmra.mxu0 %v5783
  %v5867 = vpop.f32.mrf.mxu0
  %v5868 = vadd.f32 %v5800, %v5867
  %5869 = vmatmul.f32.gmra.mxu0 %v5784
  %v5870 = vpop.f32.mrf.mxu0
  %v5871 = vadd.f32 %v5800, %v5870
  %5872 = vmatmul.f32.gmra.mxu0 %v5785
  %v5873 = vpop.f32.mrf.mxu0
  %v5874 = vadd.f32 %v5800, %v5873
  %5875 = vmatmul.f32.gmra.mxu0 %v5786
  %v5876 = vpop.f32.mrf.mxu0
  %v5877 = vadd.f32 %v5800, %v5876
  %5878 = vmatmul.f32.gmra.mxu0 %v5787
  %v5879 = vpop.f32.mrf.mxu0
  %v5880 = vadd.f32 %v5800, %v5879
  %5881 = vmatmul.f32.gmra.mxu0 %v5788
  %v5882 = vpop.f32.mrf.mxu0
  %v5883 = vadd.f32 %v5800, %v5882
  %5884 = vmatmul.f32.gmra.mxu0 %v5789
  %v5885 = vpop.f32.mrf.mxu0
  %v5886 = vadd.f32 %v5800, %v5885
  %5887 = vmatmul.f32.gmra.mxu0 %v5790
  %v5888 = vpop.f32.mrf.mxu0
  %v5889 = vadd.f32 %v5800, %v5888
  %5890 = vmatmul.f32.gmra.mxu0 %v5791
  %v5891 = vpop.f32.mrf.mxu0
  %v5892 = vadd.f32 %v5800, %v5891
  %5893 = vmatmul.f32.gmra.mxu0 %v5792
  %v5894 = vpop.f32.mrf.mxu0
  %v5895 = vadd.f32 %v5800, %v5894
  %5896 = vmatmul.f32.gmra.mxu0 %v5793
  %v5897 = vpop.f32.mrf.mxu0
  %v5898 = vadd.f32 %v5800, %v5897
  %5899 = vmatmul.f32.gmra.mxu0 %v5794
  %v5900 = vpop.f32.mrf.mxu0
  %v5901 = vadd.f32 %v5800, %v5900
  %5902 = vmatmul.f32.gmra.mxu0 %v5795
  %v5903 = vpop.f32.mrf.mxu0
  %v5904 = vadd.f32 %v5800, %v5903
  %5905 = vmatmul.f32.gmra.mxu0 %v5796
  %v5906 = vpop.f32.mrf.mxu0
  %v5907 = vadd.f32 %v5800, %v5906
  %5908 = vmatmul.f32.gmra.mxu0 %v5797
  %v5909 = vpop.f32.mrf.mxu0
  %v5910 = vadd.f32 %v5800, %v5909
  %5911 = vmatmul.f32.gmra.mxu0 %v5798
  %v5912 = vpop.f32.mrf.mxu0
  %v5913 = vadd.f32 %v5800, %v5912
  %5914 = vdwg.mxu0
  %v5915 = vadd.f32 %v5820, %v4749
  %v5916 = vadd.f32 %v5823, %v4750
  %v5917 = vadd.f32 %v5826, %v4751
  %v5918 = vadd.f32 %v5829, %v4752
  %v5919 = vadd.f32 %v5832, %v4753
  %v5920 = vadd.f32 %v5835, %v4754
  %v5921 = vadd.f32 %v5838, %v4755
  %v5922 = vadd.f32 %v5841, %v4756
  %v5923 = vadd.f32 %v5844, %v4757
  %v5924 = vadd.f32 %v5847, %v4758
  %v5925 = vadd.f32 %v5850, %v4759
  %v5926 = vadd.f32 %v5853, %v4760
  %v5927 = vadd.f32 %v5856, %v4761
  %v5928 = vadd.f32 %v5859, %v4762
  %v5929 = vadd.f32 %v5862, %v4763
  %v5930 = vadd.f32 %v5865, %v4764
  %v5931 = vadd.f32 %v5868, %v4765
  %v5932 = vadd.f32 %v5871, %v4766
  %v5933 = vadd.f32 %v5874, %v4767
  %v5934 = vadd.f32 %v5877, %v4768
  %v5935 = vadd.f32 %v5880, %v4769
  %v5936 = vadd.f32 %v5883, %v4770
  %v5937 = vadd.f32 %v5886, %v4771
  %v5938 = vadd.f32 %v5889, %v4772
  %v5939 = vadd.f32 %v5892, %v4773
  %v5940 = vadd.f32 %v5895, %v4774
  %v5941 = vadd.f32 %v5898, %v4775
  %v5942 = vadd.f32 %v5901, %v4776
  %v5943 = vadd.f32 %v5904, %v4777
  %v5944 = vadd.f32 %v5907, %v4778
  %v5945 = vadd.f32 %v5910, %v4779
  %v5946 = vadd.f32 %v5913, %v4780
  %5947 = vst.msk [vmem:[%s15] sm:$0xff] %vm141, %v5915
  %5948 = vst.msk [vmem:[%s15 + $0x8] sm:$0xff] %vm141, %v5916
  %5949 = vst.msk [vmem:[%s15 + $0x10] sm:$0xff] %vm141, %v5917
  %5950 = vst.msk [vmem:[%s15 + $0x18] sm:$0xff] %vm141, %v5918
  %5951 = vst.msk [vmem:[%s15 + $0x20] sm:$0xff] %vm141, %v5919
  %5952 = vst.msk [vmem:[%s15 + $0x28] sm:$0xff] %vm141, %v5920
  %5953 = vst.msk [vmem:[%s15 + $0x30] sm:$0xff] %vm141, %v5921
  %5954 = vst.msk [vmem:[%s15 + $0x38] sm:$0xff] %vm141, %v5922
  %5955 = vst.msk [vmem:[%s15 + $0x40] sm:$0xff] %vm141, %v5923
  %5956 = vst.msk [vmem:[%s15 + $0x48] sm:$0xff] %vm141, %v5924
  %5957 = vst.msk [vmem:[%s15 + $0x50] sm:$0xff] %vm141, %v5925
  %5958 = vst.msk [vmem:[%s15 + $0x58] sm:$0xff] %vm141, %v5926
  %5959 = vst.msk [vmem:[%s15 + $0x60] sm:$0xff] %vm141, %v5927
  %5960 = vst.msk [vmem:[%s15 + $0x68] sm:$0xff] %vm141, %v5928
  %5961 = vst.msk [vmem:[%s15 + $0x70] sm:$0xff] %vm141, %v5929
  %5962 = vst.msk [vmem:[%s15 + $0x78] sm:$0xff] %vm141, %v5930
  %5963 = vst.msk [vmem:[%s15 + $0x80] sm:$0xff] %vm141, %v5931
  %5964 = vst.msk [vmem:[%s15 + $0x88] sm:$0xff] %vm141, %v5932
  %5965 = vst.msk [vmem:[%s15 + $0x90] sm:$0xff] %vm141, %v5933
  %5966 = vst.msk [vmem:[%s15 + $0x98] sm:$0xff] %vm141, %v5934
  %5967 = vst.msk [vmem:[%s15 + $0xa0] sm:$0xff] %vm141, %v5935
  %5968 = vst.msk [vmem:[%s15 + $0xa8] sm:$0xff] %vm141, %v5936
  %5969 = vst.msk [vmem:[%s15 + $0xb0] sm:$0xff] %vm141, %v5937
  %5970 = vst.msk [vmem:[%s15 + $0xb8] sm:$0xff] %vm141, %v5938
  %5971 = vst.msk [vmem:[%s15 + $0xc0] sm:$0xff] %vm141, %v5939
  %5972 = vst.msk [vmem:[%s15 + $0xc8] sm:$0xff] %vm141, %v5940
  %5973 = vst.msk [vmem:[%s15 + $0xd0] sm:$0xff] %vm141, %v5941
  %5974 = vst.msk [vmem:[%s15 + $0xd8] sm:$0xff] %vm141, %v5942
  %5975 = vst.msk [vmem:[%s15 + $0xe0] sm:$0xff] %vm141, %v5943
  %5976 = vst.msk [vmem:[%s15 + $0xe8] sm:$0xff] %vm141, %v5944
  %5977 = vst.msk [vmem:[%s15 + $0xf0] sm:$0xff] %vm141, %v5945
  %5978 = vst.msk [vmem:[%s15 + $0xf8] sm:$0xff] %vm141, %v5946
  %s5979 = scalar_lea.vmem %s0, 256
  %v5980 = vld [vmem:[%s5979] sm:$0xff]
  %v5981 = vld [vmem:[%s5979 + $0x8] sm:$0xff]
  %v5982 = vld [vmem:[%s5979 + $0x10] sm:$0xff]
  %v5983 = vld [vmem:[%s5979 + $0x18] sm:$0xff]
  %v5984 = vld [vmem:[%s5979 + $0x20] sm:$0xff]
  %v5985 = vld [vmem:[%s5979 + $0x28] sm:$0xff]
  %v5986 = vld [vmem:[%s5979 + $0x30] sm:$0xff]
  %v5987 = vld [vmem:[%s5979 + $0x38] sm:$0xff]
  %v5988 = vld [vmem:[%s5979 + $0x40] sm:$0xff]
  %v5989 = vld [vmem:[%s5979 + $0x48] sm:$0xff]
  %v5990 = vld [vmem:[%s5979 + $0x50] sm:$0xff]
  %v5991 = vld [vmem:[%s5979 + $0x58] sm:$0xff]
  %v5992 = vld [vmem:[%s5979 + $0x60] sm:$0xff]
  %v5993 = vld [vmem:[%s5979 + $0x68] sm:$0xff]
  %v5994 = vld [vmem:[%s5979 + $0x70] sm:$0xff]
  %v5995 = vld [vmem:[%s5979 + $0x78] sm:$0xff]
  %v5996 = vld [vmem:[%s5979 + $0x80] sm:$0xff]
  %v5997 = vld [vmem:[%s5979 + $0x88] sm:$0xff]
  %v5998 = vld [vmem:[%s5979 + $0x90] sm:$0xff]
  %v5999 = vld [vmem:[%s5979 + $0x98] sm:$0xff]
  %v6000 = vld [vmem:[%s5979 + $0xa0] sm:$0xff]
  %v6001 = vld [vmem:[%s5979 + $0xa8] sm:$0xff]
  %v6002 = vld [vmem:[%s5979 + $0xb0] sm:$0xff]
  %v6003 = vld [vmem:[%s5979 + $0xb8] sm:$0xff]
  %v6004 = vld [vmem:[%s5979 + $0xc0] sm:$0xff]
  %v6005 = vld [vmem:[%s5979 + $0xc8] sm:$0xff]
  %v6006 = vld [vmem:[%s5979 + $0xd0] sm:$0xff]
  %v6007 = vld [vmem:[%s5979 + $0xd8] sm:$0xff]
  %v6008 = vld [vmem:[%s5979 + $0xe0] sm:$0xff]
  %v6009 = vld [vmem:[%s5979 + $0xe8] sm:$0xff]
  %v6010 = vld [vmem:[%s5979 + $0xf0] sm:$0xff]
  %v6011 = vld [vmem:[%s5979 + $0xf8] sm:$0xff]
  %s6012 = scalar_lea.vmem %s1, 256
  %v6013 = vld [vmem:[%s6012] sm:$0xff]
  %v6014 = vld [vmem:[%s6012 + $0x8] sm:$0xff]
  %v6015 = vld [vmem:[%s6012 + $0x10] sm:$0xff]
  %v6016 = vld [vmem:[%s6012 + $0x18] sm:$0xff]
  %v6017 = vld [vmem:[%s6012 + $0x20] sm:$0xff]
  %v6018 = vld [vmem:[%s6012 + $0x28] sm:$0xff]
  %v6019 = vld [vmem:[%s6012 + $0x30] sm:$0xff]
  %v6020 = vld [vmem:[%s6012 + $0x38] sm:$0xff]
  %v6021 = vld [vmem:[%s6012 + $0x40] sm:$0xff]
  %v6022 = vld [vmem:[%s6012 + $0x48] sm:$0xff]
  %v6023 = vld [vmem:[%s6012 + $0x50] sm:$0xff]
  %v6024 = vld [vmem:[%s6012 + $0x58] sm:$0xff]
  %v6025 = vld [vmem:[%s6012 + $0x60] sm:$0xff]
  %v6026 = vld [vmem:[%s6012 + $0x68] sm:$0xff]
  %v6027 = vld [vmem:[%s6012 + $0x70] sm:$0xff]
  %v6028 = vld [vmem:[%s6012 + $0x78] sm:$0xff]
  %v6029 = vld [vmem:[%s6012 + $0x80] sm:$0xff]
  %v6030 = vld [vmem:[%s6012 + $0x88] sm:$0xff]
  %v6031 = vld [vmem:[%s6012 + $0x90] sm:$0xff]
  %v6032 = vld [vmem:[%s6012 + $0x98] sm:$0xff]
  %v6033 = vld [vmem:[%s6012 + $0xa0] sm:$0xff]
  %v6034 = vld [vmem:[%s6012 + $0xa8] sm:$0xff]
  %v6035 = vld [vmem:[%s6012 + $0xb0] sm:$0xff]
  %v6036 = vld [vmem:[%s6012 + $0xb8] sm:$0xff]
  %v6037 = vld [vmem:[%s6012 + $0xc0] sm:$0xff]
  %v6038 = vld [vmem:[%s6012 + $0xc8] sm:$0xff]
  %v6039 = vld [vmem:[%s6012 + $0xd0] sm:$0xff]
  %v6040 = vld [vmem:[%s6012 + $0xd8] sm:$0xff]
  %v6041 = vld [vmem:[%s6012 + $0xe0] sm:$0xff]
  %v6042 = vld [vmem:[%s6012 + $0xe8] sm:$0xff]
  %v6043 = vld [vmem:[%s6012 + $0xf0] sm:$0xff]
  %v6044 = vld [vmem:[%s6012 + $0xf8] sm:$0xff]
  %v6045 = vsel %vm141, %v5980, 0.0
  %6046 = vadd.xlane.f32.xlu0 %v6045
  %v6047 = vpop.xlane.xlu0 %6046
  %v6048 = vsel %vm141, %v5981, 0.0
  %6049 = vadd.xlane.f32.xlu0 %v6048
  %v6050 = vpop.xlane.xlu0 %6049
  %v6051 = vsel %vm141, %v5982, 0.0
  %6052 = vadd.xlane.f32.xlu0 %v6051
  %v6053 = vpop.xlane.xlu0 %6052
  %v6054 = vsel %vm141, %v5983, 0.0
  %6055 = vadd.xlane.f32.xlu0 %v6054
  %v6056 = vpop.xlane.xlu0 %6055
  %v6057 = vsel %vm141, %v5984, 0.0
  %6058 = vadd.xlane.f32.xlu0 %v6057
  %v6059 = vpop.xlane.xlu0 %6058
  %v6060 = vsel %vm141, %v5985, 0.0
  %6061 = vadd.xlane.f32.xlu0 %v6060
  %v6062 = vpop.xlane.xlu0 %6061
  %v6063 = vsel %vm141, %v5986, 0.0
  %6064 = vadd.xlane.f32.xlu0 %v6063
  %v6065 = vpop.xlane.xlu0 %6064
  %v6066 = vsel %vm141, %v5987, 0.0
  %6067 = vadd.xlane.f32.xlu0 %v6066
  %v6068 = vpop.xlane.xlu0 %6067
  %v6069 = vsel %vm141, %v5988, 0.0
  %6070 = vadd.xlane.f32.xlu0 %v6069
  %v6071 = vpop.xlane.xlu0 %6070
  %v6072 = vsel %vm141, %v5989, 0.0
  %6073 = vadd.xlane.f32.xlu0 %v6072
  %v6074 = vpop.xlane.xlu0 %6073
  %v6075 = vsel %vm141, %v5990, 0.0
  %6076 = vadd.xlane.f32.xlu0 %v6075
  %v6077 = vpop.xlane.xlu0 %6076
  %v6078 = vsel %vm141, %v5991, 0.0
  %6079 = vadd.xlane.f32.xlu0 %v6078
  %v6080 = vpop.xlane.xlu0 %6079
  %v6081 = vsel %vm141, %v5992, 0.0
  %6082 = vadd.xlane.f32.xlu0 %v6081
  %v6083 = vpop.xlane.xlu0 %6082
  %v6084 = vsel %vm141, %v5993, 0.0
  %6085 = vadd.xlane.f32.xlu0 %v6084
  %v6086 = vpop.xlane.xlu0 %6085
  %v6087 = vsel %vm141, %v5994, 0.0
  %6088 = vadd.xlane.f32.xlu0 %v6087
  %v6089 = vpop.xlane.xlu0 %6088
  %v6090 = vsel %vm141, %v5995, 0.0
  %6091 = vadd.xlane.f32.xlu0 %v6090
  %v6092 = vpop.xlane.xlu0 %6091
  %v6093 = vsel %vm141, %v5996, 0.0
  %6094 = vadd.xlane.f32.xlu0 %v6093
  %v6095 = vpop.xlane.xlu0 %6094
  %v6096 = vsel %vm141, %v5997, 0.0
  %6097 = vadd.xlane.f32.xlu0 %v6096
  %v6098 = vpop.xlane.xlu0 %6097
  %v6099 = vsel %vm141, %v5998, 0.0
  %6100 = vadd.xlane.f32.xlu0 %v6099
  %v6101 = vpop.xlane.xlu0 %6100
  %v6102 = vsel %vm141, %v5999, 0.0
  %6103 = vadd.xlane.f32.xlu0 %v6102
  %v6104 = vpop.xlane.xlu0 %6103
  %v6105 = vsel %vm141, %v6000, 0.0
  %6106 = vadd.xlane.f32.xlu0 %v6105
  %v6107 = vpop.xlane.xlu0 %6106
  %v6108 = vsel %vm141, %v6001, 0.0
  %6109 = vadd.xlane.f32.xlu0 %v6108
  %v6110 = vpop.xlane.xlu0 %6109
  %v6111 = vsel %vm141, %v6002, 0.0
  %6112 = vadd.xlane.f32.xlu0 %v6111
  %v6113 = vpop.xlane.xlu0 %6112
  %v6114 = vsel %vm141, %v6003, 0.0
  %6115 = vadd.xlane.f32.xlu0 %v6114
  %v6116 = vpop.xlane.xlu0 %6115
  %v6117 = vsel %vm141, %v6004, 0.0
  %6118 = vadd.xlane.f32.xlu0 %v6117
  %v6119 = vpop.xlane.xlu0 %6118
  %v6120 = vsel %vm141, %v6005, 0.0
  %6121 = vadd.xlane.f32.xlu0 %v6120
  %v6122 = vpop.xlane.xlu0 %6121
  %v6123 = vsel %vm141, %v6006, 0.0
  %6124 = vadd.xlane.f32.xlu0 %v6123
  %v6125 = vpop.xlane.xlu0 %6124
  %v6126 = vsel %vm141, %v6007, 0.0
  %6127 = vadd.xlane.f32.xlu0 %v6126
  %v6128 = vpop.xlane.xlu0 %6127
  %v6129 = vsel %vm141, %v6008, 0.0
  %6130 = vadd.xlane.f32.xlu0 %v6129
  %v6131 = vpop.xlane.xlu0 %6130
  %v6132 = vsel %vm141, %v6009, 0.0
  %6133 = vadd.xlane.f32.xlu0 %v6132
  %v6134 = vpop.xlane.xlu0 %6133
  %v6135 = vsel %vm141, %v6010, 0.0
  %6136 = vadd.xlane.f32.xlu0 %v6135
  %v6137 = vpop.xlane.xlu0 %6136
  %v6138 = vsel %vm141, %v6011, 0.0
  %6139 = vadd.xlane.f32.xlu0 %v6138
  %v6140 = vpop.xlane.xlu0 %6139
  %v6141 = vmul.f32 %v6047, %v244
  %v6142 = vmul.f32 %v6050, %v244
  %v6143 = vmul.f32 %v6053, %v244
  %v6144 = vmul.f32 %v6056, %v244
  %v6145 = vmul.f32 %v6059, %v244
  %v6146 = vmul.f32 %v6062, %v244
  %v6147 = vmul.f32 %v6065, %v244
  %v6148 = vmul.f32 %v6068, %v244
  %v6149 = vmul.f32 %v6071, %v244
  %v6150 = vmul.f32 %v6074, %v244
  %v6151 = vmul.f32 %v6077, %v244
  %v6152 = vmul.f32 %v6080, %v244
  %v6153 = vmul.f32 %v6083, %v244
  %v6154 = vmul.f32 %v6086, %v244
  %v6155 = vmul.f32 %v6089, %v244
  %v6156 = vmul.f32 %v6092, %v244
  %v6157 = vmul.f32 %v6095, %v244
  %v6158 = vmul.f32 %v6098, %v244
  %v6159 = vmul.f32 %v6101, %v244
  %v6160 = vmul.f32 %v6104, %v244
  %v6161 = vmul.f32 %v6107, %v244
  %v6162 = vmul.f32 %v6110, %v244
  %v6163 = vmul.f32 %v6113, %v244
  %v6164 = vmul.f32 %v6116, %v244
  %v6165 = vmul.f32 %v6119, %v244
  %v6166 = vmul.f32 %v6122, %v244
  %v6167 = vmul.f32 %v6125, %v244
  %v6168 = vmul.f32 %v6128, %v244
  %v6169 = vmul.f32 %v6131, %v244
  %v6170 = vmul.f32 %v6134, %v244
  %v6171 = vmul.f32 %v6137, %v244
  %v6172 = vmul.f32 %v6140, %v244
  %v6173 = vsub.f32 %v5980, %v6141
  %v6174 = vsub.f32 %v5981, %v6142
  %v6175 = vsub.f32 %v5982, %v6143
  %v6176 = vsub.f32 %v5983, %v6144
  %v6177 = vsub.f32 %v5984, %v6145
  %v6178 = vsub.f32 %v5985, %v6146
  %v6179 = vsub.f32 %v5986, %v6147
  %v6180 = vsub.f32 %v5987, %v6148
  %v6181 = vsub.f32 %v5988, %v6149
  %v6182 = vsub.f32 %v5989, %v6150
  %v6183 = vsub.f32 %v5990, %v6151
  %v6184 = vsub.f32 %v5991, %v6152
  %v6185 = vsub.f32 %v5992, %v6153
  %v6186 = vsub.f32 %v5993, %v6154
  %v6187 = vsub.f32 %v5994, %v6155
  %v6188 = vsub.f32 %v5995, %v6156
  %v6189 = vsub.f32 %v5996, %v6157
  %v6190 = vsub.f32 %v5997, %v6158
  %v6191 = vsub.f32 %v5998, %v6159
  %v6192 = vsub.f32 %v5999, %v6160
  %v6193 = vsub.f32 %v6000, %v6161
  %v6194 = vsub.f32 %v6001, %v6162
  %v6195 = vsub.f32 %v6002, %v6163
  %v6196 = vsub.f32 %v6003, %v6164
  %v6197 = vsub.f32 %v6004, %v6165
  %v6198 = vsub.f32 %v6005, %v6166
  %v6199 = vsub.f32 %v6006, %v6167
  %v6200 = vsub.f32 %v6007, %v6168
  %v6201 = vsub.f32 %v6008, %v6169
  %v6202 = vsub.f32 %v6009, %v6170
  %v6203 = vsub.f32 %v6010, %v6171
  %v6204 = vsub.f32 %v6011, %v6172
  %v6205 = vmul.f32 %v6173, %v6173
  %v6206 = vmul.f32 %v6174, %v6174
  %v6207 = vmul.f32 %v6175, %v6175
  %v6208 = vmul.f32 %v6176, %v6176
  %v6209 = vmul.f32 %v6177, %v6177
  %v6210 = vmul.f32 %v6178, %v6178
  %v6211 = vmul.f32 %v6179, %v6179
  %v6212 = vmul.f32 %v6180, %v6180
  %v6213 = vmul.f32 %v6181, %v6181
  %v6214 = vmul.f32 %v6182, %v6182
  %v6215 = vmul.f32 %v6183, %v6183
  %v6216 = vmul.f32 %v6184, %v6184
  %v6217 = vmul.f32 %v6185, %v6185
  %v6218 = vmul.f32 %v6186, %v6186
  %v6219 = vmul.f32 %v6187, %v6187
  %v6220 = vmul.f32 %v6188, %v6188
  %v6221 = vmul.f32 %v6189, %v6189
  %v6222 = vmul.f32 %v6190, %v6190
  %v6223 = vmul.f32 %v6191, %v6191
  %v6224 = vmul.f32 %v6192, %v6192
  %v6225 = vmul.f32 %v6193, %v6193
  %v6226 = vmul.f32 %v6194, %v6194
  %v6227 = vmul.f32 %v6195, %v6195
  %v6228 = vmul.f32 %v6196, %v6196
  %v6229 = vmul.f32 %v6197, %v6197
  %v6230 = vmul.f32 %v6198, %v6198
  %v6231 = vmul.f32 %v6199, %v6199
  %v6232 = vmul.f32 %v6200, %v6200
  %v6233 = vmul.f32 %v6201, %v6201
  %v6234 = vmul.f32 %v6202, %v6202
  %v6235 = vmul.f32 %v6203, %v6203
  %v6236 = vmul.f32 %v6204, %v6204
  %v6237 = vsel %vm141, %v6205, 0.0
  %6238 = vadd.xlane.f32.xlu0 %v6237
  %v6239 = vpop.xlane.xlu0 %6238
  %v6240 = vsel %vm141, %v6206, 0.0
  %6241 = vadd.xlane.f32.xlu0 %v6240
  %v6242 = vpop.xlane.xlu0 %6241
  %v6243 = vsel %vm141, %v6207, 0.0
  %6244 = vadd.xlane.f32.xlu0 %v6243
  %v6245 = vpop.xlane.xlu0 %6244
  %v6246 = vsel %vm141, %v6208, 0.0
  %6247 = vadd.xlane.f32.xlu0 %v6246
  %v6248 = vpop.xlane.xlu0 %6247
  %v6249 = vsel %vm141, %v6209, 0.0
  %6250 = vadd.xlane.f32.xlu0 %v6249
  %v6251 = vpop.xlane.xlu0 %6250
  %v6252 = vsel %vm141, %v6210, 0.0
  %6253 = vadd.xlane.f32.xlu0 %v6252
  %v6254 = vpop.xlane.xlu0 %6253
  %v6255 = vsel %vm141, %v6211, 0.0
  %6256 = vadd.xlane.f32.xlu0 %v6255
  %v6257 = vpop.xlane.xlu0 %6256
  %v6258 = vsel %vm141, %v6212, 0.0
  %6259 = vadd.xlane.f32.xlu0 %v6258
  %v6260 = vpop.xlane.xlu0 %6259
  %v6261 = vsel %vm141, %v6213, 0.0
  %6262 = vadd.xlane.f32.xlu0 %v6261
  %v6263 = vpop.xlane.xlu0 %6262
  %v6264 = vsel %vm141, %v6214, 0.0
  %6265 = vadd.xlane.f32.xlu0 %v6264
  %v6266 = vpop.xlane.xlu0 %6265
  %v6267 = vsel %vm141, %v6215, 0.0
  %6268 = vadd.xlane.f32.xlu0 %v6267
  %v6269 = vpop.xlane.xlu0 %6268
  %v6270 = vsel %vm141, %v6216, 0.0
  %6271 = vadd.xlane.f32.xlu0 %v6270
  %v6272 = vpop.xlane.xlu0 %6271
  %v6273 = vsel %vm141, %v6217, 0.0
  %6274 = vadd.xlane.f32.xlu0 %v6273
  %v6275 = vpop.xlane.xlu0 %6274
  %v6276 = vsel %vm141, %v6218, 0.0
  %6277 = vadd.xlane.f32.xlu0 %v6276
  %v6278 = vpop.xlane.xlu0 %6277
  %v6279 = vsel %vm141, %v6219, 0.0
  %6280 = vadd.xlane.f32.xlu0 %v6279
  %v6281 = vpop.xlane.xlu0 %6280
  %v6282 = vsel %vm141, %v6220, 0.0
  %6283 = vadd.xlane.f32.xlu0 %v6282
  %v6284 = vpop.xlane.xlu0 %6283
  %v6285 = vsel %vm141, %v6221, 0.0
  %6286 = vadd.xlane.f32.xlu0 %v6285
  %v6287 = vpop.xlane.xlu0 %6286
  %v6288 = vsel %vm141, %v6222, 0.0
  %6289 = vadd.xlane.f32.xlu0 %v6288
  %v6290 = vpop.xlane.xlu0 %6289
  %v6291 = vsel %vm141, %v6223, 0.0
  %6292 = vadd.xlane.f32.xlu0 %v6291
  %v6293 = vpop.xlane.xlu0 %6292
  %v6294 = vsel %vm141, %v6224, 0.0
  %6295 = vadd.xlane.f32.xlu0 %v6294
  %v6296 = vpop.xlane.xlu0 %6295
  %v6297 = vsel %vm141, %v6225, 0.0
  %6298 = vadd.xlane.f32.xlu0 %v6297
  %v6299 = vpop.xlane.xlu0 %6298
  %v6300 = vsel %vm141, %v6226, 0.0
  %6301 = vadd.xlane.f32.xlu0 %v6300
  %v6302 = vpop.xlane.xlu0 %6301
  %v6303 = vsel %vm141, %v6227, 0.0
  %6304 = vadd.xlane.f32.xlu0 %v6303
  %v6305 = vpop.xlane.xlu0 %6304
  %v6306 = vsel %vm141, %v6228, 0.0
  %6307 = vadd.xlane.f32.xlu0 %v6306
  %v6308 = vpop.xlane.xlu0 %6307
  %v6309 = vsel %vm141, %v6229, 0.0
  %6310 = vadd.xlane.f32.xlu0 %v6309
  %v6311 = vpop.xlane.xlu0 %6310
  %v6312 = vsel %vm141, %v6230, 0.0
  %6313 = vadd.xlane.f32.xlu0 %v6312
  %v6314 = vpop.xlane.xlu0 %6313
  %v6315 = vsel %vm141, %v6231, 0.0
  %6316 = vadd.xlane.f32.xlu0 %v6315
  %v6317 = vpop.xlane.xlu0 %6316
  %v6318 = vsel %vm141, %v6232, 0.0
  %6319 = vadd.xlane.f32.xlu0 %v6318
  %v6320 = vpop.xlane.xlu0 %6319
  %v6321 = vsel %vm141, %v6233, 0.0
  %6322 = vadd.xlane.f32.xlu0 %v6321
  %v6323 = vpop.xlane.xlu0 %6322
  %v6324 = vsel %vm141, %v6234, 0.0
  %6325 = vadd.xlane.f32.xlu0 %v6324
  %v6326 = vpop.xlane.xlu0 %6325
  %v6327 = vsel %vm141, %v6235, 0.0
  %6328 = vadd.xlane.f32.xlu0 %v6327
  %v6329 = vpop.xlane.xlu0 %6328
  %v6330 = vsel %vm141, %v6236, 0.0
  %6331 = vadd.xlane.f32.xlu0 %v6330
  %v6332 = vpop.xlane.xlu0 %6331
  %v6333 = vmul.f32 %v6239, %v244
  %v6334 = vmul.f32 %v6242, %v244
  %v6335 = vmul.f32 %v6245, %v244
  %v6336 = vmul.f32 %v6248, %v244
  %v6337 = vmul.f32 %v6251, %v244
  %v6338 = vmul.f32 %v6254, %v244
  %v6339 = vmul.f32 %v6257, %v244
  %v6340 = vmul.f32 %v6260, %v244
  %v6341 = vmul.f32 %v6263, %v244
  %v6342 = vmul.f32 %v6266, %v244
  %v6343 = vmul.f32 %v6269, %v244
  %v6344 = vmul.f32 %v6272, %v244
  %v6345 = vmul.f32 %v6275, %v244
  %v6346 = vmul.f32 %v6278, %v244
  %v6347 = vmul.f32 %v6281, %v244
  %v6348 = vmul.f32 %v6284, %v244
  %v6349 = vmul.f32 %v6287, %v244
  %v6350 = vmul.f32 %v6290, %v244
  %v6351 = vmul.f32 %v6293, %v244
  %v6352 = vmul.f32 %v6296, %v244
  %v6353 = vmul.f32 %v6299, %v244
  %v6354 = vmul.f32 %v6302, %v244
  %v6355 = vmul.f32 %v6305, %v244
  %v6356 = vmul.f32 %v6308, %v244
  %v6357 = vmul.f32 %v6311, %v244
  %v6358 = vmul.f32 %v6314, %v244
  %v6359 = vmul.f32 %v6317, %v244
  %v6360 = vmul.f32 %v6320, %v244
  %v6361 = vmul.f32 %v6323, %v244
  %v6362 = vmul.f32 %v6326, %v244
  %v6363 = vmul.f32 %v6329, %v244
  %v6364 = vmul.f32 %v6332, %v244
  %v6365 = vadd.f32 %v6333, 1e-05
  %v6366 = vadd.f32 %v6334, 1e-05
  %v6367 = vadd.f32 %v6335, 1e-05
  %v6368 = vadd.f32 %v6336, 1e-05
  %v6369 = vadd.f32 %v6337, 1e-05
  %v6370 = vadd.f32 %v6338, 1e-05
  %v6371 = vadd.f32 %v6339, 1e-05
  %v6372 = vadd.f32 %v6340, 1e-05
  %v6373 = vadd.f32 %v6341, 1e-05
  %v6374 = vadd.f32 %v6342, 1e-05
  %v6375 = vadd.f32 %v6343, 1e-05
  %v6376 = vadd.f32 %v6344, 1e-05
  %v6377 = vadd.f32 %v6345, 1e-05
  %v6378 = vadd.f32 %v6346, 1e-05
  %v6379 = vadd.f32 %v6347, 1e-05
  %v6380 = vadd.f32 %v6348, 1e-05
  %v6381 = vadd.f32 %v6349, 1e-05
  %v6382 = vadd.f32 %v6350, 1e-05
  %v6383 = vadd.f32 %v6351, 1e-05
  %v6384 = vadd.f32 %v6352, 1e-05
  %v6385 = vadd.f32 %v6353, 1e-05
  %v6386 = vadd.f32 %v6354, 1e-05
  %v6387 = vadd.f32 %v6355, 1e-05
  %v6388 = vadd.f32 %v6356, 1e-05
  %v6389 = vadd.f32 %v6357, 1e-05
  %v6390 = vadd.f32 %v6358, 1e-05
  %v6391 = vadd.f32 %v6359, 1e-05
  %v6392 = vadd.f32 %v6360, 1e-05
  %v6393 = vadd.f32 %v6361, 1e-05
  %v6394 = vadd.f32 %v6362, 1e-05
  %v6395 = vadd.f32 %v6363, 1e-05
  %v6396 = vadd.f32 %v6364, 1e-05
  %v6397 = vrsqrt.pop %v6365
  %v6398 = vmul.f32 %v6397, %v6365
  %v6399 = vmul.f32 %v6398, %v6397
  %v6400 = vmul.f32 0.5, %v6399
  %v6401 = vsub.f32 1.5, %v6400
  %v6402 = vmul.f32 %v6397, %v6401
  %vm6403 = vweird.f32 %v6365
  %vm6404 = vweird.f32 %v6397
  %vm6405 = vmor %vm6403, %vm6404
  %v6406 = vsel %vm6405, %v6397, %v6402
  %v6407 = vrsqrt.pop %v6366
  %v6408 = vmul.f32 %v6407, %v6366
  %v6409 = vmul.f32 %v6408, %v6407
  %v6410 = vmul.f32 0.5, %v6409
  %v6411 = vsub.f32 1.5, %v6410
  %v6412 = vmul.f32 %v6407, %v6411
  %vm6413 = vweird.f32 %v6366
  %vm6414 = vweird.f32 %v6407
  %vm6415 = vmor %vm6413, %vm6414
  %v6416 = vsel %vm6415, %v6407, %v6412
  %v6417 = vrsqrt.pop %v6367
  %v6418 = vmul.f32 %v6417, %v6367
  %v6419 = vmul.f32 %v6418, %v6417
  %v6420 = vmul.f32 0.5, %v6419
  %v6421 = vsub.f32 1.5, %v6420
  %v6422 = vmul.f32 %v6417, %v6421
  %vm6423 = vweird.f32 %v6367
  %vm6424 = vweird.f32 %v6417
  %vm6425 = vmor %vm6423, %vm6424
  %v6426 = vsel %vm6425, %v6417, %v6422
  %v6427 = vrsqrt.pop %v6368
  %v6428 = vmul.f32 %v6427, %v6368
  %v6429 = vmul.f32 %v6428, %v6427
  %v6430 = vmul.f32 0.5, %v6429
  %v6431 = vsub.f32 1.5, %v6430
  %v6432 = vmul.f32 %v6427, %v6431
  %vm6433 = vweird.f32 %v6368
  %vm6434 = vweird.f32 %v6427
  %vm6435 = vmor %vm6433, %vm6434
  %v6436 = vsel %vm6435, %v6427, %v6432
  %v6437 = vrsqrt.pop %v6369
  %v6438 = vmul.f32 %v6437, %v6369
  %v6439 = vmul.f32 %v6438, %v6437
  %v6440 = vmul.f32 0.5, %v6439
  %v6441 = vsub.f32 1.5, %v6440
  %v6442 = vmul.f32 %v6437, %v6441
  %vm6443 = vweird.f32 %v6369
  %vm6444 = vweird.f32 %v6437
  %vm6445 = vmor %vm6443, %vm6444
  %v6446 = vsel %vm6445, %v6437, %v6442
  %v6447 = vrsqrt.pop %v6370
  %v6448 = vmul.f32 %v6447, %v6370
  %v6449 = vmul.f32 %v6448, %v6447
  %v6450 = vmul.f32 0.5, %v6449
  %v6451 = vsub.f32 1.5, %v6450
  %v6452 = vmul.f32 %v6447, %v6451
  %vm6453 = vweird.f32 %v6370
  %vm6454 = vweird.f32 %v6447
  %vm6455 = vmor %vm6453, %vm6454
  %v6456 = vsel %vm6455, %v6447, %v6452
  %v6457 = vrsqrt.pop %v6371
  %v6458 = vmul.f32 %v6457, %v6371
  %v6459 = vmul.f32 %v6458, %v6457
  %v6460 = vmul.f32 0.5, %v6459
  %v6461 = vsub.f32 1.5, %v6460
  %v6462 = vmul.f32 %v6457, %v6461
  %vm6463 = vweird.f32 %v6371
  %vm6464 = vweird.f32 %v6457
  %vm6465 = vmor %vm6463, %vm6464
  %v6466 = vsel %vm6465, %v6457, %v6462
  %v6467 = vrsqrt.pop %v6372
  %v6468 = vmul.f32 %v6467, %v6372
  %v6469 = vmul.f32 %v6468, %v6467
  %v6470 = vmul.f32 0.5, %v6469
  %v6471 = vsub.f32 1.5, %v6470
  %v6472 = vmul.f32 %v6467, %v6471
  %vm6473 = vweird.f32 %v6372
  %vm6474 = vweird.f32 %v6467
  %vm6475 = vmor %vm6473, %vm6474
  %v6476 = vsel %vm6475, %v6467, %v6472
  %v6477 = vrsqrt.pop %v6373
  %v6478 = vmul.f32 %v6477, %v6373
  %v6479 = vmul.f32 %v6478, %v6477
  %v6480 = vmul.f32 0.5, %v6479
  %v6481 = vsub.f32 1.5, %v6480
  %v6482 = vmul.f32 %v6477, %v6481
  %vm6483 = vweird.f32 %v6373
  %vm6484 = vweird.f32 %v6477
  %vm6485 = vmor %vm6483, %vm6484
  %v6486 = vsel %vm6485, %v6477, %v6482
  %v6487 = vrsqrt.pop %v6374
  %v6488 = vmul.f32 %v6487, %v6374
  %v6489 = vmul.f32 %v6488, %v6487
  %v6490 = vmul.f32 0.5, %v6489
  %v6491 = vsub.f32 1.5, %v6490
  %v6492 = vmul.f32 %v6487, %v6491
  %vm6493 = vweird.f32 %v6374
  %vm6494 = vweird.f32 %v6487
  %vm6495 = vmor %vm6493, %vm6494
  %v6496 = vsel %vm6495, %v6487, %v6492
  %v6497 = vrsqrt.pop %v6375
  %v6498 = vmul.f32 %v6497, %v6375
  %v6499 = vmul.f32 %v6498, %v6497
  %v6500 = vmul.f32 0.5, %v6499
  %v6501 = vsub.f32 1.5, %v6500
  %v6502 = vmul.f32 %v6497, %v6501
  %vm6503 = vweird.f32 %v6375
  %vm6504 = vweird.f32 %v6497
  %vm6505 = vmor %vm6503, %vm6504
  %v6506 = vsel %vm6505, %v6497, %v6502
  %v6507 = vrsqrt.pop %v6376
  %v6508 = vmul.f32 %v6507, %v6376
  %v6509 = vmul.f32 %v6508, %v6507
  %v6510 = vmul.f32 0.5, %v6509
  %v6511 = vsub.f32 1.5, %v6510
  %v6512 = vmul.f32 %v6507, %v6511
  %vm6513 = vweird.f32 %v6376
  %vm6514 = vweird.f32 %v6507
  %vm6515 = vmor %vm6513, %vm6514
  %v6516 = vsel %vm6515, %v6507, %v6512
  %v6517 = vrsqrt.pop %v6377
  %v6518 = vmul.f32 %v6517, %v6377
  %v6519 = vmul.f32 %v6518, %v6517
  %v6520 = vmul.f32 0.5, %v6519
  %v6521 = vsub.f32 1.5, %v6520
  %v6522 = vmul.f32 %v6517, %v6521
  %vm6523 = vweird.f32 %v6377
  %vm6524 = vweird.f32 %v6517
  %vm6525 = vmor %vm6523, %vm6524
  %v6526 = vsel %vm6525, %v6517, %v6522
  %v6527 = vrsqrt.pop %v6378
  %v6528 = vmul.f32 %v6527, %v6378
  %v6529 = vmul.f32 %v6528, %v6527
  %v6530 = vmul.f32 0.5, %v6529
  %v6531 = vsub.f32 1.5, %v6530
  %v6532 = vmul.f32 %v6527, %v6531
  %vm6533 = vweird.f32 %v6378
  %vm6534 = vweird.f32 %v6527
  %vm6535 = vmor %vm6533, %vm6534
  %v6536 = vsel %vm6535, %v6527, %v6532
  %v6537 = vrsqrt.pop %v6379
  %v6538 = vmul.f32 %v6537, %v6379
  %v6539 = vmul.f32 %v6538, %v6537
  %v6540 = vmul.f32 0.5, %v6539
  %v6541 = vsub.f32 1.5, %v6540
  %v6542 = vmul.f32 %v6537, %v6541
  %vm6543 = vweird.f32 %v6379
  %vm6544 = vweird.f32 %v6537
  %vm6545 = vmor %vm6543, %vm6544
  %v6546 = vsel %vm6545, %v6537, %v6542
  %v6547 = vrsqrt.pop %v6380
  %v6548 = vmul.f32 %v6547, %v6380
  %v6549 = vmul.f32 %v6548, %v6547
  %v6550 = vmul.f32 0.5, %v6549
  %v6551 = vsub.f32 1.5, %v6550
  %v6552 = vmul.f32 %v6547, %v6551
  %vm6553 = vweird.f32 %v6380
  %vm6554 = vweird.f32 %v6547
  %vm6555 = vmor %vm6553, %vm6554
  %v6556 = vsel %vm6555, %v6547, %v6552
  %v6557 = vrsqrt.pop %v6381
  %v6558 = vmul.f32 %v6557, %v6381
  %v6559 = vmul.f32 %v6558, %v6557
  %v6560 = vmul.f32 0.5, %v6559
  %v6561 = vsub.f32 1.5, %v6560
  %v6562 = vmul.f32 %v6557, %v6561
  %vm6563 = vweird.f32 %v6381
  %vm6564 = vweird.f32 %v6557
  %vm6565 = vmor %vm6563, %vm6564
  %v6566 = vsel %vm6565, %v6557, %v6562
  %v6567 = vrsqrt.pop %v6382
  %v6568 = vmul.f32 %v6567, %v6382
  %v6569 = vmul.f32 %v6568, %v6567
  %v6570 = vmul.f32 0.5, %v6569
  %v6571 = vsub.f32 1.5, %v6570
  %v6572 = vmul.f32 %v6567, %v6571
  %vm6573 = vweird.f32 %v6382
  %vm6574 = vweird.f32 %v6567
  %vm6575 = vmor %vm6573, %vm6574
  %v6576 = vsel %vm6575, %v6567, %v6572
  %v6577 = vrsqrt.pop %v6383
  %v6578 = vmul.f32 %v6577, %v6383
  %v6579 = vmul.f32 %v6578, %v6577
  %v6580 = vmul.f32 0.5, %v6579
  %v6581 = vsub.f32 1.5, %v6580
  %v6582 = vmul.f32 %v6577, %v6581
  %vm6583 = vweird.f32 %v6383
  %vm6584 = vweird.f32 %v6577
  %vm6585 = vmor %vm6583, %vm6584
  %v6586 = vsel %vm6585, %v6577, %v6582
  %v6587 = vrsqrt.pop %v6384
  %v6588 = vmul.f32 %v6587, %v6384
  %v6589 = vmul.f32 %v6588, %v6587
  %v6590 = vmul.f32 0.5, %v6589
  %v6591 = vsub.f32 1.5, %v6590
  %v6592 = vmul.f32 %v6587, %v6591
  %vm6593 = vweird.f32 %v6384
  %vm6594 = vweird.f32 %v6587
  %vm6595 = vmor %vm6593, %vm6594
  %v6596 = vsel %vm6595, %v6587, %v6592
  %v6597 = vrsqrt.pop %v6385
  %v6598 = vmul.f32 %v6597, %v6385
  %v6599 = vmul.f32 %v6598, %v6597
  %v6600 = vmul.f32 0.5, %v6599
  %v6601 = vsub.f32 1.5, %v6600
  %v6602 = vmul.f32 %v6597, %v6601
  %vm6603 = vweird.f32 %v6385
  %vm6604 = vweird.f32 %v6597
  %vm6605 = vmor %vm6603, %vm6604
  %v6606 = vsel %vm6605, %v6597, %v6602
  %v6607 = vrsqrt.pop %v6386
  %v6608 = vmul.f32 %v6607, %v6386
  %v6609 = vmul.f32 %v6608, %v6607
  %v6610 = vmul.f32 0.5, %v6609
  %v6611 = vsub.f32 1.5, %v6610
  %v6612 = vmul.f32 %v6607, %v6611
  %vm6613 = vweird.f32 %v6386
  %vm6614 = vweird.f32 %v6607
  %vm6615 = vmor %vm6613, %vm6614
  %v6616 = vsel %vm6615, %v6607, %v6612
  %v6617 = vrsqrt.pop %v6387
  %v6618 = vmul.f32 %v6617, %v6387
  %v6619 = vmul.f32 %v6618, %v6617
  %v6620 = vmul.f32 0.5, %v6619
  %v6621 = vsub.f32 1.5, %v6620
  %v6622 = vmul.f32 %v6617, %v6621
  %vm6623 = vweird.f32 %v6387
  %vm6624 = vweird.f32 %v6617
  %vm6625 = vmor %vm6623, %vm6624
  %v6626 = vsel %vm6625, %v6617, %v6622
  %v6627 = vrsqrt.pop %v6388
  %v6628 = vmul.f32 %v6627, %v6388
  %v6629 = vmul.f32 %v6628, %v6627
  %v6630 = vmul.f32 0.5, %v6629
  %v6631 = vsub.f32 1.5, %v6630
  %v6632 = vmul.f32 %v6627, %v6631
  %vm6633 = vweird.f32 %v6388
  %vm6634 = vweird.f32 %v6627
  %vm6635 = vmor %vm6633, %vm6634
  %v6636 = vsel %vm6635, %v6627, %v6632
  %v6637 = vrsqrt.pop %v6389
  %v6638 = vmul.f32 %v6637, %v6389
  %v6639 = vmul.f32 %v6638, %v6637
  %v6640 = vmul.f32 0.5, %v6639
  %v6641 = vsub.f32 1.5, %v6640
  %v6642 = vmul.f32 %v6637, %v6641
  %vm6643 = vweird.f32 %v6389
  %vm6644 = vweird.f32 %v6637
  %vm6645 = vmor %vm6643, %vm6644
  %v6646 = vsel %vm6645, %v6637, %v6642
  %v6647 = vrsqrt.pop %v6390
  %v6648 = vmul.f32 %v6647, %v6390
  %v6649 = vmul.f32 %v6648, %v6647
  %v6650 = vmul.f32 0.5, %v6649
  %v6651 = vsub.f32 1.5, %v6650
  %v6652 = vmul.f32 %v6647, %v6651
  %vm6653 = vweird.f32 %v6390
  %vm6654 = vweird.f32 %v6647
  %vm6655 = vmor %vm6653, %vm6654
  %v6656 = vsel %vm6655, %v6647, %v6652
  %v6657 = vrsqrt.pop %v6391
  %v6658 = vmul.f32 %v6657, %v6391
  %v6659 = vmul.f32 %v6658, %v6657
  %v6660 = vmul.f32 0.5, %v6659
  %v6661 = vsub.f32 1.5, %v6660
  %v6662 = vmul.f32 %v6657, %v6661
  %vm6663 = vweird.f32 %v6391
  %vm6664 = vweird.f32 %v6657
  %vm6665 = vmor %vm6663, %vm6664
  %v6666 = vsel %vm6665, %v6657, %v6662
  %v6667 = vrsqrt.pop %v6392
  %v6668 = vmul.f32 %v6667, %v6392
  %v6669 = vmul.f32 %v6668, %v6667
  %v6670 = vmul.f32 0.5, %v6669
  %v6671 = vsub.f32 1.5, %v6670
  %v6672 = vmul.f32 %v6667, %v6671
  %vm6673 = vweird.f32 %v6392
  %vm6674 = vweird.f32 %v6667
  %vm6675 = vmor %vm6673, %vm6674
  %v6676 = vsel %vm6675, %v6667, %v6672
  %v6677 = vrsqrt.pop %v6393
  %v6678 = vmul.f32 %v6677, %v6393
  %v6679 = vmul.f32 %v6678, %v6677
  %v6680 = vmul.f32 0.5, %v6679
  %v6681 = vsub.f32 1.5, %v6680
  %v6682 = vmul.f32 %v6677, %v6681
  %vm6683 = vweird.f32 %v6393
  %vm6684 = vweird.f32 %v6677
  %vm6685 = vmor %vm6683, %vm6684
  %v6686 = vsel %vm6685, %v6677, %v6682
  %v6687 = vrsqrt.pop %v6394
  %v6688 = vmul.f32 %v6687, %v6394
  %v6689 = vmul.f32 %v6688, %v6687
  %v6690 = vmul.f32 0.5, %v6689
  %v6691 = vsub.f32 1.5, %v6690
  %v6692 = vmul.f32 %v6687, %v6691
  %vm6693 = vweird.f32 %v6394
  %vm6694 = vweird.f32 %v6687
  %vm6695 = vmor %vm6693, %vm6694
  %v6696 = vsel %vm6695, %v6687, %v6692
  %v6697 = vrsqrt.pop %v6395
  %v6698 = vmul.f32 %v6697, %v6395
  %v6699 = vmul.f32 %v6698, %v6697
  %v6700 = vmul.f32 0.5, %v6699
  %v6701 = vsub.f32 1.5, %v6700
  %v6702 = vmul.f32 %v6697, %v6701
  %vm6703 = vweird.f32 %v6395
  %vm6704 = vweird.f32 %v6697
  %vm6705 = vmor %vm6703, %vm6704
  %v6706 = vsel %vm6705, %v6697, %v6702
  %v6707 = vrsqrt.pop %v6396
  %v6708 = vmul.f32 %v6707, %v6396
  %v6709 = vmul.f32 %v6708, %v6707
  %v6710 = vmul.f32 0.5, %v6709
  %v6711 = vsub.f32 1.5, %v6710
  %v6712 = vmul.f32 %v6707, %v6711
  %vm6713 = vweird.f32 %v6396
  %vm6714 = vweird.f32 %v6707
  %vm6715 = vmor %vm6713, %vm6714
  %v6716 = vsel %vm6715, %v6707, %v6712
  %v6717 = vmul.f32 %v6173, %v6406
  %v6718 = vmul.f32 %v6174, %v6416
  %v6719 = vmul.f32 %v6175, %v6426
  %v6720 = vmul.f32 %v6176, %v6436
  %v6721 = vmul.f32 %v6177, %v6446
  %v6722 = vmul.f32 %v6178, %v6456
  %v6723 = vmul.f32 %v6179, %v6466
  %v6724 = vmul.f32 %v6180, %v6476
  %v6725 = vmul.f32 %v6181, %v6486
  %v6726 = vmul.f32 %v6182, %v6496
  %v6727 = vmul.f32 %v6183, %v6506
  %v6728 = vmul.f32 %v6184, %v6516
  %v6729 = vmul.f32 %v6185, %v6526
  %v6730 = vmul.f32 %v6186, %v6536
  %v6731 = vmul.f32 %v6187, %v6546
  %v6732 = vmul.f32 %v6188, %v6556
  %v6733 = vmul.f32 %v6189, %v6566
  %v6734 = vmul.f32 %v6190, %v6576
  %v6735 = vmul.f32 %v6191, %v6586
  %v6736 = vmul.f32 %v6192, %v6596
  %v6737 = vmul.f32 %v6193, %v6606
  %v6738 = vmul.f32 %v6194, %v6616
  %v6739 = vmul.f32 %v6195, %v6626
  %v6740 = vmul.f32 %v6196, %v6636
  %v6741 = vmul.f32 %v6197, %v6646
  %v6742 = vmul.f32 %v6198, %v6656
  %v6743 = vmul.f32 %v6199, %v6666
  %v6744 = vmul.f32 %v6200, %v6676
  %v6745 = vmul.f32 %v6201, %v6686
  %v6746 = vmul.f32 %v6202, %v6696
  %v6747 = vmul.f32 %v6203, %v6706
  %v6748 = vmul.f32 %v6204, %v6716
  %v6749 = vmul.f32 %v6717, %v854
  %v6750 = vmul.f32 %v6718, %v854
  %v6751 = vmul.f32 %v6719, %v854
  %v6752 = vmul.f32 %v6720, %v854
  %v6753 = vmul.f32 %v6721, %v854
  %v6754 = vmul.f32 %v6722, %v854
  %v6755 = vmul.f32 %v6723, %v854
  %v6756 = vmul.f32 %v6724, %v854
  %v6757 = vmul.f32 %v6725, %v854
  %v6758 = vmul.f32 %v6726, %v854
  %v6759 = vmul.f32 %v6727, %v854
  %v6760 = vmul.f32 %v6728, %v854
  %v6761 = vmul.f32 %v6729, %v854
  %v6762 = vmul.f32 %v6730, %v854
  %v6763 = vmul.f32 %v6731, %v854
  %v6764 = vmul.f32 %v6732, %v854
  %v6765 = vmul.f32 %v6733, %v854
  %v6766 = vmul.f32 %v6734, %v854
  %v6767 = vmul.f32 %v6735, %v854
  %v6768 = vmul.f32 %v6736, %v854
  %v6769 = vmul.f32 %v6737, %v854
  %v6770 = vmul.f32 %v6738, %v854
  %v6771 = vmul.f32 %v6739, %v854
  %v6772 = vmul.f32 %v6740, %v854
  %v6773 = vmul.f32 %v6741, %v854
  %v6774 = vmul.f32 %v6742, %v854
  %v6775 = vmul.f32 %v6743, %v854
  %v6776 = vmul.f32 %v6744, %v854
  %v6777 = vmul.f32 %v6745, %v854
  %v6778 = vmul.f32 %v6746, %v854
  %v6779 = vmul.f32 %v6747, %v854
  %v6780 = vmul.f32 %v6748, %v854
  %v6781 = vadd.f32 %v6749, %v889
  %v6782 = vadd.f32 %v6750, %v889
  %v6783 = vadd.f32 %v6751, %v889
  %v6784 = vadd.f32 %v6752, %v889
  %v6785 = vadd.f32 %v6753, %v889
  %v6786 = vadd.f32 %v6754, %v889
  %v6787 = vadd.f32 %v6755, %v889
  %v6788 = vadd.f32 %v6756, %v889
  %v6789 = vadd.f32 %v6757, %v889
  %v6790 = vadd.f32 %v6758, %v889
  %v6791 = vadd.f32 %v6759, %v889
  %v6792 = vadd.f32 %v6760, %v889
  %v6793 = vadd.f32 %v6761, %v889
  %v6794 = vadd.f32 %v6762, %v889
  %v6795 = vadd.f32 %v6763, %v889
  %v6796 = vadd.f32 %v6764, %v889
  %v6797 = vadd.f32 %v6765, %v889
  %v6798 = vadd.f32 %v6766, %v889
  %v6799 = vadd.f32 %v6767, %v889
  %v6800 = vadd.f32 %v6768, %v889
  %v6801 = vadd.f32 %v6769, %v889
  %v6802 = vadd.f32 %v6770, %v889
  %v6803 = vadd.f32 %v6771, %v889
  %v6804 = vadd.f32 %v6772, %v889
  %v6805 = vadd.f32 %v6773, %v889
  %v6806 = vadd.f32 %v6774, %v889
  %v6807 = vadd.f32 %v6775, %v889
  %v6808 = vadd.f32 %v6776, %v889
  %v6809 = vadd.f32 %v6777, %v889
  %v6810 = vadd.f32 %v6778, %v889
  %v6811 = vadd.f32 %v6779, %v889
  %v6812 = vadd.f32 %v6780, %v889
  %v6813 = vld [vmem:[%s4] sm:$0xff]
  %v6814 = vld [vmem:[%s4 + $0x8] sm:$0xff]
  %v6815 = vld [vmem:[%s4 + $0x10] sm:$0xff]
  %v6816 = vld [vmem:[%s4 + $0x18] sm:$0xff]
  %v6818 = vsel %vm141, %v6781, 0
  %v6821 = vsel %vm141, %v6782, 0
  %v6824 = vsel %vm141, %v6783, 0
  %v6827 = vsel %vm141, %v6784, 0
  %v6830 = vsel %vm141, %v6785, 0
  %v6833 = vsel %vm141, %v6786, 0
  %v6836 = vsel %vm141, %v6787, 0
  %v6839 = vsel %vm141, %v6788, 0
  %v6842 = vsel %vm141, %v6789, 0
  %v6845 = vsel %vm141, %v6790, 0
  %v6848 = vsel %vm141, %v6791, 0
  %v6851 = vsel %vm141, %v6792, 0
  %v6854 = vsel %vm141, %v6793, 0
  %v6857 = vsel %vm141, %v6794, 0
  %v6860 = vsel %vm141, %v6795, 0
  %v6863 = vsel %vm141, %v6796, 0
  %v6866 = vsel %vm141, %v6797, 0
  %v6869 = vsel %vm141, %v6798, 0
  %v6872 = vsel %vm141, %v6799, 0
  %v6875 = vsel %vm141, %v6800, 0
  %v6878 = vsel %vm141, %v6801, 0
  %v6881 = vsel %vm141, %v6802, 0
  %v6884 = vsel %vm141, %v6803, 0
  %v6887 = vsel %vm141, %v6804, 0
  %v6890 = vsel %vm141, %v6805, 0
  %v6893 = vsel %vm141, %v6806, 0
  %v6896 = vsel %vm141, %v6807, 0
  %v6899 = vsel %vm141, %v6808, 0
  %v6902 = vsel %vm141, %v6809, 0
  %v6905 = vsel %vm141, %v6810, 0
  %v6908 = vsel %vm141, %v6811, 0
  %v6911 = vsel %vm141, %v6812, 0
  %6913 = vmatpush.msra.mxu0 0.0
  %6914 = vmatpush.msra.mxu0 0.0
  %6915 = vmatpush.msra.mxu0 0.0
  %6916 = vmatpush.msra.mxu0 0.0
  %6917 = vmatpush.msra.mxu0 0.0
  %6918 = vmatpush.msra.mxu0 0.0
  %6919 = vmatpush.msra.mxu0 0.0
  %6920 = vmatpush.msra.mxu0 0.0
  %6921 = vmatpush.msra.mxu0 0.0
  %6922 = vmatpush.msra.mxu0 0.0
  %6923 = vmatpush.msra.mxu0 0.0
  %6924 = vmatpush.msra.mxu0 0.0
  %6925 = vmatpush.msra.mxu0 %v6816
  %6926 = vmatpush.msra.mxu0 %v6815
  %6927 = vmatpush.msra.mxu0 %v6814
  %6928 = vmatpush.msra.mxu0 %v6813
  %6929 = vmatmul.f32.gmra.mxu0 %v6818
  %v6930 = vpop.f32.mrf.mxu0
  %v6931 = vadd.f32 0.0, %v6930
  %6932 = vmatmul.f32.gmra.mxu0 %v6821
  %v6933 = vpop.f32.mrf.mxu0
  %v6934 = vadd.f32 0.0, %v6933
  %6935 = vmatmul.f32.gmra.mxu0 %v6824
  %v6936 = vpop.f32.mrf.mxu0
  %v6937 = vadd.f32 0.0, %v6936
  %6938 = vmatmul.f32.gmra.mxu0 %v6827
  %v6939 = vpop.f32.mrf.mxu0
  %v6940 = vadd.f32 0.0, %v6939
  %6941 = vmatmul.f32.gmra.mxu0 %v6830
  %v6942 = vpop.f32.mrf.mxu0
  %v6943 = vadd.f32 0.0, %v6942
  %6944 = vmatmul.f32.gmra.mxu0 %v6833
  %v6945 = vpop.f32.mrf.mxu0
  %v6946 = vadd.f32 0.0, %v6945
  %6947 = vmatmul.f32.gmra.mxu0 %v6836
  %v6948 = vpop.f32.mrf.mxu0
  %v6949 = vadd.f32 0.0, %v6948
  %6950 = vmatmul.f32.gmra.mxu0 %v6839
  %v6951 = vpop.f32.mrf.mxu0
  %v6952 = vadd.f32 0.0, %v6951
  %6953 = vmatmul.f32.gmra.mxu0 %v6842
  %v6954 = vpop.f32.mrf.mxu0
  %v6955 = vadd.f32 0.0, %v6954
  %6956 = vmatmul.f32.gmra.mxu0 %v6845
  %v6957 = vpop.f32.mrf.mxu0
  %v6958 = vadd.f32 0.0, %v6957
  %6959 = vmatmul.f32.gmra.mxu0 %v6848
  %v6960 = vpop.f32.mrf.mxu0
  %v6961 = vadd.f32 0.0, %v6960
  %6962 = vmatmul.f32.gmra.mxu0 %v6851
  %v6963 = vpop.f32.mrf.mxu0
  %v6964 = vadd.f32 0.0, %v6963
  %6965 = vmatmul.f32.gmra.mxu0 %v6854
  %v6966 = vpop.f32.mrf.mxu0
  %v6967 = vadd.f32 0.0, %v6966
  %6968 = vmatmul.f32.gmra.mxu0 %v6857
  %v6969 = vpop.f32.mrf.mxu0
  %v6970 = vadd.f32 0.0, %v6969
  %6971 = vmatmul.f32.gmra.mxu0 %v6860
  %v6972 = vpop.f32.mrf.mxu0
  %v6973 = vadd.f32 0.0, %v6972
  %6974 = vmatmul.f32.gmra.mxu0 %v6863
  %v6975 = vpop.f32.mrf.mxu0
  %v6976 = vadd.f32 0.0, %v6975
  %6977 = vmatmul.f32.gmra.mxu0 %v6866
  %v6978 = vpop.f32.mrf.mxu0
  %v6979 = vadd.f32 0.0, %v6978
  %6980 = vmatmul.f32.gmra.mxu0 %v6869
  %v6981 = vpop.f32.mrf.mxu0
  %v6982 = vadd.f32 0.0, %v6981
  %6983 = vmatmul.f32.gmra.mxu0 %v6872
  %v6984 = vpop.f32.mrf.mxu0
  %v6985 = vadd.f32 0.0, %v6984
  %6986 = vmatmul.f32.gmra.mxu0 %v6875
  %v6987 = vpop.f32.mrf.mxu0
  %v6988 = vadd.f32 0.0, %v6987
  %6989 = vmatmul.f32.gmra.mxu0 %v6878
  %v6990 = vpop.f32.mrf.mxu0
  %v6991 = vadd.f32 0.0, %v6990
  %6992 = vmatmul.f32.gmra.mxu0 %v6881
  %v6993 = vpop.f32.mrf.mxu0
  %v6994 = vadd.f32 0.0, %v6993
  %6995 = vmatmul.f32.gmra.mxu0 %v6884
  %v6996 = vpop.f32.mrf.mxu0
  %v6997 = vadd.f32 0.0, %v6996
  %6998 = vmatmul.f32.gmra.mxu0 %v6887
  %v6999 = vpop.f32.mrf.mxu0
  %v7000 = vadd.f32 0.0, %v6999
  %7001 = vmatmul.f32.gmra.mxu0 %v6890
  %v7002 = vpop.f32.mrf.mxu0
  %v7003 = vadd.f32 0.0, %v7002
  %7004 = vmatmul.f32.gmra.mxu0 %v6893
  %v7005 = vpop.f32.mrf.mxu0
  %v7006 = vadd.f32 0.0, %v7005
  %7007 = vmatmul.f32.gmra.mxu0 %v6896
  %v7008 = vpop.f32.mrf.mxu0
  %v7009 = vadd.f32 0.0, %v7008
  %7010 = vmatmul.f32.gmra.mxu0 %v6899
  %v7011 = vpop.f32.mrf.mxu0
  %v7012 = vadd.f32 0.0, %v7011
  %7013 = vmatmul.f32.gmra.mxu0 %v6902
  %v7014 = vpop.f32.mrf.mxu0
  %v7015 = vadd.f32 0.0, %v7014
  %7016 = vmatmul.f32.gmra.mxu0 %v6905
  %v7017 = vpop.f32.mrf.mxu0
  %v7018 = vadd.f32 0.0, %v7017
  %7019 = vmatmul.f32.gmra.mxu0 %v6908
  %v7020 = vpop.f32.mrf.mxu0
  %v7021 = vadd.f32 0.0, %v7020
  %7022 = vmatmul.f32.gmra.mxu0 %v6911
  %v7023 = vpop.f32.mrf.mxu0
  %v7024 = vadd.f32 0.0, %v7023
  %7025 = vdwg.mxu0
  %v7026 = vld [vmem:[%s5] sm:$0xff]
  %v7027 = vld [vmem:[%s5 + $0x8] sm:$0xff]
  %v7028 = vld [vmem:[%s5 + $0x10] sm:$0xff]
  %v7029 = vld [vmem:[%s5 + $0x18] sm:$0xff]
  %7030 = vmatpush.msra.mxu0 0.0
  %7031 = vmatpush.msra.mxu0 0.0
  %7032 = vmatpush.msra.mxu0 0.0
  %7033 = vmatpush.msra.mxu0 0.0
  %7034 = vmatpush.msra.mxu0 0.0
  %7035 = vmatpush.msra.mxu0 0.0
  %7036 = vmatpush.msra.mxu0 0.0
  %7037 = vmatpush.msra.mxu0 0.0
  %7038 = vmatpush.msra.mxu0 0.0
  %7039 = vmatpush.msra.mxu0 0.0
  %7040 = vmatpush.msra.mxu0 0.0
  %7041 = vmatpush.msra.mxu0 0.0
  %7042 = vmatpush.msra.mxu0 %v7029
  %7043 = vmatpush.msra.mxu0 %v7028
  %7044 = vmatpush.msra.mxu0 %v7027
  %7045 = vmatpush.msra.mxu0 %v7026
  %7046 = vmatmul.f32.gmra.mxu0 %v6818
  %v7047 = vpop.f32.mrf.mxu0
  %v7048 = vadd.f32 0.0, %v7047
  %7049 = vmatmul.f32.gmra.mxu0 %v6821
  %v7050 = vpop.f32.mrf.mxu0
  %v7051 = vadd.f32 0.0, %v7050
  %7052 = vmatmul.f32.gmra.mxu0 %v6824
  %v7053 = vpop.f32.mrf.mxu0
  %v7054 = vadd.f32 0.0, %v7053
  %7055 = vmatmul.f32.gmra.mxu0 %v6827
  %v7056 = vpop.f32.mrf.mxu0
  %v7057 = vadd.f32 0.0, %v7056
  %7058 = vmatmul.f32.gmra.mxu0 %v6830
  %v7059 = vpop.f32.mrf.mxu0
  %v7060 = vadd.f32 0.0, %v7059
  %7061 = vmatmul.f32.gmra.mxu0 %v6833
  %v7062 = vpop.f32.mrf.mxu0
  %v7063 = vadd.f32 0.0, %v7062
  %7064 = vmatmul.f32.gmra.mxu0 %v6836
  %v7065 = vpop.f32.mrf.mxu0
  %v7066 = vadd.f32 0.0, %v7065
  %7067 = vmatmul.f32.gmra.mxu0 %v6839
  %v7068 = vpop.f32.mrf.mxu0
  %v7069 = vadd.f32 0.0, %v7068
  %7070 = vmatmul.f32.gmra.mxu0 %v6842
  %v7071 = vpop.f32.mrf.mxu0
  %v7072 = vadd.f32 0.0, %v7071
  %7073 = vmatmul.f32.gmra.mxu0 %v6845
  %v7074 = vpop.f32.mrf.mxu0
  %v7075 = vadd.f32 0.0, %v7074
  %7076 = vmatmul.f32.gmra.mxu0 %v6848
  %v7077 = vpop.f32.mrf.mxu0
  %v7078 = vadd.f32 0.0, %v7077
  %7079 = vmatmul.f32.gmra.mxu0 %v6851
  %v7080 = vpop.f32.mrf.mxu0
  %v7081 = vadd.f32 0.0, %v7080
  %7082 = vmatmul.f32.gmra.mxu0 %v6854
  %v7083 = vpop.f32.mrf.mxu0
  %v7084 = vadd.f32 0.0, %v7083
  %7085 = vmatmul.f32.gmra.mxu0 %v6857
  %v7086 = vpop.f32.mrf.mxu0
  %v7087 = vadd.f32 0.0, %v7086
  %7088 = vmatmul.f32.gmra.mxu0 %v6860
  %v7089 = vpop.f32.mrf.mxu0
  %v7090 = vadd.f32 0.0, %v7089
  %7091 = vmatmul.f32.gmra.mxu0 %v6863
  %v7092 = vpop.f32.mrf.mxu0
  %v7093 = vadd.f32 0.0, %v7092
  %7094 = vmatmul.f32.gmra.mxu0 %v6866
  %v7095 = vpop.f32.mrf.mxu0
  %v7096 = vadd.f32 0.0, %v7095
  %7097 = vmatmul.f32.gmra.mxu0 %v6869
  %v7098 = vpop.f32.mrf.mxu0
  %v7099 = vadd.f32 0.0, %v7098
  %7100 = vmatmul.f32.gmra.mxu0 %v6872
  %v7101 = vpop.f32.mrf.mxu0
  %v7102 = vadd.f32 0.0, %v7101
  %7103 = vmatmul.f32.gmra.mxu0 %v6875
  %v7104 = vpop.f32.mrf.mxu0
  %v7105 = vadd.f32 0.0, %v7104
  %7106 = vmatmul.f32.gmra.mxu0 %v6878
  %v7107 = vpop.f32.mrf.mxu0
  %v7108 = vadd.f32 0.0, %v7107
  %7109 = vmatmul.f32.gmra.mxu0 %v6881
  %v7110 = vpop.f32.mrf.mxu0
  %v7111 = vadd.f32 0.0, %v7110
  %7112 = vmatmul.f32.gmra.mxu0 %v6884
  %v7113 = vpop.f32.mrf.mxu0
  %v7114 = vadd.f32 0.0, %v7113
  %7115 = vmatmul.f32.gmra.mxu0 %v6887
  %v7116 = vpop.f32.mrf.mxu0
  %v7117 = vadd.f32 0.0, %v7116
  %7118 = vmatmul.f32.gmra.mxu0 %v6890
  %v7119 = vpop.f32.mrf.mxu0
  %v7120 = vadd.f32 0.0, %v7119
  %7121 = vmatmul.f32.gmra.mxu0 %v6893
  %v7122 = vpop.f32.mrf.mxu0
  %v7123 = vadd.f32 0.0, %v7122
  %7124 = vmatmul.f32.gmra.mxu0 %v6896
  %v7125 = vpop.f32.mrf.mxu0
  %v7126 = vadd.f32 0.0, %v7125
  %7127 = vmatmul.f32.gmra.mxu0 %v6899
  %v7128 = vpop.f32.mrf.mxu0
  %v7129 = vadd.f32 0.0, %v7128
  %7130 = vmatmul.f32.gmra.mxu0 %v6902
  %v7131 = vpop.f32.mrf.mxu0
  %v7132 = vadd.f32 0.0, %v7131
  %7133 = vmatmul.f32.gmra.mxu0 %v6905
  %v7134 = vpop.f32.mrf.mxu0
  %v7135 = vadd.f32 0.0, %v7134
  %7136 = vmatmul.f32.gmra.mxu0 %v6908
  %v7137 = vpop.f32.mrf.mxu0
  %v7138 = vadd.f32 0.0, %v7137
  %7139 = vmatmul.f32.gmra.mxu0 %v6911
  %v7140 = vpop.f32.mrf.mxu0
  %v7141 = vadd.f32 0.0, %v7140
  %7142 = vdwg.mxu0
  %v7143 = vld [vmem:[%s6] sm:$0xff]
  %v7144 = vld [vmem:[%s6 + $0x8] sm:$0xff]
  %v7145 = vld [vmem:[%s6 + $0x10] sm:$0xff]
  %v7146 = vld [vmem:[%s6 + $0x18] sm:$0xff]
  %7147 = vmatpush.msra.mxu0 0.0
  %7148 = vmatpush.msra.mxu0 0.0
  %7149 = vmatpush.msra.mxu0 0.0
  %7150 = vmatpush.msra.mxu0 0.0
  %7151 = vmatpush.msra.mxu0 0.0
  %7152 = vmatpush.msra.mxu0 0.0
  %7153 = vmatpush.msra.mxu0 0.0
  %7154 = vmatpush.msra.mxu0 0.0
  %7155 = vmatpush.msra.mxu0 0.0
  %7156 = vmatpush.msra.mxu0 0.0
  %7157 = vmatpush.msra.mxu0 0.0
  %7158 = vmatpush.msra.mxu0 0.0
  %7159 = vmatpush.msra.mxu0 %v7146
  %7160 = vmatpush.msra.mxu0 %v7145
  %7161 = vmatpush.msra.mxu0 %v7144
  %7162 = vmatpush.msra.mxu0 %v7143
  %7163 = vmatmul.f32.gmra.mxu0 %v6818
  %v7164 = vpop.f32.mrf.mxu0
  %v7165 = vadd.f32 0.0, %v7164
  %7166 = vmatmul.f32.gmra.mxu0 %v6821
  %v7167 = vpop.f32.mrf.mxu0
  %v7168 = vadd.f32 0.0, %v7167
  %7169 = vmatmul.f32.gmra.mxu0 %v6824
  %v7170 = vpop.f32.mrf.mxu0
  %v7171 = vadd.f32 0.0, %v7170
  %7172 = vmatmul.f32.gmra.mxu0 %v6827
  %v7173 = vpop.f32.mrf.mxu0
  %v7174 = vadd.f32 0.0, %v7173
  %7175 = vmatmul.f32.gmra.mxu0 %v6830
  %v7176 = vpop.f32.mrf.mxu0
  %v7177 = vadd.f32 0.0, %v7176
  %7178 = vmatmul.f32.gmra.mxu0 %v6833
  %v7179 = vpop.f32.mrf.mxu0
  %v7180 = vadd.f32 0.0, %v7179
  %7181 = vmatmul.f32.gmra.mxu0 %v6836
  %v7182 = vpop.f32.mrf.mxu0
  %v7183 = vadd.f32 0.0, %v7182
  %7184 = vmatmul.f32.gmra.mxu0 %v6839
  %v7185 = vpop.f32.mrf.mxu0
  %v7186 = vadd.f32 0.0, %v7185
  %7187 = vmatmul.f32.gmra.mxu0 %v6842
  %v7188 = vpop.f32.mrf.mxu0
  %v7189 = vadd.f32 0.0, %v7188
  %7190 = vmatmul.f32.gmra.mxu0 %v6845
  %v7191 = vpop.f32.mrf.mxu0
  %v7192 = vadd.f32 0.0, %v7191
  %7193 = vmatmul.f32.gmra.mxu0 %v6848
  %v7194 = vpop.f32.mrf.mxu0
  %v7195 = vadd.f32 0.0, %v7194
  %7196 = vmatmul.f32.gmra.mxu0 %v6851
  %v7197 = vpop.f32.mrf.mxu0
  %v7198 = vadd.f32 0.0, %v7197
  %7199 = vmatmul.f32.gmra.mxu0 %v6854
  %v7200 = vpop.f32.mrf.mxu0
  %v7201 = vadd.f32 0.0, %v7200
  %7202 = vmatmul.f32.gmra.mxu0 %v6857
  %v7203 = vpop.f32.mrf.mxu0
  %v7204 = vadd.f32 0.0, %v7203
  %7205 = vmatmul.f32.gmra.mxu0 %v6860
  %v7206 = vpop.f32.mrf.mxu0
  %v7207 = vadd.f32 0.0, %v7206
  %7208 = vmatmul.f32.gmra.mxu0 %v6863
  %v7209 = vpop.f32.mrf.mxu0
  %v7210 = vadd.f32 0.0, %v7209
  %7211 = vmatmul.f32.gmra.mxu0 %v6866
  %v7212 = vpop.f32.mrf.mxu0
  %v7213 = vadd.f32 0.0, %v7212
  %7214 = vmatmul.f32.gmra.mxu0 %v6869
  %v7215 = vpop.f32.mrf.mxu0
  %v7216 = vadd.f32 0.0, %v7215
  %7217 = vmatmul.f32.gmra.mxu0 %v6872
  %v7218 = vpop.f32.mrf.mxu0
  %v7219 = vadd.f32 0.0, %v7218
  %7220 = vmatmul.f32.gmra.mxu0 %v6875
  %v7221 = vpop.f32.mrf.mxu0
  %v7222 = vadd.f32 0.0, %v7221
  %7223 = vmatmul.f32.gmra.mxu0 %v6878
  %v7224 = vpop.f32.mrf.mxu0
  %v7225 = vadd.f32 0.0, %v7224
  %7226 = vmatmul.f32.gmra.mxu0 %v6881
  %v7227 = vpop.f32.mrf.mxu0
  %v7228 = vadd.f32 0.0, %v7227
  %7229 = vmatmul.f32.gmra.mxu0 %v6884
  %v7230 = vpop.f32.mrf.mxu0
  %v7231 = vadd.f32 0.0, %v7230
  %7232 = vmatmul.f32.gmra.mxu0 %v6887
  %v7233 = vpop.f32.mrf.mxu0
  %v7234 = vadd.f32 0.0, %v7233
  %7235 = vmatmul.f32.gmra.mxu0 %v6890
  %v7236 = vpop.f32.mrf.mxu0
  %v7237 = vadd.f32 0.0, %v7236
  %7238 = vmatmul.f32.gmra.mxu0 %v6893
  %v7239 = vpop.f32.mrf.mxu0
  %v7240 = vadd.f32 0.0, %v7239
  %7241 = vmatmul.f32.gmra.mxu0 %v6896
  %v7242 = vpop.f32.mrf.mxu0
  %v7243 = vadd.f32 0.0, %v7242
  %7244 = vmatmul.f32.gmra.mxu0 %v6899
  %v7245 = vpop.f32.mrf.mxu0
  %v7246 = vadd.f32 0.0, %v7245
  %7247 = vmatmul.f32.gmra.mxu0 %v6902
  %v7248 = vpop.f32.mrf.mxu0
  %v7249 = vadd.f32 0.0, %v7248
  %7250 = vmatmul.f32.gmra.mxu0 %v6905
  %v7251 = vpop.f32.mrf.mxu0
  %v7252 = vadd.f32 0.0, %v7251
  %7253 = vmatmul.f32.gmra.mxu0 %v6908
  %v7254 = vpop.f32.mrf.mxu0
  %v7255 = vadd.f32 0.0, %v7254
  %7256 = vmatmul.f32.gmra.mxu0 %v6911
  %v7257 = vpop.f32.mrf.mxu0
  %v7258 = vadd.f32 0.0, %v7257
  %7259 = vdwg.mxu0
  %v7261 = vsel %vm1370, %v6931, 0
  %v7264 = vsel %vm1370, %v6934, 0
  %v7267 = vsel %vm1370, %v6937, 0
  %v7270 = vsel %vm1370, %v6940, 0
  %v7273 = vsel %vm1370, %v6943, 0
  %v7276 = vsel %vm1370, %v6946, 0
  %v7279 = vsel %vm1370, %v6949, 0
  %v7282 = vsel %vm1370, %v6952, 0
  %v7285 = vsel %vm1370, %v6955, 0
  %v7288 = vsel %vm1370, %v6958, 0
  %v7291 = vsel %vm1370, %v6961, 0
  %v7294 = vsel %vm1370, %v6964, 0
  %v7297 = vsel %vm1370, %v6967, 0
  %v7300 = vsel %vm1370, %v6970, 0
  %v7303 = vsel %vm1370, %v6973, 0
  %v7306 = vsel %vm1370, %v6976, 0
  %v7309 = vsel %vm1370, %v6979, 0
  %v7312 = vsel %vm1370, %v6982, 0
  %v7315 = vsel %vm1370, %v6985, 0
  %v7318 = vsel %vm1370, %v6988, 0
  %v7321 = vsel %vm1370, %v6991, 0
  %v7324 = vsel %vm1370, %v6994, 0
  %v7327 = vsel %vm1370, %v6997, 0
  %v7330 = vsel %vm1370, %v7000, 0
  %v7333 = vsel %vm1370, %v7003, 0
  %v7336 = vsel %vm1370, %v7006, 0
  %v7339 = vsel %vm1370, %v7009, 0
  %v7342 = vsel %vm1370, %v7012, 0
  %v7345 = vsel %vm1370, %v7015, 0
  %v7348 = vsel %vm1370, %v7018, 0
  %v7351 = vsel %vm1370, %v7021, 0
  %v7354 = vsel %vm1370, %v7024, 0
  %v7357 = vsel %vm1370, %v7048, 0
  %v7360 = vsel %vm1370, %v7051, 0
  %v7363 = vsel %vm1370, %v7054, 0
  %v7366 = vsel %vm1370, %v7057, 0
  %v7369 = vsel %vm1370, %v7060, 0
  %v7372 = vsel %vm1370, %v7063, 0
  %v7375 = vsel %vm1370, %v7066, 0
  %v7378 = vsel %vm1370, %v7069, 0
  %v7381 = vsel %vm1370, %v7072, 0
  %v7384 = vsel %vm1370, %v7075, 0
  %v7387 = vsel %vm1370, %v7078, 0
  %v7390 = vsel %vm1370, %v7081, 0
  %v7393 = vsel %vm1370, %v7084, 0
  %v7396 = vsel %vm1370, %v7087, 0
  %v7399 = vsel %vm1370, %v7090, 0
  %v7402 = vsel %vm1370, %v7093, 0
  %v7405 = vsel %vm1370, %v7096, 0
  %v7408 = vsel %vm1370, %v7099, 0
  %v7411 = vsel %vm1370, %v7102, 0
  %v7414 = vsel %vm1370, %v7105, 0
  %v7417 = vsel %vm1370, %v7108, 0
  %v7420 = vsel %vm1370, %v7111, 0
  %v7423 = vsel %vm1370, %v7114, 0
  %v7426 = vsel %vm1370, %v7117, 0
  %v7429 = vsel %vm1370, %v7120, 0
  %v7432 = vsel %vm1370, %v7123, 0
  %v7435 = vsel %vm1370, %v7126, 0
  %v7438 = vsel %vm1370, %v7129, 0
  %v7441 = vsel %vm1370, %v7132, 0
  %v7444 = vsel %vm1370, %v7135, 0
  %v7447 = vsel %vm1370, %v7138, 0
  %v7450 = vsel %vm1370, %v7141, 0
  %7452 = vmatpush.xpose.msra.mxu0 %v7402
  %7453 = vmatpush.xpose.msra.mxu0 %v7399
  %7454 = vmatpush.xpose.msra.mxu0 %v7396
  %7455 = vmatpush.xpose.msra.mxu0 %v7393
  %7456 = vmatpush.xpose.msra.mxu0 %v7390
  %7457 = vmatpush.xpose.msra.mxu0 %v7387
  %7458 = vmatpush.xpose.msra.mxu0 %v7384
  %7459 = vmatpush.xpose.msra.mxu0 %v7381
  %7460 = vmatpush.xpose.msra.mxu0 %v7378
  %7461 = vmatpush.xpose.msra.mxu0 %v7375
  %7462 = vmatpush.xpose.msra.mxu0 %v7372
  %7463 = vmatpush.xpose.msra.mxu0 %v7369
  %7464 = vmatpush.xpose.msra.mxu0 %v7366
  %7465 = vmatpush.xpose.msra.mxu0 %v7363
  %7466 = vmatpush.xpose.msra.mxu0 %v7360
  %7467 = vmatpush.xpose.msra.mxu0 %v7357
  %7468 = vmatmul.f32.gmra.mxu0 %v7261
  %v7469 = vpop.f32.mrf.mxu0
  %v7470 = vadd.f32 0.0, %v7469
  %7471 = vmatmul.f32.gmra.mxu0 %v7264
  %v7472 = vpop.f32.mrf.mxu0
  %v7473 = vadd.f32 0.0, %v7472
  %7474 = vmatmul.f32.gmra.mxu0 %v7267
  %v7475 = vpop.f32.mrf.mxu0
  %v7476 = vadd.f32 0.0, %v7475
  %7477 = vmatmul.f32.gmra.mxu0 %v7270
  %v7478 = vpop.f32.mrf.mxu0
  %v7479 = vadd.f32 0.0, %v7478
  %7480 = vmatmul.f32.gmra.mxu0 %v7273
  %v7481 = vpop.f32.mrf.mxu0
  %v7482 = vadd.f32 0.0, %v7481
  %7483 = vmatmul.f32.gmra.mxu0 %v7276
  %v7484 = vpop.f32.mrf.mxu0
  %v7485 = vadd.f32 0.0, %v7484
  %7486 = vmatmul.f32.gmra.mxu0 %v7279
  %v7487 = vpop.f32.mrf.mxu0
  %v7488 = vadd.f32 0.0, %v7487
  %7489 = vmatmul.f32.gmra.mxu0 %v7282
  %v7490 = vpop.f32.mrf.mxu0
  %v7491 = vadd.f32 0.0, %v7490
  %7492 = vmatmul.f32.gmra.mxu0 %v7285
  %v7493 = vpop.f32.mrf.mxu0
  %v7494 = vadd.f32 0.0, %v7493
  %7495 = vmatmul.f32.gmra.mxu0 %v7288
  %v7496 = vpop.f32.mrf.mxu0
  %v7497 = vadd.f32 0.0, %v7496
  %7498 = vmatmul.f32.gmra.mxu0 %v7291
  %v7499 = vpop.f32.mrf.mxu0
  %v7500 = vadd.f32 0.0, %v7499
  %7501 = vmatmul.f32.gmra.mxu0 %v7294
  %v7502 = vpop.f32.mrf.mxu0
  %v7503 = vadd.f32 0.0, %v7502
  %7504 = vmatmul.f32.gmra.mxu0 %v7297
  %v7505 = vpop.f32.mrf.mxu0
  %v7506 = vadd.f32 0.0, %v7505
  %7507 = vmatmul.f32.gmra.mxu0 %v7300
  %v7508 = vpop.f32.mrf.mxu0
  %v7509 = vadd.f32 0.0, %v7508
  %7510 = vmatmul.f32.gmra.mxu0 %v7303
  %v7511 = vpop.f32.mrf.mxu0
  %v7512 = vadd.f32 0.0, %v7511
  %7513 = vmatmul.f32.gmra.mxu0 %v7306
  %v7514 = vpop.f32.mrf.mxu0
  %v7515 = vadd.f32 0.0, %v7514
  %7516 = vmatmul.f32.gmra.mxu0 %v7309
  %v7517 = vpop.f32.mrf.mxu0
  %v7518 = vadd.f32 0.0, %v7517
  %7519 = vmatmul.f32.gmra.mxu0 %v7312
  %v7520 = vpop.f32.mrf.mxu0
  %v7521 = vadd.f32 0.0, %v7520
  %7522 = vmatmul.f32.gmra.mxu0 %v7315
  %v7523 = vpop.f32.mrf.mxu0
  %v7524 = vadd.f32 0.0, %v7523
  %7525 = vmatmul.f32.gmra.mxu0 %v7318
  %v7526 = vpop.f32.mrf.mxu0
  %v7527 = vadd.f32 0.0, %v7526
  %7528 = vmatmul.f32.gmra.mxu0 %v7321
  %v7529 = vpop.f32.mrf.mxu0
  %v7530 = vadd.f32 0.0, %v7529
  %7531 = vmatmul.f32.gmra.mxu0 %v7324
  %v7532 = vpop.f32.mrf.mxu0
  %v7533 = vadd.f32 0.0, %v7532
  %7534 = vmatmul.f32.gmra.mxu0 %v7327
  %v7535 = vpop.f32.mrf.mxu0
  %v7536 = vadd.f32 0.0, %v7535
  %7537 = vmatmul.f32.gmra.mxu0 %v7330
  %v7538 = vpop.f32.mrf.mxu0
  %v7539 = vadd.f32 0.0, %v7538
  %7540 = vmatmul.f32.gmra.mxu0 %v7333
  %v7541 = vpop.f32.mrf.mxu0
  %v7542 = vadd.f32 0.0, %v7541
  %7543 = vmatmul.f32.gmra.mxu0 %v7336
  %v7544 = vpop.f32.mrf.mxu0
  %v7545 = vadd.f32 0.0, %v7544
  %7546 = vmatmul.f32.gmra.mxu0 %v7339
  %v7547 = vpop.f32.mrf.mxu0
  %v7548 = vadd.f32 0.0, %v7547
  %7549 = vmatmul.f32.gmra.mxu0 %v7342
  %v7550 = vpop.f32.mrf.mxu0
  %v7551 = vadd.f32 0.0, %v7550
  %7552 = vmatmul.f32.gmra.mxu0 %v7345
  %v7553 = vpop.f32.mrf.mxu0
  %v7554 = vadd.f32 0.0, %v7553
  %7555 = vmatmul.f32.gmra.mxu0 %v7348
  %v7556 = vpop.f32.mrf.mxu0
  %v7557 = vadd.f32 0.0, %v7556
  %7558 = vmatmul.f32.gmra.mxu0 %v7351
  %v7559 = vpop.f32.mrf.mxu0
  %v7560 = vadd.f32 0.0, %v7559
  %7561 = vmatmul.f32.gmra.mxu0 %v7354
  %v7562 = vpop.f32.mrf.mxu0
  %v7563 = vadd.f32 0.0, %v7562
  %7564 = vdwg.mxu0
  %7565 = vmatpush.xpose.msra.mxu0 %v7450
  %7566 = vmatpush.xpose.msra.mxu0 %v7447
  %7567 = vmatpush.xpose.msra.mxu0 %v7444
  %7568 = vmatpush.xpose.msra.mxu0 %v7441
  %7569 = vmatpush.xpose.msra.mxu0 %v7438
  %7570 = vmatpush.xpose.msra.mxu0 %v7435
  %7571 = vmatpush.xpose.msra.mxu0 %v7432
  %7572 = vmatpush.xpose.msra.mxu0 %v7429
  %7573 = vmatpush.xpose.msra.mxu0 %v7426
  %7574 = vmatpush.xpose.msra.mxu0 %v7423
  %7575 = vmatpush.xpose.msra.mxu0 %v7420
  %7576 = vmatpush.xpose.msra.mxu0 %v7417
  %7577 = vmatpush.xpose.msra.mxu0 %v7414
  %7578 = vmatpush.xpose.msra.mxu0 %v7411
  %7579 = vmatpush.xpose.msra.mxu0 %v7408
  %7580 = vmatpush.xpose.msra.mxu0 %v7405
  %7581 = vmatmul.f32.gmra.mxu0 %v7261
  %v7582 = vpop.f32.mrf.mxu0
  %v7583 = vadd.f32 0.0, %v7582
  %7584 = vmatmul.f32.gmra.mxu0 %v7264
  %v7585 = vpop.f32.mrf.mxu0
  %v7586 = vadd.f32 0.0, %v7585
  %7587 = vmatmul.f32.gmra.mxu0 %v7267
  %v7588 = vpop.f32.mrf.mxu0
  %v7589 = vadd.f32 0.0, %v7588
  %7590 = vmatmul.f32.gmra.mxu0 %v7270
  %v7591 = vpop.f32.mrf.mxu0
  %v7592 = vadd.f32 0.0, %v7591
  %7593 = vmatmul.f32.gmra.mxu0 %v7273
  %v7594 = vpop.f32.mrf.mxu0
  %v7595 = vadd.f32 0.0, %v7594
  %7596 = vmatmul.f32.gmra.mxu0 %v7276
  %v7597 = vpop.f32.mrf.mxu0
  %v7598 = vadd.f32 0.0, %v7597
  %7599 = vmatmul.f32.gmra.mxu0 %v7279
  %v7600 = vpop.f32.mrf.mxu0
  %v7601 = vadd.f32 0.0, %v7600
  %7602 = vmatmul.f32.gmra.mxu0 %v7282
  %v7603 = vpop.f32.mrf.mxu0
  %v7604 = vadd.f32 0.0, %v7603
  %7605 = vmatmul.f32.gmra.mxu0 %v7285
  %v7606 = vpop.f32.mrf.mxu0
  %v7607 = vadd.f32 0.0, %v7606
  %7608 = vmatmul.f32.gmra.mxu0 %v7288
  %v7609 = vpop.f32.mrf.mxu0
  %v7610 = vadd.f32 0.0, %v7609
  %7611 = vmatmul.f32.gmra.mxu0 %v7291
  %v7612 = vpop.f32.mrf.mxu0
  %v7613 = vadd.f32 0.0, %v7612
  %7614 = vmatmul.f32.gmra.mxu0 %v7294
  %v7615 = vpop.f32.mrf.mxu0
  %v7616 = vadd.f32 0.0, %v7615
  %7617 = vmatmul.f32.gmra.mxu0 %v7297
  %v7618 = vpop.f32.mrf.mxu0
  %v7619 = vadd.f32 0.0, %v7618
  %7620 = vmatmul.f32.gmra.mxu0 %v7300
  %v7621 = vpop.f32.mrf.mxu0
  %v7622 = vadd.f32 0.0, %v7621
  %7623 = vmatmul.f32.gmra.mxu0 %v7303
  %v7624 = vpop.f32.mrf.mxu0
  %v7625 = vadd.f32 0.0, %v7624
  %7626 = vmatmul.f32.gmra.mxu0 %v7306
  %v7627 = vpop.f32.mrf.mxu0
  %v7628 = vadd.f32 0.0, %v7627
  %7629 = vmatmul.f32.gmra.mxu0 %v7309
  %v7630 = vpop.f32.mrf.mxu0
  %v7631 = vadd.f32 0.0, %v7630
  %7632 = vmatmul.f32.gmra.mxu0 %v7312
  %v7633 = vpop.f32.mrf.mxu0
  %v7634 = vadd.f32 0.0, %v7633
  %7635 = vmatmul.f32.gmra.mxu0 %v7315
  %v7636 = vpop.f32.mrf.mxu0
  %v7637 = vadd.f32 0.0, %v7636
  %7638 = vmatmul.f32.gmra.mxu0 %v7318
  %v7639 = vpop.f32.mrf.mxu0
  %v7640 = vadd.f32 0.0, %v7639
  %7641 = vmatmul.f32.gmra.mxu0 %v7321
  %v7642 = vpop.f32.mrf.mxu0
  %v7643 = vadd.f32 0.0, %v7642
  %7644 = vmatmul.f32.gmra.mxu0 %v7324
  %v7645 = vpop.f32.mrf.mxu0
  %v7646 = vadd.f32 0.0, %v7645
  %7647 = vmatmul.f32.gmra.mxu0 %v7327
  %v7648 = vpop.f32.mrf.mxu0
  %v7649 = vadd.f32 0.0, %v7648
  %7650 = vmatmul.f32.gmra.mxu0 %v7330
  %v7651 = vpop.f32.mrf.mxu0
  %v7652 = vadd.f32 0.0, %v7651
  %7653 = vmatmul.f32.gmra.mxu0 %v7333
  %v7654 = vpop.f32.mrf.mxu0
  %v7655 = vadd.f32 0.0, %v7654
  %7656 = vmatmul.f32.gmra.mxu0 %v7336
  %v7657 = vpop.f32.mrf.mxu0
  %v7658 = vadd.f32 0.0, %v7657
  %7659 = vmatmul.f32.gmra.mxu0 %v7339
  %v7660 = vpop.f32.mrf.mxu0
  %v7661 = vadd.f32 0.0, %v7660
  %7662 = vmatmul.f32.gmra.mxu0 %v7342
  %v7663 = vpop.f32.mrf.mxu0
  %v7664 = vadd.f32 0.0, %v7663
  %7665 = vmatmul.f32.gmra.mxu0 %v7345
  %v7666 = vpop.f32.mrf.mxu0
  %v7667 = vadd.f32 0.0, %v7666
  %7668 = vmatmul.f32.gmra.mxu0 %v7348
  %v7669 = vpop.f32.mrf.mxu0
  %v7670 = vadd.f32 0.0, %v7669
  %7671 = vmatmul.f32.gmra.mxu0 %v7351
  %v7672 = vpop.f32.mrf.mxu0
  %v7673 = vadd.f32 0.0, %v7672
  %7674 = vmatmul.f32.gmra.mxu0 %v7354
  %v7675 = vpop.f32.mrf.mxu0
  %v7676 = vadd.f32 0.0, %v7675
  %7677 = vdwg.mxu0
  %v7678 = vmul.f32 %v7470, 0.35355338
  %v7679 = vmul.f32 %v7583, 0.35355338
  %v7680 = vmul.f32 %v7473, 0.35355338
  %v7681 = vmul.f32 %v7586, 0.35355338
  %v7682 = vmul.f32 %v7476, 0.35355338
  %v7683 = vmul.f32 %v7589, 0.35355338
  %v7684 = vmul.f32 %v7479, 0.35355338
  %v7685 = vmul.f32 %v7592, 0.35355338
  %v7686 = vmul.f32 %v7482, 0.35355338
  %v7687 = vmul.f32 %v7595, 0.35355338
  %v7688 = vmul.f32 %v7485, 0.35355338
  %v7689 = vmul.f32 %v7598, 0.35355338
  %v7690 = vmul.f32 %v7488, 0.35355338
  %v7691 = vmul.f32 %v7601, 0.35355338
  %v7692 = vmul.f32 %v7491, 0.35355338
  %v7693 = vmul.f32 %v7604, 0.35355338
  %v7694 = vmul.f32 %v7494, 0.35355338
  %v7695 = vmul.f32 %v7607, 0.35355338
  %v7696 = vmul.f32 %v7497, 0.35355338
  %v7697 = vmul.f32 %v7610, 0.35355338
  %v7698 = vmul.f32 %v7500, 0.35355338
  %v7699 = vmul.f32 %v7613, 0.35355338
  %v7700 = vmul.f32 %v7503, 0.35355338
  %v7701 = vmul.f32 %v7616, 0.35355338
  %v7702 = vmul.f32 %v7506, 0.35355338
  %v7703 = vmul.f32 %v7619, 0.35355338
  %v7704 = vmul.f32 %v7509, 0.35355338
  %v7705 = vmul.f32 %v7622, 0.35355338
  %v7706 = vmul.f32 %v7512, 0.35355338
  %v7707 = vmul.f32 %v7625, 0.35355338
  %v7708 = vmul.f32 %v7515, 0.35355338
  %v7709 = vmul.f32 %v7628, 0.35355338
  %v7710 = vmul.f32 %v7518, 0.35355338
  %v7711 = vmul.f32 %v7631, 0.35355338
  %v7712 = vmul.f32 %v7521, 0.35355338
  %v7713 = vmul.f32 %v7634, 0.35355338
  %v7714 = vmul.f32 %v7524, 0.35355338
  %v7715 = vmul.f32 %v7637, 0.35355338
  %v7716 = vmul.f32 %v7527, 0.35355338
  %v7717 = vmul.f32 %v7640, 0.35355338
  %v7718 = vmul.f32 %v7530, 0.35355338
  %v7719 = vmul.f32 %v7643, 0.35355338
  %v7720 = vmul.f32 %v7533, 0.35355338
  %v7721 = vmul.f32 %v7646, 0.35355338
  %v7722 = vmul.f32 %v7536, 0.35355338
  %v7723 = vmul.f32 %v7649, 0.35355338
  %v7724 = vmul.f32 %v7539, 0.35355338
  %v7725 = vmul.f32 %v7652, 0.35355338
  %v7726 = vmul.f32 %v7542, 0.35355338
  %v7727 = vmul.f32 %v7655, 0.35355338
  %v7728 = vmul.f32 %v7545, 0.35355338
  %v7729 = vmul.f32 %v7658, 0.35355338
  %v7730 = vmul.f32 %v7548, 0.35355338
  %v7731 = vmul.f32 %v7661, 0.35355338
  %v7732 = vmul.f32 %v7551, 0.35355338
  %v7733 = vmul.f32 %v7664, 0.35355338
  %v7734 = vmul.f32 %v7554, 0.35355338
  %v7735 = vmul.f32 %v7667, 0.35355338
  %v7736 = vmul.f32 %v7557, 0.35355338
  %v7737 = vmul.f32 %v7670, 0.35355338
  %v7738 = vmul.f32 %v7560, 0.35355338
  %v7739 = vmul.f32 %v7673, 0.35355338
  %v7740 = vmul.f32 %v7563, 0.35355338
  %v7741 = vmul.f32 %v7676, 0.35355338
  %v7742 = vmax.f32 %v7678, %v7679
  %7743 = vmax.xlane.f32.xlu0 %v7742
  %v7744 = vpop.xlane.xlu0 %7743
  %v7745 = vmax.f32 %v7680, %v7681
  %7746 = vmax.xlane.f32.xlu0 %v7745
  %v7747 = vpop.xlane.xlu0 %7746
  %v7748 = vmax.f32 %v7682, %v7683
  %7749 = vmax.xlane.f32.xlu0 %v7748
  %v7750 = vpop.xlane.xlu0 %7749
  %v7751 = vmax.f32 %v7684, %v7685
  %7752 = vmax.xlane.f32.xlu0 %v7751
  %v7753 = vpop.xlane.xlu0 %7752
  %v7754 = vmax.f32 %v7686, %v7687
  %7755 = vmax.xlane.f32.xlu0 %v7754
  %v7756 = vpop.xlane.xlu0 %7755
  %v7757 = vmax.f32 %v7688, %v7689
  %7758 = vmax.xlane.f32.xlu0 %v7757
  %v7759 = vpop.xlane.xlu0 %7758
  %v7760 = vmax.f32 %v7690, %v7691
  %7761 = vmax.xlane.f32.xlu0 %v7760
  %v7762 = vpop.xlane.xlu0 %7761
  %v7763 = vmax.f32 %v7692, %v7693
  %7764 = vmax.xlane.f32.xlu0 %v7763
  %v7765 = vpop.xlane.xlu0 %7764
  %v7766 = vmax.f32 %v7694, %v7695
  %7767 = vmax.xlane.f32.xlu0 %v7766
  %v7768 = vpop.xlane.xlu0 %7767
  %v7769 = vmax.f32 %v7696, %v7697
  %7770 = vmax.xlane.f32.xlu0 %v7769
  %v7771 = vpop.xlane.xlu0 %7770
  %v7772 = vmax.f32 %v7698, %v7699
  %7773 = vmax.xlane.f32.xlu0 %v7772
  %v7774 = vpop.xlane.xlu0 %7773
  %v7775 = vmax.f32 %v7700, %v7701
  %7776 = vmax.xlane.f32.xlu0 %v7775
  %v7777 = vpop.xlane.xlu0 %7776
  %v7778 = vmax.f32 %v7702, %v7703
  %7779 = vmax.xlane.f32.xlu0 %v7778
  %v7780 = vpop.xlane.xlu0 %7779
  %v7781 = vmax.f32 %v7704, %v7705
  %7782 = vmax.xlane.f32.xlu0 %v7781
  %v7783 = vpop.xlane.xlu0 %7782
  %v7784 = vmax.f32 %v7706, %v7707
  %7785 = vmax.xlane.f32.xlu0 %v7784
  %v7786 = vpop.xlane.xlu0 %7785
  %v7787 = vmax.f32 %v7708, %v7709
  %7788 = vmax.xlane.f32.xlu0 %v7787
  %v7789 = vpop.xlane.xlu0 %7788
  %v7790 = vmax.f32 %v7710, %v7711
  %7791 = vmax.xlane.f32.xlu0 %v7790
  %v7792 = vpop.xlane.xlu0 %7791
  %v7793 = vmax.f32 %v7712, %v7713
  %7794 = vmax.xlane.f32.xlu0 %v7793
  %v7795 = vpop.xlane.xlu0 %7794
  %v7796 = vmax.f32 %v7714, %v7715
  %7797 = vmax.xlane.f32.xlu0 %v7796
  %v7798 = vpop.xlane.xlu0 %7797
  %v7799 = vmax.f32 %v7716, %v7717
  %7800 = vmax.xlane.f32.xlu0 %v7799
  %v7801 = vpop.xlane.xlu0 %7800
  %v7802 = vmax.f32 %v7718, %v7719
  %7803 = vmax.xlane.f32.xlu0 %v7802
  %v7804 = vpop.xlane.xlu0 %7803
  %v7805 = vmax.f32 %v7720, %v7721
  %7806 = vmax.xlane.f32.xlu0 %v7805
  %v7807 = vpop.xlane.xlu0 %7806
  %v7808 = vmax.f32 %v7722, %v7723
  %7809 = vmax.xlane.f32.xlu0 %v7808
  %v7810 = vpop.xlane.xlu0 %7809
  %v7811 = vmax.f32 %v7724, %v7725
  %7812 = vmax.xlane.f32.xlu0 %v7811
  %v7813 = vpop.xlane.xlu0 %7812
  %v7814 = vmax.f32 %v7726, %v7727
  %7815 = vmax.xlane.f32.xlu0 %v7814
  %v7816 = vpop.xlane.xlu0 %7815
  %v7817 = vmax.f32 %v7728, %v7729
  %7818 = vmax.xlane.f32.xlu0 %v7817
  %v7819 = vpop.xlane.xlu0 %7818
  %v7820 = vmax.f32 %v7730, %v7731
  %7821 = vmax.xlane.f32.xlu0 %v7820
  %v7822 = vpop.xlane.xlu0 %7821
  %v7823 = vmax.f32 %v7732, %v7733
  %7824 = vmax.xlane.f32.xlu0 %v7823
  %v7825 = vpop.xlane.xlu0 %7824
  %v7826 = vmax.f32 %v7734, %v7735
  %7827 = vmax.xlane.f32.xlu0 %v7826
  %v7828 = vpop.xlane.xlu0 %7827
  %v7829 = vmax.f32 %v7736, %v7737
  %7830 = vmax.xlane.f32.xlu0 %v7829
  %v7831 = vpop.xlane.xlu0 %7830
  %v7832 = vmax.f32 %v7738, %v7739
  %7833 = vmax.xlane.f32.xlu0 %v7832
  %v7834 = vpop.xlane.xlu0 %7833
  %v7835 = vmax.f32 %v7740, %v7741
  %7836 = vmax.xlane.f32.xlu0 %v7835
  %v7837 = vpop.xlane.xlu0 %7836
  %v7838 = vsub.f32 %v7678, %v7744
  %v7839 = vsub.f32 %v7679, %v7744
  %v7840 = vsub.f32 %v7680, %v7747
  %v7841 = vsub.f32 %v7681, %v7747
  %v7842 = vsub.f32 %v7682, %v7750
  %v7843 = vsub.f32 %v7683, %v7750
  %v7844 = vsub.f32 %v7684, %v7753
  %v7845 = vsub.f32 %v7685, %v7753
  %v7846 = vsub.f32 %v7686, %v7756
  %v7847 = vsub.f32 %v7687, %v7756
  %v7848 = vsub.f32 %v7688, %v7759
  %v7849 = vsub.f32 %v7689, %v7759
  %v7850 = vsub.f32 %v7690, %v7762
  %v7851 = vsub.f32 %v7691, %v7762
  %v7852 = vsub.f32 %v7692, %v7765
  %v7853 = vsub.f32 %v7693, %v7765
  %v7854 = vsub.f32 %v7694, %v7768
  %v7855 = vsub.f32 %v7695, %v7768
  %v7856 = vsub.f32 %v7696, %v7771
  %v7857 = vsub.f32 %v7697, %v7771
  %v7858 = vsub.f32 %v7698, %v7774
  %v7859 = vsub.f32 %v7699, %v7774
  %v7860 = vsub.f32 %v7700, %v7777
  %v7861 = vsub.f32 %v7701, %v7777
  %v7862 = vsub.f32 %v7702, %v7780
  %v7863 = vsub.f32 %v7703, %v7780
  %v7864 = vsub.f32 %v7704, %v7783
  %v7865 = vsub.f32 %v7705, %v7783
  %v7866 = vsub.f32 %v7706, %v7786
  %v7867 = vsub.f32 %v7707, %v7786
  %v7868 = vsub.f32 %v7708, %v7789
  %v7869 = vsub.f32 %v7709, %v7789
  %v7870 = vsub.f32 %v7710, %v7792
  %v7871 = vsub.f32 %v7711, %v7792
  %v7872 = vsub.f32 %v7712, %v7795
  %v7873 = vsub.f32 %v7713, %v7795
  %v7874 = vsub.f32 %v7714, %v7798
  %v7875 = vsub.f32 %v7715, %v7798
  %v7876 = vsub.f32 %v7716, %v7801
  %v7877 = vsub.f32 %v7717, %v7801
  %v7878 = vsub.f32 %v7718, %v7804
  %v7879 = vsub.f32 %v7719, %v7804
  %v7880 = vsub.f32 %v7720, %v7807
  %v7881 = vsub.f32 %v7721, %v7807
  %v7882 = vsub.f32 %v7722, %v7810
  %v7883 = vsub.f32 %v7723, %v7810
  %v7884 = vsub.f32 %v7724, %v7813
  %v7885 = vsub.f32 %v7725, %v7813
  %v7886 = vsub.f32 %v7726, %v7816
  %v7887 = vsub.f32 %v7727, %v7816
  %v7888 = vsub.f32 %v7728, %v7819
  %v7889 = vsub.f32 %v7729, %v7819
  %v7890 = vsub.f32 %v7730, %v7822
  %v7891 = vsub.f32 %v7731, %v7822
  %v7892 = vsub.f32 %v7732, %v7825
  %v7893 = vsub.f32 %v7733, %v7825
  %v7894 = vsub.f32 %v7734, %v7828
  %v7895 = vsub.f32 %v7735, %v7828
  %v7896 = vsub.f32 %v7736, %v7831
  %v7897 = vsub.f32 %v7737, %v7831
  %v7898 = vsub.f32 %v7738, %v7834
  %v7899 = vsub.f32 %v7739, %v7834
  %v7900 = vsub.f32 %v7740, %v7837
  %v7901 = vsub.f32 %v7741, %v7837
  %v7902 = vmul.f32 %v7838, 1.442695
  %v7903 = vpow.pop %v7902
  %v7904 = vmul.f32 %v7839, 1.442695
  %v7905 = vpow.pop %v7904
  %v7906 = vmul.f32 %v7840, 1.442695
  %v7907 = vpow.pop %v7906
  %v7908 = vmul.f32 %v7841, 1.442695
  %v7909 = vpow.pop %v7908
  %v7910 = vmul.f32 %v7842, 1.442695
  %v7911 = vpow.pop %v7910
  %v7912 = vmul.f32 %v7843, 1.442695
  %v7913 = vpow.pop %v7912
  %v7914 = vmul.f32 %v7844, 1.442695
  %v7915 = vpow.pop %v7914
  %v7916 = vmul.f32 %v7845, 1.442695
  %v7917 = vpow.pop %v7916
  %v7918 = vmul.f32 %v7846, 1.442695
  %v7919 = vpow.pop %v7918
  %v7920 = vmul.f32 %v7847, 1.442695
  %v7921 = vpow.pop %v7920
  %v7922 = vmul.f32 %v7848, 1.442695
  %v7923 = vpow.pop %v7922
  %v7924 = vmul.f32 %v7849, 1.442695
  %v7925 = vpow.pop %v7924
  %v7926 = vmul.f32 %v7850, 1.442695
  %v7927 = vpow.pop %v7926
  %v7928 = vmul.f32 %v7851, 1.442695
  %v7929 = vpow.pop %v7928
  %v7930 = vmul.f32 %v7852, 1.442695
  %v7931 = vpow.pop %v7930
  %v7932 = vmul.f32 %v7853, 1.442695
  %v7933 = vpow.pop %v7932
  %v7934 = vmul.f32 %v7854, 1.442695
  %v7935 = vpow.pop %v7934
  %v7936 = vmul.f32 %v7855, 1.442695
  %v7937 = vpow.pop %v7936
  %v7938 = vmul.f32 %v7856, 1.442695
  %v7939 = vpow.pop %v7938
  %v7940 = vmul.f32 %v7857, 1.442695
  %v7941 = vpow.pop %v7940
  %v7942 = vmul.f32 %v7858, 1.442695
  %v7943 = vpow.pop %v7942
  %v7944 = vmul.f32 %v7859, 1.442695
  %v7945 = vpow.pop %v7944
  %v7946 = vmul.f32 %v7860, 1.442695
  %v7947 = vpow.pop %v7946
  %v7948 = vmul.f32 %v7861, 1.442695
  %v7949 = vpow.pop %v7948
  %v7950 = vmul.f32 %v7862, 1.442695
  %v7951 = vpow.pop %v7950
  %v7952 = vmul.f32 %v7863, 1.442695
  %v7953 = vpow.pop %v7952
  %v7954 = vmul.f32 %v7864, 1.442695
  %v7955 = vpow.pop %v7954
  %v7956 = vmul.f32 %v7865, 1.442695
  %v7957 = vpow.pop %v7956
  %v7958 = vmul.f32 %v7866, 1.442695
  %v7959 = vpow.pop %v7958
  %v7960 = vmul.f32 %v7867, 1.442695
  %v7961 = vpow.pop %v7960
  %v7962 = vmul.f32 %v7868, 1.442695
  %v7963 = vpow.pop %v7962
  %v7964 = vmul.f32 %v7869, 1.442695
  %v7965 = vpow.pop %v7964
  %v7966 = vmul.f32 %v7870, 1.442695
  %v7967 = vpow.pop %v7966
  %v7968 = vmul.f32 %v7871, 1.442695
  %v7969 = vpow.pop %v7968
  %v7970 = vmul.f32 %v7872, 1.442695
  %v7971 = vpow.pop %v7970
  %v7972 = vmul.f32 %v7873, 1.442695
  %v7973 = vpow.pop %v7972
  %v7974 = vmul.f32 %v7874, 1.442695
  %v7975 = vpow.pop %v7974
  %v7976 = vmul.f32 %v7875, 1.442695
  %v7977 = vpow.pop %v7976
  %v7978 = vmul.f32 %v7876, 1.442695
  %v7979 = vpow.pop %v7978
  %v7980 = vmul.f32 %v7877, 1.442695
  %v7981 = vpow.pop %v7980
  %v7982 = vmul.f32 %v7878, 1.442695
  %v7983 = vpow.pop %v7982
  %v7984 = vmul.f32 %v7879, 1.442695
  %v7985 = vpow.pop %v7984
  %v7986 = vmul.f32 %v7880, 1.442695
  %v7987 = vpow.pop %v7986
  %v7988 = vmul.f32 %v7881, 1.442695
  %v7989 = vpow.pop %v7988
  %v7990 = vmul.f32 %v7882, 1.442695
  %v7991 = vpow.pop %v7990
  %v7992 = vmul.f32 %v7883, 1.442695
  %v7993 = vpow.pop %v7992
  %v7994 = vmul.f32 %v7884, 1.442695
  %v7995 = vpow.pop %v7994
  %v7996 = vmul.f32 %v7885, 1.442695
  %v7997 = vpow.pop %v7996
  %v7998 = vmul.f32 %v7886, 1.442695
  %v7999 = vpow.pop %v7998
  %v8000 = vmul.f32 %v7887, 1.442695
  %v8001 = vpow.pop %v8000
  %v8002 = vmul.f32 %v7888, 1.442695
  %v8003 = vpow.pop %v8002
  %v8004 = vmul.f32 %v7889, 1.442695
  %v8005 = vpow.pop %v8004
  %v8006 = vmul.f32 %v7890, 1.442695
  %v8007 = vpow.pop %v8006
  %v8008 = vmul.f32 %v7891, 1.442695
  %v8009 = vpow.pop %v8008
  %v8010 = vmul.f32 %v7892, 1.442695
  %v8011 = vpow.pop %v8010
  %v8012 = vmul.f32 %v7893, 1.442695
  %v8013 = vpow.pop %v8012
  %v8014 = vmul.f32 %v7894, 1.442695
  %v8015 = vpow.pop %v8014
  %v8016 = vmul.f32 %v7895, 1.442695
  %v8017 = vpow.pop %v8016
  %v8018 = vmul.f32 %v7896, 1.442695
  %v8019 = vpow.pop %v8018
  %v8020 = vmul.f32 %v7897, 1.442695
  %v8021 = vpow.pop %v8020
  %v8022 = vmul.f32 %v7898, 1.442695
  %v8023 = vpow.pop %v8022
  %v8024 = vmul.f32 %v7899, 1.442695
  %v8025 = vpow.pop %v8024
  %v8026 = vmul.f32 %v7900, 1.442695
  %v8027 = vpow.pop %v8026
  %v8028 = vmul.f32 %v7901, 1.442695
  %v8029 = vpow.pop %v8028
  %v8030 = vadd.f32 %v7903, %v7905
  %8031 = vadd.xlane.f32.xlu0 %v8030
  %v8032 = vpop.xlane.xlu0 %8031
  %v8033 = vadd.f32 %v7907, %v7909
  %8034 = vadd.xlane.f32.xlu0 %v8033
  %v8035 = vpop.xlane.xlu0 %8034
  %v8036 = vadd.f32 %v7911, %v7913
  %8037 = vadd.xlane.f32.xlu0 %v8036
  %v8038 = vpop.xlane.xlu0 %8037
  %v8039 = vadd.f32 %v7915, %v7917
  %8040 = vadd.xlane.f32.xlu0 %v8039
  %v8041 = vpop.xlane.xlu0 %8040
  %v8042 = vadd.f32 %v7919, %v7921
  %8043 = vadd.xlane.f32.xlu0 %v8042
  %v8044 = vpop.xlane.xlu0 %8043
  %v8045 = vadd.f32 %v7923, %v7925
  %8046 = vadd.xlane.f32.xlu0 %v8045
  %v8047 = vpop.xlane.xlu0 %8046
  %v8048 = vadd.f32 %v7927, %v7929
  %8049 = vadd.xlane.f32.xlu0 %v8048
  %v8050 = vpop.xlane.xlu0 %8049
  %v8051 = vadd.f32 %v7931, %v7933
  %8052 = vadd.xlane.f32.xlu0 %v8051
  %v8053 = vpop.xlane.xlu0 %8052
  %v8054 = vadd.f32 %v7935, %v7937
  %8055 = vadd.xlane.f32.xlu0 %v8054
  %v8056 = vpop.xlane.xlu0 %8055
  %v8057 = vadd.f32 %v7939, %v7941
  %8058 = vadd.xlane.f32.xlu0 %v8057
  %v8059 = vpop.xlane.xlu0 %8058
  %v8060 = vadd.f32 %v7943, %v7945
  %8061 = vadd.xlane.f32.xlu0 %v8060
  %v8062 = vpop.xlane.xlu0 %8061
  %v8063 = vadd.f32 %v7947, %v7949
  %8064 = vadd.xlane.f32.xlu0 %v8063
  %v8065 = vpop.xlane.xlu0 %8064
  %v8066 = vadd.f32 %v7951, %v7953
  %8067 = vadd.xlane.f32.xlu0 %v8066
  %v8068 = vpop.xlane.xlu0 %8067
  %v8069 = vadd.f32 %v7955, %v7957
  %8070 = vadd.xlane.f32.xlu0 %v8069
  %v8071 = vpop.xlane.xlu0 %8070
  %v8072 = vadd.f32 %v7959, %v7961
  %8073 = vadd.xlane.f32.xlu0 %v8072
  %v8074 = vpop.xlane.xlu0 %8073
  %v8075 = vadd.f32 %v7963, %v7965
  %8076 = vadd.xlane.f32.xlu0 %v8075
  %v8077 = vpop.xlane.xlu0 %8076
  %v8078 = vadd.f32 %v7967, %v7969
  %8079 = vadd.xlane.f32.xlu0 %v8078
  %v8080 = vpop.xlane.xlu0 %8079
  %v8081 = vadd.f32 %v7971, %v7973
  %8082 = vadd.xlane.f32.xlu0 %v8081
  %v8083 = vpop.xlane.xlu0 %8082
  %v8084 = vadd.f32 %v7975, %v7977
  %8085 = vadd.xlane.f32.xlu0 %v8084
  %v8086 = vpop.xlane.xlu0 %8085
  %v8087 = vadd.f32 %v7979, %v7981
  %8088 = vadd.xlane.f32.xlu0 %v8087
  %v8089 = vpop.xlane.xlu0 %8088
  %v8090 = vadd.f32 %v7983, %v7985
  %8091 = vadd.xlane.f32.xlu0 %v8090
  %v8092 = vpop.xlane.xlu0 %8091
  %v8093 = vadd.f32 %v7987, %v7989
  %8094 = vadd.xlane.f32.xlu0 %v8093
  %v8095 = vpop.xlane.xlu0 %8094
  %v8096 = vadd.f32 %v7991, %v7993
  %8097 = vadd.xlane.f32.xlu0 %v8096
  %v8098 = vpop.xlane.xlu0 %8097
  %v8099 = vadd.f32 %v7995, %v7997
  %8100 = vadd.xlane.f32.xlu0 %v8099
  %v8101 = vpop.xlane.xlu0 %8100
  %v8102 = vadd.f32 %v7999, %v8001
  %8103 = vadd.xlane.f32.xlu0 %v8102
  %v8104 = vpop.xlane.xlu0 %8103
  %v8105 = vadd.f32 %v8003, %v8005
  %8106 = vadd.xlane.f32.xlu0 %v8105
  %v8107 = vpop.xlane.xlu0 %8106
  %v8108 = vadd.f32 %v8007, %v8009
  %8109 = vadd.xlane.f32.xlu0 %v8108
  %v8110 = vpop.xlane.xlu0 %8109
  %v8111 = vadd.f32 %v8011, %v8013
  %8112 = vadd.xlane.f32.xlu0 %v8111
  %v8113 = vpop.xlane.xlu0 %8112
  %v8114 = vadd.f32 %v8015, %v8017
  %8115 = vadd.xlane.f32.xlu0 %v8114
  %v8116 = vpop.xlane.xlu0 %8115
  %v8117 = vadd.f32 %v8019, %v8021
  %8118 = vadd.xlane.f32.xlu0 %v8117
  %v8119 = vpop.xlane.xlu0 %8118
  %v8120 = vadd.f32 %v8023, %v8025
  %8121 = vadd.xlane.f32.xlu0 %v8120
  %v8122 = vpop.xlane.xlu0 %8121
  %v8123 = vadd.f32 %v8027, %v8029
  %8124 = vadd.xlane.f32.xlu0 %v8123
  %v8125 = vpop.xlane.xlu0 %8124
  %v8126 = vrcp.pop %v8032
  %v8127 = vrcp.pop %v8035
  %v8128 = vrcp.pop %v8038
  %v8129 = vrcp.pop %v8041
  %v8130 = vrcp.pop %v8044
  %v8131 = vrcp.pop %v8047
  %v8132 = vrcp.pop %v8050
  %v8133 = vrcp.pop %v8053
  %v8134 = vrcp.pop %v8056
  %v8135 = vrcp.pop %v8059
  %v8136 = vrcp.pop %v8062
  %v8137 = vrcp.pop %v8065
  %v8138 = vrcp.pop %v8068
  %v8139 = vrcp.pop %v8071
  %v8140 = vrcp.pop %v8074
  %v8141 = vrcp.pop %v8077
  %v8142 = vrcp.pop %v8080
  %v8143 = vrcp.pop %v8083
  %v8144 = vrcp.pop %v8086
  %v8145 = vrcp.pop %v8089
  %v8146 = vrcp.pop %v8092
  %v8147 = vrcp.pop %v8095
  %v8148 = vrcp.pop %v8098
  %v8149 = vrcp.pop %v8101
  %v8150 = vrcp.pop %v8104
  %v8151 = vrcp.pop %v8107
  %v8152 = vrcp.pop %v8110
  %v8153 = vrcp.pop %v8113
  %v8154 = vrcp.pop %v8116
  %v8155 = vrcp.pop %v8119
  %v8156 = vrcp.pop %v8122
  %v8157 = vrcp.pop %v8125
  %v8158 = vmul.f32 %v7903, %v8126
  %v8159 = vmul.f32 %v7905, %v8126
  %v8160 = vmul.f32 %v7907, %v8127
  %v8161 = vmul.f32 %v7909, %v8127
  %v8162 = vmul.f32 %v7911, %v8128
  %v8163 = vmul.f32 %v7913, %v8128
  %v8164 = vmul.f32 %v7915, %v8129
  %v8165 = vmul.f32 %v7917, %v8129
  %v8166 = vmul.f32 %v7919, %v8130
  %v8167 = vmul.f32 %v7921, %v8130
  %v8168 = vmul.f32 %v7923, %v8131
  %v8169 = vmul.f32 %v7925, %v8131
  %v8170 = vmul.f32 %v7927, %v8132
  %v8171 = vmul.f32 %v7929, %v8132
  %v8172 = vmul.f32 %v7931, %v8133
  %v8173 = vmul.f32 %v7933, %v8133
  %v8174 = vmul.f32 %v7935, %v8134
  %v8175 = vmul.f32 %v7937, %v8134
  %v8176 = vmul.f32 %v7939, %v8135
  %v8177 = vmul.f32 %v7941, %v8135
  %v8178 = vmul.f32 %v7943, %v8136
  %v8179 = vmul.f32 %v7945, %v8136
  %v8180 = vmul.f32 %v7947, %v8137
  %v8181 = vmul.f32 %v7949, %v8137
  %v8182 = vmul.f32 %v7951, %v8138
  %v8183 = vmul.f32 %v7953, %v8138
  %v8184 = vmul.f32 %v7955, %v8139
  %v8185 = vmul.f32 %v7957, %v8139
  %v8186 = vmul.f32 %v7959, %v8140
  %v8187 = vmul.f32 %v7961, %v8140
  %v8188 = vmul.f32 %v7963, %v8141
  %v8189 = vmul.f32 %v7965, %v8141
  %v8190 = vmul.f32 %v7967, %v8142
  %v8191 = vmul.f32 %v7969, %v8142
  %v8192 = vmul.f32 %v7971, %v8143
  %v8193 = vmul.f32 %v7973, %v8143
  %v8194 = vmul.f32 %v7975, %v8144
  %v8195 = vmul.f32 %v7977, %v8144
  %v8196 = vmul.f32 %v7979, %v8145
  %v8197 = vmul.f32 %v7981, %v8145
  %v8198 = vmul.f32 %v7983, %v8146
  %v8199 = vmul.f32 %v7985, %v8146
  %v8200 = vmul.f32 %v7987, %v8147
  %v8201 = vmul.f32 %v7989, %v8147
  %v8202 = vmul.f32 %v7991, %v8148
  %v8203 = vmul.f32 %v7993, %v8148
  %v8204 = vmul.f32 %v7995, %v8149
  %v8205 = vmul.f32 %v7997, %v8149
  %v8206 = vmul.f32 %v7999, %v8150
  %v8207 = vmul.f32 %v8001, %v8150
  %v8208 = vmul.f32 %v8003, %v8151
  %v8209 = vmul.f32 %v8005, %v8151
  %v8210 = vmul.f32 %v8007, %v8152
  %v8211 = vmul.f32 %v8009, %v8152
  %v8212 = vmul.f32 %v8011, %v8153
  %v8213 = vmul.f32 %v8013, %v8153
  %v8214 = vmul.f32 %v8015, %v8154
  %v8215 = vmul.f32 %v8017, %v8154
  %v8216 = vmul.f32 %v8019, %v8155
  %v8217 = vmul.f32 %v8021, %v8155
  %v8218 = vmul.f32 %v8023, %v8156
  %v8219 = vmul.f32 %v8025, %v8156
  %v8220 = vmul.f32 %v8027, %v8157
  %v8221 = vmul.f32 %v8029, %v8157
  %8222 = vmatpush.msra.mxu0 %v7210
  %8223 = vmatpush.msra.mxu0 %v7207
  %8224 = vmatpush.msra.mxu0 %v7204
  %8225 = vmatpush.msra.mxu0 %v7201
  %8226 = vmatpush.msra.mxu0 %v7198
  %8227 = vmatpush.msra.mxu0 %v7195
  %8228 = vmatpush.msra.mxu0 %v7192
  %8229 = vmatpush.msra.mxu0 %v7189
  %8230 = vmatpush.msra.mxu0 %v7186
  %8231 = vmatpush.msra.mxu0 %v7183
  %8232 = vmatpush.msra.mxu0 %v7180
  %8233 = vmatpush.msra.mxu0 %v7177
  %8234 = vmatpush.msra.mxu0 %v7174
  %8235 = vmatpush.msra.mxu0 %v7171
  %8236 = vmatpush.msra.mxu0 %v7168
  %8237 = vmatpush.msra.mxu0 %v7165
  %8238 = vmatmul.f32.gmra.mxu0 %v8158
  %v8239 = vpop.f32.mrf.mxu0
  %v8240 = vadd.f32 0.0, %v8239
  %8241 = vmatmul.f32.gmra.mxu0 %v8160
  %v8242 = vpop.f32.mrf.mxu0
  %v8243 = vadd.f32 0.0, %v8242
  %8244 = vmatmul.f32.gmra.mxu0 %v8162
  %v8245 = vpop.f32.mrf.mxu0
  %v8246 = vadd.f32 0.0, %v8245
  %8247 = vmatmul.f32.gmra.mxu0 %v8164
  %v8248 = vpop.f32.mrf.mxu0
  %v8249 = vadd.f32 0.0, %v8248
  %8250 = vmatmul.f32.gmra.mxu0 %v8166
  %v8251 = vpop.f32.mrf.mxu0
  %v8252 = vadd.f32 0.0, %v8251
  %8253 = vmatmul.f32.gmra.mxu0 %v8168
  %v8254 = vpop.f32.mrf.mxu0
  %v8255 = vadd.f32 0.0, %v8254
  %8256 = vmatmul.f32.gmra.mxu0 %v8170
  %v8257 = vpop.f32.mrf.mxu0
  %v8258 = vadd.f32 0.0, %v8257
  %8259 = vmatmul.f32.gmra.mxu0 %v8172
  %v8260 = vpop.f32.mrf.mxu0
  %v8261 = vadd.f32 0.0, %v8260
  %8262 = vmatmul.f32.gmra.mxu0 %v8174
  %v8263 = vpop.f32.mrf.mxu0
  %v8264 = vadd.f32 0.0, %v8263
  %8265 = vmatmul.f32.gmra.mxu0 %v8176
  %v8266 = vpop.f32.mrf.mxu0
  %v8267 = vadd.f32 0.0, %v8266
  %8268 = vmatmul.f32.gmra.mxu0 %v8178
  %v8269 = vpop.f32.mrf.mxu0
  %v8270 = vadd.f32 0.0, %v8269
  %8271 = vmatmul.f32.gmra.mxu0 %v8180
  %v8272 = vpop.f32.mrf.mxu0
  %v8273 = vadd.f32 0.0, %v8272
  %8274 = vmatmul.f32.gmra.mxu0 %v8182
  %v8275 = vpop.f32.mrf.mxu0
  %v8276 = vadd.f32 0.0, %v8275
  %8277 = vmatmul.f32.gmra.mxu0 %v8184
  %v8278 = vpop.f32.mrf.mxu0
  %v8279 = vadd.f32 0.0, %v8278
  %8280 = vmatmul.f32.gmra.mxu0 %v8186
  %v8281 = vpop.f32.mrf.mxu0
  %v8282 = vadd.f32 0.0, %v8281
  %8283 = vmatmul.f32.gmra.mxu0 %v8188
  %v8284 = vpop.f32.mrf.mxu0
  %v8285 = vadd.f32 0.0, %v8284
  %8286 = vmatmul.f32.gmra.mxu0 %v8190
  %v8287 = vpop.f32.mrf.mxu0
  %v8288 = vadd.f32 0.0, %v8287
  %8289 = vmatmul.f32.gmra.mxu0 %v8192
  %v8290 = vpop.f32.mrf.mxu0
  %v8291 = vadd.f32 0.0, %v8290
  %8292 = vmatmul.f32.gmra.mxu0 %v8194
  %v8293 = vpop.f32.mrf.mxu0
  %v8294 = vadd.f32 0.0, %v8293
  %8295 = vmatmul.f32.gmra.mxu0 %v8196
  %v8296 = vpop.f32.mrf.mxu0
  %v8297 = vadd.f32 0.0, %v8296
  %8298 = vmatmul.f32.gmra.mxu0 %v8198
  %v8299 = vpop.f32.mrf.mxu0
  %v8300 = vadd.f32 0.0, %v8299
  %8301 = vmatmul.f32.gmra.mxu0 %v8200
  %v8302 = vpop.f32.mrf.mxu0
  %v8303 = vadd.f32 0.0, %v8302
  %8304 = vmatmul.f32.gmra.mxu0 %v8202
  %v8305 = vpop.f32.mrf.mxu0
  %v8306 = vadd.f32 0.0, %v8305
  %8307 = vmatmul.f32.gmra.mxu0 %v8204
  %v8308 = vpop.f32.mrf.mxu0
  %v8309 = vadd.f32 0.0, %v8308
  %8310 = vmatmul.f32.gmra.mxu0 %v8206
  %v8311 = vpop.f32.mrf.mxu0
  %v8312 = vadd.f32 0.0, %v8311
  %8313 = vmatmul.f32.gmra.mxu0 %v8208
  %v8314 = vpop.f32.mrf.mxu0
  %v8315 = vadd.f32 0.0, %v8314
  %8316 = vmatmul.f32.gmra.mxu0 %v8210
  %v8317 = vpop.f32.mrf.mxu0
  %v8318 = vadd.f32 0.0, %v8317
  %8319 = vmatmul.f32.gmra.mxu0 %v8212
  %v8320 = vpop.f32.mrf.mxu0
  %v8321 = vadd.f32 0.0, %v8320
  %8322 = vmatmul.f32.gmra.mxu0 %v8214
  %v8323 = vpop.f32.mrf.mxu0
  %v8324 = vadd.f32 0.0, %v8323
  %8325 = vmatmul.f32.gmra.mxu0 %v8216
  %v8326 = vpop.f32.mrf.mxu0
  %v8327 = vadd.f32 0.0, %v8326
  %8328 = vmatmul.f32.gmra.mxu0 %v8218
  %v8329 = vpop.f32.mrf.mxu0
  %v8330 = vadd.f32 0.0, %v8329
  %8331 = vmatmul.f32.gmra.mxu0 %v8220
  %v8332 = vpop.f32.mrf.mxu0
  %v8333 = vadd.f32 0.0, %v8332
  %8334 = vdwg.mxu0
  %8335 = vmatpush.msra.mxu0 %v7258
  %8336 = vmatpush.msra.mxu0 %v7255
  %8337 = vmatpush.msra.mxu0 %v7252
  %8338 = vmatpush.msra.mxu0 %v7249
  %8339 = vmatpush.msra.mxu0 %v7246
  %8340 = vmatpush.msra.mxu0 %v7243
  %8341 = vmatpush.msra.mxu0 %v7240
  %8342 = vmatpush.msra.mxu0 %v7237
  %8343 = vmatpush.msra.mxu0 %v7234
  %8344 = vmatpush.msra.mxu0 %v7231
  %8345 = vmatpush.msra.mxu0 %v7228
  %8346 = vmatpush.msra.mxu0 %v7225
  %8347 = vmatpush.msra.mxu0 %v7222
  %8348 = vmatpush.msra.mxu0 %v7219
  %8349 = vmatpush.msra.mxu0 %v7216
  %8350 = vmatpush.msra.mxu0 %v7213
  %8351 = vmatmul.f32.gmra.mxu0 %v8159
  %v8352 = vpop.f32.mrf.mxu0
  %v8353 = vadd.f32 %v8240, %v8352
  %8354 = vmatmul.f32.gmra.mxu0 %v8161
  %v8355 = vpop.f32.mrf.mxu0
  %v8356 = vadd.f32 %v8243, %v8355
  %8357 = vmatmul.f32.gmra.mxu0 %v8163
  %v8358 = vpop.f32.mrf.mxu0
  %v8359 = vadd.f32 %v8246, %v8358
  %8360 = vmatmul.f32.gmra.mxu0 %v8165
  %v8361 = vpop.f32.mrf.mxu0
  %v8362 = vadd.f32 %v8249, %v8361
  %8363 = vmatmul.f32.gmra.mxu0 %v8167
  %v8364 = vpop.f32.mrf.mxu0
  %v8365 = vadd.f32 %v8252, %v8364
  %8366 = vmatmul.f32.gmra.mxu0 %v8169
  %v8367 = vpop.f32.mrf.mxu0
  %v8368 = vadd.f32 %v8255, %v8367
  %8369 = vmatmul.f32.gmra.mxu0 %v8171
  %v8370 = vpop.f32.mrf.mxu0
  %v8371 = vadd.f32 %v8258, %v8370
  %8372 = vmatmul.f32.gmra.mxu0 %v8173
  %v8373 = vpop.f32.mrf.mxu0
  %v8374 = vadd.f32 %v8261, %v8373
  %8375 = vmatmul.f32.gmra.mxu0 %v8175
  %v8376 = vpop.f32.mrf.mxu0
  %v8377 = vadd.f32 %v8264, %v8376
  %8378 = vmatmul.f32.gmra.mxu0 %v8177
  %v8379 = vpop.f32.mrf.mxu0
  %v8380 = vadd.f32 %v8267, %v8379
  %8381 = vmatmul.f32.gmra.mxu0 %v8179
  %v8382 = vpop.f32.mrf.mxu0
  %v8383 = vadd.f32 %v8270, %v8382
  %8384 = vmatmul.f32.gmra.mxu0 %v8181
  %v8385 = vpop.f32.mrf.mxu0
  %v8386 = vadd.f32 %v8273, %v8385
  %8387 = vmatmul.f32.gmra.mxu0 %v8183
  %v8388 = vpop.f32.mrf.mxu0
  %v8389 = vadd.f32 %v8276, %v8388
  %8390 = vmatmul.f32.gmra.mxu0 %v8185
  %v8391 = vpop.f32.mrf.mxu0
  %v8392 = vadd.f32 %v8279, %v8391
  %8393 = vmatmul.f32.gmra.mxu0 %v8187
  %v8394 = vpop.f32.mrf.mxu0
  %v8395 = vadd.f32 %v8282, %v8394
  %8396 = vmatmul.f32.gmra.mxu0 %v8189
  %v8397 = vpop.f32.mrf.mxu0
  %v8398 = vadd.f32 %v8285, %v8397
  %8399 = vmatmul.f32.gmra.mxu0 %v8191
  %v8400 = vpop.f32.mrf.mxu0
  %v8401 = vadd.f32 %v8288, %v8400
  %8402 = vmatmul.f32.gmra.mxu0 %v8193
  %v8403 = vpop.f32.mrf.mxu0
  %v8404 = vadd.f32 %v8291, %v8403
  %8405 = vmatmul.f32.gmra.mxu0 %v8195
  %v8406 = vpop.f32.mrf.mxu0
  %v8407 = vadd.f32 %v8294, %v8406
  %8408 = vmatmul.f32.gmra.mxu0 %v8197
  %v8409 = vpop.f32.mrf.mxu0
  %v8410 = vadd.f32 %v8297, %v8409
  %8411 = vmatmul.f32.gmra.mxu0 %v8199
  %v8412 = vpop.f32.mrf.mxu0
  %v8413 = vadd.f32 %v8300, %v8412
  %8414 = vmatmul.f32.gmra.mxu0 %v8201
  %v8415 = vpop.f32.mrf.mxu0
  %v8416 = vadd.f32 %v8303, %v8415
  %8417 = vmatmul.f32.gmra.mxu0 %v8203
  %v8418 = vpop.f32.mrf.mxu0
  %v8419 = vadd.f32 %v8306, %v8418
  %8420 = vmatmul.f32.gmra.mxu0 %v8205
  %v8421 = vpop.f32.mrf.mxu0
  %v8422 = vadd.f32 %v8309, %v8421
  %8423 = vmatmul.f32.gmra.mxu0 %v8207
  %v8424 = vpop.f32.mrf.mxu0
  %v8425 = vadd.f32 %v8312, %v8424
  %8426 = vmatmul.f32.gmra.mxu0 %v8209
  %v8427 = vpop.f32.mrf.mxu0
  %v8428 = vadd.f32 %v8315, %v8427
  %8429 = vmatmul.f32.gmra.mxu0 %v8211
  %v8430 = vpop.f32.mrf.mxu0
  %v8431 = vadd.f32 %v8318, %v8430
  %8432 = vmatmul.f32.gmra.mxu0 %v8213
  %v8433 = vpop.f32.mrf.mxu0
  %v8434 = vadd.f32 %v8321, %v8433
  %8435 = vmatmul.f32.gmra.mxu0 %v8215
  %v8436 = vpop.f32.mrf.mxu0
  %v8437 = vadd.f32 %v8324, %v8436
  %8438 = vmatmul.f32.gmra.mxu0 %v8217
  %v8439 = vpop.f32.mrf.mxu0
  %v8440 = vadd.f32 %v8327, %v8439
  %8441 = vmatmul.f32.gmra.mxu0 %v8219
  %v8442 = vpop.f32.mrf.mxu0
  %v8443 = vadd.f32 %v8330, %v8442
  %8444 = vmatmul.f32.gmra.mxu0 %v8221
  %v8445 = vpop.f32.mrf.mxu0
  %v8446 = vadd.f32 %v8333, %v8445
  %8447 = vdwg.mxu0
  %v8448 = vld [vmem:[%s7] sm:$0xff]
  %v8449 = vld [vmem:[%s2560] sm:$0xff]
  %v8450 = vld [vmem:[%s2560 + $0x8] sm:$0xff]
  %v8451 = vld [vmem:[%s2560 + $0x10] sm:$0xff]
  %v8452 = vld [vmem:[%s2560 + $0x18] sm:$0xff]
  %8453 = vmatpush.msra.mxu0 0.0
  %8454 = vmatpush.msra.mxu0 0.0
  %8455 = vmatpush.msra.mxu0 0.0
  %8456 = vmatpush.msra.mxu0 0.0
  %8457 = vmatpush.msra.mxu0 0.0
  %8458 = vmatpush.msra.mxu0 0.0
  %8459 = vmatpush.msra.mxu0 0.0
  %8460 = vmatpush.msra.mxu0 0.0
  %8461 = vmatpush.msra.mxu0 0.0
  %8462 = vmatpush.msra.mxu0 0.0
  %8463 = vmatpush.msra.mxu0 0.0
  %8464 = vmatpush.msra.mxu0 0.0
  %8465 = vmatpush.msra.mxu0 %v8452
  %8466 = vmatpush.msra.mxu0 %v8451
  %8467 = vmatpush.msra.mxu0 %v8450
  %8468 = vmatpush.msra.mxu0 %v8449
  %8469 = vmatmul.f32.gmra.mxu0 %v6818
  %v8470 = vpop.f32.mrf.mxu0
  %v8471 = vadd.f32 0.0, %v8470
  %8472 = vmatmul.f32.gmra.mxu0 %v6821
  %v8473 = vpop.f32.mrf.mxu0
  %v8474 = vadd.f32 0.0, %v8473
  %8475 = vmatmul.f32.gmra.mxu0 %v6824
  %v8476 = vpop.f32.mrf.mxu0
  %v8477 = vadd.f32 0.0, %v8476
  %8478 = vmatmul.f32.gmra.mxu0 %v6827
  %v8479 = vpop.f32.mrf.mxu0
  %v8480 = vadd.f32 0.0, %v8479
  %8481 = vmatmul.f32.gmra.mxu0 %v6830
  %v8482 = vpop.f32.mrf.mxu0
  %v8483 = vadd.f32 0.0, %v8482
  %8484 = vmatmul.f32.gmra.mxu0 %v6833
  %v8485 = vpop.f32.mrf.mxu0
  %v8486 = vadd.f32 0.0, %v8485
  %8487 = vmatmul.f32.gmra.mxu0 %v6836
  %v8488 = vpop.f32.mrf.mxu0
  %v8489 = vadd.f32 0.0, %v8488
  %8490 = vmatmul.f32.gmra.mxu0 %v6839
  %v8491 = vpop.f32.mrf.mxu0
  %v8492 = vadd.f32 0.0, %v8491
  %8493 = vmatmul.f32.gmra.mxu0 %v6842
  %v8494 = vpop.f32.mrf.mxu0
  %v8495 = vadd.f32 0.0, %v8494
  %8496 = vmatmul.f32.gmra.mxu0 %v6845
  %v8497 = vpop.f32.mrf.mxu0
  %v8498 = vadd.f32 0.0, %v8497
  %8499 = vmatmul.f32.gmra.mxu0 %v6848
  %v8500 = vpop.f32.mrf.mxu0
  %v8501 = vadd.f32 0.0, %v8500
  %8502 = vmatmul.f32.gmra.mxu0 %v6851
  %v8503 = vpop.f32.mrf.mxu0
  %v8504 = vadd.f32 0.0, %v8503
  %8505 = vmatmul.f32.gmra.mxu0 %v6854
  %v8506 = vpop.f32.mrf.mxu0
  %v8507 = vadd.f32 0.0, %v8506
  %8508 = vmatmul.f32.gmra.mxu0 %v6857
  %v8509 = vpop.f32.mrf.mxu0
  %v8510 = vadd.f32 0.0, %v8509
  %8511 = vmatmul.f32.gmra.mxu0 %v6860
  %v8512 = vpop.f32.mrf.mxu0
  %v8513 = vadd.f32 0.0, %v8512
  %8514 = vmatmul.f32.gmra.mxu0 %v6863
  %v8515 = vpop.f32.mrf.mxu0
  %v8516 = vadd.f32 0.0, %v8515
  %8517 = vmatmul.f32.gmra.mxu0 %v6866
  %v8518 = vpop.f32.mrf.mxu0
  %v8519 = vadd.f32 0.0, %v8518
  %8520 = vmatmul.f32.gmra.mxu0 %v6869
  %v8521 = vpop.f32.mrf.mxu0
  %v8522 = vadd.f32 0.0, %v8521
  %8523 = vmatmul.f32.gmra.mxu0 %v6872
  %v8524 = vpop.f32.mrf.mxu0
  %v8525 = vadd.f32 0.0, %v8524
  %8526 = vmatmul.f32.gmra.mxu0 %v6875
  %v8527 = vpop.f32.mrf.mxu0
  %v8528 = vadd.f32 0.0, %v8527
  %8529 = vmatmul.f32.gmra.mxu0 %v6878
  %v8530 = vpop.f32.mrf.mxu0
  %v8531 = vadd.f32 0.0, %v8530
  %8532 = vmatmul.f32.gmra.mxu0 %v6881
  %v8533 = vpop.f32.mrf.mxu0
  %v8534 = vadd.f32 0.0, %v8533
  %8535 = vmatmul.f32.gmra.mxu0 %v6884
  %v8536 = vpop.f32.mrf.mxu0
  %v8537 = vadd.f32 0.0, %v8536
  %8538 = vmatmul.f32.gmra.mxu0 %v6887
  %v8539 = vpop.f32.mrf.mxu0
  %v8540 = vadd.f32 0.0, %v8539
  %8541 = vmatmul.f32.gmra.mxu0 %v6890
  %v8542 = vpop.f32.mrf.mxu0
  %v8543 = vadd.f32 0.0, %v8542
  %8544 = vmatmul.f32.gmra.mxu0 %v6893
  %v8545 = vpop.f32.mrf.mxu0
  %v8546 = vadd.f32 0.0, %v8545
  %8547 = vmatmul.f32.gmra.mxu0 %v6896
  %v8548 = vpop.f32.mrf.mxu0
  %v8549 = vadd.f32 0.0, %v8548
  %8550 = vmatmul.f32.gmra.mxu0 %v6899
  %v8551 = vpop.f32.mrf.mxu0
  %v8552 = vadd.f32 0.0, %v8551
  %8553 = vmatmul.f32.gmra.mxu0 %v6902
  %v8554 = vpop.f32.mrf.mxu0
  %v8555 = vadd.f32 0.0, %v8554
  %8556 = vmatmul.f32.gmra.mxu0 %v6905
  %v8557 = vpop.f32.mrf.mxu0
  %v8558 = vadd.f32 0.0, %v8557
  %8559 = vmatmul.f32.gmra.mxu0 %v6908
  %v8560 = vpop.f32.mrf.mxu0
  %v8561 = vadd.f32 0.0, %v8560
  %8562 = vmatmul.f32.gmra.mxu0 %v6911
  %v8563 = vpop.f32.mrf.mxu0
  %v8564 = vadd.f32 0.0, %v8563
  %8565 = vdwg.mxu0
  %v8566 = vld [vmem:[%s2678] sm:$0xff]
  %v8567 = vld [vmem:[%s2678 + $0x8] sm:$0xff]
  %v8568 = vld [vmem:[%s2678 + $0x10] sm:$0xff]
  %v8569 = vld [vmem:[%s2678 + $0x18] sm:$0xff]
  %8570 = vmatpush.msra.mxu0 0.0
  %8571 = vmatpush.msra.mxu0 0.0
  %8572 = vmatpush.msra.mxu0 0.0
  %8573 = vmatpush.msra.mxu0 0.0
  %8574 = vmatpush.msra.mxu0 0.0
  %8575 = vmatpush.msra.mxu0 0.0
  %8576 = vmatpush.msra.mxu0 0.0
  %8577 = vmatpush.msra.mxu0 0.0
  %8578 = vmatpush.msra.mxu0 0.0
  %8579 = vmatpush.msra.mxu0 0.0
  %8580 = vmatpush.msra.mxu0 0.0
  %8581 = vmatpush.msra.mxu0 0.0
  %8582 = vmatpush.msra.mxu0 %v8569
  %8583 = vmatpush.msra.mxu0 %v8568
  %8584 = vmatpush.msra.mxu0 %v8567
  %8585 = vmatpush.msra.mxu0 %v8566
  %8586 = vmatmul.f32.gmra.mxu0 %v6818
  %v8587 = vpop.f32.mrf.mxu0
  %v8588 = vadd.f32 0.0, %v8587
  %8589 = vmatmul.f32.gmra.mxu0 %v6821
  %v8590 = vpop.f32.mrf.mxu0
  %v8591 = vadd.f32 0.0, %v8590
  %8592 = vmatmul.f32.gmra.mxu0 %v6824
  %v8593 = vpop.f32.mrf.mxu0
  %v8594 = vadd.f32 0.0, %v8593
  %8595 = vmatmul.f32.gmra.mxu0 %v6827
  %v8596 = vpop.f32.mrf.mxu0
  %v8597 = vadd.f32 0.0, %v8596
  %8598 = vmatmul.f32.gmra.mxu0 %v6830
  %v8599 = vpop.f32.mrf.mxu0
  %v8600 = vadd.f32 0.0, %v8599
  %8601 = vmatmul.f32.gmra.mxu0 %v6833
  %v8602 = vpop.f32.mrf.mxu0
  %v8603 = vadd.f32 0.0, %v8602
  %8604 = vmatmul.f32.gmra.mxu0 %v6836
  %v8605 = vpop.f32.mrf.mxu0
  %v8606 = vadd.f32 0.0, %v8605
  %8607 = vmatmul.f32.gmra.mxu0 %v6839
  %v8608 = vpop.f32.mrf.mxu0
  %v8609 = vadd.f32 0.0, %v8608
  %8610 = vmatmul.f32.gmra.mxu0 %v6842
  %v8611 = vpop.f32.mrf.mxu0
  %v8612 = vadd.f32 0.0, %v8611
  %8613 = vmatmul.f32.gmra.mxu0 %v6845
  %v8614 = vpop.f32.mrf.mxu0
  %v8615 = vadd.f32 0.0, %v8614
  %8616 = vmatmul.f32.gmra.mxu0 %v6848
  %v8617 = vpop.f32.mrf.mxu0
  %v8618 = vadd.f32 0.0, %v8617
  %8619 = vmatmul.f32.gmra.mxu0 %v6851
  %v8620 = vpop.f32.mrf.mxu0
  %v8621 = vadd.f32 0.0, %v8620
  %8622 = vmatmul.f32.gmra.mxu0 %v6854
  %v8623 = vpop.f32.mrf.mxu0
  %v8624 = vadd.f32 0.0, %v8623
  %8625 = vmatmul.f32.gmra.mxu0 %v6857
  %v8626 = vpop.f32.mrf.mxu0
  %v8627 = vadd.f32 0.0, %v8626
  %8628 = vmatmul.f32.gmra.mxu0 %v6860
  %v8629 = vpop.f32.mrf.mxu0
  %v8630 = vadd.f32 0.0, %v8629
  %8631 = vmatmul.f32.gmra.mxu0 %v6863
  %v8632 = vpop.f32.mrf.mxu0
  %v8633 = vadd.f32 0.0, %v8632
  %8634 = vmatmul.f32.gmra.mxu0 %v6866
  %v8635 = vpop.f32.mrf.mxu0
  %v8636 = vadd.f32 0.0, %v8635
  %8637 = vmatmul.f32.gmra.mxu0 %v6869
  %v8638 = vpop.f32.mrf.mxu0
  %v8639 = vadd.f32 0.0, %v8638
  %8640 = vmatmul.f32.gmra.mxu0 %v6872
  %v8641 = vpop.f32.mrf.mxu0
  %v8642 = vadd.f32 0.0, %v8641
  %8643 = vmatmul.f32.gmra.mxu0 %v6875
  %v8644 = vpop.f32.mrf.mxu0
  %v8645 = vadd.f32 0.0, %v8644
  %8646 = vmatmul.f32.gmra.mxu0 %v6878
  %v8647 = vpop.f32.mrf.mxu0
  %v8648 = vadd.f32 0.0, %v8647
  %8649 = vmatmul.f32.gmra.mxu0 %v6881
  %v8650 = vpop.f32.mrf.mxu0
  %v8651 = vadd.f32 0.0, %v8650
  %8652 = vmatmul.f32.gmra.mxu0 %v6884
  %v8653 = vpop.f32.mrf.mxu0
  %v8654 = vadd.f32 0.0, %v8653
  %8655 = vmatmul.f32.gmra.mxu0 %v6887
  %v8656 = vpop.f32.mrf.mxu0
  %v8657 = vadd.f32 0.0, %v8656
  %8658 = vmatmul.f32.gmra.mxu0 %v6890
  %v8659 = vpop.f32.mrf.mxu0
  %v8660 = vadd.f32 0.0, %v8659
  %8661 = vmatmul.f32.gmra.mxu0 %v6893
  %v8662 = vpop.f32.mrf.mxu0
  %v8663 = vadd.f32 0.0, %v8662
  %8664 = vmatmul.f32.gmra.mxu0 %v6896
  %v8665 = vpop.f32.mrf.mxu0
  %v8666 = vadd.f32 0.0, %v8665
  %8667 = vmatmul.f32.gmra.mxu0 %v6899
  %v8668 = vpop.f32.mrf.mxu0
  %v8669 = vadd.f32 0.0, %v8668
  %8670 = vmatmul.f32.gmra.mxu0 %v6902
  %v8671 = vpop.f32.mrf.mxu0
  %v8672 = vadd.f32 0.0, %v8671
  %8673 = vmatmul.f32.gmra.mxu0 %v6905
  %v8674 = vpop.f32.mrf.mxu0
  %v8675 = vadd.f32 0.0, %v8674
  %8676 = vmatmul.f32.gmra.mxu0 %v6908
  %v8677 = vpop.f32.mrf.mxu0
  %v8678 = vadd.f32 0.0, %v8677
  %8679 = vmatmul.f32.gmra.mxu0 %v6911
  %v8680 = vpop.f32.mrf.mxu0
  %v8681 = vadd.f32 0.0, %v8680
  %8682 = vdwg.mxu0
  %v8683 = vld [vmem:[%s2796] sm:$0xff]
  %v8684 = vld [vmem:[%s2796 + $0x8] sm:$0xff]
  %v8685 = vld [vmem:[%s2796 + $0x10] sm:$0xff]
  %v8686 = vld [vmem:[%s2796 + $0x18] sm:$0xff]
  %8687 = vmatpush.msra.mxu0 0.0
  %8688 = vmatpush.msra.mxu0 0.0
  %8689 = vmatpush.msra.mxu0 0.0
  %8690 = vmatpush.msra.mxu0 0.0
  %8691 = vmatpush.msra.mxu0 0.0
  %8692 = vmatpush.msra.mxu0 0.0
  %8693 = vmatpush.msra.mxu0 0.0
  %8694 = vmatpush.msra.mxu0 0.0
  %8695 = vmatpush.msra.mxu0 0.0
  %8696 = vmatpush.msra.mxu0 0.0
  %8697 = vmatpush.msra.mxu0 0.0
  %8698 = vmatpush.msra.mxu0 0.0
  %8699 = vmatpush.msra.mxu0 %v8686
  %8700 = vmatpush.msra.mxu0 %v8685
  %8701 = vmatpush.msra.mxu0 %v8684
  %8702 = vmatpush.msra.mxu0 %v8683
  %8703 = vmatmul.f32.gmra.mxu0 %v6818
  %v8704 = vpop.f32.mrf.mxu0
  %v8705 = vadd.f32 0.0, %v8704
  %8706 = vmatmul.f32.gmra.mxu0 %v6821
  %v8707 = vpop.f32.mrf.mxu0
  %v8708 = vadd.f32 0.0, %v8707
  %8709 = vmatmul.f32.gmra.mxu0 %v6824
  %v8710 = vpop.f32.mrf.mxu0
  %v8711 = vadd.f32 0.0, %v8710
  %8712 = vmatmul.f32.gmra.mxu0 %v6827
  %v8713 = vpop.f32.mrf.mxu0
  %v8714 = vadd.f32 0.0, %v8713
  %8715 = vmatmul.f32.gmra.mxu0 %v6830
  %v8716 = vpop.f32.mrf.mxu0
  %v8717 = vadd.f32 0.0, %v8716
  %8718 = vmatmul.f32.gmra.mxu0 %v6833
  %v8719 = vpop.f32.mrf.mxu0
  %v8720 = vadd.f32 0.0, %v8719
  %8721 = vmatmul.f32.gmra.mxu0 %v6836
  %v8722 = vpop.f32.mrf.mxu0
  %v8723 = vadd.f32 0.0, %v8722
  %8724 = vmatmul.f32.gmra.mxu0 %v6839
  %v8725 = vpop.f32.mrf.mxu0
  %v8726 = vadd.f32 0.0, %v8725
  %8727 = vmatmul.f32.gmra.mxu0 %v6842
  %v8728 = vpop.f32.mrf.mxu0
  %v8729 = vadd.f32 0.0, %v8728
  %8730 = vmatmul.f32.gmra.mxu0 %v6845
  %v8731 = vpop.f32.mrf.mxu0
  %v8732 = vadd.f32 0.0, %v8731
  %8733 = vmatmul.f32.gmra.mxu0 %v6848
  %v8734 = vpop.f32.mrf.mxu0
  %v8735 = vadd.f32 0.0, %v8734
  %8736 = vmatmul.f32.gmra.mxu0 %v6851
  %v8737 = vpop.f32.mrf.mxu0
  %v8738 = vadd.f32 0.0, %v8737
  %8739 = vmatmul.f32.gmra.mxu0 %v6854
  %v8740 = vpop.f32.mrf.mxu0
  %v8741 = vadd.f32 0.0, %v8740
  %8742 = vmatmul.f32.gmra.mxu0 %v6857
  %v8743 = vpop.f32.mrf.mxu0
  %v8744 = vadd.f32 0.0, %v8743
  %8745 = vmatmul.f32.gmra.mxu0 %v6860
  %v8746 = vpop.f32.mrf.mxu0
  %v8747 = vadd.f32 0.0, %v8746
  %8748 = vmatmul.f32.gmra.mxu0 %v6863
  %v8749 = vpop.f32.mrf.mxu0
  %v8750 = vadd.f32 0.0, %v8749
  %8751 = vmatmul.f32.gmra.mxu0 %v6866
  %v8752 = vpop.f32.mrf.mxu0
  %v8753 = vadd.f32 0.0, %v8752
  %8754 = vmatmul.f32.gmra.mxu0 %v6869
  %v8755 = vpop.f32.mrf.mxu0
  %v8756 = vadd.f32 0.0, %v8755
  %8757 = vmatmul.f32.gmra.mxu0 %v6872
  %v8758 = vpop.f32.mrf.mxu0
  %v8759 = vadd.f32 0.0, %v8758
  %8760 = vmatmul.f32.gmra.mxu0 %v6875
  %v8761 = vpop.f32.mrf.mxu0
  %v8762 = vadd.f32 0.0, %v8761
  %8763 = vmatmul.f32.gmra.mxu0 %v6878
  %v8764 = vpop.f32.mrf.mxu0
  %v8765 = vadd.f32 0.0, %v8764
  %8766 = vmatmul.f32.gmra.mxu0 %v6881
  %v8767 = vpop.f32.mrf.mxu0
  %v8768 = vadd.f32 0.0, %v8767
  %8769 = vmatmul.f32.gmra.mxu0 %v6884
  %v8770 = vpop.f32.mrf.mxu0
  %v8771 = vadd.f32 0.0, %v8770
  %8772 = vmatmul.f32.gmra.mxu0 %v6887
  %v8773 = vpop.f32.mrf.mxu0
  %v8774 = vadd.f32 0.0, %v8773
  %8775 = vmatmul.f32.gmra.mxu0 %v6890
  %v8776 = vpop.f32.mrf.mxu0
  %v8777 = vadd.f32 0.0, %v8776
  %8778 = vmatmul.f32.gmra.mxu0 %v6893
  %v8779 = vpop.f32.mrf.mxu0
  %v8780 = vadd.f32 0.0, %v8779
  %8781 = vmatmul.f32.gmra.mxu0 %v6896
  %v8782 = vpop.f32.mrf.mxu0
  %v8783 = vadd.f32 0.0, %v8782
  %8784 = vmatmul.f32.gmra.mxu0 %v6899
  %v8785 = vpop.f32.mrf.mxu0
  %v8786 = vadd.f32 0.0, %v8785
  %8787 = vmatmul.f32.gmra.mxu0 %v6902
  %v8788 = vpop.f32.mrf.mxu0
  %v8789 = vadd.f32 0.0, %v8788
  %8790 = vmatmul.f32.gmra.mxu0 %v6905
  %v8791 = vpop.f32.mrf.mxu0
  %v8792 = vadd.f32 0.0, %v8791
  %8793 = vmatmul.f32.gmra.mxu0 %v6908
  %v8794 = vpop.f32.mrf.mxu0
  %v8795 = vadd.f32 0.0, %v8794
  %8796 = vmatmul.f32.gmra.mxu0 %v6911
  %v8797 = vpop.f32.mrf.mxu0
  %v8798 = vadd.f32 0.0, %v8797
  %8799 = vdwg.mxu0
  %v8801 = vsel %vm1370, %v8471, 0
  %v8804 = vsel %vm1370, %v8474, 0
  %v8807 = vsel %vm1370, %v8477, 0
  %v8810 = vsel %vm1370, %v8480, 0
  %v8813 = vsel %vm1370, %v8483, 0
  %v8816 = vsel %vm1370, %v8486, 0
  %v8819 = vsel %vm1370, %v8489, 0
  %v8822 = vsel %vm1370, %v8492, 0
  %v8825 = vsel %vm1370, %v8495, 0
  %v8828 = vsel %vm1370, %v8498, 0
  %v8831 = vsel %vm1370, %v8501, 0
  %v8834 = vsel %vm1370, %v8504, 0
  %v8837 = vsel %vm1370, %v8507, 0
  %v8840 = vsel %vm1370, %v8510, 0
  %v8843 = vsel %vm1370, %v8513, 0
  %v8846 = vsel %vm1370, %v8516, 0
  %v8849 = vsel %vm1370, %v8519, 0
  %v8852 = vsel %vm1370, %v8522, 0
  %v8855 = vsel %vm1370, %v8525, 0
  %v8858 = vsel %vm1370, %v8528, 0
  %v8861 = vsel %vm1370, %v8531, 0
  %v8864 = vsel %vm1370, %v8534, 0
  %v8867 = vsel %vm1370, %v8537, 0
  %v8870 = vsel %vm1370, %v8540, 0
  %v8873 = vsel %vm1370, %v8543, 0
  %v8876 = vsel %vm1370, %v8546, 0
  %v8879 = vsel %vm1370, %v8549, 0
  %v8882 = vsel %vm1370, %v8552, 0
  %v8885 = vsel %vm1370, %v8555, 0
  %v8888 = vsel %vm1370, %v8558, 0
  %v8891 = vsel %vm1370, %v8561, 0
  %v8894 = vsel %vm1370, %v8564, 0
  %v8897 = vsel %vm1370, %v8588, 0
  %v8900 = vsel %vm1370, %v8591, 0
  %v8903 = vsel %vm1370, %v8594, 0
  %v8906 = vsel %vm1370, %v8597, 0
  %v8909 = vsel %vm1370, %v8600, 0
  %v8912 = vsel %vm1370, %v8603, 0
  %v8915 = vsel %vm1370, %v8606, 0
  %v8918 = vsel %vm1370, %v8609, 0
  %v8921 = vsel %vm1370, %v8612, 0
  %v8924 = vsel %vm1370, %v8615, 0
  %v8927 = vsel %vm1370, %v8618, 0
  %v8930 = vsel %vm1370, %v8621, 0
  %v8933 = vsel %vm1370, %v8624, 0
  %v8936 = vsel %vm1370, %v8627, 0
  %v8939 = vsel %vm1370, %v8630, 0
  %v8942 = vsel %vm1370, %v8633, 0
  %v8945 = vsel %vm1370, %v8636, 0
  %v8948 = vsel %vm1370, %v8639, 0
  %v8951 = vsel %vm1370, %v8642, 0
  %v8954 = vsel %vm1370, %v8645, 0
  %v8957 = vsel %vm1370, %v8648, 0
  %v8960 = vsel %vm1370, %v8651, 0
  %v8963 = vsel %vm1370, %v8654, 0
  %v8966 = vsel %vm1370, %v8657, 0
  %v8969 = vsel %vm1370, %v8660, 0
  %v8972 = vsel %vm1370, %v8663, 0
  %v8975 = vsel %vm1370, %v8666, 0
  %v8978 = vsel %vm1370, %v8669, 0
  %v8981 = vsel %vm1370, %v8672, 0
  %v8984 = vsel %vm1370, %v8675, 0
  %v8987 = vsel %vm1370, %v8678, 0
  %v8990 = vsel %vm1370, %v8681, 0
  %8992 = vmatpush.xpose.msra.mxu0 %v8942
  %8993 = vmatpush.xpose.msra.mxu0 %v8939
  %8994 = vmatpush.xpose.msra.mxu0 %v8936
  %8995 = vmatpush.xpose.msra.mxu0 %v8933
  %8996 = vmatpush.xpose.msra.mxu0 %v8930
  %8997 = vmatpush.xpose.msra.mxu0 %v8927
  %8998 = vmatpush.xpose.msra.mxu0 %v8924
  %8999 = vmatpush.xpose.msra.mxu0 %v8921
  %9000 = vmatpush.xpose.msra.mxu0 %v8918
  %9001 = vmatpush.xpose.msra.mxu0 %v8915
  %9002 = vmatpush.xpose.msra.mxu0 %v8912
  %9003 = vmatpush.xpose.msra.mxu0 %v8909
  %9004 = vmatpush.xpose.msra.mxu0 %v8906
  %9005 = vmatpush.xpose.msra.mxu0 %v8903
  %9006 = vmatpush.xpose.msra.mxu0 %v8900
  %9007 = vmatpush.xpose.msra.mxu0 %v8897
  %9008 = vmatmul.f32.gmra.mxu0 %v8801
  %v9009 = vpop.f32.mrf.mxu0
  %v9010 = vadd.f32 0.0, %v9009
  %9011 = vmatmul.f32.gmra.mxu0 %v8804
  %v9012 = vpop.f32.mrf.mxu0
  %v9013 = vadd.f32 0.0, %v9012
  %9014 = vmatmul.f32.gmra.mxu0 %v8807
  %v9015 = vpop.f32.mrf.mxu0
  %v9016 = vadd.f32 0.0, %v9015
  %9017 = vmatmul.f32.gmra.mxu0 %v8810
  %v9018 = vpop.f32.mrf.mxu0
  %v9019 = vadd.f32 0.0, %v9018
  %9020 = vmatmul.f32.gmra.mxu0 %v8813
  %v9021 = vpop.f32.mrf.mxu0
  %v9022 = vadd.f32 0.0, %v9021
  %9023 = vmatmul.f32.gmra.mxu0 %v8816
  %v9024 = vpop.f32.mrf.mxu0
  %v9025 = vadd.f32 0.0, %v9024
  %9026 = vmatmul.f32.gmra.mxu0 %v8819
  %v9027 = vpop.f32.mrf.mxu0
  %v9028 = vadd.f32 0.0, %v9027
  %9029 = vmatmul.f32.gmra.mxu0 %v8822
  %v9030 = vpop.f32.mrf.mxu0
  %v9031 = vadd.f32 0.0, %v9030
  %9032 = vmatmul.f32.gmra.mxu0 %v8825
  %v9033 = vpop.f32.mrf.mxu0
  %v9034 = vadd.f32 0.0, %v9033
  %9035 = vmatmul.f32.gmra.mxu0 %v8828
  %v9036 = vpop.f32.mrf.mxu0
  %v9037 = vadd.f32 0.0, %v9036
  %9038 = vmatmul.f32.gmra.mxu0 %v8831
  %v9039 = vpop.f32.mrf.mxu0
  %v9040 = vadd.f32 0.0, %v9039
  %9041 = vmatmul.f32.gmra.mxu0 %v8834
  %v9042 = vpop.f32.mrf.mxu0
  %v9043 = vadd.f32 0.0, %v9042
  %9044 = vmatmul.f32.gmra.mxu0 %v8837
  %v9045 = vpop.f32.mrf.mxu0
  %v9046 = vadd.f32 0.0, %v9045
  %9047 = vmatmul.f32.gmra.mxu0 %v8840
  %v9048 = vpop.f32.mrf.mxu0
  %v9049 = vadd.f32 0.0, %v9048
  %9050 = vmatmul.f32.gmra.mxu0 %v8843
  %v9051 = vpop.f32.mrf.mxu0
  %v9052 = vadd.f32 0.0, %v9051
  %9053 = vmatmul.f32.gmra.mxu0 %v8846
  %v9054 = vpop.f32.mrf.mxu0
  %v9055 = vadd.f32 0.0, %v9054
  %9056 = vmatmul.f32.gmra.mxu0 %v8849
  %v9057 = vpop.f32.mrf.mxu0
  %v9058 = vadd.f32 0.0, %v9057
  %9059 = vmatmul.f32.gmra.mxu0 %v8852
  %v9060 = vpop.f32.mrf.mxu0
  %v9061 = vadd.f32 0.0, %v9060
  %9062 = vmatmul.f32.gmra.mxu0 %v8855
  %v9063 = vpop.f32.mrf.mxu0
  %v9064 = vadd.f32 0.0, %v9063
  %9065 = vmatmul.f32.gmra.mxu0 %v8858
  %v9066 = vpop.f32.mrf.mxu0
  %v9067 = vadd.f32 0.0, %v9066
  %9068 = vmatmul.f32.gmra.mxu0 %v8861
  %v9069 = vpop.f32.mrf.mxu0
  %v9070 = vadd.f32 0.0, %v9069
  %9071 = vmatmul.f32.gmra.mxu0 %v8864
  %v9072 = vpop.f32.mrf.mxu0
  %v9073 = vadd.f32 0.0, %v9072
  %9074 = vmatmul.f32.gmra.mxu0 %v8867
  %v9075 = vpop.f32.mrf.mxu0
  %v9076 = vadd.f32 0.0, %v9075
  %9077 = vmatmul.f32.gmra.mxu0 %v8870
  %v9078 = vpop.f32.mrf.mxu0
  %v9079 = vadd.f32 0.0, %v9078
  %9080 = vmatmul.f32.gmra.mxu0 %v8873
  %v9081 = vpop.f32.mrf.mxu0
  %v9082 = vadd.f32 0.0, %v9081
  %9083 = vmatmul.f32.gmra.mxu0 %v8876
  %v9084 = vpop.f32.mrf.mxu0
  %v9085 = vadd.f32 0.0, %v9084
  %9086 = vmatmul.f32.gmra.mxu0 %v8879
  %v9087 = vpop.f32.mrf.mxu0
  %v9088 = vadd.f32 0.0, %v9087
  %9089 = vmatmul.f32.gmra.mxu0 %v8882
  %v9090 = vpop.f32.mrf.mxu0
  %v9091 = vadd.f32 0.0, %v9090
  %9092 = vmatmul.f32.gmra.mxu0 %v8885
  %v9093 = vpop.f32.mrf.mxu0
  %v9094 = vadd.f32 0.0, %v9093
  %9095 = vmatmul.f32.gmra.mxu0 %v8888
  %v9096 = vpop.f32.mrf.mxu0
  %v9097 = vadd.f32 0.0, %v9096
  %9098 = vmatmul.f32.gmra.mxu0 %v8891
  %v9099 = vpop.f32.mrf.mxu0
  %v9100 = vadd.f32 0.0, %v9099
  %9101 = vmatmul.f32.gmra.mxu0 %v8894
  %v9102 = vpop.f32.mrf.mxu0
  %v9103 = vadd.f32 0.0, %v9102
  %9104 = vdwg.mxu0
  %9105 = vmatpush.xpose.msra.mxu0 %v8990
  %9106 = vmatpush.xpose.msra.mxu0 %v8987
  %9107 = vmatpush.xpose.msra.mxu0 %v8984
  %9108 = vmatpush.xpose.msra.mxu0 %v8981
  %9109 = vmatpush.xpose.msra.mxu0 %v8978
  %9110 = vmatpush.xpose.msra.mxu0 %v8975
  %9111 = vmatpush.xpose.msra.mxu0 %v8972
  %9112 = vmatpush.xpose.msra.mxu0 %v8969
  %9113 = vmatpush.xpose.msra.mxu0 %v8966
  %9114 = vmatpush.xpose.msra.mxu0 %v8963
  %9115 = vmatpush.xpose.msra.mxu0 %v8960
  %9116 = vmatpush.xpose.msra.mxu0 %v8957
  %9117 = vmatpush.xpose.msra.mxu0 %v8954
  %9118 = vmatpush.xpose.msra.mxu0 %v8951
  %9119 = vmatpush.xpose.msra.mxu0 %v8948
  %9120 = vmatpush.xpose.msra.mxu0 %v8945
  %9121 = vmatmul.f32.gmra.mxu0 %v8801
  %v9122 = vpop.f32.mrf.mxu0
  %v9123 = vadd.f32 0.0, %v9122
  %9124 = vmatmul.f32.gmra.mxu0 %v8804
  %v9125 = vpop.f32.mrf.mxu0
  %v9126 = vadd.f32 0.0, %v9125
  %9127 = vmatmul.f32.gmra.mxu0 %v8807
  %v9128 = vpop.f32.mrf.mxu0
  %v9129 = vadd.f32 0.0, %v9128
  %9130 = vmatmul.f32.gmra.mxu0 %v8810
  %v9131 = vpop.f32.mrf.mxu0
  %v9132 = vadd.f32 0.0, %v9131
  %9133 = vmatmul.f32.gmra.mxu0 %v8813
  %v9134 = vpop.f32.mrf.mxu0
  %v9135 = vadd.f32 0.0, %v9134
  %9136 = vmatmul.f32.gmra.mxu0 %v8816
  %v9137 = vpop.f32.mrf.mxu0
  %v9138 = vadd.f32 0.0, %v9137
  %9139 = vmatmul.f32.gmra.mxu0 %v8819
  %v9140 = vpop.f32.mrf.mxu0
  %v9141 = vadd.f32 0.0, %v9140
  %9142 = vmatmul.f32.gmra.mxu0 %v8822
  %v9143 = vpop.f32.mrf.mxu0
  %v9144 = vadd.f32 0.0, %v9143
  %9145 = vmatmul.f32.gmra.mxu0 %v8825
  %v9146 = vpop.f32.mrf.mxu0
  %v9147 = vadd.f32 0.0, %v9146
  %9148 = vmatmul.f32.gmra.mxu0 %v8828
  %v9149 = vpop.f32.mrf.mxu0
  %v9150 = vadd.f32 0.0, %v9149
  %9151 = vmatmul.f32.gmra.mxu0 %v8831
  %v9152 = vpop.f32.mrf.mxu0
  %v9153 = vadd.f32 0.0, %v9152
  %9154 = vmatmul.f32.gmra.mxu0 %v8834
  %v9155 = vpop.f32.mrf.mxu0
  %v9156 = vadd.f32 0.0, %v9155
  %9157 = vmatmul.f32.gmra.mxu0 %v8837
  %v9158 = vpop.f32.mrf.mxu0
  %v9159 = vadd.f32 0.0, %v9158
  %9160 = vmatmul.f32.gmra.mxu0 %v8840
  %v9161 = vpop.f32.mrf.mxu0
  %v9162 = vadd.f32 0.0, %v9161
  %9163 = vmatmul.f32.gmra.mxu0 %v8843
  %v9164 = vpop.f32.mrf.mxu0
  %v9165 = vadd.f32 0.0, %v9164
  %9166 = vmatmul.f32.gmra.mxu0 %v8846
  %v9167 = vpop.f32.mrf.mxu0
  %v9168 = vadd.f32 0.0, %v9167
  %9169 = vmatmul.f32.gmra.mxu0 %v8849
  %v9170 = vpop.f32.mrf.mxu0
  %v9171 = vadd.f32 0.0, %v9170
  %9172 = vmatmul.f32.gmra.mxu0 %v8852
  %v9173 = vpop.f32.mrf.mxu0
  %v9174 = vadd.f32 0.0, %v9173
  %9175 = vmatmul.f32.gmra.mxu0 %v8855
  %v9176 = vpop.f32.mrf.mxu0
  %v9177 = vadd.f32 0.0, %v9176
  %9178 = vmatmul.f32.gmra.mxu0 %v8858
  %v9179 = vpop.f32.mrf.mxu0
  %v9180 = vadd.f32 0.0, %v9179
  %9181 = vmatmul.f32.gmra.mxu0 %v8861
  %v9182 = vpop.f32.mrf.mxu0
  %v9183 = vadd.f32 0.0, %v9182
  %9184 = vmatmul.f32.gmra.mxu0 %v8864
  %v9185 = vpop.f32.mrf.mxu0
  %v9186 = vadd.f32 0.0, %v9185
  %9187 = vmatmul.f32.gmra.mxu0 %v8867
  %v9188 = vpop.f32.mrf.mxu0
  %v9189 = vadd.f32 0.0, %v9188
  %9190 = vmatmul.f32.gmra.mxu0 %v8870
  %v9191 = vpop.f32.mrf.mxu0
  %v9192 = vadd.f32 0.0, %v9191
  %9193 = vmatmul.f32.gmra.mxu0 %v8873
  %v9194 = vpop.f32.mrf.mxu0
  %v9195 = vadd.f32 0.0, %v9194
  %9196 = vmatmul.f32.gmra.mxu0 %v8876
  %v9197 = vpop.f32.mrf.mxu0
  %v9198 = vadd.f32 0.0, %v9197
  %9199 = vmatmul.f32.gmra.mxu0 %v8879
  %v9200 = vpop.f32.mrf.mxu0
  %v9201 = vadd.f32 0.0, %v9200
  %9202 = vmatmul.f32.gmra.mxu0 %v8882
  %v9203 = vpop.f32.mrf.mxu0
  %v9204 = vadd.f32 0.0, %v9203
  %9205 = vmatmul.f32.gmra.mxu0 %v8885
  %v9206 = vpop.f32.mrf.mxu0
  %v9207 = vadd.f32 0.0, %v9206
  %9208 = vmatmul.f32.gmra.mxu0 %v8888
  %v9209 = vpop.f32.mrf.mxu0
  %v9210 = vadd.f32 0.0, %v9209
  %9211 = vmatmul.f32.gmra.mxu0 %v8891
  %v9212 = vpop.f32.mrf.mxu0
  %v9213 = vadd.f32 0.0, %v9212
  %9214 = vmatmul.f32.gmra.mxu0 %v8894
  %v9215 = vpop.f32.mrf.mxu0
  %v9216 = vadd.f32 0.0, %v9215
  %9217 = vdwg.mxu0
  %v9218 = vmul.f32 %v9010, 0.35355338
  %v9219 = vmul.f32 %v9123, 0.35355338
  %v9220 = vmul.f32 %v9013, 0.35355338
  %v9221 = vmul.f32 %v9126, 0.35355338
  %v9222 = vmul.f32 %v9016, 0.35355338
  %v9223 = vmul.f32 %v9129, 0.35355338
  %v9224 = vmul.f32 %v9019, 0.35355338
  %v9225 = vmul.f32 %v9132, 0.35355338
  %v9226 = vmul.f32 %v9022, 0.35355338
  %v9227 = vmul.f32 %v9135, 0.35355338
  %v9228 = vmul.f32 %v9025, 0.35355338
  %v9229 = vmul.f32 %v9138, 0.35355338
  %v9230 = vmul.f32 %v9028, 0.35355338
  %v9231 = vmul.f32 %v9141, 0.35355338
  %v9232 = vmul.f32 %v9031, 0.35355338
  %v9233 = vmul.f32 %v9144, 0.35355338
  %v9234 = vmul.f32 %v9034, 0.35355338
  %v9235 = vmul.f32 %v9147, 0.35355338
  %v9236 = vmul.f32 %v9037, 0.35355338
  %v9237 = vmul.f32 %v9150, 0.35355338
  %v9238 = vmul.f32 %v9040, 0.35355338
  %v9239 = vmul.f32 %v9153, 0.35355338
  %v9240 = vmul.f32 %v9043, 0.35355338
  %v9241 = vmul.f32 %v9156, 0.35355338
  %v9242 = vmul.f32 %v9046, 0.35355338
  %v9243 = vmul.f32 %v9159, 0.35355338
  %v9244 = vmul.f32 %v9049, 0.35355338
  %v9245 = vmul.f32 %v9162, 0.35355338
  %v9246 = vmul.f32 %v9052, 0.35355338
  %v9247 = vmul.f32 %v9165, 0.35355338
  %v9248 = vmul.f32 %v9055, 0.35355338
  %v9249 = vmul.f32 %v9168, 0.35355338
  %v9250 = vmul.f32 %v9058, 0.35355338
  %v9251 = vmul.f32 %v9171, 0.35355338
  %v9252 = vmul.f32 %v9061, 0.35355338
  %v9253 = vmul.f32 %v9174, 0.35355338
  %v9254 = vmul.f32 %v9064, 0.35355338
  %v9255 = vmul.f32 %v9177, 0.35355338
  %v9256 = vmul.f32 %v9067, 0.35355338
  %v9257 = vmul.f32 %v9180, 0.35355338
  %v9258 = vmul.f32 %v9070, 0.35355338
  %v9259 = vmul.f32 %v9183, 0.35355338
  %v9260 = vmul.f32 %v9073, 0.35355338
  %v9261 = vmul.f32 %v9186, 0.35355338
  %v9262 = vmul.f32 %v9076, 0.35355338
  %v9263 = vmul.f32 %v9189, 0.35355338
  %v9264 = vmul.f32 %v9079, 0.35355338
  %v9265 = vmul.f32 %v9192, 0.35355338
  %v9266 = vmul.f32 %v9082, 0.35355338
  %v9267 = vmul.f32 %v9195, 0.35355338
  %v9268 = vmul.f32 %v9085, 0.35355338
  %v9269 = vmul.f32 %v9198, 0.35355338
  %v9270 = vmul.f32 %v9088, 0.35355338
  %v9271 = vmul.f32 %v9201, 0.35355338
  %v9272 = vmul.f32 %v9091, 0.35355338
  %v9273 = vmul.f32 %v9204, 0.35355338
  %v9274 = vmul.f32 %v9094, 0.35355338
  %v9275 = vmul.f32 %v9207, 0.35355338
  %v9276 = vmul.f32 %v9097, 0.35355338
  %v9277 = vmul.f32 %v9210, 0.35355338
  %v9278 = vmul.f32 %v9100, 0.35355338
  %v9279 = vmul.f32 %v9213, 0.35355338
  %v9280 = vmul.f32 %v9103, 0.35355338
  %v9281 = vmul.f32 %v9216, 0.35355338
  %v9282 = vmax.f32 %v9218, %v9219
  %9283 = vmax.xlane.f32.xlu0 %v9282
  %v9284 = vpop.xlane.xlu0 %9283
  %v9285 = vmax.f32 %v9220, %v9221
  %9286 = vmax.xlane.f32.xlu0 %v9285
  %v9287 = vpop.xlane.xlu0 %9286
  %v9288 = vmax.f32 %v9222, %v9223
  %9289 = vmax.xlane.f32.xlu0 %v9288
  %v9290 = vpop.xlane.xlu0 %9289
  %v9291 = vmax.f32 %v9224, %v9225
  %9292 = vmax.xlane.f32.xlu0 %v9291
  %v9293 = vpop.xlane.xlu0 %9292
  %v9294 = vmax.f32 %v9226, %v9227
  %9295 = vmax.xlane.f32.xlu0 %v9294
  %v9296 = vpop.xlane.xlu0 %9295
  %v9297 = vmax.f32 %v9228, %v9229
  %9298 = vmax.xlane.f32.xlu0 %v9297
  %v9299 = vpop.xlane.xlu0 %9298
  %v9300 = vmax.f32 %v9230, %v9231
  %9301 = vmax.xlane.f32.xlu0 %v9300
  %v9302 = vpop.xlane.xlu0 %9301
  %v9303 = vmax.f32 %v9232, %v9233
  %9304 = vmax.xlane.f32.xlu0 %v9303
  %v9305 = vpop.xlane.xlu0 %9304
  %v9306 = vmax.f32 %v9234, %v9235
  %9307 = vmax.xlane.f32.xlu0 %v9306
  %v9308 = vpop.xlane.xlu0 %9307
  %v9309 = vmax.f32 %v9236, %v9237
  %9310 = vmax.xlane.f32.xlu0 %v9309
  %v9311 = vpop.xlane.xlu0 %9310
  %v9312 = vmax.f32 %v9238, %v9239
  %9313 = vmax.xlane.f32.xlu0 %v9312
  %v9314 = vpop.xlane.xlu0 %9313
  %v9315 = vmax.f32 %v9240, %v9241
  %9316 = vmax.xlane.f32.xlu0 %v9315
  %v9317 = vpop.xlane.xlu0 %9316
  %v9318 = vmax.f32 %v9242, %v9243
  %9319 = vmax.xlane.f32.xlu0 %v9318
  %v9320 = vpop.xlane.xlu0 %9319
  %v9321 = vmax.f32 %v9244, %v9245
  %9322 = vmax.xlane.f32.xlu0 %v9321
  %v9323 = vpop.xlane.xlu0 %9322
  %v9324 = vmax.f32 %v9246, %v9247
  %9325 = vmax.xlane.f32.xlu0 %v9324
  %v9326 = vpop.xlane.xlu0 %9325
  %v9327 = vmax.f32 %v9248, %v9249
  %9328 = vmax.xlane.f32.xlu0 %v9327
  %v9329 = vpop.xlane.xlu0 %9328
  %v9330 = vmax.f32 %v9250, %v9251
  %9331 = vmax.xlane.f32.xlu0 %v9330
  %v9332 = vpop.xlane.xlu0 %9331
  %v9333 = vmax.f32 %v9252, %v9253
  %9334 = vmax.xlane.f32.xlu0 %v9333
  %v9335 = vpop.xlane.xlu0 %9334
  %v9336 = vmax.f32 %v9254, %v9255
  %9337 = vmax.xlane.f32.xlu0 %v9336
  %v9338 = vpop.xlane.xlu0 %9337
  %v9339 = vmax.f32 %v9256, %v9257
  %9340 = vmax.xlane.f32.xlu0 %v9339
  %v9341 = vpop.xlane.xlu0 %9340
  %v9342 = vmax.f32 %v9258, %v9259
  %9343 = vmax.xlane.f32.xlu0 %v9342
  %v9344 = vpop.xlane.xlu0 %9343
  %v9345 = vmax.f32 %v9260, %v9261
  %9346 = vmax.xlane.f32.xlu0 %v9345
  %v9347 = vpop.xlane.xlu0 %9346
  %v9348 = vmax.f32 %v9262, %v9263
  %9349 = vmax.xlane.f32.xlu0 %v9348
  %v9350 = vpop.xlane.xlu0 %9349
  %v9351 = vmax.f32 %v9264, %v9265
  %9352 = vmax.xlane.f32.xlu0 %v9351
  %v9353 = vpop.xlane.xlu0 %9352
  %v9354 = vmax.f32 %v9266, %v9267
  %9355 = vmax.xlane.f32.xlu0 %v9354
  %v9356 = vpop.xlane.xlu0 %9355
  %v9357 = vmax.f32 %v9268, %v9269
  %9358 = vmax.xlane.f32.xlu0 %v9357
  %v9359 = vpop.xlane.xlu0 %9358
  %v9360 = vmax.f32 %v9270, %v9271
  %9361 = vmax.xlane.f32.xlu0 %v9360
  %v9362 = vpop.xlane.xlu0 %9361
  %v9363 = vmax.f32 %v9272, %v9273
  %9364 = vmax.xlane.f32.xlu0 %v9363
  %v9365 = vpop.xlane.xlu0 %9364
  %v9366 = vmax.f32 %v9274, %v9275
  %9367 = vmax.xlane.f32.xlu0 %v9366
  %v9368 = vpop.xlane.xlu0 %9367
  %v9369 = vmax.f32 %v9276, %v9277
  %9370 = vmax.xlane.f32.xlu0 %v9369
  %v9371 = vpop.xlane.xlu0 %9370
  %v9372 = vmax.f32 %v9278, %v9279
  %9373 = vmax.xlane.f32.xlu0 %v9372
  %v9374 = vpop.xlane.xlu0 %9373
  %v9375 = vmax.f32 %v9280, %v9281
  %9376 = vmax.xlane.f32.xlu0 %v9375
  %v9377 = vpop.xlane.xlu0 %9376
  %v9378 = vsub.f32 %v9218, %v9284
  %v9379 = vsub.f32 %v9219, %v9284
  %v9380 = vsub.f32 %v9220, %v9287
  %v9381 = vsub.f32 %v9221, %v9287
  %v9382 = vsub.f32 %v9222, %v9290
  %v9383 = vsub.f32 %v9223, %v9290
  %v9384 = vsub.f32 %v9224, %v9293
  %v9385 = vsub.f32 %v9225, %v9293
  %v9386 = vsub.f32 %v9226, %v9296
  %v9387 = vsub.f32 %v9227, %v9296
  %v9388 = vsub.f32 %v9228, %v9299
  %v9389 = vsub.f32 %v9229, %v9299
  %v9390 = vsub.f32 %v9230, %v9302
  %v9391 = vsub.f32 %v9231, %v9302
  %v9392 = vsub.f32 %v9232, %v9305
  %v9393 = vsub.f32 %v9233, %v9305
  %v9394 = vsub.f32 %v9234, %v9308
  %v9395 = vsub.f32 %v9235, %v9308
  %v9396 = vsub.f32 %v9236, %v9311
  %v9397 = vsub.f32 %v9237, %v9311
  %v9398 = vsub.f32 %v9238, %v9314
  %v9399 = vsub.f32 %v9239, %v9314
  %v9400 = vsub.f32 %v9240, %v9317
  %v9401 = vsub.f32 %v9241, %v9317
  %v9402 = vsub.f32 %v9242, %v9320
  %v9403 = vsub.f32 %v9243, %v9320
  %v9404 = vsub.f32 %v9244, %v9323
  %v9405 = vsub.f32 %v9245, %v9323
  %v9406 = vsub.f32 %v9246, %v9326
  %v9407 = vsub.f32 %v9247, %v9326
  %v9408 = vsub.f32 %v9248, %v9329
  %v9409 = vsub.f32 %v9249, %v9329
  %v9410 = vsub.f32 %v9250, %v9332
  %v9411 = vsub.f32 %v9251, %v9332
  %v9412 = vsub.f32 %v9252, %v9335
  %v9413 = vsub.f32 %v9253, %v9335
  %v9414 = vsub.f32 %v9254, %v9338
  %v9415 = vsub.f32 %v9255, %v9338
  %v9416 = vsub.f32 %v9256, %v9341
  %v9417 = vsub.f32 %v9257, %v9341
  %v9418 = vsub.f32 %v9258, %v9344
  %v9419 = vsub.f32 %v9259, %v9344
  %v9420 = vsub.f32 %v9260, %v9347
  %v9421 = vsub.f32 %v9261, %v9347
  %v9422 = vsub.f32 %v9262, %v9350
  %v9423 = vsub.f32 %v9263, %v9350
  %v9424 = vsub.f32 %v9264, %v9353
  %v9425 = vsub.f32 %v9265, %v9353
  %v9426 = vsub.f32 %v9266, %v9356
  %v9427 = vsub.f32 %v9267, %v9356
  %v9428 = vsub.f32 %v9268, %v9359
  %v9429 = vsub.f32 %v9269, %v9359
  %v9430 = vsub.f32 %v9270, %v9362
  %v9431 = vsub.f32 %v9271, %v9362
  %v9432 = vsub.f32 %v9272, %v9365
  %v9433 = vsub.f32 %v9273, %v9365
  %v9434 = vsub.f32 %v9274, %v9368
  %v9435 = vsub.f32 %v9275, %v9368
  %v9436 = vsub.f32 %v9276, %v9371
  %v9437 = vsub.f32 %v9277, %v9371
  %v9438 = vsub.f32 %v9278, %v9374
  %v9439 = vsub.f32 %v9279, %v9374
  %v9440 = vsub.f32 %v9280, %v9377
  %v9441 = vsub.f32 %v9281, %v9377
  %v9442 = vmul.f32 %v9378, 1.442695
  %v9443 = vpow.pop %v9442
  %v9444 = vmul.f32 %v9379, 1.442695
  %v9445 = vpow.pop %v9444
  %v9446 = vmul.f32 %v9380, 1.442695
  %v9447 = vpow.pop %v9446
  %v9448 = vmul.f32 %v9381, 1.442695
  %v9449 = vpow.pop %v9448
  %v9450 = vmul.f32 %v9382, 1.442695
  %v9451 = vpow.pop %v9450
  %v9452 = vmul.f32 %v9383, 1.442695
  %v9453 = vpow.pop %v9452
  %v9454 = vmul.f32 %v9384, 1.442695
  %v9455 = vpow.pop %v9454
  %v9456 = vmul.f32 %v9385, 1.442695
  %v9457 = vpow.pop %v9456
  %v9458 = vmul.f32 %v9386, 1.442695
  %v9459 = vpow.pop %v9458
  %v9460 = vmul.f32 %v9387, 1.442695
  %v9461 = vpow.pop %v9460
  %v9462 = vmul.f32 %v9388, 1.442695
  %v9463 = vpow.pop %v9462
  %v9464 = vmul.f32 %v9389, 1.442695
  %v9465 = vpow.pop %v9464
  %v9466 = vmul.f32 %v9390, 1.442695
  %v9467 = vpow.pop %v9466
  %v9468 = vmul.f32 %v9391, 1.442695
  %v9469 = vpow.pop %v9468
  %v9470 = vmul.f32 %v9392, 1.442695
  %v9471 = vpow.pop %v9470
  %v9472 = vmul.f32 %v9393, 1.442695
  %v9473 = vpow.pop %v9472
  %v9474 = vmul.f32 %v9394, 1.442695
  %v9475 = vpow.pop %v9474
  %v9476 = vmul.f32 %v9395, 1.442695
  %v9477 = vpow.pop %v9476
  %v9478 = vmul.f32 %v9396, 1.442695
  %v9479 = vpow.pop %v9478
  %v9480 = vmul.f32 %v9397, 1.442695
  %v9481 = vpow.pop %v9480
  %v9482 = vmul.f32 %v9398, 1.442695
  %v9483 = vpow.pop %v9482
  %v9484 = vmul.f32 %v9399, 1.442695
  %v9485 = vpow.pop %v9484
  %v9486 = vmul.f32 %v9400, 1.442695
  %v9487 = vpow.pop %v9486
  %v9488 = vmul.f32 %v9401, 1.442695
  %v9489 = vpow.pop %v9488
  %v9490 = vmul.f32 %v9402, 1.442695
  %v9491 = vpow.pop %v9490
  %v9492 = vmul.f32 %v9403, 1.442695
  %v9493 = vpow.pop %v9492
  %v9494 = vmul.f32 %v9404, 1.442695
  %v9495 = vpow.pop %v9494
  %v9496 = vmul.f32 %v9405, 1.442695
  %v9497 = vpow.pop %v9496
  %v9498 = vmul.f32 %v9406, 1.442695
  %v9499 = vpow.pop %v9498
  %v9500 = vmul.f32 %v9407, 1.442695
  %v9501 = vpow.pop %v9500
  %v9502 = vmul.f32 %v9408, 1.442695
  %v9503 = vpow.pop %v9502
  %v9504 = vmul.f32 %v9409, 1.442695
  %v9505 = vpow.pop %v9504
  %v9506 = vmul.f32 %v9410, 1.442695
  %v9507 = vpow.pop %v9506
  %v9508 = vmul.f32 %v9411, 1.442695
  %v9509 = vpow.pop %v9508
  %v9510 = vmul.f32 %v9412, 1.442695
  %v9511 = vpow.pop %v9510
  %v9512 = vmul.f32 %v9413, 1.442695
  %v9513 = vpow.pop %v9512
  %v9514 = vmul.f32 %v9414, 1.442695
  %v9515 = vpow.pop %v9514
  %v9516 = vmul.f32 %v9415, 1.442695
  %v9517 = vpow.pop %v9516
  %v9518 = vmul.f32 %v9416, 1.442695
  %v9519 = vpow.pop %v9518
  %v9520 = vmul.f32 %v9417, 1.442695
  %v9521 = vpow.pop %v9520
  %v9522 = vmul.f32 %v9418, 1.442695
  %v9523 = vpow.pop %v9522
  %v9524 = vmul.f32 %v9419, 1.442695
  %v9525 = vpow.pop %v9524
  %v9526 = vmul.f32 %v9420, 1.442695
  %v9527 = vpow.pop %v9526
  %v9528 = vmul.f32 %v9421, 1.442695
  %v9529 = vpow.pop %v9528
  %v9530 = vmul.f32 %v9422, 1.442695
  %v9531 = vpow.pop %v9530
  %v9532 = vmul.f32 %v9423, 1.442695
  %v9533 = vpow.pop %v9532
  %v9534 = vmul.f32 %v9424, 1.442695
  %v9535 = vpow.pop %v9534
  %v9536 = vmul.f32 %v9425, 1.442695
  %v9537 = vpow.pop %v9536
  %v9538 = vmul.f32 %v9426, 1.442695
  %v9539 = vpow.pop %v9538
  %v9540 = vmul.f32 %v9427, 1.442695
  %v9541 = vpow.pop %v9540
  %v9542 = vmul.f32 %v9428, 1.442695
  %v9543 = vpow.pop %v9542
  %v9544 = vmul.f32 %v9429, 1.442695
  %v9545 = vpow.pop %v9544
  %v9546 = vmul.f32 %v9430, 1.442695
  %v9547 = vpow.pop %v9546
  %v9548 = vmul.f32 %v9431, 1.442695
  %v9549 = vpow.pop %v9548
  %v9550 = vmul.f32 %v9432, 1.442695
  %v9551 = vpow.pop %v9550
  %v9552 = vmul.f32 %v9433, 1.442695
  %v9553 = vpow.pop %v9552
  %v9554 = vmul.f32 %v9434, 1.442695
  %v9555 = vpow.pop %v9554
  %v9556 = vmul.f32 %v9435, 1.442695
  %v9557 = vpow.pop %v9556
  %v9558 = vmul.f32 %v9436, 1.442695
  %v9559 = vpow.pop %v9558
  %v9560 = vmul.f32 %v9437, 1.442695
  %v9561 = vpow.pop %v9560
  %v9562 = vmul.f32 %v9438, 1.442695
  %v9563 = vpow.pop %v9562
  %v9564 = vmul.f32 %v9439, 1.442695
  %v9565 = vpow.pop %v9564
  %v9566 = vmul.f32 %v9440, 1.442695
  %v9567 = vpow.pop %v9566
  %v9568 = vmul.f32 %v9441, 1.442695
  %v9569 = vpow.pop %v9568
  %v9570 = vadd.f32 %v9443, %v9445
  %9571 = vadd.xlane.f32.xlu0 %v9570
  %v9572 = vpop.xlane.xlu0 %9571
  %v9573 = vadd.f32 %v9447, %v9449
  %9574 = vadd.xlane.f32.xlu0 %v9573
  %v9575 = vpop.xlane.xlu0 %9574
  %v9576 = vadd.f32 %v9451, %v9453
  %9577 = vadd.xlane.f32.xlu0 %v9576
  %v9578 = vpop.xlane.xlu0 %9577
  %v9579 = vadd.f32 %v9455, %v9457
  %9580 = vadd.xlane.f32.xlu0 %v9579
  %v9581 = vpop.xlane.xlu0 %9580
  %v9582 = vadd.f32 %v9459, %v9461
  %9583 = vadd.xlane.f32.xlu0 %v9582
  %v9584 = vpop.xlane.xlu0 %9583
  %v9585 = vadd.f32 %v9463, %v9465
  %9586 = vadd.xlane.f32.xlu0 %v9585
  %v9587 = vpop.xlane.xlu0 %9586
  %v9588 = vadd.f32 %v9467, %v9469
  %9589 = vadd.xlane.f32.xlu0 %v9588
  %v9590 = vpop.xlane.xlu0 %9589
  %v9591 = vadd.f32 %v9471, %v9473
  %9592 = vadd.xlane.f32.xlu0 %v9591
  %v9593 = vpop.xlane.xlu0 %9592
  %v9594 = vadd.f32 %v9475, %v9477
  %9595 = vadd.xlane.f32.xlu0 %v9594
  %v9596 = vpop.xlane.xlu0 %9595
  %v9597 = vadd.f32 %v9479, %v9481
  %9598 = vadd.xlane.f32.xlu0 %v9597
  %v9599 = vpop.xlane.xlu0 %9598
  %v9600 = vadd.f32 %v9483, %v9485
  %9601 = vadd.xlane.f32.xlu0 %v9600
  %v9602 = vpop.xlane.xlu0 %9601
  %v9603 = vadd.f32 %v9487, %v9489
  %9604 = vadd.xlane.f32.xlu0 %v9603
  %v9605 = vpop.xlane.xlu0 %9604
  %v9606 = vadd.f32 %v9491, %v9493
  %9607 = vadd.xlane.f32.xlu0 %v9606
  %v9608 = vpop.xlane.xlu0 %9607
  %v9609 = vadd.f32 %v9495, %v9497
  %9610 = vadd.xlane.f32.xlu0 %v9609
  %v9611 = vpop.xlane.xlu0 %9610
  %v9612 = vadd.f32 %v9499, %v9501
  %9613 = vadd.xlane.f32.xlu0 %v9612
  %v9614 = vpop.xlane.xlu0 %9613
  %v9615 = vadd.f32 %v9503, %v9505
  %9616 = vadd.xlane.f32.xlu0 %v9615
  %v9617 = vpop.xlane.xlu0 %9616
  %v9618 = vadd.f32 %v9507, %v9509
  %9619 = vadd.xlane.f32.xlu0 %v9618
  %v9620 = vpop.xlane.xlu0 %9619
  %v9621 = vadd.f32 %v9511, %v9513
  %9622 = vadd.xlane.f32.xlu0 %v9621
  %v9623 = vpop.xlane.xlu0 %9622
  %v9624 = vadd.f32 %v9515, %v9517
  %9625 = vadd.xlane.f32.xlu0 %v9624
  %v9626 = vpop.xlane.xlu0 %9625
  %v9627 = vadd.f32 %v9519, %v9521
  %9628 = vadd.xlane.f32.xlu0 %v9627
  %v9629 = vpop.xlane.xlu0 %9628
  %v9630 = vadd.f32 %v9523, %v9525
  %9631 = vadd.xlane.f32.xlu0 %v9630
  %v9632 = vpop.xlane.xlu0 %9631
  %v9633 = vadd.f32 %v9527, %v9529
  %9634 = vadd.xlane.f32.xlu0 %v9633
  %v9635 = vpop.xlane.xlu0 %9634
  %v9636 = vadd.f32 %v9531, %v9533
  %9637 = vadd.xlane.f32.xlu0 %v9636
  %v9638 = vpop.xlane.xlu0 %9637
  %v9639 = vadd.f32 %v9535, %v9537
  %9640 = vadd.xlane.f32.xlu0 %v9639
  %v9641 = vpop.xlane.xlu0 %9640
  %v9642 = vadd.f32 %v9539, %v9541
  %9643 = vadd.xlane.f32.xlu0 %v9642
  %v9644 = vpop.xlane.xlu0 %9643
  %v9645 = vadd.f32 %v9543, %v9545
  %9646 = vadd.xlane.f32.xlu0 %v9645
  %v9647 = vpop.xlane.xlu0 %9646
  %v9648 = vadd.f32 %v9547, %v9549
  %9649 = vadd.xlane.f32.xlu0 %v9648
  %v9650 = vpop.xlane.xlu0 %9649
  %v9651 = vadd.f32 %v9551, %v9553
  %9652 = vadd.xlane.f32.xlu0 %v9651
  %v9653 = vpop.xlane.xlu0 %9652
  %v9654 = vadd.f32 %v9555, %v9557
  %9655 = vadd.xlane.f32.xlu0 %v9654
  %v9656 = vpop.xlane.xlu0 %9655
  %v9657 = vadd.f32 %v9559, %v9561
  %9658 = vadd.xlane.f32.xlu0 %v9657
  %v9659 = vpop.xlane.xlu0 %9658
  %v9660 = vadd.f32 %v9563, %v9565
  %9661 = vadd.xlane.f32.xlu0 %v9660
  %v9662 = vpop.xlane.xlu0 %9661
  %v9663 = vadd.f32 %v9567, %v9569
  %9664 = vadd.xlane.f32.xlu0 %v9663
  %v9665 = vpop.xlane.xlu0 %9664
  %v9666 = vrcp.pop %v9572
  %v9667 = vrcp.pop %v9575
  %v9668 = vrcp.pop %v9578
  %v9669 = vrcp.pop %v9581
  %v9670 = vrcp.pop %v9584
  %v9671 = vrcp.pop %v9587
  %v9672 = vrcp.pop %v9590
  %v9673 = vrcp.pop %v9593
  %v9674 = vrcp.pop %v9596
  %v9675 = vrcp.pop %v9599
  %v9676 = vrcp.pop %v9602
  %v9677 = vrcp.pop %v9605
  %v9678 = vrcp.pop %v9608
  %v9679 = vrcp.pop %v9611
  %v9680 = vrcp.pop %v9614
  %v9681 = vrcp.pop %v9617
  %v9682 = vrcp.pop %v9620
  %v9683 = vrcp.pop %v9623
  %v9684 = vrcp.pop %v9626
  %v9685 = vrcp.pop %v9629
  %v9686 = vrcp.pop %v9632
  %v9687 = vrcp.pop %v9635
  %v9688 = vrcp.pop %v9638
  %v9689 = vrcp.pop %v9641
  %v9690 = vrcp.pop %v9644
  %v9691 = vrcp.pop %v9647
  %v9692 = vrcp.pop %v9650
  %v9693 = vrcp.pop %v9653
  %v9694 = vrcp.pop %v9656
  %v9695 = vrcp.pop %v9659
  %v9696 = vrcp.pop %v9662
  %v9697 = vrcp.pop %v9665
  %v9698 = vmul.f32 %v9443, %v9666
  %v9699 = vmul.f32 %v9445, %v9666
  %v9700 = vmul.f32 %v9447, %v9667
  %v9701 = vmul.f32 %v9449, %v9667
  %v9702 = vmul.f32 %v9451, %v9668
  %v9703 = vmul.f32 %v9453, %v9668
  %v9704 = vmul.f32 %v9455, %v9669
  %v9705 = vmul.f32 %v9457, %v9669
  %v9706 = vmul.f32 %v9459, %v9670
  %v9707 = vmul.f32 %v9461, %v9670
  %v9708 = vmul.f32 %v9463, %v9671
  %v9709 = vmul.f32 %v9465, %v9671
  %v9710 = vmul.f32 %v9467, %v9672
  %v9711 = vmul.f32 %v9469, %v9672
  %v9712 = vmul.f32 %v9471, %v9673
  %v9713 = vmul.f32 %v9473, %v9673
  %v9714 = vmul.f32 %v9475, %v9674
  %v9715 = vmul.f32 %v9477, %v9674
  %v9716 = vmul.f32 %v9479, %v9675
  %v9717 = vmul.f32 %v9481, %v9675
  %v9718 = vmul.f32 %v9483, %v9676
  %v9719 = vmul.f32 %v9485, %v9676
  %v9720 = vmul.f32 %v9487, %v9677
  %v9721 = vmul.f32 %v9489, %v9677
  %v9722 = vmul.f32 %v9491, %v9678
  %v9723 = vmul.f32 %v9493, %v9678
  %v9724 = vmul.f32 %v9495, %v9679
  %v9725 = vmul.f32 %v9497, %v9679
  %v9726 = vmul.f32 %v9499, %v9680
  %v9727 = vmul.f32 %v9501, %v9680
  %v9728 = vmul.f32 %v9503, %v9681
  %v9729 = vmul.f32 %v9505, %v9681
  %v9730 = vmul.f32 %v9507, %v9682
  %v9731 = vmul.f32 %v9509, %v9682
  %v9732 = vmul.f32 %v9511, %v9683
  %v9733 = vmul.f32 %v9513, %v9683
  %v9734 = vmul.f32 %v9515, %v9684
  %v9735 = vmul.f32 %v9517, %v9684
  %v9736 = vmul.f32 %v9519, %v9685
  %v9737 = vmul.f32 %v9521, %v9685
  %v9738 = vmul.f32 %v9523, %v9686
  %v9739 = vmul.f32 %v9525, %v9686
  %v9740 = vmul.f32 %v9527, %v9687
  %v9741 = vmul.f32 %v9529, %v9687
  %v9742 = vmul.f32 %v9531, %v9688
  %v9743 = vmul.f32 %v9533, %v9688
  %v9744 = vmul.f32 %v9535, %v9689
  %v9745 = vmul.f32 %v9537, %v9689
  %v9746 = vmul.f32 %v9539, %v9690
  %v9747 = vmul.f32 %v9541, %v9690
  %v9748 = vmul.f32 %v9543, %v9691
  %v9749 = vmul.f32 %v9545, %v9691
  %v9750 = vmul.f32 %v9547, %v9692
  %v9751 = vmul.f32 %v9549, %v9692
  %v9752 = vmul.f32 %v9551, %v9693
  %v9753 = vmul.f32 %v9553, %v9693
  %v9754 = vmul.f32 %v9555, %v9694
  %v9755 = vmul.f32 %v9557, %v9694
  %v9756 = vmul.f32 %v9559, %v9695
  %v9757 = vmul.f32 %v9561, %v9695
  %v9758 = vmul.f32 %v9563, %v9696
  %v9759 = vmul.f32 %v9565, %v9696
  %v9760 = vmul.f32 %v9567, %v9697
  %v9761 = vmul.f32 %v9569, %v9697
  %9762 = vmatpush.msra.mxu0 %v8750
  %9763 = vmatpush.msra.mxu0 %v8747
  %9764 = vmatpush.msra.mxu0 %v8744
  %9765 = vmatpush.msra.mxu0 %v8741
  %9766 = vmatpush.msra.mxu0 %v8738
  %9767 = vmatpush.msra.mxu0 %v8735
  %9768 = vmatpush.msra.mxu0 %v8732
  %9769 = vmatpush.msra.mxu0 %v8729
  %9770 = vmatpush.msra.mxu0 %v8726
  %9771 = vmatpush.msra.mxu0 %v8723
  %9772 = vmatpush.msra.mxu0 %v8720
  %9773 = vmatpush.msra.mxu0 %v8717
  %9774 = vmatpush.msra.mxu0 %v8714
  %9775 = vmatpush.msra.mxu0 %v8711
  %9776 = vmatpush.msra.mxu0 %v8708
  %9777 = vmatpush.msra.mxu0 %v8705
  %9778 = vmatmul.f32.gmra.mxu0 %v9698
  %v9779 = vpop.f32.mrf.mxu0
  %v9780 = vadd.f32 0.0, %v9779
  %9781 = vmatmul.f32.gmra.mxu0 %v9700
  %v9782 = vpop.f32.mrf.mxu0
  %v9783 = vadd.f32 0.0, %v9782
  %9784 = vmatmul.f32.gmra.mxu0 %v9702
  %v9785 = vpop.f32.mrf.mxu0
  %v9786 = vadd.f32 0.0, %v9785
  %9787 = vmatmul.f32.gmra.mxu0 %v9704
  %v9788 = vpop.f32.mrf.mxu0
  %v9789 = vadd.f32 0.0, %v9788
  %9790 = vmatmul.f32.gmra.mxu0 %v9706
  %v9791 = vpop.f32.mrf.mxu0
  %v9792 = vadd.f32 0.0, %v9791
  %9793 = vmatmul.f32.gmra.mxu0 %v9708
  %v9794 = vpop.f32.mrf.mxu0
  %v9795 = vadd.f32 0.0, %v9794
  %9796 = vmatmul.f32.gmra.mxu0 %v9710
  %v9797 = vpop.f32.mrf.mxu0
  %v9798 = vadd.f32 0.0, %v9797
  %9799 = vmatmul.f32.gmra.mxu0 %v9712
  %v9800 = vpop.f32.mrf.mxu0
  %v9801 = vadd.f32 0.0, %v9800
  %9802 = vmatmul.f32.gmra.mxu0 %v9714
  %v9803 = vpop.f32.mrf.mxu0
  %v9804 = vadd.f32 0.0, %v9803
  %9805 = vmatmul.f32.gmra.mxu0 %v9716
  %v9806 = vpop.f32.mrf.mxu0
  %v9807 = vadd.f32 0.0, %v9806
  %9808 = vmatmul.f32.gmra.mxu0 %v9718
  %v9809 = vpop.f32.mrf.mxu0
  %v9810 = vadd.f32 0.0, %v9809
  %9811 = vmatmul.f32.gmra.mxu0 %v9720
  %v9812 = vpop.f32.mrf.mxu0
  %v9813 = vadd.f32 0.0, %v9812
  %9814 = vmatmul.f32.gmra.mxu0 %v9722
  %v9815 = vpop.f32.mrf.mxu0
  %v9816 = vadd.f32 0.0, %v9815
  %9817 = vmatmul.f32.gmra.mxu0 %v9724
  %v9818 = vpop.f32.mrf.mxu0
  %v9819 = vadd.f32 0.0, %v9818
  %9820 = vmatmul.f32.gmra.mxu0 %v9726
  %v9821 = vpop.f32.mrf.mxu0
  %v9822 = vadd.f32 0.0, %v9821
  %9823 = vmatmul.f32.gmra.mxu0 %v9728
  %v9824 = vpop.f32.mrf.mxu0
  %v9825 = vadd.f32 0.0, %v9824
  %9826 = vmatmul.f32.gmra.mxu0 %v9730
  %v9827 = vpop.f32.mrf.mxu0
  %v9828 = vadd.f32 0.0, %v9827
  %9829 = vmatmul.f32.gmra.mxu0 %v9732
  %v9830 = vpop.f32.mrf.mxu0
  %v9831 = vadd.f32 0.0, %v9830
  %9832 = vmatmul.f32.gmra.mxu0 %v9734
  %v9833 = vpop.f32.mrf.mxu0
  %v9834 = vadd.f32 0.0, %v9833
  %9835 = vmatmul.f32.gmra.mxu0 %v9736
  %v9836 = vpop.f32.mrf.mxu0
  %v9837 = vadd.f32 0.0, %v9836
  %9838 = vmatmul.f32.gmra.mxu0 %v9738
  %v9839 = vpop.f32.mrf.mxu0
  %v9840 = vadd.f32 0.0, %v9839
  %9841 = vmatmul.f32.gmra.mxu0 %v9740
  %v9842 = vpop.f32.mrf.mxu0
  %v9843 = vadd.f32 0.0, %v9842
  %9844 = vmatmul.f32.gmra.mxu0 %v9742
  %v9845 = vpop.f32.mrf.mxu0
  %v9846 = vadd.f32 0.0, %v9845
  %9847 = vmatmul.f32.gmra.mxu0 %v9744
  %v9848 = vpop.f32.mrf.mxu0
  %v9849 = vadd.f32 0.0, %v9848
  %9850 = vmatmul.f32.gmra.mxu0 %v9746
  %v9851 = vpop.f32.mrf.mxu0
  %v9852 = vadd.f32 0.0, %v9851
  %9853 = vmatmul.f32.gmra.mxu0 %v9748
  %v9854 = vpop.f32.mrf.mxu0
  %v9855 = vadd.f32 0.0, %v9854
  %9856 = vmatmul.f32.gmra.mxu0 %v9750
  %v9857 = vpop.f32.mrf.mxu0
  %v9858 = vadd.f32 0.0, %v9857
  %9859 = vmatmul.f32.gmra.mxu0 %v9752
  %v9860 = vpop.f32.mrf.mxu0
  %v9861 = vadd.f32 0.0, %v9860
  %9862 = vmatmul.f32.gmra.mxu0 %v9754
  %v9863 = vpop.f32.mrf.mxu0
  %v9864 = vadd.f32 0.0, %v9863
  %9865 = vmatmul.f32.gmra.mxu0 %v9756
  %v9866 = vpop.f32.mrf.mxu0
  %v9867 = vadd.f32 0.0, %v9866
  %9868 = vmatmul.f32.gmra.mxu0 %v9758
  %v9869 = vpop.f32.mrf.mxu0
  %v9870 = vadd.f32 0.0, %v9869
  %9871 = vmatmul.f32.gmra.mxu0 %v9760
  %v9872 = vpop.f32.mrf.mxu0
  %v9873 = vadd.f32 0.0, %v9872
  %9874 = vdwg.mxu0
  %9875 = vmatpush.msra.mxu0 %v8798
  %9876 = vmatpush.msra.mxu0 %v8795
  %9877 = vmatpush.msra.mxu0 %v8792
  %9878 = vmatpush.msra.mxu0 %v8789
  %9879 = vmatpush.msra.mxu0 %v8786
  %9880 = vmatpush.msra.mxu0 %v8783
  %9881 = vmatpush.msra.mxu0 %v8780
  %9882 = vmatpush.msra.mxu0 %v8777
  %9883 = vmatpush.msra.mxu0 %v8774
  %9884 = vmatpush.msra.mxu0 %v8771
  %9885 = vmatpush.msra.mxu0 %v8768
  %9886 = vmatpush.msra.mxu0 %v8765
  %9887 = vmatpush.msra.mxu0 %v8762
  %9888 = vmatpush.msra.mxu0 %v8759
  %9889 = vmatpush.msra.mxu0 %v8756
  %9890 = vmatpush.msra.mxu0 %v8753
  %9891 = vmatmul.f32.gmra.mxu0 %v9699
  %v9892 = vpop.f32.mrf.mxu0
  %v9893 = vadd.f32 %v9780, %v9892
  %9894 = vmatmul.f32.gmra.mxu0 %v9701
  %v9895 = vpop.f32.mrf.mxu0
  %v9896 = vadd.f32 %v9783, %v9895
  %9897 = vmatmul.f32.gmra.mxu0 %v9703
  %v9898 = vpop.f32.mrf.mxu0
  %v9899 = vadd.f32 %v9786, %v9898
  %9900 = vmatmul.f32.gmra.mxu0 %v9705
  %v9901 = vpop.f32.mrf.mxu0
  %v9902 = vadd.f32 %v9789, %v9901
  %9903 = vmatmul.f32.gmra.mxu0 %v9707
  %v9904 = vpop.f32.mrf.mxu0
  %v9905 = vadd.f32 %v9792, %v9904
  %9906 = vmatmul.f32.gmra.mxu0 %v9709
  %v9907 = vpop.f32.mrf.mxu0
  %v9908 = vadd.f32 %v9795, %v9907
  %9909 = vmatmul.f32.gmra.mxu0 %v9711
  %v9910 = vpop.f32.mrf.mxu0
  %v9911 = vadd.f32 %v9798, %v9910
  %9912 = vmatmul.f32.gmra.mxu0 %v9713
  %v9913 = vpop.f32.mrf.mxu0
  %v9914 = vadd.f32 %v9801, %v9913
  %9915 = vmatmul.f32.gmra.mxu0 %v9715
  %v9916 = vpop.f32.mrf.mxu0
  %v9917 = vadd.f32 %v9804, %v9916
  %9918 = vmatmul.f32.gmra.mxu0 %v9717
  %v9919 = vpop.f32.mrf.mxu0
  %v9920 = vadd.f32 %v9807, %v9919
  %9921 = vmatmul.f32.gmra.mxu0 %v9719
  %v9922 = vpop.f32.mrf.mxu0
  %v9923 = vadd.f32 %v9810, %v9922
  %9924 = vmatmul.f32.gmra.mxu0 %v9721
  %v9925 = vpop.f32.mrf.mxu0
  %v9926 = vadd.f32 %v9813, %v9925
  %9927 = vmatmul.f32.gmra.mxu0 %v9723
  %v9928 = vpop.f32.mrf.mxu0
  %v9929 = vadd.f32 %v9816, %v9928
  %9930 = vmatmul.f32.gmra.mxu0 %v9725
  %v9931 = vpop.f32.mrf.mxu0
  %v9932 = vadd.f32 %v9819, %v9931
  %9933 = vmatmul.f32.gmra.mxu0 %v9727
  %v9934 = vpop.f32.mrf.mxu0
  %v9935 = vadd.f32 %v9822, %v9934
  %9936 = vmatmul.f32.gmra.mxu0 %v9729
  %v9937 = vpop.f32.mrf.mxu0
  %v9938 = vadd.f32 %v9825, %v9937
  %9939 = vmatmul.f32.gmra.mxu0 %v9731
  %v9940 = vpop.f32.mrf.mxu0
  %v9941 = vadd.f32 %v9828, %v9940
  %9942 = vmatmul.f32.gmra.mxu0 %v9733
  %v9943 = vpop.f32.mrf.mxu0
  %v9944 = vadd.f32 %v9831, %v9943
  %9945 = vmatmul.f32.gmra.mxu0 %v9735
  %v9946 = vpop.f32.mrf.mxu0
  %v9947 = vadd.f32 %v9834, %v9946
  %9948 = vmatmul.f32.gmra.mxu0 %v9737
  %v9949 = vpop.f32.mrf.mxu0
  %v9950 = vadd.f32 %v9837, %v9949
  %9951 = vmatmul.f32.gmra.mxu0 %v9739
  %v9952 = vpop.f32.mrf.mxu0
  %v9953 = vadd.f32 %v9840, %v9952
  %9954 = vmatmul.f32.gmra.mxu0 %v9741
  %v9955 = vpop.f32.mrf.mxu0
  %v9956 = vadd.f32 %v9843, %v9955
  %9957 = vmatmul.f32.gmra.mxu0 %v9743
  %v9958 = vpop.f32.mrf.mxu0
  %v9959 = vadd.f32 %v9846, %v9958
  %9960 = vmatmul.f32.gmra.mxu0 %v9745
  %v9961 = vpop.f32.mrf.mxu0
  %v9962 = vadd.f32 %v9849, %v9961
  %9963 = vmatmul.f32.gmra.mxu0 %v9747
  %v9964 = vpop.f32.mrf.mxu0
  %v9965 = vadd.f32 %v9852, %v9964
  %9966 = vmatmul.f32.gmra.mxu0 %v9749
  %v9967 = vpop.f32.mrf.mxu0
  %v9968 = vadd.f32 %v9855, %v9967
  %9969 = vmatmul.f32.gmra.mxu0 %v9751
  %v9970 = vpop.f32.mrf.mxu0
  %v9971 = vadd.f32 %v9858, %v9970
  %9972 = vmatmul.f32.gmra.mxu0 %v9753
  %v9973 = vpop.f32.mrf.mxu0
  %v9974 = vadd.f32 %v9861, %v9973
  %9975 = vmatmul.f32.gmra.mxu0 %v9755
  %v9976 = vpop.f32.mrf.mxu0
  %v9977 = vadd.f32 %v9864, %v9976
  %9978 = vmatmul.f32.gmra.mxu0 %v9757
  %v9979 = vpop.f32.mrf.mxu0
  %v9980 = vadd.f32 %v9867, %v9979
  %9981 = vmatmul.f32.gmra.mxu0 %v9759
  %v9982 = vpop.f32.mrf.mxu0
  %v9983 = vadd.f32 %v9870, %v9982
  %9984 = vmatmul.f32.gmra.mxu0 %v9761
  %v9985 = vpop.f32.mrf.mxu0
  %v9986 = vadd.f32 %v9873, %v9985
  %9987 = vdwg.mxu0
  %v9988 = vld [vmem:[%s4102] sm:$0xff]
  %v9990 = vsel %vm1370, %v9893, 0
  %v9993 = vsel %vm1370, %v9896, 0
  %v9996 = vsel %vm1370, %v9899, 0
  %v9999 = vsel %vm1370, %v9902, 0
  %v10002 = vsel %vm1370, %v9905, 0
  %v10005 = vsel %vm1370, %v9908, 0
  %v10008 = vsel %vm1370, %v9911, 0
  %v10011 = vsel %vm1370, %v9914, 0
  %v10014 = vsel %vm1370, %v9917, 0
  %v10017 = vsel %vm1370, %v9920, 0
  %v10020 = vsel %vm1370, %v9923, 0
  %v10023 = vsel %vm1370, %v9926, 0
  %v10026 = vsel %vm1370, %v9929, 0
  %v10029 = vsel %vm1370, %v9932, 0
  %v10032 = vsel %vm1370, %v9935, 0
  %v10035 = vsel %vm1370, %v9938, 0
  %v10038 = vsel %vm1370, %v9941, 0
  %v10041 = vsel %vm1370, %v9944, 0
  %v10044 = vsel %vm1370, %v9947, 0
  %v10047 = vsel %vm1370, %v9950, 0
  %v10050 = vsel %vm1370, %v9953, 0
  %v10053 = vsel %vm1370, %v9956, 0
  %v10056 = vsel %vm1370, %v9959, 0
  %v10059 = vsel %vm1370, %v9962, 0
  %v10062 = vsel %vm1370, %v9965, 0
  %v10065 = vsel %vm1370, %v9968, 0
  %v10068 = vsel %vm1370, %v9971, 0
  %v10071 = vsel %vm1370, %v9974, 0
  %v10074 = vsel %vm1370, %v9977, 0
  %v10077 = vsel %vm1370, %v9980, 0
  %v10080 = vsel %vm1370, %v9983, 0
  %v10083 = vsel %vm1370, %v9986, 0
  %10085 = vmatpush.msra.mxu0 0.0
  %10086 = vmatpush.msra.mxu0 0.0
  %10087 = vmatpush.msra.mxu0 0.0
  %10088 = vmatpush.msra.mxu0 0.0
  %10089 = vmatpush.msra.mxu0 0.0
  %10090 = vmatpush.msra.mxu0 0.0
  %10091 = vmatpush.msra.mxu0 0.0
  %10092 = vmatpush.msra.mxu0 0.0
  %10093 = vmatpush.msra.mxu0 0.0
  %10094 = vmatpush.msra.mxu0 0.0
  %10095 = vmatpush.msra.mxu0 0.0
  %10096 = vmatpush.msra.mxu0 0.0
  %10097 = vmatpush.msra.mxu0 0.0
  %10098 = vmatpush.msra.mxu0 0.0
  %10099 = vmatpush.msra.mxu0 0.0
  %10100 = vmatpush.msra.mxu0 %v9988
  %10101 = vmatmul.f32.gmra.mxu0 %v9990
  %v10102 = vpop.f32.mrf.mxu0
  %v10103 = vadd.f32 0.0, %v10102
  %10104 = vmatmul.f32.gmra.mxu0 %v9993
  %v10105 = vpop.f32.mrf.mxu0
  %v10106 = vadd.f32 0.0, %v10105
  %10107 = vmatmul.f32.gmra.mxu0 %v9996
  %v10108 = vpop.f32.mrf.mxu0
  %v10109 = vadd.f32 0.0, %v10108
  %10110 = vmatmul.f32.gmra.mxu0 %v9999
  %v10111 = vpop.f32.mrf.mxu0
  %v10112 = vadd.f32 0.0, %v10111
  %10113 = vmatmul.f32.gmra.mxu0 %v10002
  %v10114 = vpop.f32.mrf.mxu0
  %v10115 = vadd.f32 0.0, %v10114
  %10116 = vmatmul.f32.gmra.mxu0 %v10005
  %v10117 = vpop.f32.mrf.mxu0
  %v10118 = vadd.f32 0.0, %v10117
  %10119 = vmatmul.f32.gmra.mxu0 %v10008
  %v10120 = vpop.f32.mrf.mxu0
  %v10121 = vadd.f32 0.0, %v10120
  %10122 = vmatmul.f32.gmra.mxu0 %v10011
  %v10123 = vpop.f32.mrf.mxu0
  %v10124 = vadd.f32 0.0, %v10123
  %10125 = vmatmul.f32.gmra.mxu0 %v10014
  %v10126 = vpop.f32.mrf.mxu0
  %v10127 = vadd.f32 0.0, %v10126
  %10128 = vmatmul.f32.gmra.mxu0 %v10017
  %v10129 = vpop.f32.mrf.mxu0
  %v10130 = vadd.f32 0.0, %v10129
  %10131 = vmatmul.f32.gmra.mxu0 %v10020
  %v10132 = vpop.f32.mrf.mxu0
  %v10133 = vadd.f32 0.0, %v10132
  %10134 = vmatmul.f32.gmra.mxu0 %v10023
  %v10135 = vpop.f32.mrf.mxu0
  %v10136 = vadd.f32 0.0, %v10135
  %10137 = vmatmul.f32.gmra.mxu0 %v10026
  %v10138 = vpop.f32.mrf.mxu0
  %v10139 = vadd.f32 0.0, %v10138
  %10140 = vmatmul.f32.gmra.mxu0 %v10029
  %v10141 = vpop.f32.mrf.mxu0
  %v10142 = vadd.f32 0.0, %v10141
  %10143 = vmatmul.f32.gmra.mxu0 %v10032
  %v10144 = vpop.f32.mrf.mxu0
  %v10145 = vadd.f32 0.0, %v10144
  %10146 = vmatmul.f32.gmra.mxu0 %v10035
  %v10147 = vpop.f32.mrf.mxu0
  %v10148 = vadd.f32 0.0, %v10147
  %10149 = vmatmul.f32.gmra.mxu0 %v10038
  %v10150 = vpop.f32.mrf.mxu0
  %v10151 = vadd.f32 0.0, %v10150
  %10152 = vmatmul.f32.gmra.mxu0 %v10041
  %v10153 = vpop.f32.mrf.mxu0
  %v10154 = vadd.f32 0.0, %v10153
  %10155 = vmatmul.f32.gmra.mxu0 %v10044
  %v10156 = vpop.f32.mrf.mxu0
  %v10157 = vadd.f32 0.0, %v10156
  %10158 = vmatmul.f32.gmra.mxu0 %v10047
  %v10159 = vpop.f32.mrf.mxu0
  %v10160 = vadd.f32 0.0, %v10159
  %10161 = vmatmul.f32.gmra.mxu0 %v10050
  %v10162 = vpop.f32.mrf.mxu0
  %v10163 = vadd.f32 0.0, %v10162
  %10164 = vmatmul.f32.gmra.mxu0 %v10053
  %v10165 = vpop.f32.mrf.mxu0
  %v10166 = vadd.f32 0.0, %v10165
  %10167 = vmatmul.f32.gmra.mxu0 %v10056
  %v10168 = vpop.f32.mrf.mxu0
  %v10169 = vadd.f32 0.0, %v10168
  %10170 = vmatmul.f32.gmra.mxu0 %v10059
  %v10171 = vpop.f32.mrf.mxu0
  %v10172 = vadd.f32 0.0, %v10171
  %10173 = vmatmul.f32.gmra.mxu0 %v10062
  %v10174 = vpop.f32.mrf.mxu0
  %v10175 = vadd.f32 0.0, %v10174
  %10176 = vmatmul.f32.gmra.mxu0 %v10065
  %v10177 = vpop.f32.mrf.mxu0
  %v10178 = vadd.f32 0.0, %v10177
  %10179 = vmatmul.f32.gmra.mxu0 %v10068
  %v10180 = vpop.f32.mrf.mxu0
  %v10181 = vadd.f32 0.0, %v10180
  %10182 = vmatmul.f32.gmra.mxu0 %v10071
  %v10183 = vpop.f32.mrf.mxu0
  %v10184 = vadd.f32 0.0, %v10183
  %10185 = vmatmul.f32.gmra.mxu0 %v10074
  %v10186 = vpop.f32.mrf.mxu0
  %v10187 = vadd.f32 0.0, %v10186
  %10188 = vmatmul.f32.gmra.mxu0 %v10077
  %v10189 = vpop.f32.mrf.mxu0
  %v10190 = vadd.f32 0.0, %v10189
  %10191 = vmatmul.f32.gmra.mxu0 %v10080
  %v10192 = vpop.f32.mrf.mxu0
  %v10193 = vadd.f32 0.0, %v10192
  %10194 = vmatmul.f32.gmra.mxu0 %v10083
  %v10195 = vpop.f32.mrf.mxu0
  %v10196 = vadd.f32 0.0, %v10195
  %10197 = vdwg.mxu0
  %v10199 = vsel %vm1370, %v8353, 0
  %v10202 = vsel %vm1370, %v8356, 0
  %v10205 = vsel %vm1370, %v8359, 0
  %v10208 = vsel %vm1370, %v8362, 0
  %v10211 = vsel %vm1370, %v8365, 0
  %v10214 = vsel %vm1370, %v8368, 0
  %v10217 = vsel %vm1370, %v8371, 0
  %v10220 = vsel %vm1370, %v8374, 0
  %v10223 = vsel %vm1370, %v8377, 0
  %v10226 = vsel %vm1370, %v8380, 0
  %v10229 = vsel %vm1370, %v8383, 0
  %v10232 = vsel %vm1370, %v8386, 0
  %v10235 = vsel %vm1370, %v8389, 0
  %v10238 = vsel %vm1370, %v8392, 0
  %v10241 = vsel %vm1370, %v8395, 0
  %v10244 = vsel %vm1370, %v8398, 0
  %v10247 = vsel %vm1370, %v8401, 0
  %v10250 = vsel %vm1370, %v8404, 0
  %v10253 = vsel %vm1370, %v8407, 0
  %v10256 = vsel %vm1370, %v8410, 0
  %v10259 = vsel %vm1370, %v8413, 0
  %v10262 = vsel %vm1370, %v8416, 0
  %v10265 = vsel %vm1370, %v8419, 0
  %v10268 = vsel %vm1370, %v8422, 0
  %v10271 = vsel %vm1370, %v8425, 0
  %v10274 = vsel %vm1370, %v8428, 0
  %v10277 = vsel %vm1370, %v8431, 0
  %v10280 = vsel %vm1370, %v8434, 0
  %v10283 = vsel %vm1370, %v8437, 0
  %v10286 = vsel %vm1370, %v8440, 0
  %v10289 = vsel %vm1370, %v8443, 0
  %v10292 = vsel %vm1370, %v8446, 0
  %10294 = vmatpush.msra.mxu0 0.0
  %10295 = vmatpush.msra.mxu0 0.0
  %10296 = vmatpush.msra.mxu0 0.0
  %10297 = vmatpush.msra.mxu0 0.0
  %10298 = vmatpush.msra.mxu0 0.0
  %10299 = vmatpush.msra.mxu0 0.0
  %10300 = vmatpush.msra.mxu0 0.0
  %10301 = vmatpush.msra.mxu0 0.0
  %10302 = vmatpush.msra.mxu0 0.0
  %10303 = vmatpush.msra.mxu0 0.0
  %10304 = vmatpush.msra.mxu0 0.0
  %10305 = vmatpush.msra.mxu0 0.0
  %10306 = vmatpush.msra.mxu0 0.0
  %10307 = vmatpush.msra.mxu0 0.0
  %10308 = vmatpush.msra.mxu0 0.0
  %10309 = vmatpush.msra.mxu0 %v8448
  %10310 = vmatmul.f32.gmra.mxu0 %v10199
  %v10311 = vpop.f32.mrf.mxu0
  %v10312 = vadd.f32 %v10103, %v10311
  %10313 = vmatmul.f32.gmra.mxu0 %v10202
  %v10314 = vpop.f32.mrf.mxu0
  %v10315 = vadd.f32 %v10106, %v10314
  %10316 = vmatmul.f32.gmra.mxu0 %v10205
  %v10317 = vpop.f32.mrf.mxu0
  %v10318 = vadd.f32 %v10109, %v10317
  %10319 = vmatmul.f32.gmra.mxu0 %v10208
  %v10320 = vpop.f32.mrf.mxu0
  %v10321 = vadd.f32 %v10112, %v10320
  %10322 = vmatmul.f32.gmra.mxu0 %v10211
  %v10323 = vpop.f32.mrf.mxu0
  %v10324 = vadd.f32 %v10115, %v10323
  %10325 = vmatmul.f32.gmra.mxu0 %v10214
  %v10326 = vpop.f32.mrf.mxu0
  %v10327 = vadd.f32 %v10118, %v10326
  %10328 = vmatmul.f32.gmra.mxu0 %v10217
  %v10329 = vpop.f32.mrf.mxu0
  %v10330 = vadd.f32 %v10121, %v10329
  %10331 = vmatmul.f32.gmra.mxu0 %v10220
  %v10332 = vpop.f32.mrf.mxu0
  %v10333 = vadd.f32 %v10124, %v10332
  %10334 = vmatmul.f32.gmra.mxu0 %v10223
  %v10335 = vpop.f32.mrf.mxu0
  %v10336 = vadd.f32 %v10127, %v10335
  %10337 = vmatmul.f32.gmra.mxu0 %v10226
  %v10338 = vpop.f32.mrf.mxu0
  %v10339 = vadd.f32 %v10130, %v10338
  %10340 = vmatmul.f32.gmra.mxu0 %v10229
  %v10341 = vpop.f32.mrf.mxu0
  %v10342 = vadd.f32 %v10133, %v10341
  %10343 = vmatmul.f32.gmra.mxu0 %v10232
  %v10344 = vpop.f32.mrf.mxu0
  %v10345 = vadd.f32 %v10136, %v10344
  %10346 = vmatmul.f32.gmra.mxu0 %v10235
  %v10347 = vpop.f32.mrf.mxu0
  %v10348 = vadd.f32 %v10139, %v10347
  %10349 = vmatmul.f32.gmra.mxu0 %v10238
  %v10350 = vpop.f32.mrf.mxu0
  %v10351 = vadd.f32 %v10142, %v10350
  %10352 = vmatmul.f32.gmra.mxu0 %v10241
  %v10353 = vpop.f32.mrf.mxu0
  %v10354 = vadd.f32 %v10145, %v10353
  %10355 = vmatmul.f32.gmra.mxu0 %v10244
  %v10356 = vpop.f32.mrf.mxu0
  %v10357 = vadd.f32 %v10148, %v10356
  %10358 = vmatmul.f32.gmra.mxu0 %v10247
  %v10359 = vpop.f32.mrf.mxu0
  %v10360 = vadd.f32 %v10151, %v10359
  %10361 = vmatmul.f32.gmra.mxu0 %v10250
  %v10362 = vpop.f32.mrf.mxu0
  %v10363 = vadd.f32 %v10154, %v10362
  %10364 = vmatmul.f32.gmra.mxu0 %v10253
  %v10365 = vpop.f32.mrf.mxu0
  %v10366 = vadd.f32 %v10157, %v10365
  %10367 = vmatmul.f32.gmra.mxu0 %v10256
  %v10368 = vpop.f32.mrf.mxu0
  %v10369 = vadd.f32 %v10160, %v10368
  %10370 = vmatmul.f32.gmra.mxu0 %v10259
  %v10371 = vpop.f32.mrf.mxu0
  %v10372 = vadd.f32 %v10163, %v10371
  %10373 = vmatmul.f32.gmra.mxu0 %v10262
  %v10374 = vpop.f32.mrf.mxu0
  %v10375 = vadd.f32 %v10166, %v10374
  %10376 = vmatmul.f32.gmra.mxu0 %v10265
  %v10377 = vpop.f32.mrf.mxu0
  %v10378 = vadd.f32 %v10169, %v10377
  %10379 = vmatmul.f32.gmra.mxu0 %v10268
  %v10380 = vpop.f32.mrf.mxu0
  %v10381 = vadd.f32 %v10172, %v10380
  %10382 = vmatmul.f32.gmra.mxu0 %v10271
  %v10383 = vpop.f32.mrf.mxu0
  %v10384 = vadd.f32 %v10175, %v10383
  %10385 = vmatmul.f32.gmra.mxu0 %v10274
  %v10386 = vpop.f32.mrf.mxu0
  %v10387 = vadd.f32 %v10178, %v10386
  %10388 = vmatmul.f32.gmra.mxu0 %v10277
  %v10389 = vpop.f32.mrf.mxu0
  %v10390 = vadd.f32 %v10181, %v10389
  %10391 = vmatmul.f32.gmra.mxu0 %v10280
  %v10392 = vpop.f32.mrf.mxu0
  %v10393 = vadd.f32 %v10184, %v10392
  %10394 = vmatmul.f32.gmra.mxu0 %v10283
  %v10395 = vpop.f32.mrf.mxu0
  %v10396 = vadd.f32 %v10187, %v10395
  %10397 = vmatmul.f32.gmra.mxu0 %v10286
  %v10398 = vpop.f32.mrf.mxu0
  %v10399 = vadd.f32 %v10190, %v10398
  %10400 = vmatmul.f32.gmra.mxu0 %v10289
  %v10401 = vpop.f32.mrf.mxu0
  %v10402 = vadd.f32 %v10193, %v10401
  %10403 = vmatmul.f32.gmra.mxu0 %v10292
  %v10404 = vpop.f32.mrf.mxu0
  %v10405 = vadd.f32 %v10196, %v10404
  %10406 = vdwg.mxu0
  %10408 = vset.pattern.permute.xlu0 0
  %10409 = vperm.xlu0 %10408, %v6013
  %v10410 = vpop.permute.xlu0 %10409
  %10413 = vset.pattern.permute.xlu0 0
  %10414 = vperm.xlu0 %10413, %v6014
  %v10415 = vpop.permute.xlu0 %10414
  %10418 = vset.pattern.permute.xlu0 0
  %10419 = vperm.xlu0 %10418, %v6015
  %v10420 = vpop.permute.xlu0 %10419
  %10423 = vset.pattern.permute.xlu0 0
  %10424 = vperm.xlu0 %10423, %v6016
  %v10425 = vpop.permute.xlu0 %10424
  %10428 = vset.pattern.permute.xlu0 0
  %10429 = vperm.xlu0 %10428, %v6017
  %v10430 = vpop.permute.xlu0 %10429
  %10433 = vset.pattern.permute.xlu0 0
  %10434 = vperm.xlu0 %10433, %v6018
  %v10435 = vpop.permute.xlu0 %10434
  %10438 = vset.pattern.permute.xlu0 0
  %10439 = vperm.xlu0 %10438, %v6019
  %v10440 = vpop.permute.xlu0 %10439
  %10443 = vset.pattern.permute.xlu0 0
  %10444 = vperm.xlu0 %10443, %v6020
  %v10445 = vpop.permute.xlu0 %10444
  %10448 = vset.pattern.permute.xlu0 0
  %10449 = vperm.xlu0 %10448, %v6021
  %v10450 = vpop.permute.xlu0 %10449
  %10453 = vset.pattern.permute.xlu0 0
  %10454 = vperm.xlu0 %10453, %v6022
  %v10455 = vpop.permute.xlu0 %10454
  %10458 = vset.pattern.permute.xlu0 0
  %10459 = vperm.xlu0 %10458, %v6023
  %v10460 = vpop.permute.xlu0 %10459
  %10463 = vset.pattern.permute.xlu0 0
  %10464 = vperm.xlu0 %10463, %v6024
  %v10465 = vpop.permute.xlu0 %10464
  %10468 = vset.pattern.permute.xlu0 0
  %10469 = vperm.xlu0 %10468, %v6025
  %v10470 = vpop.permute.xlu0 %10469
  %10473 = vset.pattern.permute.xlu0 0
  %10474 = vperm.xlu0 %10473, %v6026
  %v10475 = vpop.permute.xlu0 %10474
  %10478 = vset.pattern.permute.xlu0 0
  %10479 = vperm.xlu0 %10478, %v6027
  %v10480 = vpop.permute.xlu0 %10479
  %10483 = vset.pattern.permute.xlu0 0
  %10484 = vperm.xlu0 %10483, %v6028
  %v10485 = vpop.permute.xlu0 %10484
  %10488 = vset.pattern.permute.xlu0 0
  %10489 = vperm.xlu0 %10488, %v6029
  %v10490 = vpop.permute.xlu0 %10489
  %10493 = vset.pattern.permute.xlu0 0
  %10494 = vperm.xlu0 %10493, %v6030
  %v10495 = vpop.permute.xlu0 %10494
  %10498 = vset.pattern.permute.xlu0 0
  %10499 = vperm.xlu0 %10498, %v6031
  %v10500 = vpop.permute.xlu0 %10499
  %10503 = vset.pattern.permute.xlu0 0
  %10504 = vperm.xlu0 %10503, %v6032
  %v10505 = vpop.permute.xlu0 %10504
  %10508 = vset.pattern.permute.xlu0 0
  %10509 = vperm.xlu0 %10508, %v6033
  %v10510 = vpop.permute.xlu0 %10509
  %10513 = vset.pattern.permute.xlu0 0
  %10514 = vperm.xlu0 %10513, %v6034
  %v10515 = vpop.permute.xlu0 %10514
  %10518 = vset.pattern.permute.xlu0 0
  %10519 = vperm.xlu0 %10518, %v6035
  %v10520 = vpop.permute.xlu0 %10519
  %10523 = vset.pattern.permute.xlu0 0
  %10524 = vperm.xlu0 %10523, %v6036
  %v10525 = vpop.permute.xlu0 %10524
  %10528 = vset.pattern.permute.xlu0 0
  %10529 = vperm.xlu0 %10528, %v6037
  %v10530 = vpop.permute.xlu0 %10529
  %10533 = vset.pattern.permute.xlu0 0
  %10534 = vperm.xlu0 %10533, %v6038
  %v10535 = vpop.permute.xlu0 %10534
  %10538 = vset.pattern.permute.xlu0 0
  %10539 = vperm.xlu0 %10538, %v6039
  %v10540 = vpop.permute.xlu0 %10539
  %10543 = vset.pattern.permute.xlu0 0
  %10544 = vperm.xlu0 %10543, %v6040
  %v10545 = vpop.permute.xlu0 %10544
  %10548 = vset.pattern.permute.xlu0 0
  %10549 = vperm.xlu0 %10548, %v6041
  %v10550 = vpop.permute.xlu0 %10549
  %10553 = vset.pattern.permute.xlu0 0
  %10554 = vperm.xlu0 %10553, %v6042
  %v10555 = vpop.permute.xlu0 %10554
  %10558 = vset.pattern.permute.xlu0 0
  %10559 = vperm.xlu0 %10558, %v6043
  %v10560 = vpop.permute.xlu0 %10559
  %10563 = vset.pattern.permute.xlu0 0
  %10564 = vperm.xlu0 %10563, %v6044
  %v10565 = vpop.permute.xlu0 %10564
  %v10567 = vmul.f32 %v10410, %v10312
  %v10568 = vmul.f32 %v10415, %v10315
  %v10569 = vmul.f32 %v10420, %v10318
  %v10570 = vmul.f32 %v10425, %v10321
  %v10571 = vmul.f32 %v10430, %v10324
  %v10572 = vmul.f32 %v10435, %v10327
  %v10573 = vmul.f32 %v10440, %v10330
  %v10574 = vmul.f32 %v10445, %v10333
  %v10575 = vmul.f32 %v10450, %v10336
  %v10576 = vmul.f32 %v10455, %v10339
  %v10577 = vmul.f32 %v10460, %v10342
  %v10578 = vmul.f32 %v10465, %v10345
  %v10579 = vmul.f32 %v10470, %v10348
  %v10580 = vmul.f32 %v10475, %v10351
  %v10581 = vmul.f32 %v10480, %v10354
  %v10582 = vmul.f32 %v10485, %v10357
  %v10583 = vmul.f32 %v10490, %v10360
  %v10584 = vmul.f32 %v10495, %v10363
  %v10585 = vmul.f32 %v10500, %v10366
  %v10586 = vmul.f32 %v10505, %v10369
  %v10587 = vmul.f32 %v10510, %v10372
  %v10588 = vmul.f32 %v10515, %v10375
  %v10589 = vmul.f32 %v10520, %v10378
  %v10590 = vmul.f32 %v10525, %v10381
  %v10591 = vmul.f32 %v10530, %v10384
  %v10592 = vmul.f32 %v10535, %v10387
  %v10593 = vmul.f32 %v10540, %v10390
  %v10594 = vmul.f32 %v10545, %v10393
  %v10595 = vmul.f32 %v10550, %v10396
  %v10596 = vmul.f32 %v10555, %v10399
  %v10597 = vmul.f32 %v10560, %v10402
  %v10598 = vmul.f32 %v10565, %v10405
  %v10599 = vadd.f32 %v10567, %v4715
  %v10600 = vadd.f32 %v10568, %v4715
  %v10601 = vadd.f32 %v10569, %v4715
  %v10602 = vadd.f32 %v10570, %v4715
  %v10603 = vadd.f32 %v10571, %v4715
  %v10604 = vadd.f32 %v10572, %v4715
  %v10605 = vadd.f32 %v10573, %v4715
  %v10606 = vadd.f32 %v10574, %v4715
  %v10607 = vadd.f32 %v10575, %v4715
  %v10608 = vadd.f32 %v10576, %v4715
  %v10609 = vadd.f32 %v10577, %v4715
  %v10610 = vadd.f32 %v10578, %v4715
  %v10611 = vadd.f32 %v10579, %v4715
  %v10612 = vadd.f32 %v10580, %v4715
  %v10613 = vadd.f32 %v10581, %v4715
  %v10614 = vadd.f32 %v10582, %v4715
  %v10615 = vadd.f32 %v10583, %v4715
  %v10616 = vadd.f32 %v10584, %v4715
  %v10617 = vadd.f32 %v10585, %v4715
  %v10618 = vadd.f32 %v10586, %v4715
  %v10619 = vadd.f32 %v10587, %v4715
  %v10620 = vadd.f32 %v10588, %v4715
  %v10621 = vadd.f32 %v10589, %v4715
  %v10622 = vadd.f32 %v10590, %v4715
  %v10623 = vadd.f32 %v10591, %v4715
  %v10624 = vadd.f32 %v10592, %v4715
  %v10625 = vadd.f32 %v10593, %v4715
  %v10626 = vadd.f32 %v10594, %v4715
  %v10627 = vadd.f32 %v10595, %v4715
  %v10628 = vadd.f32 %v10596, %v4715
  %v10629 = vadd.f32 %v10597, %v4715
  %v10630 = vadd.f32 %v10598, %v4715
  %v10631 = vadd.f32 %v10599, %v5980
  %v10632 = vadd.f32 %v10600, %v5981
  %v10633 = vadd.f32 %v10601, %v5982
  %v10634 = vadd.f32 %v10602, %v5983
  %v10635 = vadd.f32 %v10603, %v5984
  %v10636 = vadd.f32 %v10604, %v5985
  %v10637 = vadd.f32 %v10605, %v5986
  %v10638 = vadd.f32 %v10606, %v5987
  %v10639 = vadd.f32 %v10607, %v5988
  %v10640 = vadd.f32 %v10608, %v5989
  %v10641 = vadd.f32 %v10609, %v5990
  %v10642 = vadd.f32 %v10610, %v5991
  %v10643 = vadd.f32 %v10611, %v5992
  %v10644 = vadd.f32 %v10612, %v5993
  %v10645 = vadd.f32 %v10613, %v5994
  %v10646 = vadd.f32 %v10614, %v5995
  %v10647 = vadd.f32 %v10615, %v5996
  %v10648 = vadd.f32 %v10616, %v5997
  %v10649 = vadd.f32 %v10617, %v5998
  %v10650 = vadd.f32 %v10618, %v5999
  %v10651 = vadd.f32 %v10619, %v6000
  %v10652 = vadd.f32 %v10620, %v6001
  %v10653 = vadd.f32 %v10621, %v6002
  %v10654 = vadd.f32 %v10622, %v6003
  %v10655 = vadd.f32 %v10623, %v6004
  %v10656 = vadd.f32 %v10624, %v6005
  %v10657 = vadd.f32 %v10625, %v6006
  %v10658 = vadd.f32 %v10626, %v6007
  %v10659 = vadd.f32 %v10627, %v6008
  %v10660 = vadd.f32 %v10628, %v6009
  %v10661 = vadd.f32 %v10629, %v6010
  %v10662 = vadd.f32 %v10630, %v6011
  %v10663 = vsel %vm141, %v10631, 0.0
  %10664 = vadd.xlane.f32.xlu0 %v10663
  %v10665 = vpop.xlane.xlu0 %10664
  %v10666 = vsel %vm141, %v10632, 0.0
  %10667 = vadd.xlane.f32.xlu0 %v10666
  %v10668 = vpop.xlane.xlu0 %10667
  %v10669 = vsel %vm141, %v10633, 0.0
  %10670 = vadd.xlane.f32.xlu0 %v10669
  %v10671 = vpop.xlane.xlu0 %10670
  %v10672 = vsel %vm141, %v10634, 0.0
  %10673 = vadd.xlane.f32.xlu0 %v10672
  %v10674 = vpop.xlane.xlu0 %10673
  %v10675 = vsel %vm141, %v10635, 0.0
  %10676 = vadd.xlane.f32.xlu0 %v10675
  %v10677 = vpop.xlane.xlu0 %10676
  %v10678 = vsel %vm141, %v10636, 0.0
  %10679 = vadd.xlane.f32.xlu0 %v10678
  %v10680 = vpop.xlane.xlu0 %10679
  %v10681 = vsel %vm141, %v10637, 0.0
  %10682 = vadd.xlane.f32.xlu0 %v10681
  %v10683 = vpop.xlane.xlu0 %10682
  %v10684 = vsel %vm141, %v10638, 0.0
  %10685 = vadd.xlane.f32.xlu0 %v10684
  %v10686 = vpop.xlane.xlu0 %10685
  %v10687 = vsel %vm141, %v10639, 0.0
  %10688 = vadd.xlane.f32.xlu0 %v10687
  %v10689 = vpop.xlane.xlu0 %10688
  %v10690 = vsel %vm141, %v10640, 0.0
  %10691 = vadd.xlane.f32.xlu0 %v10690
  %v10692 = vpop.xlane.xlu0 %10691
  %v10693 = vsel %vm141, %v10641, 0.0
  %10694 = vadd.xlane.f32.xlu0 %v10693
  %v10695 = vpop.xlane.xlu0 %10694
  %v10696 = vsel %vm141, %v10642, 0.0
  %10697 = vadd.xlane.f32.xlu0 %v10696
  %v10698 = vpop.xlane.xlu0 %10697
  %v10699 = vsel %vm141, %v10643, 0.0
  %10700 = vadd.xlane.f32.xlu0 %v10699
  %v10701 = vpop.xlane.xlu0 %10700
  %v10702 = vsel %vm141, %v10644, 0.0
  %10703 = vadd.xlane.f32.xlu0 %v10702
  %v10704 = vpop.xlane.xlu0 %10703
  %v10705 = vsel %vm141, %v10645, 0.0
  %10706 = vadd.xlane.f32.xlu0 %v10705
  %v10707 = vpop.xlane.xlu0 %10706
  %v10708 = vsel %vm141, %v10646, 0.0
  %10709 = vadd.xlane.f32.xlu0 %v10708
  %v10710 = vpop.xlane.xlu0 %10709
  %v10711 = vsel %vm141, %v10647, 0.0
  %10712 = vadd.xlane.f32.xlu0 %v10711
  %v10713 = vpop.xlane.xlu0 %10712
  %v10714 = vsel %vm141, %v10648, 0.0
  %10715 = vadd.xlane.f32.xlu0 %v10714
  %v10716 = vpop.xlane.xlu0 %10715
  %v10717 = vsel %vm141, %v10649, 0.0
  %10718 = vadd.xlane.f32.xlu0 %v10717
  %v10719 = vpop.xlane.xlu0 %10718
  %v10720 = vsel %vm141, %v10650, 0.0
  %10721 = vadd.xlane.f32.xlu0 %v10720
  %v10722 = vpop.xlane.xlu0 %10721
  %v10723 = vsel %vm141, %v10651, 0.0
  %10724 = vadd.xlane.f32.xlu0 %v10723
  %v10725 = vpop.xlane.xlu0 %10724
  %v10726 = vsel %vm141, %v10652, 0.0
  %10727 = vadd.xlane.f32.xlu0 %v10726
  %v10728 = vpop.xlane.xlu0 %10727
  %v10729 = vsel %vm141, %v10653, 0.0
  %10730 = vadd.xlane.f32.xlu0 %v10729
  %v10731 = vpop.xlane.xlu0 %10730
  %v10732 = vsel %vm141, %v10654, 0.0
  %10733 = vadd.xlane.f32.xlu0 %v10732
  %v10734 = vpop.xlane.xlu0 %10733
  %v10735 = vsel %vm141, %v10655, 0.0
  %10736 = vadd.xlane.f32.xlu0 %v10735
  %v10737 = vpop.xlane.xlu0 %10736
  %v10738 = vsel %vm141, %v10656, 0.0
  %10739 = vadd.xlane.f32.xlu0 %v10738
  %v10740 = vpop.xlane.xlu0 %10739
  %v10741 = vsel %vm141, %v10657, 0.0
  %10742 = vadd.xlane.f32.xlu0 %v10741
  %v10743 = vpop.xlane.xlu0 %10742
  %v10744 = vsel %vm141, %v10658, 0.0
  %10745 = vadd.xlane.f32.xlu0 %v10744
  %v10746 = vpop.xlane.xlu0 %10745
  %v10747 = vsel %vm141, %v10659, 0.0
  %10748 = vadd.xlane.f32.xlu0 %v10747
  %v10749 = vpop.xlane.xlu0 %10748
  %v10750 = vsel %vm141, %v10660, 0.0
  %10751 = vadd.xlane.f32.xlu0 %v10750
  %v10752 = vpop.xlane.xlu0 %10751
  %v10753 = vsel %vm141, %v10661, 0.0
  %10754 = vadd.xlane.f32.xlu0 %v10753
  %v10755 = vpop.xlane.xlu0 %10754
  %v10756 = vsel %vm141, %v10662, 0.0
  %10757 = vadd.xlane.f32.xlu0 %v10756
  %v10758 = vpop.xlane.xlu0 %10757
  %v10759 = vmul.f32 %v10665, %v244
  %v10760 = vmul.f32 %v10668, %v244
  %v10761 = vmul.f32 %v10671, %v244
  %v10762 = vmul.f32 %v10674, %v244
  %v10763 = vmul.f32 %v10677, %v244
  %v10764 = vmul.f32 %v10680, %v244
  %v10765 = vmul.f32 %v10683, %v244
  %v10766 = vmul.f32 %v10686, %v244
  %v10767 = vmul.f32 %v10689, %v244
  %v10768 = vmul.f32 %v10692, %v244
  %v10769 = vmul.f32 %v10695, %v244
  %v10770 = vmul.f32 %v10698, %v244
  %v10771 = vmul.f32 %v10701, %v244
  %v10772 = vmul.f32 %v10704, %v244
  %v10773 = vmul.f32 %v10707, %v244
  %v10774 = vmul.f32 %v10710, %v244
  %v10775 = vmul.f32 %v10713, %v244
  %v10776 = vmul.f32 %v10716, %v244
  %v10777 = vmul.f32 %v10719, %v244
  %v10778 = vmul.f32 %v10722, %v244
  %v10779 = vmul.f32 %v10725, %v244
  %v10780 = vmul.f32 %v10728, %v244
  %v10781 = vmul.f32 %v10731, %v244
  %v10782 = vmul.f32 %v10734, %v244
  %v10783 = vmul.f32 %v10737, %v244
  %v10784 = vmul.f32 %v10740, %v244
  %v10785 = vmul.f32 %v10743, %v244
  %v10786 = vmul.f32 %v10746, %v244
  %v10787 = vmul.f32 %v10749, %v244
  %v10788 = vmul.f32 %v10752, %v244
  %v10789 = vmul.f32 %v10755, %v244
  %v10790 = vmul.f32 %v10758, %v244
  %v10791 = vsub.f32 %v10631, %v10759
  %v10792 = vsub.f32 %v10632, %v10760
  %v10793 = vsub.f32 %v10633, %v10761
  %v10794 = vsub.f32 %v10634, %v10762
  %v10795 = vsub.f32 %v10635, %v10763
  %v10796 = vsub.f32 %v10636, %v10764
  %v10797 = vsub.f32 %v10637, %v10765
  %v10798 = vsub.f32 %v10638, %v10766
  %v10799 = vsub.f32 %v10639, %v10767
  %v10800 = vsub.f32 %v10640, %v10768
  %v10801 = vsub.f32 %v10641, %v10769
  %v10802 = vsub.f32 %v10642, %v10770
  %v10803 = vsub.f32 %v10643, %v10771
  %v10804 = vsub.f32 %v10644, %v10772
  %v10805 = vsub.f32 %v10645, %v10773
  %v10806 = vsub.f32 %v10646, %v10774
  %v10807 = vsub.f32 %v10647, %v10775
  %v10808 = vsub.f32 %v10648, %v10776
  %v10809 = vsub.f32 %v10649, %v10777
  %v10810 = vsub.f32 %v10650, %v10778
  %v10811 = vsub.f32 %v10651, %v10779
  %v10812 = vsub.f32 %v10652, %v10780
  %v10813 = vsub.f32 %v10653, %v10781
  %v10814 = vsub.f32 %v10654, %v10782
  %v10815 = vsub.f32 %v10655, %v10783
  %v10816 = vsub.f32 %v10656, %v10784
  %v10817 = vsub.f32 %v10657, %v10785
  %v10818 = vsub.f32 %v10658, %v10786
  %v10819 = vsub.f32 %v10659, %v10787
  %v10820 = vsub.f32 %v10660, %v10788
  %v10821 = vsub.f32 %v10661, %v10789
  %v10822 = vsub.f32 %v10662, %v10790
  %v10823 = vmul.f32 %v10791, %v10791
  %v10824 = vmul.f32 %v10792, %v10792
  %v10825 = vmul.f32 %v10793, %v10793
  %v10826 = vmul.f32 %v10794, %v10794
  %v10827 = vmul.f32 %v10795, %v10795
  %v10828 = vmul.f32 %v10796, %v10796
  %v10829 = vmul.f32 %v10797, %v10797
  %v10830 = vmul.f32 %v10798, %v10798
  %v10831 = vmul.f32 %v10799, %v10799
  %v10832 = vmul.f32 %v10800, %v10800
  %v10833 = vmul.f32 %v10801, %v10801
  %v10834 = vmul.f32 %v10802, %v10802
  %v10835 = vmul.f32 %v10803, %v10803
  %v10836 = vmul.f32 %v10804, %v10804
  %v10837 = vmul.f32 %v10805, %v10805
  %v10838 = vmul.f32 %v10806, %v10806
  %v10839 = vmul.f32 %v10807, %v10807
  %v10840 = vmul.f32 %v10808, %v10808
  %v10841 = vmul.f32 %v10809, %v10809
  %v10842 = vmul.f32 %v10810, %v10810
  %v10843 = vmul.f32 %v10811, %v10811
  %v10844 = vmul.f32 %v10812, %v10812
  %v10845 = vmul.f32 %v10813, %v10813
  %v10846 = vmul.f32 %v10814, %v10814
  %v10847 = vmul.f32 %v10815, %v10815
  %v10848 = vmul.f32 %v10816, %v10816
  %v10849 = vmul.f32 %v10817, %v10817
  %v10850 = vmul.f32 %v10818, %v10818
  %v10851 = vmul.f32 %v10819, %v10819
  %v10852 = vmul.f32 %v10820, %v10820
  %v10853 = vmul.f32 %v10821, %v10821
  %v10854 = vmul.f32 %v10822, %v10822
  %v10855 = vsel %vm141, %v10823, 0.0
  %10856 = vadd.xlane.f32.xlu0 %v10855
  %v10857 = vpop.xlane.xlu0 %10856
  %v10858 = vsel %vm141, %v10824, 0.0
  %10859 = vadd.xlane.f32.xlu0 %v10858
  %v10860 = vpop.xlane.xlu0 %10859
  %v10861 = vsel %vm141, %v10825, 0.0
  %10862 = vadd.xlane.f32.xlu0 %v10861
  %v10863 = vpop.xlane.xlu0 %10862
  %v10864 = vsel %vm141, %v10826, 0.0
  %10865 = vadd.xlane.f32.xlu0 %v10864
  %v10866 = vpop.xlane.xlu0 %10865
  %v10867 = vsel %vm141, %v10827, 0.0
  %10868 = vadd.xlane.f32.xlu0 %v10867
  %v10869 = vpop.xlane.xlu0 %10868
  %v10870 = vsel %vm141, %v10828, 0.0
  %10871 = vadd.xlane.f32.xlu0 %v10870
  %v10872 = vpop.xlane.xlu0 %10871
  %v10873 = vsel %vm141, %v10829, 0.0
  %10874 = vadd.xlane.f32.xlu0 %v10873
  %v10875 = vpop.xlane.xlu0 %10874
  %v10876 = vsel %vm141, %v10830, 0.0
  %10877 = vadd.xlane.f32.xlu0 %v10876
  %v10878 = vpop.xlane.xlu0 %10877
  %v10879 = vsel %vm141, %v10831, 0.0
  %10880 = vadd.xlane.f32.xlu0 %v10879
  %v10881 = vpop.xlane.xlu0 %10880
  %v10882 = vsel %vm141, %v10832, 0.0
  %10883 = vadd.xlane.f32.xlu0 %v10882
  %v10884 = vpop.xlane.xlu0 %10883
  %v10885 = vsel %vm141, %v10833, 0.0
  %10886 = vadd.xlane.f32.xlu0 %v10885
  %v10887 = vpop.xlane.xlu0 %10886
  %v10888 = vsel %vm141, %v10834, 0.0
  %10889 = vadd.xlane.f32.xlu0 %v10888
  %v10890 = vpop.xlane.xlu0 %10889
  %v10891 = vsel %vm141, %v10835, 0.0
  %10892 = vadd.xlane.f32.xlu0 %v10891
  %v10893 = vpop.xlane.xlu0 %10892
  %v10894 = vsel %vm141, %v10836, 0.0
  %10895 = vadd.xlane.f32.xlu0 %v10894
  %v10896 = vpop.xlane.xlu0 %10895
  %v10897 = vsel %vm141, %v10837, 0.0
  %10898 = vadd.xlane.f32.xlu0 %v10897
  %v10899 = vpop.xlane.xlu0 %10898
  %v10900 = vsel %vm141, %v10838, 0.0
  %10901 = vadd.xlane.f32.xlu0 %v10900
  %v10902 = vpop.xlane.xlu0 %10901
  %v10903 = vsel %vm141, %v10839, 0.0
  %10904 = vadd.xlane.f32.xlu0 %v10903
  %v10905 = vpop.xlane.xlu0 %10904
  %v10906 = vsel %vm141, %v10840, 0.0
  %10907 = vadd.xlane.f32.xlu0 %v10906
  %v10908 = vpop.xlane.xlu0 %10907
  %v10909 = vsel %vm141, %v10841, 0.0
  %10910 = vadd.xlane.f32.xlu0 %v10909
  %v10911 = vpop.xlane.xlu0 %10910
  %v10912 = vsel %vm141, %v10842, 0.0
  %10913 = vadd.xlane.f32.xlu0 %v10912
  %v10914 = vpop.xlane.xlu0 %10913
  %v10915 = vsel %vm141, %v10843, 0.0
  %10916 = vadd.xlane.f32.xlu0 %v10915
  %v10917 = vpop.xlane.xlu0 %10916
  %v10918 = vsel %vm141, %v10844, 0.0
  %10919 = vadd.xlane.f32.xlu0 %v10918
  %v10920 = vpop.xlane.xlu0 %10919
  %v10921 = vsel %vm141, %v10845, 0.0
  %10922 = vadd.xlane.f32.xlu0 %v10921
  %v10923 = vpop.xlane.xlu0 %10922
  %v10924 = vsel %vm141, %v10846, 0.0
  %10925 = vadd.xlane.f32.xlu0 %v10924
  %v10926 = vpop.xlane.xlu0 %10925
  %v10927 = vsel %vm141, %v10847, 0.0
  %10928 = vadd.xlane.f32.xlu0 %v10927
  %v10929 = vpop.xlane.xlu0 %10928
  %v10930 = vsel %vm141, %v10848, 0.0
  %10931 = vadd.xlane.f32.xlu0 %v10930
  %v10932 = vpop.xlane.xlu0 %10931
  %v10933 = vsel %vm141, %v10849, 0.0
  %10934 = vadd.xlane.f32.xlu0 %v10933
  %v10935 = vpop.xlane.xlu0 %10934
  %v10936 = vsel %vm141, %v10850, 0.0
  %10937 = vadd.xlane.f32.xlu0 %v10936
  %v10938 = vpop.xlane.xlu0 %10937
  %v10939 = vsel %vm141, %v10851, 0.0
  %10940 = vadd.xlane.f32.xlu0 %v10939
  %v10941 = vpop.xlane.xlu0 %10940
  %v10942 = vsel %vm141, %v10852, 0.0
  %10943 = vadd.xlane.f32.xlu0 %v10942
  %v10944 = vpop.xlane.xlu0 %10943
  %v10945 = vsel %vm141, %v10853, 0.0
  %10946 = vadd.xlane.f32.xlu0 %v10945
  %v10947 = vpop.xlane.xlu0 %10946
  %v10948 = vsel %vm141, %v10854, 0.0
  %10949 = vadd.xlane.f32.xlu0 %v10948
  %v10950 = vpop.xlane.xlu0 %10949
  %v10951 = vmul.f32 %v10857, %v244
  %v10952 = vmul.f32 %v10860, %v244
  %v10953 = vmul.f32 %v10863, %v244
  %v10954 = vmul.f32 %v10866, %v244
  %v10955 = vmul.f32 %v10869, %v244
  %v10956 = vmul.f32 %v10872, %v244
  %v10957 = vmul.f32 %v10875, %v244
  %v10958 = vmul.f32 %v10878, %v244
  %v10959 = vmul.f32 %v10881, %v244
  %v10960 = vmul.f32 %v10884, %v244
  %v10961 = vmul.f32 %v10887, %v244
  %v10962 = vmul.f32 %v10890, %v244
  %v10963 = vmul.f32 %v10893, %v244
  %v10964 = vmul.f32 %v10896, %v244
  %v10965 = vmul.f32 %v10899, %v244
  %v10966 = vmul.f32 %v10902, %v244
  %v10967 = vmul.f32 %v10905, %v244
  %v10968 = vmul.f32 %v10908, %v244
  %v10969 = vmul.f32 %v10911, %v244
  %v10970 = vmul.f32 %v10914, %v244
  %v10971 = vmul.f32 %v10917, %v244
  %v10972 = vmul.f32 %v10920, %v244
  %v10973 = vmul.f32 %v10923, %v244
  %v10974 = vmul.f32 %v10926, %v244
  %v10975 = vmul.f32 %v10929, %v244
  %v10976 = vmul.f32 %v10932, %v244
  %v10977 = vmul.f32 %v10935, %v244
  %v10978 = vmul.f32 %v10938, %v244
  %v10979 = vmul.f32 %v10941, %v244
  %v10980 = vmul.f32 %v10944, %v244
  %v10981 = vmul.f32 %v10947, %v244
  %v10982 = vmul.f32 %v10950, %v244
  %v10983 = vadd.f32 %v10951, 1e-05
  %v10984 = vadd.f32 %v10952, 1e-05
  %v10985 = vadd.f32 %v10953, 1e-05
  %v10986 = vadd.f32 %v10954, 1e-05
  %v10987 = vadd.f32 %v10955, 1e-05
  %v10988 = vadd.f32 %v10956, 1e-05
  %v10989 = vadd.f32 %v10957, 1e-05
  %v10990 = vadd.f32 %v10958, 1e-05
  %v10991 = vadd.f32 %v10959, 1e-05
  %v10992 = vadd.f32 %v10960, 1e-05
  %v10993 = vadd.f32 %v10961, 1e-05
  %v10994 = vadd.f32 %v10962, 1e-05
  %v10995 = vadd.f32 %v10963, 1e-05
  %v10996 = vadd.f32 %v10964, 1e-05
  %v10997 = vadd.f32 %v10965, 1e-05
  %v10998 = vadd.f32 %v10966, 1e-05
  %v10999 = vadd.f32 %v10967, 1e-05
  %v11000 = vadd.f32 %v10968, 1e-05
  %v11001 = vadd.f32 %v10969, 1e-05
  %v11002 = vadd.f32 %v10970, 1e-05
  %v11003 = vadd.f32 %v10971, 1e-05
  %v11004 = vadd.f32 %v10972, 1e-05
  %v11005 = vadd.f32 %v10973, 1e-05
  %v11006 = vadd.f32 %v10974, 1e-05
  %v11007 = vadd.f32 %v10975, 1e-05
  %v11008 = vadd.f32 %v10976, 1e-05
  %v11009 = vadd.f32 %v10977, 1e-05
  %v11010 = vadd.f32 %v10978, 1e-05
  %v11011 = vadd.f32 %v10979, 1e-05
  %v11012 = vadd.f32 %v10980, 1e-05
  %v11013 = vadd.f32 %v10981, 1e-05
  %v11014 = vadd.f32 %v10982, 1e-05
  %v11015 = vrsqrt.pop %v10983
  %v11016 = vmul.f32 %v11015, %v10983
  %v11017 = vmul.f32 %v11016, %v11015
  %v11018 = vmul.f32 0.5, %v11017
  %v11019 = vsub.f32 1.5, %v11018
  %v11020 = vmul.f32 %v11015, %v11019
  %vm11021 = vweird.f32 %v10983
  %vm11022 = vweird.f32 %v11015
  %vm11023 = vmor %vm11021, %vm11022
  %v11024 = vsel %vm11023, %v11015, %v11020
  %v11025 = vrsqrt.pop %v10984
  %v11026 = vmul.f32 %v11025, %v10984
  %v11027 = vmul.f32 %v11026, %v11025
  %v11028 = vmul.f32 0.5, %v11027
  %v11029 = vsub.f32 1.5, %v11028
  %v11030 = vmul.f32 %v11025, %v11029
  %vm11031 = vweird.f32 %v10984
  %vm11032 = vweird.f32 %v11025
  %vm11033 = vmor %vm11031, %vm11032
  %v11034 = vsel %vm11033, %v11025, %v11030
  %v11035 = vrsqrt.pop %v10985
  %v11036 = vmul.f32 %v11035, %v10985
  %v11037 = vmul.f32 %v11036, %v11035
  %v11038 = vmul.f32 0.5, %v11037
  %v11039 = vsub.f32 1.5, %v11038
  %v11040 = vmul.f32 %v11035, %v11039
  %vm11041 = vweird.f32 %v10985
  %vm11042 = vweird.f32 %v11035
  %vm11043 = vmor %vm11041, %vm11042
  %v11044 = vsel %vm11043, %v11035, %v11040
  %v11045 = vrsqrt.pop %v10986
  %v11046 = vmul.f32 %v11045, %v10986
  %v11047 = vmul.f32 %v11046, %v11045
  %v11048 = vmul.f32 0.5, %v11047
  %v11049 = vsub.f32 1.5, %v11048
  %v11050 = vmul.f32 %v11045, %v11049
  %vm11051 = vweird.f32 %v10986
  %vm11052 = vweird.f32 %v11045
  %vm11053 = vmor %vm11051, %vm11052
  %v11054 = vsel %vm11053, %v11045, %v11050
  %v11055 = vrsqrt.pop %v10987
  %v11056 = vmul.f32 %v11055, %v10987
  %v11057 = vmul.f32 %v11056, %v11055
  %v11058 = vmul.f32 0.5, %v11057
  %v11059 = vsub.f32 1.5, %v11058
  %v11060 = vmul.f32 %v11055, %v11059
  %vm11061 = vweird.f32 %v10987
  %vm11062 = vweird.f32 %v11055
  %vm11063 = vmor %vm11061, %vm11062
  %v11064 = vsel %vm11063, %v11055, %v11060
  %v11065 = vrsqrt.pop %v10988
  %v11066 = vmul.f32 %v11065, %v10988
  %v11067 = vmul.f32 %v11066, %v11065
  %v11068 = vmul.f32 0.5, %v11067
  %v11069 = vsub.f32 1.5, %v11068
  %v11070 = vmul.f32 %v11065, %v11069
  %vm11071 = vweird.f32 %v10988
  %vm11072 = vweird.f32 %v11065
  %vm11073 = vmor %vm11071, %vm11072
  %v11074 = vsel %vm11073, %v11065, %v11070
  %v11075 = vrsqrt.pop %v10989
  %v11076 = vmul.f32 %v11075, %v10989
  %v11077 = vmul.f32 %v11076, %v11075
  %v11078 = vmul.f32 0.5, %v11077
  %v11079 = vsub.f32 1.5, %v11078
  %v11080 = vmul.f32 %v11075, %v11079
  %vm11081 = vweird.f32 %v10989
  %vm11082 = vweird.f32 %v11075
  %vm11083 = vmor %vm11081, %vm11082
  %v11084 = vsel %vm11083, %v11075, %v11080
  %v11085 = vrsqrt.pop %v10990
  %v11086 = vmul.f32 %v11085, %v10990
  %v11087 = vmul.f32 %v11086, %v11085
  %v11088 = vmul.f32 0.5, %v11087
  %v11089 = vsub.f32 1.5, %v11088
  %v11090 = vmul.f32 %v11085, %v11089
  %vm11091 = vweird.f32 %v10990
  %vm11092 = vweird.f32 %v11085
  %vm11093 = vmor %vm11091, %vm11092
  %v11094 = vsel %vm11093, %v11085, %v11090
  %v11095 = vrsqrt.pop %v10991
  %v11096 = vmul.f32 %v11095, %v10991
  %v11097 = vmul.f32 %v11096, %v11095
  %v11098 = vmul.f32 0.5, %v11097
  %v11099 = vsub.f32 1.5, %v11098
  %v11100 = vmul.f32 %v11095, %v11099
  %vm11101 = vweird.f32 %v10991
  %vm11102 = vweird.f32 %v11095
  %vm11103 = vmor %vm11101, %vm11102
  %v11104 = vsel %vm11103, %v11095, %v11100
  %v11105 = vrsqrt.pop %v10992
  %v11106 = vmul.f32 %v11105, %v10992
  %v11107 = vmul.f32 %v11106, %v11105
  %v11108 = vmul.f32 0.5, %v11107
  %v11109 = vsub.f32 1.5, %v11108
  %v11110 = vmul.f32 %v11105, %v11109
  %vm11111 = vweird.f32 %v10992
  %vm11112 = vweird.f32 %v11105
  %vm11113 = vmor %vm11111, %vm11112
  %v11114 = vsel %vm11113, %v11105, %v11110
  %v11115 = vrsqrt.pop %v10993
  %v11116 = vmul.f32 %v11115, %v10993
  %v11117 = vmul.f32 %v11116, %v11115
  %v11118 = vmul.f32 0.5, %v11117
  %v11119 = vsub.f32 1.5, %v11118
  %v11120 = vmul.f32 %v11115, %v11119
  %vm11121 = vweird.f32 %v10993
  %vm11122 = vweird.f32 %v11115
  %vm11123 = vmor %vm11121, %vm11122
  %v11124 = vsel %vm11123, %v11115, %v11120
  %v11125 = vrsqrt.pop %v10994
  %v11126 = vmul.f32 %v11125, %v10994
  %v11127 = vmul.f32 %v11126, %v11125
  %v11128 = vmul.f32 0.5, %v11127
  %v11129 = vsub.f32 1.5, %v11128
  %v11130 = vmul.f32 %v11125, %v11129
  %vm11131 = vweird.f32 %v10994
  %vm11132 = vweird.f32 %v11125
  %vm11133 = vmor %vm11131, %vm11132
  %v11134 = vsel %vm11133, %v11125, %v11130
  %v11135 = vrsqrt.pop %v10995
  %v11136 = vmul.f32 %v11135, %v10995
  %v11137 = vmul.f32 %v11136, %v11135
  %v11138 = vmul.f32 0.5, %v11137
  %v11139 = vsub.f32 1.5, %v11138
  %v11140 = vmul.f32 %v11135, %v11139
  %vm11141 = vweird.f32 %v10995
  %vm11142 = vweird.f32 %v11135
  %vm11143 = vmor %vm11141, %vm11142
  %v11144 = vsel %vm11143, %v11135, %v11140
  %v11145 = vrsqrt.pop %v10996
  %v11146 = vmul.f32 %v11145, %v10996
  %v11147 = vmul.f32 %v11146, %v11145
  %v11148 = vmul.f32 0.5, %v11147
  %v11149 = vsub.f32 1.5, %v11148
  %v11150 = vmul.f32 %v11145, %v11149
  %vm11151 = vweird.f32 %v10996
  %vm11152 = vweird.f32 %v11145
  %vm11153 = vmor %vm11151, %vm11152
  %v11154 = vsel %vm11153, %v11145, %v11150
  %v11155 = vrsqrt.pop %v10997
  %v11156 = vmul.f32 %v11155, %v10997
  %v11157 = vmul.f32 %v11156, %v11155
  %v11158 = vmul.f32 0.5, %v11157
  %v11159 = vsub.f32 1.5, %v11158
  %v11160 = vmul.f32 %v11155, %v11159
  %vm11161 = vweird.f32 %v10997
  %vm11162 = vweird.f32 %v11155
  %vm11163 = vmor %vm11161, %vm11162
  %v11164 = vsel %vm11163, %v11155, %v11160
  %v11165 = vrsqrt.pop %v10998
  %v11166 = vmul.f32 %v11165, %v10998
  %v11167 = vmul.f32 %v11166, %v11165
  %v11168 = vmul.f32 0.5, %v11167
  %v11169 = vsub.f32 1.5, %v11168
  %v11170 = vmul.f32 %v11165, %v11169
  %vm11171 = vweird.f32 %v10998
  %vm11172 = vweird.f32 %v11165
  %vm11173 = vmor %vm11171, %vm11172
  %v11174 = vsel %vm11173, %v11165, %v11170
  %v11175 = vrsqrt.pop %v10999
  %v11176 = vmul.f32 %v11175, %v10999
  %v11177 = vmul.f32 %v11176, %v11175
  %v11178 = vmul.f32 0.5, %v11177
  %v11179 = vsub.f32 1.5, %v11178
  %v11180 = vmul.f32 %v11175, %v11179
  %vm11181 = vweird.f32 %v10999
  %vm11182 = vweird.f32 %v11175
  %vm11183 = vmor %vm11181, %vm11182
  %v11184 = vsel %vm11183, %v11175, %v11180
  %v11185 = vrsqrt.pop %v11000
  %v11186 = vmul.f32 %v11185, %v11000
  %v11187 = vmul.f32 %v11186, %v11185
  %v11188 = vmul.f32 0.5, %v11187
  %v11189 = vsub.f32 1.5, %v11188
  %v11190 = vmul.f32 %v11185, %v11189
  %vm11191 = vweird.f32 %v11000
  %vm11192 = vweird.f32 %v11185
  %vm11193 = vmor %vm11191, %vm11192
  %v11194 = vsel %vm11193, %v11185, %v11190
  %v11195 = vrsqrt.pop %v11001
  %v11196 = vmul.f32 %v11195, %v11001
  %v11197 = vmul.f32 %v11196, %v11195
  %v11198 = vmul.f32 0.5, %v11197
  %v11199 = vsub.f32 1.5, %v11198
  %v11200 = vmul.f32 %v11195, %v11199
  %vm11201 = vweird.f32 %v11001
  %vm11202 = vweird.f32 %v11195
  %vm11203 = vmor %vm11201, %vm11202
  %v11204 = vsel %vm11203, %v11195, %v11200
  %v11205 = vrsqrt.pop %v11002
  %v11206 = vmul.f32 %v11205, %v11002
  %v11207 = vmul.f32 %v11206, %v11205
  %v11208 = vmul.f32 0.5, %v11207
  %v11209 = vsub.f32 1.5, %v11208
  %v11210 = vmul.f32 %v11205, %v11209
  %vm11211 = vweird.f32 %v11002
  %vm11212 = vweird.f32 %v11205
  %vm11213 = vmor %vm11211, %vm11212
  %v11214 = vsel %vm11213, %v11205, %v11210
  %v11215 = vrsqrt.pop %v11003
  %v11216 = vmul.f32 %v11215, %v11003
  %v11217 = vmul.f32 %v11216, %v11215
  %v11218 = vmul.f32 0.5, %v11217
  %v11219 = vsub.f32 1.5, %v11218
  %v11220 = vmul.f32 %v11215, %v11219
  %vm11221 = vweird.f32 %v11003
  %vm11222 = vweird.f32 %v11215
  %vm11223 = vmor %vm11221, %vm11222
  %v11224 = vsel %vm11223, %v11215, %v11220
  %v11225 = vrsqrt.pop %v11004
  %v11226 = vmul.f32 %v11225, %v11004
  %v11227 = vmul.f32 %v11226, %v11225
  %v11228 = vmul.f32 0.5, %v11227
  %v11229 = vsub.f32 1.5, %v11228
  %v11230 = vmul.f32 %v11225, %v11229
  %vm11231 = vweird.f32 %v11004
  %vm11232 = vweird.f32 %v11225
  %vm11233 = vmor %vm11231, %vm11232
  %v11234 = vsel %vm11233, %v11225, %v11230
  %v11235 = vrsqrt.pop %v11005
  %v11236 = vmul.f32 %v11235, %v11005
  %v11237 = vmul.f32 %v11236, %v11235
  %v11238 = vmul.f32 0.5, %v11237
  %v11239 = vsub.f32 1.5, %v11238
  %v11240 = vmul.f32 %v11235, %v11239
  %vm11241 = vweird.f32 %v11005
  %vm11242 = vweird.f32 %v11235
  %vm11243 = vmor %vm11241, %vm11242
  %v11244 = vsel %vm11243, %v11235, %v11240
  %v11245 = vrsqrt.pop %v11006
  %v11246 = vmul.f32 %v11245, %v11006
  %v11247 = vmul.f32 %v11246, %v11245
  %v11248 = vmul.f32 0.5, %v11247
  %v11249 = vsub.f32 1.5, %v11248
  %v11250 = vmul.f32 %v11245, %v11249
  %vm11251 = vweird.f32 %v11006
  %vm11252 = vweird.f32 %v11245
  %vm11253 = vmor %vm11251, %vm11252
  %v11254 = vsel %vm11253, %v11245, %v11250
  %v11255 = vrsqrt.pop %v11007
  %v11256 = vmul.f32 %v11255, %v11007
  %v11257 = vmul.f32 %v11256, %v11255
  %v11258 = vmul.f32 0.5, %v11257
  %v11259 = vsub.f32 1.5, %v11258
  %v11260 = vmul.f32 %v11255, %v11259
  %vm11261 = vweird.f32 %v11007
  %vm11262 = vweird.f32 %v11255
  %vm11263 = vmor %vm11261, %vm11262
  %v11264 = vsel %vm11263, %v11255, %v11260
  %v11265 = vrsqrt.pop %v11008
  %v11266 = vmul.f32 %v11265, %v11008
  %v11267 = vmul.f32 %v11266, %v11265
  %v11268 = vmul.f32 0.5, %v11267
  %v11269 = vsub.f32 1.5, %v11268
  %v11270 = vmul.f32 %v11265, %v11269
  %vm11271 = vweird.f32 %v11008
  %vm11272 = vweird.f32 %v11265
  %vm11273 = vmor %vm11271, %vm11272
  %v11274 = vsel %vm11273, %v11265, %v11270
  %v11275 = vrsqrt.pop %v11009
  %v11276 = vmul.f32 %v11275, %v11009
  %v11277 = vmul.f32 %v11276, %v11275
  %v11278 = vmul.f32 0.5, %v11277
  %v11279 = vsub.f32 1.5, %v11278
  %v11280 = vmul.f32 %v11275, %v11279
  %vm11281 = vweird.f32 %v11009
  %vm11282 = vweird.f32 %v11275
  %vm11283 = vmor %vm11281, %vm11282
  %v11284 = vsel %vm11283, %v11275, %v11280
  %v11285 = vrsqrt.pop %v11010
  %v11286 = vmul.f32 %v11285, %v11010
  %v11287 = vmul.f32 %v11286, %v11285
  %v11288 = vmul.f32 0.5, %v11287
  %v11289 = vsub.f32 1.5, %v11288
  %v11290 = vmul.f32 %v11285, %v11289
  %vm11291 = vweird.f32 %v11010
  %vm11292 = vweird.f32 %v11285
  %vm11293 = vmor %vm11291, %vm11292
  %v11294 = vsel %vm11293, %v11285, %v11290
  %v11295 = vrsqrt.pop %v11011
  %v11296 = vmul.f32 %v11295, %v11011
  %v11297 = vmul.f32 %v11296, %v11295
  %v11298 = vmul.f32 0.5, %v11297
  %v11299 = vsub.f32 1.5, %v11298
  %v11300 = vmul.f32 %v11295, %v11299
  %vm11301 = vweird.f32 %v11011
  %vm11302 = vweird.f32 %v11295
  %vm11303 = vmor %vm11301, %vm11302
  %v11304 = vsel %vm11303, %v11295, %v11300
  %v11305 = vrsqrt.pop %v11012
  %v11306 = vmul.f32 %v11305, %v11012
  %v11307 = vmul.f32 %v11306, %v11305
  %v11308 = vmul.f32 0.5, %v11307
  %v11309 = vsub.f32 1.5, %v11308
  %v11310 = vmul.f32 %v11305, %v11309
  %vm11311 = vweird.f32 %v11012
  %vm11312 = vweird.f32 %v11305
  %vm11313 = vmor %vm11311, %vm11312
  %v11314 = vsel %vm11313, %v11305, %v11310
  %v11315 = vrsqrt.pop %v11013
  %v11316 = vmul.f32 %v11315, %v11013
  %v11317 = vmul.f32 %v11316, %v11315
  %v11318 = vmul.f32 0.5, %v11317
  %v11319 = vsub.f32 1.5, %v11318
  %v11320 = vmul.f32 %v11315, %v11319
  %vm11321 = vweird.f32 %v11013
  %vm11322 = vweird.f32 %v11315
  %vm11323 = vmor %vm11321, %vm11322
  %v11324 = vsel %vm11323, %v11315, %v11320
  %v11325 = vrsqrt.pop %v11014
  %v11326 = vmul.f32 %v11325, %v11014
  %v11327 = vmul.f32 %v11326, %v11325
  %v11328 = vmul.f32 0.5, %v11327
  %v11329 = vsub.f32 1.5, %v11328
  %v11330 = vmul.f32 %v11325, %v11329
  %vm11331 = vweird.f32 %v11014
  %vm11332 = vweird.f32 %v11325
  %vm11333 = vmor %vm11331, %vm11332
  %v11334 = vsel %vm11333, %v11325, %v11330
  %v11335 = vmul.f32 %v10791, %v11024
  %v11336 = vmul.f32 %v10792, %v11034
  %v11337 = vmul.f32 %v10793, %v11044
  %v11338 = vmul.f32 %v10794, %v11054
  %v11339 = vmul.f32 %v10795, %v11064
  %v11340 = vmul.f32 %v10796, %v11074
  %v11341 = vmul.f32 %v10797, %v11084
  %v11342 = vmul.f32 %v10798, %v11094
  %v11343 = vmul.f32 %v10799, %v11104
  %v11344 = vmul.f32 %v10800, %v11114
  %v11345 = vmul.f32 %v10801, %v11124
  %v11346 = vmul.f32 %v10802, %v11134
  %v11347 = vmul.f32 %v10803, %v11144
  %v11348 = vmul.f32 %v10804, %v11154
  %v11349 = vmul.f32 %v10805, %v11164
  %v11350 = vmul.f32 %v10806, %v11174
  %v11351 = vmul.f32 %v10807, %v11184
  %v11352 = vmul.f32 %v10808, %v11194
  %v11353 = vmul.f32 %v10809, %v11204
  %v11354 = vmul.f32 %v10810, %v11214
  %v11355 = vmul.f32 %v10811, %v11224
  %v11356 = vmul.f32 %v10812, %v11234
  %v11357 = vmul.f32 %v10813, %v11244
  %v11358 = vmul.f32 %v10814, %v11254
  %v11359 = vmul.f32 %v10815, %v11264
  %v11360 = vmul.f32 %v10816, %v11274
  %v11361 = vmul.f32 %v10817, %v11284
  %v11362 = vmul.f32 %v10818, %v11294
  %v11363 = vmul.f32 %v10819, %v11304
  %v11364 = vmul.f32 %v10820, %v11314
  %v11365 = vmul.f32 %v10821, %v11324
  %v11366 = vmul.f32 %v10822, %v11334
  %v11367 = vmul.f32 %v11335, %v5486
  %v11368 = vmul.f32 %v11336, %v5486
  %v11369 = vmul.f32 %v11337, %v5486
  %v11370 = vmul.f32 %v11338, %v5486
  %v11371 = vmul.f32 %v11339, %v5486
  %v11372 = vmul.f32 %v11340, %v5486
  %v11373 = vmul.f32 %v11341, %v5486
  %v11374 = vmul.f32 %v11342, %v5486
  %v11375 = vmul.f32 %v11343, %v5486
  %v11376 = vmul.f32 %v11344, %v5486
  %v11377 = vmul.f32 %v11345, %v5486
  %v11378 = vmul.f32 %v11346, %v5486
  %v11379 = vmul.f32 %v11347, %v5486
  %v11380 = vmul.f32 %v11348, %v5486
  %v11381 = vmul.f32 %v11349, %v5486
  %v11382 = vmul.f32 %v11350, %v5486
  %v11383 = vmul.f32 %v11351, %v5486
  %v11384 = vmul.f32 %v11352, %v5486
  %v11385 = vmul.f32 %v11353, %v5486
  %v11386 = vmul.f32 %v11354, %v5486
  %v11387 = vmul.f32 %v11355, %v5486
  %v11388 = vmul.f32 %v11356, %v5486
  %v11389 = vmul.f32 %v11357, %v5486
  %v11390 = vmul.f32 %v11358, %v5486
  %v11391 = vmul.f32 %v11359, %v5486
  %v11392 = vmul.f32 %v11360, %v5486
  %v11393 = vmul.f32 %v11361, %v5486
  %v11394 = vmul.f32 %v11362, %v5486
  %v11395 = vmul.f32 %v11363, %v5486
  %v11396 = vmul.f32 %v11364, %v5486
  %v11397 = vmul.f32 %v11365, %v5486
  %v11398 = vmul.f32 %v11366, %v5486
  %v11399 = vadd.f32 %v11367, %v5521
  %v11400 = vadd.f32 %v11368, %v5521
  %v11401 = vadd.f32 %v11369, %v5521
  %v11402 = vadd.f32 %v11370, %v5521
  %v11403 = vadd.f32 %v11371, %v5521
  %v11404 = vadd.f32 %v11372, %v5521
  %v11405 = vadd.f32 %v11373, %v5521
  %v11406 = vadd.f32 %v11374, %v5521
  %v11407 = vadd.f32 %v11375, %v5521
  %v11408 = vadd.f32 %v11376, %v5521
  %v11409 = vadd.f32 %v11377, %v5521
  %v11410 = vadd.f32 %v11378, %v5521
  %v11411 = vadd.f32 %v11379, %v5521
  %v11412 = vadd.f32 %v11380, %v5521
  %v11413 = vadd.f32 %v11381, %v5521
  %v11414 = vadd.f32 %v11382, %v5521
  %v11415 = vadd.f32 %v11383, %v5521
  %v11416 = vadd.f32 %v11384, %v5521
  %v11417 = vadd.f32 %v11385, %v5521
  %v11418 = vadd.f32 %v11386, %v5521
  %v11419 = vadd.f32 %v11387, %v5521
  %v11420 = vadd.f32 %v11388, %v5521
  %v11421 = vadd.f32 %v11389, %v5521
  %v11422 = vadd.f32 %v11390, %v5521
  %v11423 = vadd.f32 %v11391, %v5521
  %v11424 = vadd.f32 %v11392, %v5521
  %v11425 = vadd.f32 %v11393, %v5521
  %v11426 = vadd.f32 %v11394, %v5521
  %v11427 = vadd.f32 %v11395, %v5521
  %v11428 = vadd.f32 %v11396, %v5521
  %v11429 = vadd.f32 %v11397, %v5521
  %v11430 = vadd.f32 %v11398, %v5521
  %v11432 = vsel %vm141, %v11399, 0
  %v11435 = vsel %vm141, %v11400, 0
  %v11438 = vsel %vm141, %v11401, 0
  %v11441 = vsel %vm141, %v11402, 0
  %v11444 = vsel %vm141, %v11403, 0
  %v11447 = vsel %vm141, %v11404, 0
  %v11450 = vsel %vm141, %v11405, 0
  %v11453 = vsel %vm141, %v11406, 0
  %v11456 = vsel %vm141, %v11407, 0
  %v11459 = vsel %vm141, %v11408, 0
  %v11462 = vsel %vm141, %v11409, 0
  %v11465 = vsel %vm141, %v11410, 0
  %v11468 = vsel %vm141, %v11411, 0
  %v11471 = vsel %vm141, %v11412, 0
  %v11474 = vsel %vm141, %v11413, 0
  %v11477 = vsel %vm141, %v11414, 0
  %v11480 = vsel %vm141, %v11415, 0
  %v11483 = vsel %vm141, %v11416, 0
  %v11486 = vsel %vm141, %v11417, 0
  %v11489 = vsel %vm141, %v11418, 0
  %v11492 = vsel %vm141, %v11419, 0
  %v11495 = vsel %vm141, %v11420, 0
  %v11498 = vsel %vm141, %v11421, 0
  %v11501 = vsel %vm141, %v11422, 0
  %v11504 = vsel %vm141, %v11423, 0
  %v11507 = vsel %vm141, %v11424, 0
  %v11510 = vsel %vm141, %v11425, 0
  %v11513 = vsel %vm141, %v11426, 0
  %v11516 = vsel %vm141, %v11427, 0
  %v11519 = vsel %vm141, %v11428, 0
  %v11522 = vsel %vm141, %v11429, 0
  %v11525 = vsel %vm141, %v11430, 0
  %11527 = vmatpush.msra.mxu0 0.0
  %11528 = vmatpush.msra.mxu0 0.0
  %11529 = vmatpush.msra.mxu0 0.0
  %11530 = vmatpush.msra.mxu0 0.0
  %11531 = vmatpush.msra.mxu0 0.0
  %11532 = vmatpush.msra.mxu0 0.0
  %11533 = vmatpush.msra.mxu0 0.0
  %11534 = vmatpush.msra.mxu0 0.0
  %11535 = vmatpush.msra.mxu0 0.0
  %11536 = vmatpush.msra.mxu0 0.0
  %11537 = vmatpush.msra.mxu0 0.0
  %11538 = vmatpush.msra.mxu0 0.0
  %11539 = vmatpush.msra.mxu0 %v58
  %11540 = vmatpush.msra.mxu0 %v57
  %11541 = vmatpush.msra.mxu0 %v56
  %11542 = vmatpush.msra.mxu0 %v55
  %11543 = vmatmul.f32.gmra.mxu0 %v11432
  %v11544 = vpop.f32.mrf.mxu0
  %v11545 = vadd.f32 %v5556, %v11544
  %11546 = vmatmul.f32.gmra.mxu0 %v11435
  %v11547 = vpop.f32.mrf.mxu0
  %v11548 = vadd.f32 %v5556, %v11547
  %11549 = vmatmul.f32.gmra.mxu0 %v11438
  %v11550 = vpop.f32.mrf.mxu0
  %v11551 = vadd.f32 %v5556, %v11550
  %11552 = vmatmul.f32.gmra.mxu0 %v11441
  %v11553 = vpop.f32.mrf.mxu0
  %v11554 = vadd.f32 %v5556, %v11553
  %11555 = vmatmul.f32.gmra.mxu0 %v11444
  %v11556 = vpop.f32.mrf.mxu0
  %v11557 = vadd.f32 %v5556, %v11556
  %11558 = vmatmul.f32.gmra.mxu0 %v11447
  %v11559 = vpop.f32.mrf.mxu0
  %v11560 = vadd.f32 %v5556, %v11559
  %11561 = vmatmul.f32.gmra.mxu0 %v11450
  %v11562 = vpop.f32.mrf.mxu0
  %v11563 = vadd.f32 %v5556, %v11562
  %11564 = vmatmul.f32.gmra.mxu0 %v11453
  %v11565 = vpop.f32.mrf.mxu0
  %v11566 = vadd.f32 %v5556, %v11565
  %11567 = vmatmul.f32.gmra.mxu0 %v11456
  %v11568 = vpop.f32.mrf.mxu0
  %v11569 = vadd.f32 %v5556, %v11568
  %11570 = vmatmul.f32.gmra.mxu0 %v11459
  %v11571 = vpop.f32.mrf.mxu0
  %v11572 = vadd.f32 %v5556, %v11571
  %11573 = vmatmul.f32.gmra.mxu0 %v11462
  %v11574 = vpop.f32.mrf.mxu0
  %v11575 = vadd.f32 %v5556, %v11574
  %11576 = vmatmul.f32.gmra.mxu0 %v11465
  %v11577 = vpop.f32.mrf.mxu0
  %v11578 = vadd.f32 %v5556, %v11577
  %11579 = vmatmul.f32.gmra.mxu0 %v11468
  %v11580 = vpop.f32.mrf.mxu0
  %v11581 = vadd.f32 %v5556, %v11580
  %11582 = vmatmul.f32.gmra.mxu0 %v11471
  %v11583 = vpop.f32.mrf.mxu0
  %v11584 = vadd.f32 %v5556, %v11583
  %11585 = vmatmul.f32.gmra.mxu0 %v11474
  %v11586 = vpop.f32.mrf.mxu0
  %v11587 = vadd.f32 %v5556, %v11586
  %11588 = vmatmul.f32.gmra.mxu0 %v11477
  %v11589 = vpop.f32.mrf.mxu0
  %v11590 = vadd.f32 %v5556, %v11589
  %11591 = vmatmul.f32.gmra.mxu0 %v11480
  %v11592 = vpop.f32.mrf.mxu0
  %v11593 = vadd.f32 %v5556, %v11592
  %11594 = vmatmul.f32.gmra.mxu0 %v11483
  %v11595 = vpop.f32.mrf.mxu0
  %v11596 = vadd.f32 %v5556, %v11595
  %11597 = vmatmul.f32.gmra.mxu0 %v11486
  %v11598 = vpop.f32.mrf.mxu0
  %v11599 = vadd.f32 %v5556, %v11598
  %11600 = vmatmul.f32.gmra.mxu0 %v11489
  %v11601 = vpop.f32.mrf.mxu0
  %v11602 = vadd.f32 %v5556, %v11601
  %11603 = vmatmul.f32.gmra.mxu0 %v11492
  %v11604 = vpop.f32.mrf.mxu0
  %v11605 = vadd.f32 %v5556, %v11604
  %11606 = vmatmul.f32.gmra.mxu0 %v11495
  %v11607 = vpop.f32.mrf.mxu0
  %v11608 = vadd.f32 %v5556, %v11607
  %11609 = vmatmul.f32.gmra.mxu0 %v11498
  %v11610 = vpop.f32.mrf.mxu0
  %v11611 = vadd.f32 %v5556, %v11610
  %11612 = vmatmul.f32.gmra.mxu0 %v11501
  %v11613 = vpop.f32.mrf.mxu0
  %v11614 = vadd.f32 %v5556, %v11613
  %11615 = vmatmul.f32.gmra.mxu0 %v11504
  %v11616 = vpop.f32.mrf.mxu0
  %v11617 = vadd.f32 %v5556, %v11616
  %11618 = vmatmul.f32.gmra.mxu0 %v11507
  %v11619 = vpop.f32.mrf.mxu0
  %v11620 = vadd.f32 %v5556, %v11619
  %11621 = vmatmul.f32.gmra.mxu0 %v11510
  %v11622 = vpop.f32.mrf.mxu0
  %v11623 = vadd.f32 %v5556, %v11622
  %11624 = vmatmul.f32.gmra.mxu0 %v11513
  %v11625 = vpop.f32.mrf.mxu0
  %v11626 = vadd.f32 %v5556, %v11625
  %11627 = vmatmul.f32.gmra.mxu0 %v11516
  %v11628 = vpop.f32.mrf.mxu0
  %v11629 = vadd.f32 %v5556, %v11628
  %11630 = vmatmul.f32.gmra.mxu0 %v11519
  %v11631 = vpop.f32.mrf.mxu0
  %v11632 = vadd.f32 %v5556, %v11631
  %11633 = vmatmul.f32.gmra.mxu0 %v11522
  %v11634 = vpop.f32.mrf.mxu0
  %v11635 = vadd.f32 %v5556, %v11634
  %11636 = vmatmul.f32.gmra.mxu0 %v11525
  %v11637 = vpop.f32.mrf.mxu0
  %v11638 = vadd.f32 %v5556, %v11637
  %11639 = vdwg.mxu0
  %v11640 = vmax.f32 %v11545, 0.0
  %v11641 = vmax.f32 %v11548, 0.0
  %v11642 = vmax.f32 %v11551, 0.0
  %v11643 = vmax.f32 %v11554, 0.0
  %v11644 = vmax.f32 %v11557, 0.0
  %v11645 = vmax.f32 %v11560, 0.0
  %v11646 = vmax.f32 %v11563, 0.0
  %v11647 = vmax.f32 %v11566, 0.0
  %v11648 = vmax.f32 %v11569, 0.0
  %v11649 = vmax.f32 %v11572, 0.0
  %v11650 = vmax.f32 %v11575, 0.0
  %v11651 = vmax.f32 %v11578, 0.0
  %v11652 = vmax.f32 %v11581, 0.0
  %v11653 = vmax.f32 %v11584, 0.0
  %v11654 = vmax.f32 %v11587, 0.0
  %v11655 = vmax.f32 %v11590, 0.0
  %v11656 = vmax.f32 %v11593, 0.0
  %v11657 = vmax.f32 %v11596, 0.0
  %v11658 = vmax.f32 %v11599, 0.0
  %v11659 = vmax.f32 %v11602, 0.0
  %v11660 = vmax.f32 %v11605, 0.0
  %v11661 = vmax.f32 %v11608, 0.0
  %v11662 = vmax.f32 %v11611, 0.0
  %v11663 = vmax.f32 %v11614, 0.0
  %v11664 = vmax.f32 %v11617, 0.0
  %v11665 = vmax.f32 %v11620, 0.0
  %v11666 = vmax.f32 %v11623, 0.0
  %v11667 = vmax.f32 %v11626, 0.0
  %v11668 = vmax.f32 %v11629, 0.0
  %v11669 = vmax.f32 %v11632, 0.0
  %v11670 = vmax.f32 %v11635, 0.0
  %v11671 = vmax.f32 %v11638, 0.0
  %11672 = vmatpush.msra.mxu0 %v75
  %11673 = vmatpush.msra.mxu0 %v74
  %11674 = vmatpush.msra.mxu0 %v73
  %11675 = vmatpush.msra.mxu0 %v72
  %11676 = vmatpush.msra.mxu0 %v71
  %11677 = vmatpush.msra.mxu0 %v70
  %11678 = vmatpush.msra.mxu0 %v69
  %11679 = vmatpush.msra.mxu0 %v68
  %11680 = vmatpush.msra.mxu0 %v67
  %11681 = vmatpush.msra.mxu0 %v66
  %11682 = vmatpush.msra.mxu0 %v65
  %11683 = vmatpush.msra.mxu0 %v64
  %11684 = vmatpush.msra.mxu0 %v63
  %11685 = vmatpush.msra.mxu0 %v62
  %11686 = vmatpush.msra.mxu0 %v61
  %11687 = vmatpush.msra.mxu0 %v60
  %11688 = vmatmul.f32.gmra.mxu0 %v11640
  %v11689 = vpop.f32.mrf.mxu0
  %v11690 = vadd.f32 %v5800, %v11689
  %11691 = vmatmul.f32.gmra.mxu0 %v11641
  %v11692 = vpop.f32.mrf.mxu0
  %v11693 = vadd.f32 %v5800, %v11692
  %11694 = vmatmul.f32.gmra.mxu0 %v11642
  %v11695 = vpop.f32.mrf.mxu0
  %v11696 = vadd.f32 %v5800, %v11695
  %11697 = vmatmul.f32.gmra.mxu0 %v11643
  %v11698 = vpop.f32.mrf.mxu0
  %v11699 = vadd.f32 %v5800, %v11698
  %11700 = vmatmul.f32.gmra.mxu0 %v11644
  %v11701 = vpop.f32.mrf.mxu0
  %v11702 = vadd.f32 %v5800, %v11701
  %11703 = vmatmul.f32.gmra.mxu0 %v11645
  %v11704 = vpop.f32.mrf.mxu0
  %v11705 = vadd.f32 %v5800, %v11704
  %11706 = vmatmul.f32.gmra.mxu0 %v11646
  %v11707 = vpop.f32.mrf.mxu0
  %v11708 = vadd.f32 %v5800, %v11707
  %11709 = vmatmul.f32.gmra.mxu0 %v11647
  %v11710 = vpop.f32.mrf.mxu0
  %v11711 = vadd.f32 %v5800, %v11710
  %11712 = vmatmul.f32.gmra.mxu0 %v11648
  %v11713 = vpop.f32.mrf.mxu0
  %v11714 = vadd.f32 %v5800, %v11713
  %11715 = vmatmul.f32.gmra.mxu0 %v11649
  %v11716 = vpop.f32.mrf.mxu0
  %v11717 = vadd.f32 %v5800, %v11716
  %11718 = vmatmul.f32.gmra.mxu0 %v11650
  %v11719 = vpop.f32.mrf.mxu0
  %v11720 = vadd.f32 %v5800, %v11719
  %11721 = vmatmul.f32.gmra.mxu0 %v11651
  %v11722 = vpop.f32.mrf.mxu0
  %v11723 = vadd.f32 %v5800, %v11722
  %11724 = vmatmul.f32.gmra.mxu0 %v11652
  %v11725 = vpop.f32.mrf.mxu0
  %v11726 = vadd.f32 %v5800, %v11725
  %11727 = vmatmul.f32.gmra.mxu0 %v11653
  %v11728 = vpop.f32.mrf.mxu0
  %v11729 = vadd.f32 %v5800, %v11728
  %11730 = vmatmul.f32.gmra.mxu0 %v11654
  %v11731 = vpop.f32.mrf.mxu0
  %v11732 = vadd.f32 %v5800, %v11731
  %11733 = vmatmul.f32.gmra.mxu0 %v11655
  %v11734 = vpop.f32.mrf.mxu0
  %v11735 = vadd.f32 %v5800, %v11734
  %11736 = vmatmul.f32.gmra.mxu0 %v11656
  %v11737 = vpop.f32.mrf.mxu0
  %v11738 = vadd.f32 %v5800, %v11737
  %11739 = vmatmul.f32.gmra.mxu0 %v11657
  %v11740 = vpop.f32.mrf.mxu0
  %v11741 = vadd.f32 %v5800, %v11740
  %11742 = vmatmul.f32.gmra.mxu0 %v11658
  %v11743 = vpop.f32.mrf.mxu0
  %v11744 = vadd.f32 %v5800, %v11743
  %11745 = vmatmul.f32.gmra.mxu0 %v11659
  %v11746 = vpop.f32.mrf.mxu0
  %v11747 = vadd.f32 %v5800, %v11746
  %11748 = vmatmul.f32.gmra.mxu0 %v11660
  %v11749 = vpop.f32.mrf.mxu0
  %v11750 = vadd.f32 %v5800, %v11749
  %11751 = vmatmul.f32.gmra.mxu0 %v11661
  %v11752 = vpop.f32.mrf.mxu0
  %v11753 = vadd.f32 %v5800, %v11752
  %11754 = vmatmul.f32.gmra.mxu0 %v11662
  %v11755 = vpop.f32.mrf.mxu0
  %v11756 = vadd.f32 %v5800, %v11755
  %11757 = vmatmul.f32.gmra.mxu0 %v11663
  %v11758 = vpop.f32.mrf.mxu0
  %v11759 = vadd.f32 %v5800, %v11758
  %11760 = vmatmul.f32.gmra.mxu0 %v11664
  %v11761 = vpop.f32.mrf.mxu0
  %v11762 = vadd.f32 %v5800, %v11761
  %11763 = vmatmul.f32.gmra.mxu0 %v11665
  %v11764 = vpop.f32.mrf.mxu0
  %v11765 = vadd.f32 %v5800, %v11764
  %11766 = vmatmul.f32.gmra.mxu0 %v11666
  %v11767 = vpop.f32.mrf.mxu0
  %v11768 = vadd.f32 %v5800, %v11767
  %11769 = vmatmul.f32.gmra.mxu0 %v11667
  %v11770 = vpop.f32.mrf.mxu0
  %v11771 = vadd.f32 %v5800, %v11770
  %11772 = vmatmul.f32.gmra.mxu0 %v11668
  %v11773 = vpop.f32.mrf.mxu0
  %v11774 = vadd.f32 %v5800, %v11773
  %11775 = vmatmul.f32.gmra.mxu0 %v11669
  %v11776 = vpop.f32.mrf.mxu0
  %v11777 = vadd.f32 %v5800, %v11776
  %11778 = vmatmul.f32.gmra.mxu0 %v11670
  %v11779 = vpop.f32.mrf.mxu0
  %v11780 = vadd.f32 %v5800, %v11779
  %11781 = vmatmul.f32.gmra.mxu0 %v11671
  %v11782 = vpop.f32.mrf.mxu0
  %v11783 = vadd.f32 %v5800, %v11782
  %11784 = vdwg.mxu0
  %v11785 = vadd.f32 %v11690, %v10631
  %v11786 = vadd.f32 %v11693, %v10632
  %v11787 = vadd.f32 %v11696, %v10633
  %v11788 = vadd.f32 %v11699, %v10634
  %v11789 = vadd.f32 %v11702, %v10635
  %v11790 = vadd.f32 %v11705, %v10636
  %v11791 = vadd.f32 %v11708, %v10637
  %v11792 = vadd.f32 %v11711, %v10638
  %v11793 = vadd.f32 %v11714, %v10639
  %v11794 = vadd.f32 %v11717, %v10640
  %v11795 = vadd.f32 %v11720, %v10641
  %v11796 = vadd.f32 %v11723, %v10642
  %v11797 = vadd.f32 %v11726, %v10643
  %v11798 = vadd.f32 %v11729, %v10644
  %v11799 = vadd.f32 %v11732, %v10645
  %v11800 = vadd.f32 %v11735, %v10646
  %v11801 = vadd.f32 %v11738, %v10647
  %v11802 = vadd.f32 %v11741, %v10648
  %v11803 = vadd.f32 %v11744, %v10649
  %v11804 = vadd.f32 %v11747, %v10650
  %v11805 = vadd.f32 %v11750, %v10651
  %v11806 = vadd.f32 %v11753, %v10652
  %v11807 = vadd.f32 %v11756, %v10653
  %v11808 = vadd.f32 %v11759, %v10654
  %v11809 = vadd.f32 %v11762, %v10655
  %v11810 = vadd.f32 %v11765, %v10656
  %v11811 = vadd.f32 %v11768, %v10657
  %v11812 = vadd.f32 %v11771, %v10658
  %v11813 = vadd.f32 %v11774, %v10659
  %v11814 = vadd.f32 %v11777, %v10660
  %v11815 = vadd.f32 %v11780, %v10661
  %v11816 = vadd.f32 %v11783, %v10662
  %s11817 = scalar_lea.vmem %s15, 256
  %11818 = vst.msk [vmem:[%s11817] sm:$0xff] %vm141, %v11785
  %11819 = vst.msk [vmem:[%s11817 + $0x8] sm:$0xff] %vm141, %v11786
  %11820 = vst.msk [vmem:[%s11817 + $0x10] sm:$0xff] %vm141, %v11787
  %11821 = vst.msk [vmem:[%s11817 + $0x18] sm:$0xff] %vm141, %v11788
  %11822 = vst.msk [vmem:[%s11817 + $0x20] sm:$0xff] %vm141, %v11789
  %11823 = vst.msk [vmem:[%s11817 + $0x28] sm:$0xff] %vm141, %v11790
  %11824 = vst.msk [vmem:[%s11817 + $0x30] sm:$0xff] %vm141, %v11791
  %11825 = vst.msk [vmem:[%s11817 + $0x38] sm:$0xff] %vm141, %v11792
  %11826 = vst.msk [vmem:[%s11817 + $0x40] sm:$0xff] %vm141, %v11793
  %11827 = vst.msk [vmem:[%s11817 + $0x48] sm:$0xff] %vm141, %v11794
  %11828 = vst.msk [vmem:[%s11817 + $0x50] sm:$0xff] %vm141, %v11795
  %11829 = vst.msk [vmem:[%s11817 + $0x58] sm:$0xff] %vm141, %v11796
  %11830 = vst.msk [vmem:[%s11817 + $0x60] sm:$0xff] %vm141, %v11797
  %11831 = vst.msk [vmem:[%s11817 + $0x68] sm:$0xff] %vm141, %v11798
  %11832 = vst.msk [vmem:[%s11817 + $0x70] sm:$0xff] %vm141, %v11799
  %11833 = vst.msk [vmem:[%s11817 + $0x78] sm:$0xff] %vm141, %v11800
  %11834 = vst.msk [vmem:[%s11817 + $0x80] sm:$0xff] %vm141, %v11801
  %11835 = vst.msk [vmem:[%s11817 + $0x88] sm:$0xff] %vm141, %v11802
  %11836 = vst.msk [vmem:[%s11817 + $0x90] sm:$0xff] %vm141, %v11803
  %11837 = vst.msk [vmem:[%s11817 + $0x98] sm:$0xff] %vm141, %v11804
  %11838 = vst.msk [vmem:[%s11817 + $0xa0] sm:$0xff] %vm141, %v11805
  %11839 = vst.msk [vmem:[%s11817 + $0xa8] sm:$0xff] %vm141, %v11806
  %11840 = vst.msk [vmem:[%s11817 + $0xb0] sm:$0xff] %vm141, %v11807
  %11841 = vst.msk [vmem:[%s11817 + $0xb8] sm:$0xff] %vm141, %v11808
  %11842 = vst.msk [vmem:[%s11817 + $0xc0] sm:$0xff] %vm141, %v11809
  %11843 = vst.msk [vmem:[%s11817 + $0xc8] sm:$0xff] %vm141, %v11810
  %11844 = vst.msk [vmem:[%s11817 + $0xd0] sm:$0xff] %vm141, %v11811
  %11845 = vst.msk [vmem:[%s11817 + $0xd8] sm:$0xff] %vm141, %v11812
  %11846 = vst.msk [vmem:[%s11817 + $0xe0] sm:$0xff] %vm141, %v11813
  %11847 = vst.msk [vmem:[%s11817 + $0xe8] sm:$0xff] %vm141, %v11814
  %11848 = vst.msk [vmem:[%s11817 + $0xf0] sm:$0xff] %vm141, %v11815
  %11849 = vst.msk [vmem:[%s11817 + $0xf8] sm:$0xff] %vm141, %v11816
  // Predicated region
  $region62: #{tpu_custom_call.1} parent=0 // pred_check
    _
  $region63: #{tpu_custom_call.1} parent=0 // pred_check_branch
    %11851 = sbr.rel (0) target = $region65
  $region64: #{tpu_custom_call.1} parent=0 // pred_region
    _
  $region65: #{tpu_custom_call.1} parent=0 // pred_fallthru
    _
  // Predicated region
  $region66: #{tpu_custom_call.1} parent=0 // pred_check
    _
  $region67: #{tpu_custom_call.1} parent=0 // pred_check_branch
    %11853 = sbr.rel (0) target = $region69
  $region68: #{tpu_custom_call.1} parent=0 // pred_region
    _
  $region69: #{tpu_custom_call.1} parent=0 // pred_fallthru
    _

</llo_original>
